<compile_context>
chip_gen: v7x
topology: tpu7x:2x2x1
jax: 0.10.0
libtpu: 0.0.40
codegen_flags: <defaults>
</compile_context>

<pallas_src>
import functools
import math

import jax
import jax.numpy as jnp
from jax.experimental import pallas as pl
from jax.experimental.pallas import tpu as pltpu

MM_DTYPE = jnp.bfloat16   # MXU operand dtype (accumulation is always f32)


# ----------------------------------------------------------------------------
# Fused decoder-layer kernel
# ----------------------------------------------------------------------------
def _decoder_layer_kernel(
    trg_ref, enc_ref, tmask_ref, smask_ref,
    s_wq_ref, s_bq_ref, s_wkv_ref, s_bkv_ref, s_wo_ref, s_bo_ref,   # self-attn
    e_wq_ref, e_bq_ref, e_wkv_ref, e_bkv_ref, e_wo_ref, e_bo_ref,   # enc-attn
    ff_w1_ref, ff_b1_ref, ff_w2_ref, ff_b2_ref,                      # FFN
    ln1g_ref, ln1b_ref, ln2g_ref, ln2b_ref, ln3g_ref, ln3b_ref,
    out_ref, attn_ref,
    *, n_heads, head_dim, mm_dtype):
    D = n_heads * head_dim
    inv_scale = 1.0 / math.sqrt(head_dim)

    x = trg_ref[0]        # (Sq, D)  f32
    enc = enc_ref[0]      # (Sk, D)  f32
    tmask = tmask_ref[0]  # (Sq, Sq) f32
    smask = smask_ref[0]  # (1, Sk)  f32

    def project(inp, w_ref, b_ref):
        return jnp.dot(inp.astype(mm_dtype), w_ref[...],
                       preferred_element_type=jnp.float32) + b_ref[...]

    def mha_core(q, kv, mask, wo_ref, bo_ref, attn_store):
        # q: (Sq, D) f32; kv: (Skv, 2D) f32 = [K | V]
        # wo_ref: (H, Dh, D); bo_ref: (1, D)
        out = None
        for h in range(n_heads):
            lo, hi = h * head_dim, (h + 1) * head_dim
            qh = q[:, lo:hi]
            kh = kv[:, lo:hi]
            vh = kv[:, D + lo:D + hi]
            # q @ k^T without an explicit transpose
            energy = jax.lax.dot_general(
                qh.astype(mm_dtype), kh.astype(mm_dtype),
                dimension_numbers=(((1,), (1,)), ((), ())),
                preferred_element_type=jnp.float32) * inv_scale
            energy = jnp.where(mask > 0.0, energy, -1e10)
            mx = jnp.max(energy, axis=-1, keepdims=True)
            e = jnp.exp(energy - mx)
            p = e * pl.reciprocal(jnp.sum(e, axis=-1, keepdims=True))
            if attn_store is not None:
                attn_store[0, h] = p.astype(attn_store.dtype)
            oh = jnp.dot(p.astype(mm_dtype), vh.astype(mm_dtype),
                         preferred_element_type=jnp.float32)
            contrib = jnp.dot(oh.astype(mm_dtype), wo_ref[h],
                              preferred_element_type=jnp.float32)
            out = contrib if out is None else out + contrib
        return out + bo_ref[...]

    def layernorm(h, g_ref, b_ref):   # f32 math, eps = 1e-5 (PyTorch default)
        mean = jnp.mean(h, axis=-1, keepdims=True)
        c = h - mean
        var = jnp.mean(c * c, axis=-1, keepdims=True)
        return c * jax.lax.rsqrt(var + 1e-5) * g_ref[...] + b_ref[...]

    # ---- self attention + residual LayerNorm (attn probs not materialized) --
    q = project(x, s_wq_ref, s_bq_ref)
    kv = project(x, s_wkv_ref, s_bkv_ref)
    sa = mha_core(q, kv, tmask, s_wo_ref, s_bo_ref, None)
    x = layernorm(x + sa, ln1g_ref, ln1b_ref)

    # ---- encoder attention + residual LayerNorm (attn probs written) --------
    q = project(x, e_wq_ref, e_bq_ref)
    kv = project(enc, e_wkv_ref, e_bkv_ref)
    ea = mha_core(q, kv, smask, e_wo_ref, e_bo_ref, attn_ref)
    x = layernorm(x + ea, ln2g_ref, ln2b_ref)

    # ---- position-wise feed-forward + residual LayerNorm --------------------
    h1 = jnp.maximum(project(x, ff_w1_ref, ff_b1_ref), 0.0)
    ff = project(h1, ff_w2_ref, ff_b2_ref)
    x = layernorm(x + ff, ln3g_ref, ln3b_ref)

    out_ref[0] = x.astype(out_ref.dtype)


def _rep_spec(shape):
    zeros = (0,) * len(shape)
    return pl.BlockSpec(tuple(shape), lambda b: zeros)


def _batch_spec(rest):
    zeros = (0,) * len(rest)
    return pl.BlockSpec((1,) + tuple(rest), lambda b: (b,) + zeros)


def decoder_layer(trg, enc_src, tmask, smask, lp, n_heads, mm_dtype):
    B, Sq, D = trg.shape
    Sk = enc_src.shape[1]
    H = n_heads
    Dh = D // H
    PF = lp["w1"].shape[1]

    kernel = functools.partial(_decoder_layer_kernel, n_heads=H, head_dim=Dh,
                               mm_dtype=mm_dtype)

    in_specs = [
        _batch_spec((Sq, D)),        # trg
        _batch_spec((Sk, D)),        # enc_src
        _batch_spec((Sq, Sq)),       # trg mask (shared across heads)
        _batch_spec((1, Sk)),        # src mask (shared across heads & queries)
        _rep_spec((D, D)),           # self-attn Wq
        _rep_spec((1, D)),           # self-attn bq
        _rep_spec((D, 2 * D)),       # self-attn [Wk | Wv]
        _rep_spec((1, 2 * D)),       # self-attn [bk | bv]
        _rep_spec((H, Dh, D)),       # self-attn Wo (per-head slabs)
        _rep_spec((1, D)),           # self-attn bo
        _rep_spec((D, D)),           # enc-attn Wq
        _rep_spec((1, D)),           # enc-attn bq
        _rep_spec((D, 2 * D)),       # enc-attn [Wk | Wv]
        _rep_spec((1, 2 * D)),       # enc-attn [bk | bv]
        _rep_spec((H, Dh, D)),       # enc-attn Wo
        _rep_spec((1, D)),           # enc-attn bo
        _rep_spec((D, PF)),          # ff w1
        _rep_spec((1, PF)),          # ff b1
        _rep_spec((PF, D)),          # ff w2
        _rep_spec((1, D)),           # ff b2
    ] + [_rep_spec((1, D))] * 6      # ln1_g/b, ln2_g/b, ln3_g/b

    out_specs = (
        _batch_spec((Sq, D)),
        _batch_spec((H, Sq, Sk)),
    )
    out_shape = (
        jax.ShapeDtypeStruct((B, Sq, D), jnp.float32),
        jax.ShapeDtypeStruct((B, H, Sq, Sk), jnp.float32),
    )

    sa, ea = lp["sa"], lp["ea"]
    trg_out, attn = pl.pallas_call(
        kernel,
        out_shape=out_shape,
        grid=(B,),
        in_specs=in_specs,
        out_specs=out_specs,
        compiler_params=pltpu.CompilerParams(dimension_semantics=("parallel",)),
    )(trg, enc_src, tmask, smask,
      sa["wq"], sa["bq"], sa["wkv"], sa["bkv"], sa["wo"], sa["bo"],
      ea["wq"], ea["bq"], ea["wkv"], ea["bkv"], ea["wo"], ea["bo"],
      lp["w1"], lp["b1"], lp["w2"], lp["b2"],
      lp["ln1g"], lp["ln1b"], lp["ln2g"], lp["ln2b"], lp["ln3g"], lp["ln3b"])
    return trg_out, attn


# ----------------------------------------------------------------------------
# fc_out kernel (lane-dense output, vocab padded to a multiple of 128)
# ----------------------------------------------------------------------------
def _fc_out_kernel(x_ref, w_ref, b_ref, o_ref):
    y = jnp.dot(x_ref[...].astype(w_ref.dtype), w_ref[...],
                preferred_element_type=jnp.float32)
    o_ref[...] = (y + b_ref[...]).astype(o_ref.dtype)


def fc_out(x2d, w_pad, b_pad):
    M, D = x2d.shape
    Np = w_pad.shape[1]
    if M <= 512:
        tm = M
    elif M % 128 == 0:
        tm = 128
    elif M % 8 == 0:
        tm = 8
    else:
        tm = M
    return pl.pallas_call(
        _fc_out_kernel,
        out_shape=jax.ShapeDtypeStruct((M, Np), jnp.float32),
        grid=(pl.cdiv(M, tm),),
        in_specs=[pl.BlockSpec((tm, D), lambda i: (i, 0)),
                  pl.BlockSpec((D, Np), lambda i: (0, 0)),
                  pl.BlockSpec((1, Np), lambda i: (0, 0))],
        out_specs=pl.BlockSpec((tm, Np), lambda i: (i, 0)),
        compiler_params=pltpu.CompilerParams(dimension_semantics=("parallel",)),
    )(x2d, w_pad, b_pad)


# ----------------------------------------------------------------------------
# One-time parameter packing (done OUTSIDE the per-call forward): fused KV
# weights, per-head Wo slabs, bf16 casts, padded fc_out.
# ----------------------------------------------------------------------------
def pack_params(params, n_heads, mm_dtype=MM_DTYPE):
    D = params["tok_emb"].shape[1]
    Dh = D // n_heads
    V = params["fc_out_w"].shape[1]
    Vp = ((V + 127) // 128) * 128

    def attn(p):
        return dict(
            wq=p["wq"].astype(mm_dtype),
            bq=p["bq"].reshape(1, D),
            wkv=jnp.concatenate([p["wk"], p["wv"]], axis=1).astype(mm_dtype),
            bkv=jnp.concatenate([p["bk"], p["bv"]]).reshape(1, 2 * D),
            wo=p["wo"].reshape(n_heads, Dh, D).astype(mm_dtype),
            bo=p["bo"].reshape(1, D),
        )

    layers = []
    for lp in params["layers"]:
        ff = lp["ff"]
        layers.append(dict(
            sa=attn(lp["self_attn"]),
            ea=attn(lp["enc_attn"]),
            w1=ff["w1"].astype(mm_dtype), b1=ff["b1"].reshape(1, -1),
            w2=ff["w2"].astype(mm_dtype), b2=ff["b2"].reshape(1, -1),
            ln1g=lp["ln1_g"].reshape(1, -1), ln1b=lp["ln1_b"].reshape(1, -1),
            ln2g=lp["ln2_g"].reshape(1, -1), ln2b=lp["ln2_b"].reshape(1, -1),
            ln3g=lp["ln3_g"].reshape(1, -1), ln3b=lp["ln3_b"].reshape(1, -1),
        ))

    fc_w = jnp.zeros((D, Vp), mm_dtype).at[:, :V].set(
        params["fc_out_w"].astype(mm_dtype))
    fc_b = jnp.zeros((1, Vp), jnp.float32).at[:, :V].set(params["fc_out_b"])
    return dict(tok_emb=params["tok_emb"], pos_emb=params["pos_emb"],
                layers=layers, fc_out_w=fc_w, fc_out_b=fc_b)


# ----------------------------------------------------------------------------
# Full decoder forward (packed params; n_heads / vocab are static)
# ----------------------------------------------------------------------------
def decoder_forward(packed, trg_tokens, enc_src, trg_mask, src_mask,
                    n_heads, vocab, mm_dtype=MM_DTYPE):
    B, Sq = trg_tokens.shape
    D = packed["tok_emb"].shape[1]
    Sk = enc_src.shape[1]
    emb_scale = jnp.float32(math.sqrt(D))

    # token + positional embedding (XLA gather); dropout = identity.
    trg = (jnp.take(packed["tok_emb"], trg_tokens, axis=0) * emb_scale
           + packed["pos_emb"][:Sq][None, :, :]).astype(jnp.float32)
    enc_src = enc_src.astype(jnp.float32)

    # masks: (B,1,Sq,Sq)->(B,Sq,Sq), (B,1,1,Sk)->(B,1,Sk) — no head broadcast.
    tmask = trg_mask.reshape(B, Sq, Sq).astype(jnp.float32)
    smask = src_mask.reshape(B, 1, Sk).astype(jnp.float32)

    attention = None
    for lp in packed["layers"]:
        trg, attention = decoder_layer(trg, enc_src, tmask, smask, lp,
                                       n_heads, mm_dtype)

    out = fc_out(trg.reshape(-1, D), packed["fc_out_w"], packed["fc_out_b"])
    out = out[:, :vocab].reshape(B, Sq, vocab)
    return out, attention


# ----------------------------------------------------------------------------
# Deterministic parameter init (mirrors the PyTorch module structure)
# ----------------------------------------------------------------------------
def _lin_params(key, d_in, d_out):
    return (0.02 * jax.random.normal(key, (d_in, d_out), jnp.float32),
            jnp.zeros((d_out,), jnp.float32))


def init_params(key, output_dim, hid_dim, n_layers, n_heads, pf_dim, max_length):
    keys = jax.random.split(key, 3 + n_layers)
    params = {
        "tok_emb": 0.02 * jax.random.normal(keys[0], (output_dim, hid_dim), jnp.float32),
        "pos_emb": 0.02 * jax.random.normal(keys[1], (max_length, hid_dim), jnp.float32),
        "layers": [],
    }
    fw, fb = _lin_params(keys[2], hid_dim, output_dim)
    params["fc_out_w"], params["fc_out_b"] = fw, fb

    for li in range(n_layers):
        lk = jax.random.split(keys[3 + li], 10)

        def mha_params(k4):
            wq, bq = _lin_params(k4[0], hid_dim, hid_dim)
            wk, bk = _lin_params(k4[1], hid_dim, hid_dim)
            wv, bv = _lin_params(k4[2], hid_dim, hid_dim)
            wo, bo = _lin_params(k4[3], hid_dim, hid_dim)
            return {"wq": wq, "bq": bq, "wk": wk, "bk": bk,
                    "wv": wv, "bv": bv, "wo": wo, "bo": bo}

        w1, b1 = _lin_params(lk[8], hid_dim, pf_dim)
        w2, b2 = _lin_params(lk[9], pf_dim, hid_dim)
        params["layers"].append({
            "self_attn": mha_params(lk[0:4]),
            "enc_attn": mha_params(lk[4:8]),
            "ff": {"w1": w1, "b1": b1, "w2": w2, "b2": b2},
            "ln1_g": jnp.ones((hid_dim,), jnp.float32),
            "ln1_b": jnp.zeros((hid_dim,), jnp.float32),
            "ln2_g": jnp.ones((hid_dim,), jnp.float32),
            "ln2_b": jnp.zeros((hid_dim,), jnp.float32),
            "ln3_g": jnp.ones((hid_dim,), jnp.float32),
            "ln3_b": jnp.zeros((hid_dim,), jnp.float32),
        })
    return params


# ----------------------------------------------------------------------------
if __name__ == "__main__":
    OUTPUT_DIM = 50
    HID_DIM = 32
    N_LAYERS = 2
    N_HEADS = 4
    PF_DIM = 64
    MAX_LEN = 100
    B = 2
    TRG_LEN = 8
    SRC_LEN = 10

    key = jax.random.PRNGKey(0)
    k_param, k_trg, k_enc = jax.random.split(key, 3)

    params = init_params(k_param, OUTPUT_DIM, HID_DIM, N_LAYERS, N_HEADS,
                         PF_DIM, MAX_LEN)
    packed = pack_params(params, N_HEADS)       # packed ONCE, outside forward

    trg_tokens = jax.random.randint(k_trg, (B, TRG_LEN), 0, OUTPUT_DIM, jnp.int32)
    enc_src = jax.random.normal(k_enc, (B, SRC_LEN, HID_DIM), jnp.float32)

    # trg_mask: (B, 1, TRG_LEN, TRG_LEN) causal; src_mask: (B, 1, 1, SRC_LEN)
    trg_mask = jnp.tril(jnp.ones((TRG_LEN, TRG_LEN), jnp.float32))[None, None]
    trg_mask = jnp.broadcast_to(trg_mask, (B, 1, TRG_LEN, TRG_LEN))
    src_mask = jnp.ones((B, 1, 1, SRC_LEN), jnp.float32)
    src_mask = src_mask.at[1, :, :, -2:].set(0.0)  # pad last 2 src positions of batch 1

    fwd = jax.jit(functools.partial(decoder_forward, n_heads=N_HEADS,
                                    vocab=OUTPUT_DIM))
    output, attention = fwd(packed, trg_tokens, enc_src, trg_mask, src_mask)
    jax.block_until_ready((output, attention))

    assert output.shape == (B, TRG_LEN, OUTPUT_DIM)
    assert attention.shape == (B, N_HEADS, TRG_LEN, SRC_LEN)
    assert bool(jnp.all(jnp.isfinite(output)))
    assert bool(jnp.all(jnp.isfinite(attention)))
    # attention rows are softmax distributions -> should sum to ~1
    assert bool(jnp.allclose(jnp.sum(attention, axis=-1), 1.0, atol=1e-3))
    print("KERNEL_OK")
</pallas_src>

<mosaic_0001>
module attributes {stable_mosaic.version = 11 : i64} {
  func.func @_fc_out_kernel(%arg0: i32, %arg1: memref<16x32xf32, #tpu.memory_space<vmem>>, %arg2: memref<32x128xbf16, #tpu.memory_space<vmem>>, %arg3: memref<1x128xf32, #tpu.memory_space<vmem>>, %arg4: memref<16x128xf32, #tpu.memory_space<vmem>>) attributes {dimension_semantics = [#tpu.dimension_semantics<parallel>], iteration_bounds = array<i64: 1>, scalar_prefetch = 0 : i64, scratch_operands = 0 : i64, tpu.core_type = #tpu.core_type<tc>, window_params = [{transform_indices = @transform_0, window_bounds = array<i64: 16, 32>}, {pipeline_mode = #tpu.pipeline_mode<synchronous>, transform_indices = @transform_1, window_bounds = array<i64: 32, 128>}, {pipeline_mode = #tpu.pipeline_mode<synchronous>, transform_indices = @transform_2, window_bounds = array<i64: 1, 128>}, {transform_indices = @transform_3, window_bounds = array<i64: 16, 128>}]} {
    %c0 = arith.constant 0 : index
    %c0_0 = arith.constant 0 : index
    %0 = vector.load %arg1[%c0, %c0_0] : memref<16x32xf32, #tpu.memory_space<vmem>>, vector<16x32xf32>
    %1 = arith.truncf %0 : vector<16x32xf32> to vector<16x32xbf16>
    %c0_1 = arith.constant 0 : index
    %c0_2 = arith.constant 0 : index
    %2 = vector.load %arg2[%c0_1, %c0_2] : memref<32x128xbf16, #tpu.memory_space<vmem>>, vector<32x128xbf16>
    %cst = arith.constant dense<0.000000e+00> : vector<16x128xf32>
    %3 = tpu.matmul %1, %2, %cst {dimension_numbers = #tpu.dot_dimension_numbers<[1], [0], [0], [1], [0, 0, 1, 1], [], []>} : vector<16x32xbf16>, vector<32x128xbf16>, vector<16x128xf32> -> vector<16x128xf32>
    %c0_3 = arith.constant 0 : index
    %c0_4 = arith.constant 0 : index
    %4 = vector.load %arg3[%c0_3, %c0_4] : memref<1x128xf32, #tpu.memory_space<vmem>>, vector<1x128xf32>
    %5 = vector.broadcast %4 : vector<1x128xf32> to vector<16x128xf32>
    %6 = arith.addf %3, %5 : vector<16x128xf32>
    %c0_5 = arith.constant 0 : index
    %c0_6 = arith.constant 0 : index
    %7 = vector.load %arg4[%c0_5, %c0_6] : memref<16x128xf32, #tpu.memory_space<vmem>>, vector<16x128xf32>
    tpu.vector_store %arg4[%c0_5, %c0_6], %6 {strides = array<i32>} : memref<16x128xf32, #tpu.memory_space<vmem>>, vector<16x128xf32>,
    return
  }
  func.func @transform_0(%arg0: i32) -> (i32, i32) {
    %c0_i32 = arith.constant 0 : i32
    %c0_i32_0 = arith.constant 0 : i32
    return %arg0, %c0_i32 : i32, i32
  }
  func.func @transform_1(%arg0: i32) -> (i32, i32) {
    %c0_i32 = arith.constant 0 : i32
    %c0_i32_0 = arith.constant 0 : i32
    %c0_i32_1 = arith.constant 0 : i32
    return %c0_i32, %c0_i32_0 : i32, i32
  }
  func.func @transform_2(%arg0: i32) -> (i32, i32) {
    %c0_i32 = arith.constant 0 : i32
    %c0_i32_0 = arith.constant 0 : i32
    %c0_i32_1 = arith.constant 0 : i32
    return %c0_i32, %c0_i32_0 : i32, i32
  }
  func.func @transform_3(%arg0: i32) -> (i32, i32) {
    %c0_i32 = arith.constant 0 : i32
    %c0_i32_0 = arith.constant 0 : i32
    return %arg0, %c0_i32 : i32, i32
  }
}

module attributes {stable_mosaic.version = 11 : i64} {
  func.func @_decoder_layer_kernel(%arg0: i32, %arg1: memref<1x8x32xf32, #tpu.memory_space<vmem>>, %arg2: memref<1x10x32xf32, #tpu.memory_space<vmem>>, %arg3: memref<1x8x8xf32, #tpu.memory_space<vmem>>, %arg4: memref<1x1x10xf32, #tpu.memory_space<vmem>>, %arg5: memref<32x32xbf16, #tpu.memory_space<vmem>>, %arg6: memref<1x32xf32, #tpu.memory_space<vmem>>, %arg7: memref<32x64xbf16, #tpu.memory_space<vmem>>, %arg8: memref<1x64xf32, #tpu.memory_space<vmem>>, %arg9: memref<4x8x32xbf16, #tpu.memory_space<vmem>>, %arg10: memref<1x32xf32, #tpu.memory_space<vmem>>, %arg11: memref<32x32xbf16, #tpu.memory_space<vmem>>, %arg12: memref<1x32xf32, #tpu.memory_space<vmem>>, %arg13: memref<32x64xbf16, #tpu.memory_space<vmem>>, %arg14: memref<1x64xf32, #tpu.memory_space<vmem>>, %arg15: memref<4x8x32xbf16, #tpu.memory_space<vmem>>, %arg16: memref<1x32xf32, #tpu.memory_space<vmem>>, %arg17: memref<32x64xbf16, #tpu.memory_space<vmem>>, %arg18: memref<1x64xf32, #tpu.memory_space<vmem>>, %arg19: memref<64x32xbf16, #tpu.memory_space<vmem>>, %arg20: memref<1x32xf32, #tpu.memory_space<vmem>>, %arg21: memref<1x32xf32, #tpu.memory_space<vmem>>, %arg22: memref<1x32xf32, #tpu.memory_space<vmem>>, %arg23: memref<1x32xf32, #tpu.memory_space<vmem>>, %arg24: memref<1x32xf32, #tpu.memory_space<vmem>>, %arg25: memref<1x32xf32, #tpu.memory_space<vmem>>, %arg26: memref<1x32xf32, #tpu.memory_space<vmem>>, %arg27: memref<1x8x32xf32, #tpu.memory_space<vmem>>, %arg28: memref<1x4x8x10xf32, #tpu.memory_space<vmem>>) attributes {dimension_semantics = [#tpu.dimension_semantics<parallel>], iteration_bounds = array<i64: 2>, scalar_prefetch = 0 : i64, scratch_operands = 0 : i64, tpu.core_type = #tpu.core_type<tc>, window_params = [{transform_indices = @transform_0, window_bounds = array<i64: 1, 8, 32>}, {transform_indices = @transform_1, window_bounds = array<i64: 1, 10, 32>}, {transform_indices = @transform_2, window_bounds = array<i64: 1, 8, 8>}, {transform_indices = @transform_3, window_bounds = array<i64: 1, 1, 10>}, {pipeline_mode = #tpu.pipeline_mode<synchronous>, transform_indices = @transform_4, window_bounds = array<i64: 32, 32>}, {pipeline_mode = #tpu.pipeline_mode<synchronous>, transform_indices = @transform_5, window_bounds = array<i64: 1, 32>}, {pipeline_mode = #tpu.pipeline_mode<synchronous>, transform_indices = @transform_6, window_bounds = array<i64: 32, 64>}, {pipeline_mode = #tpu.pipeline_mode<synchronous>, transform_indices = @transform_7, window_bounds = array<i64: 1, 64>}, {pipeline_mode = #tpu.pipeline_mode<synchronous>, transform_indices = @transform_8, window_bounds = array<i64: 4, 8, 32>}, {pipeline_mode = #tpu.pipeline_mode<synchronous>, transform_indices = @transform_9, window_bounds = array<i64: 1, 32>}, {pipeline_mode = #tpu.pipeline_mode<synchronous>, transform_indices = @transform_10, window_bounds = array<i64: 32, 32>}, {pipeline_mode = #tpu.pipeline_mode<synchronous>, transform_indices = @transform_11, window_bounds = array<i64: 1, 32>}, {pipeline_mode = #tpu.pipeline_mode<synchronous>, transform_indices = @transform_12, window_bounds = array<i64: 32, 64>}, {pipeline_mode = #tpu.pipeline_mode<synchronous>, transform_indices = @transform_13, window_bounds = array<i64: 1, 64>}, {pipeline_mode = #tpu.pipeline_mode<synchronous>, transform_indices = @transform_14, window_bounds = array<i64: 4, 8, 32>}, {pipeline_mode = #tpu.pipeline_mode<synchronous>, transform_indices = @transform_15, window_bounds = array<i64: 1, 32>}, {pipeline_mode = #tpu.pipeline_mode<synchronous>, transform_indices = @transform_16, window_bounds = array<i64: 32, 64>}, {pipeline_mode = #tpu.pipeline_mode<synchronous>, transform_indices = @transform_17, window_bounds = array<i64: 1, 64>}, {pipeline_mode = #tpu.pipeline_mode<synchronous>, transform_indices = @transform_18, window_bounds = array<i64: 64, 32>}, {pipeline_mode = #tpu.pipeline_mode<synchronous>, transform_indices = @transform_19, window_bounds = array<i64: 1, 32>}, {pipeline_mode = #tpu.pipeline_mode<synchronous>, transform_indices = @transform_20, window_bounds = array<i64: 1, 32>}, {pipeline_mode = #tpu.pipeline_mode<synchronous>, transform_indices = @transform_21, window_bounds = array<i64: 1, 32>}, {pipeline_mode = #tpu.pipeline_mode<synchronous>, transform_indices = @transform_22, window_bounds = array<i64: 1, 32>}, {pipeline_mode = #tpu.pipeline_mode<synchronous>, transform_indices = @transform_23, window_bounds = array<i64: 1, 32>}, {pipeline_mode = #tpu.pipeline_mode<synchronous>, transform_indices = @transform_24, window_bounds = array<i64: 1, 32>}, {pipeline_mode = #tpu.pipeline_mode<synchronous>, transform_indices = @transform_25, window_bounds = array<i64: 1, 32>}, {transform_indices = @transform_26, window_bounds = array<i64: 1, 8, 32>}, {transform_indices = @transform_27, window_bounds = array<i64: 1, 4, 8, 10>}]} {
    %c0 = arith.constant 0 : index
    %c0_0 = arith.constant 0 : index
    %c0_1 = arith.constant 0 : index
    %0 = vector.load %arg1[%c0, %c0_0, %c0_1] : memref<1x8x32xf32, #tpu.memory_space<vmem>>, vector<1x8x32xf32>
    %1 = vector.shape_cast %0 : vector<1x8x32xf32> to vector<8x32xf32>
    %c0_2 = arith.constant 0 : index
    %c0_3 = arith.constant 0 : index
    %c0_4 = arith.constant 0 : index
    %2 = vector.load %arg2[%c0_2, %c0_3, %c0_4] : memref<1x10x32xf32, #tpu.memory_space<vmem>>, vector<1x10x32xf32>
    %3 = vector.shape_cast %2 : vector<1x10x32xf32> to vector<10x32xf32>
    %c0_5 = arith.constant 0 : index
    %c0_6 = arith.constant 0 : index
    %c0_7 = arith.constant 0 : index
    %4 = vector.load %arg3[%c0_5, %c0_6, %c0_7] : memref<1x8x8xf32, #tpu.memory_space<vmem>>, vector<1x8x8xf32>
    %5 = vector.shape_cast %4 : vector<1x8x8xf32> to vector<8x8xf32>
    %c0_8 = arith.constant 0 : index
    %c0_9 = arith.constant 0 : index
    %c0_10 = arith.constant 0 : index
    %6 = vector.load %arg4[%c0_8, %c0_9, %c0_10] : memref<1x1x10xf32, #tpu.memory_space<vmem>>, vector<1x1x10xf32>
    %7 = vector.shape_cast %6 : vector<1x1x10xf32> to vector<1x10xf32>
    %8 = arith.truncf %1 : vector<8x32xf32> to vector<8x32xbf16>
    %c0_11 = arith.constant 0 : index
    %c0_12 = arith.constant 0 : index
    %9 = vector.load %arg5[%c0_11, %c0_12] : memref<32x32xbf16, #tpu.memory_space<vmem>>, vector<32x32xbf16>
    %cst = arith.constant dense<0.000000e+00> : vector<8x32xf32>
    %10 = tpu.matmul %8, %9, %cst {dimension_numbers = #tpu.dot_dimension_numbers<[1], [0], [0], [1], [0, 0, 1, 1], [], []>} : vector<8x32xbf16>, vector<32x32xbf16>, vector<8x32xf32> -> vector<8x32xf32>
    %c0_13 = arith.constant 0 : index
    %c0_14 = arith.constant 0 : index
    %11 = vector.load %arg6[%c0_13, %c0_14] : memref<1x32xf32, #tpu.memory_space<vmem>>, vector<1x32xf32>
    %12 = vector.broadcast %11 : vector<1x32xf32> to vector<8x32xf32>
    %13 = arith.addf %10, %12 : vector<8x32xf32>
    %14 = arith.truncf %1 : vector<8x32xf32> to vector<8x32xbf16>
    %c0_15 = arith.constant 0 : index
    %c0_16 = arith.constant 0 : index
    %15 = vector.load %arg7[%c0_15, %c0_16] : memref<32x64xbf16, #tpu.memory_space<vmem>>, vector<32x64xbf16>
    %cst_17 = arith.constant dense<0.000000e+00> : vector<8x64xf32>
    %16 = tpu.matmul %14, %15, %cst_17 {dimension_numbers = #tpu.dot_dimension_numbers<[1], [0], [0], [1], [0, 0, 1, 1], [], []>} : vector<8x32xbf16>, vector<32x64xbf16>, vector<8x64xf32> -> vector<8x64xf32>
    %c0_18 = arith.constant 0 : index
    %c0_19 = arith.constant 0 : index
    %17 = vector.load %arg8[%c0_18, %c0_19] : memref<1x64xf32, #tpu.memory_space<vmem>>, vector<1x64xf32>
    %18 = vector.broadcast %17 : vector<1x64xf32> to vector<8x64xf32>
    %19 = arith.addf %16, %18 : vector<8x64xf32>
    %20 = vector.extract_strided_slice %13 {offsets = [0, 0], sizes = [8, 8], strides = [1, 1]} : vector<8x32xf32> to vector<8x8xf32>
    %21 = vector.extract_strided_slice %19 {offsets = [0, 0], sizes = [8, 8], strides = [1, 1]} : vector<8x64xf32> to vector<8x8xf32>
    %22 = vector.extract_strided_slice %19 {offsets = [0, 32], sizes = [8, 8], strides = [1, 1]} : vector<8x64xf32> to vector<8x8xf32>
    %23 = arith.truncf %20 : vector<8x8xf32> to vector<8x8xbf16>
    %24 = arith.truncf %21 : vector<8x8xf32> to vector<8x8xbf16>
    %cst_20 = arith.constant dense<0.000000e+00> : vector<8x8xf32>
    %25 = tpu.matmul %23, %24, %cst_20 {dimension_numbers = #tpu.dot_dimension_numbers<[1], [1], [0], [0], [0, 0, 1, 0], [], []>} : vector<8x8xbf16>, vector<8x8xbf16>, vector<8x8xf32> -> vector<8x8xf32>
    %cst_21 = arith.constant 0.353553385 : f32
    %26 = vector.broadcast %cst_21 : f32 to vector<8x8xf32>
    %27 = arith.mulf %25, %26 : vector<8x8xf32>
    %cst_22 = arith.constant 0.000000e+00 : f32
    %28 = vector.broadcast %cst_22 : f32 to vector<8x8xf32>
    %29 = arith.cmpf ogt, %5, %28 : vector<8x8xf32>
    %cst_23 = arith.constant -1.000000e+10 : f32
    %30 = vector.broadcast %cst_23 : f32 to vector<8x8xf32>
    %31 = arith.select %29, %27, %30 : vector<8x8xi1>, vector<8x8xf32>
    %cst_24 = arith.constant dense<0xFF800000> : vector<8xf32>
    %32 = vector.multi_reduction <maximumf>, %31, %cst_24 [1] : vector<8x8xf32> to vector<8xf32>
    %33 = vector.shape_cast %32 : vector<8xf32> to vector<8x1xf32>
    %34 = vector.broadcast %33 : vector<8x1xf32> to vector<8x8xf32>
    %35 = arith.subf %31, %34 : vector<8x8xf32>
    %36 = math.exp %35 : vector<8x8xf32>
    %cst_25 = arith.constant dense<0.000000e+00> : vector<8xf32>
    %37 = vector.multi_reduction <add>, %36, %cst_25 [1] : vector<8x8xf32> to vector<8xf32>
    %38 = vector.shape_cast %37 : vector<8xf32> to vector<8x1xf32>
    %39 = tpu.reciprocal %38 : vector<8x1xf32> -> vector<8x1xf32>
    %40 = vector.broadcast %39 : vector<8x1xf32> to vector<8x8xf32>
    %41 = arith.mulf %36, %40 : vector<8x8xf32>
    %42 = arith.truncf %41 : vector<8x8xf32> to vector<8x8xbf16>
    %43 = arith.truncf %22 : vector<8x8xf32> to vector<8x8xbf16>
    %cst_26 = arith.constant dense<0.000000e+00> : vector<8x8xf32>
    %44 = tpu.matmul %42, %43, %cst_26 {dimension_numbers = #tpu.dot_dimension_numbers<[1], [0], [0], [1], [0, 0, 1, 1], [], []>} : vector<8x8xbf16>, vector<8x8xbf16>, vector<8x8xf32> -> vector<8x8xf32>
    %45 = arith.truncf %44 : vector<8x8xf32> to vector<8x8xbf16>
    %c0_27 = arith.constant 0 : index
    %c0_28 = arith.constant 0 : index
    %c0_29 = arith.constant 0 : index
    %46 = vector.load %arg9[%c0_27, %c0_28, %c0_29] : memref<4x8x32xbf16, #tpu.memory_space<vmem>>, vector<1x8x32xbf16>
    %47 = vector.shape_cast %46 : vector<1x8x32xbf16> to vector<8x32xbf16>
    %cst_30 = arith.constant dense<0.000000e+00> : vector<8x32xf32>
    %48 = tpu.matmul %45, %47, %cst_30 {dimension_numbers = #tpu.dot_dimension_numbers<[1], [0], [0], [1], [0, 0, 1, 1], [], []>} : vector<8x8xbf16>, vector<8x32xbf16>, vector<8x32xf32> -> vector<8x32xf32>
    %49 = vector.extract_strided_slice %13 {offsets = [0, 8], sizes = [8, 8], strides = [1, 1]} : vector<8x32xf32> to vector<8x8xf32>
    %50 = vector.extract_strided_slice %19 {offsets = [0, 8], sizes = [8, 8], strides = [1, 1]} : vector<8x64xf32> to vector<8x8xf32>
    %51 = vector.extract_strided_slice %19 {offsets = [0, 40], sizes = [8, 8], strides = [1, 1]} : vector<8x64xf32> to vector<8x8xf32>
    %52 = arith.truncf %49 : vector<8x8xf32> to vector<8x8xbf16>
    %53 = arith.truncf %50 : vector<8x8xf32> to vector<8x8xbf16>
    %cst_31 = arith.constant dense<0.000000e+00> : vector<8x8xf32>
    %54 = tpu.matmul %52, %53, %cst_31 {dimension_numbers = #tpu.dot_dimension_numbers<[1], [1], [0], [0], [0, 0, 1, 0], [], []>} : vector<8x8xbf16>, vector<8x8xbf16>, vector<8x8xf32> -> vector<8x8xf32>
    %cst_32 = arith.constant 0.353553385 : f32
    %55 = vector.broadcast %cst_32 : f32 to vector<8x8xf32>
    %56 = arith.mulf %54, %55 : vector<8x8xf32>
    %cst_33 = arith.constant 0.000000e+00 : f32
    %57 = vector.broadcast %cst_33 : f32 to vector<8x8xf32>
    %58 = arith.cmpf ogt, %5, %57 : vector<8x8xf32>
    %cst_34 = arith.constant -1.000000e+10 : f32
    %59 = vector.broadcast %cst_34 : f32 to vector<8x8xf32>
    %60 = arith.select %58, %56, %59 : vector<8x8xi1>, vector<8x8xf32>
    %cst_35 = arith.constant dense<0xFF800000> : vector<8xf32>
    %61 = vector.multi_reduction <maximumf>, %60, %cst_35 [1] : vector<8x8xf32> to vector<8xf32>
    %62 = vector.shape_cast %61 : vector<8xf32> to vector<8x1xf32>
    %63 = vector.broadcast %62 : vector<8x1xf32> to vector<8x8xf32>
    %64 = arith.subf %60, %63 : vector<8x8xf32>
    %65 = math.exp %64 : vector<8x8xf32>
    %cst_36 = arith.constant dense<0.000000e+00> : vector<8xf32>
    %66 = vector.multi_reduction <add>, %65, %cst_36 [1] : vector<8x8xf32> to vector<8xf32>
    %67 = vector.shape_cast %66 : vector<8xf32> to vector<8x1xf32>
    %68 = tpu.reciprocal %67 : vector<8x1xf32> -> vector<8x1xf32>
    %69 = vector.broadcast %68 : vector<8x1xf32> to vector<8x8xf32>
    %70 = arith.mulf %65, %69 : vector<8x8xf32>
    %71 = arith.truncf %70 : vector<8x8xf32> to vector<8x8xbf16>
    %72 = arith.truncf %51 : vector<8x8xf32> to vector<8x8xbf16>
    %cst_37 = arith.constant dense<0.000000e+00> : vector<8x8xf32>
    %73 = tpu.matmul %71, %72, %cst_37 {dimension_numbers = #tpu.dot_dimension_numbers<[1], [0], [0], [1], [0, 0, 1, 1], [], []>} : vector<8x8xbf16>, vector<8x8xbf16>, vector<8x8xf32> -> vector<8x8xf32>
    %74 = arith.truncf %73 : vector<8x8xf32> to vector<8x8xbf16>
    %c1 = arith.constant 1 : index
    %c0_38 = arith.constant 0 : index
    %c0_39 = arith.constant 0 : index
    %75 = vector.load %arg9[%c1, %c0_38, %c0_39] : memref<4x8x32xbf16, #tpu.memory_space<vmem>>, vector<1x8x32xbf16>
    %76 = vector.shape_cast %75 : vector<1x8x32xbf16> to vector<8x32xbf16>
    %cst_40 = arith.constant dense<0.000000e+00> : vector<8x32xf32>
    %77 = tpu.matmul %74, %76, %cst_40 {dimension_numbers = #tpu.dot_dimension_numbers<[1], [0], [0], [1], [0, 0, 1, 1], [], []>} : vector<8x8xbf16>, vector<8x32xbf16>, vector<8x32xf32> -> vector<8x32xf32>
    %78 = arith.addf %48, %77 : vector<8x32xf32>
    %79 = vector.extract_strided_slice %13 {offsets = [0, 16], sizes = [8, 8], strides = [1, 1]} : vector<8x32xf32> to vector<8x8xf32>
    %80 = vector.extract_strided_slice %19 {offsets = [0, 16], sizes = [8, 8], strides = [1, 1]} : vector<8x64xf32> to vector<8x8xf32>
    %81 = vector.extract_strided_slice %19 {offsets = [0, 48], sizes = [8, 8], strides = [1, 1]} : vector<8x64xf32> to vector<8x8xf32>
    %82 = arith.truncf %79 : vector<8x8xf32> to vector<8x8xbf16>
    %83 = arith.truncf %80 : vector<8x8xf32> to vector<8x8xbf16>
    %cst_41 = arith.constant dense<0.000000e+00> : vector<8x8xf32>
    %84 = tpu.matmul %82, %83, %cst_41 {dimension_numbers = #tpu.dot_dimension_numbers<[1], [1], [0], [0], [0, 0, 1, 0], [], []>} : vector<8x8xbf16>, vector<8x8xbf16>, vector<8x8xf32> -> vector<8x8xf32>
    %cst_42 = arith.constant 0.353553385 : f32
    %85 = vector.broadcast %cst_42 : f32 to vector<8x8xf32>
    %86 = arith.mulf %84, %85 : vector<8x8xf32>
    %cst_43 = arith.constant 0.000000e+00 : f32
    %87 = vector.broadcast %cst_43 : f32 to vector<8x8xf32>
    %88 = arith.cmpf ogt, %5, %87 : vector<8x8xf32>
    %cst_44 = arith.constant -1.000000e+10 : f32
    %89 = vector.broadcast %cst_44 : f32 to vector<8x8xf32>
    %90 = arith.select %88, %86, %89 : vector<8x8xi1>, vector<8x8xf32>
    %cst_45 = arith.constant dense<0xFF800000> : vector<8xf32>
    %91 = vector.multi_reduction <maximumf>, %90, %cst_45 [1] : vector<8x8xf32> to vector<8xf32>
    %92 = vector.shape_cast %91 : vector<8xf32> to vector<8x1xf32>
    %93 = vector.broadcast %92 : vector<8x1xf32> to vector<8x8xf32>
    %94 = arith.subf %90, %93 : vector<8x8xf32>
    %95 = math.exp %94 : vector<8x8xf32>
    %cst_46 = arith.constant dense<0.000000e+00> : vector<8xf32>
    %96 = vector.multi_reduction <add>, %95, %cst_46 [1] : vector<8x8xf32> to vector<8xf32>
    %97 = vector.shape_cast %96 : vector<8xf32> to vector<8x1xf32>
    %98 = tpu.reciprocal %97 : vector<8x1xf32> -> vector<8x1xf32>
    %99 = vector.broadcast %98 : vector<8x1xf32> to vector<8x8xf32>
    %100 = arith.mulf %95, %99 : vector<8x8xf32>
    %101 = arith.truncf %100 : vector<8x8xf32> to vector<8x8xbf16>
    %102 = arith.truncf %81 : vector<8x8xf32> to vector<8x8xbf16>
    %cst_47 = arith.constant dense<0.000000e+00> : vector<8x8xf32>
    %103 = tpu.matmul %101, %102, %cst_47 {dimension_numbers = #tpu.dot_dimension_numbers<[1], [0], [0], [1], [0, 0, 1, 1], [], []>} : vector<8x8xbf16>, vector<8x8xbf16>, vector<8x8xf32> -> vector<8x8xf32>
    %104 = arith.truncf %103 : vector<8x8xf32> to vector<8x8xbf16>
    %c2 = arith.constant 2 : index
    %c0_48 = arith.constant 0 : index
    %c0_49 = arith.constant 0 : index
    %105 = vector.load %arg9[%c2, %c0_48, %c0_49] : memref<4x8x32xbf16, #tpu.memory_space<vmem>>, vector<1x8x32xbf16>
    %106 = vector.shape_cast %105 : vector<1x8x32xbf16> to vector<8x32xbf16>
    %cst_50 = arith.constant dense<0.000000e+00> : vector<8x32xf32>
    %107 = tpu.matmul %104, %106, %cst_50 {dimension_numbers = #tpu.dot_dimension_numbers<[1], [0], [0], [1], [0, 0, 1, 1], [], []>} : vector<8x8xbf16>, vector<8x32xbf16>, vector<8x32xf32> -> vector<8x32xf32>
    %108 = arith.addf %78, %107 : vector<8x32xf32>
    %109 = vector.extract_strided_slice %13 {offsets = [0, 24], sizes = [8, 8], strides = [1, 1]} : vector<8x32xf32> to vector<8x8xf32>
    %110 = vector.extract_strided_slice %19 {offsets = [0, 24], sizes = [8, 8], strides = [1, 1]} : vector<8x64xf32> to vector<8x8xf32>
    %111 = vector.extract_strided_slice %19 {offsets = [0, 56], sizes = [8, 8], strides = [1, 1]} : vector<8x64xf32> to vector<8x8xf32>
    %112 = arith.truncf %109 : vector<8x8xf32> to vector<8x8xbf16>
    %113 = arith.truncf %110 : vector<8x8xf32> to vector<8x8xbf16>
    %cst_51 = arith.constant dense<0.000000e+00> : vector<8x8xf32>
    %114 = tpu.matmul %112, %113, %cst_51 {dimension_numbers = #tpu.dot_dimension_numbers<[1], [1], [0], [0], [0, 0, 1, 0], [], []>} : vector<8x8xbf16>, vector<8x8xbf16>, vector<8x8xf32> -> vector<8x8xf32>
    %cst_52 = arith.constant 0.353553385 : f32
    %115 = vector.broadcast %cst_52 : f32 to vector<8x8xf32>
    %116 = arith.mulf %114, %115 : vector<8x8xf32>
    %cst_53 = arith.constant 0.000000e+00 : f32
    %117 = vector.broadcast %cst_53 : f32 to vector<8x8xf32>
    %118 = arith.cmpf ogt, %5, %117 : vector<8x8xf32>
    %cst_54 = arith.constant -1.000000e+10 : f32
    %119 = vector.broadcast %cst_54 : f32 to vector<8x8xf32>
    %120 = arith.select %118, %116, %119 : vector<8x8xi1>, vector<8x8xf32>
    %cst_55 = arith.constant dense<0xFF800000> : vector<8xf32>
    %121 = vector.multi_reduction <maximumf>, %120, %cst_55 [1] : vector<8x8xf32> to vector<8xf32>
    %122 = vector.shape_cast %121 : vector<8xf32> to vector<8x1xf32>
    %123 = vector.broadcast %122 : vector<8x1xf32> to vector<8x8xf32>
    %124 = arith.subf %120, %123 : vector<8x8xf32>
    %125 = math.exp %124 : vector<8x8xf32>
    %cst_56 = arith.constant dense<0.000000e+00> : vector<8xf32>
    %126 = vector.multi_reduction <add>, %125, %cst_56 [1] : vector<8x8xf32> to vector<8xf32>
    %127 = vector.shape_cast %126 : vector<8xf32> to vector<8x1xf32>
    %128 = tpu.reciprocal %127 : vector<8x1xf32> -> vector<8x1xf32>
    %129 = vector.broadcast %128 : vector<8x1xf32> to vector<8x8xf32>
    %130 = arith.mulf %125, %129 : vector<8x8xf32>
    %131 = arith.truncf %130 : vector<8x8xf32> to vector<8x8xbf16>
    %132 = arith.truncf %111 : vector<8x8xf32> to vector<8x8xbf16>
    %cst_57 = arith.constant dense<0.000000e+00> : vector<8x8xf32>
    %133 = tpu.matmul %131, %132, %cst_57 {dimension_numbers = #tpu.dot_dimension_numbers<[1], [0], [0], [1], [0, 0, 1, 1], [], []>} : vector<8x8xbf16>, vector<8x8xbf16>, vector<8x8xf32> -> vector<8x8xf32>
    %134 = arith.truncf %133 : vector<8x8xf32> to vector<8x8xbf16>
    %c3 = arith.constant 3 : index
    %c0_58 = arith.constant 0 : index
    %c0_59 = arith.constant 0 : index
    %135 = vector.load %arg9[%c3, %c0_58, %c0_59] : memref<4x8x32xbf16, #tpu.memory_space<vmem>>, vector<1x8x32xbf16>
    %136 = vector.shape_cast %135 : vector<1x8x32xbf16> to vector<8x32xbf16>
    %cst_60 = arith.constant dense<0.000000e+00> : vector<8x32xf32>
    %137 = tpu.matmul %134, %136, %cst_60 {dimension_numbers = #tpu.dot_dimension_numbers<[1], [0], [0], [1], [0, 0, 1, 1], [], []>} : vector<8x8xbf16>, vector<8x32xbf16>, vector<8x32xf32> -> vector<8x32xf32>
    %138 = arith.addf %108, %137 : vector<8x32xf32>
    %c0_61 = arith.constant 0 : index
    %c0_62 = arith.constant 0 : index
    %139 = vector.load %arg10[%c0_61, %c0_62] : memref<1x32xf32, #tpu.memory_space<vmem>>, vector<1x32xf32>
    %140 = vector.broadcast %139 : vector<1x32xf32> to vector<8x32xf32>
    %141 = arith.addf %138, %140 : vector<8x32xf32>
    %142 = arith.addf %1, %141 : vector<8x32xf32>
    %cst_63 = arith.constant dense<0.000000e+00> : vector<8xf32>
    %143 = vector.multi_reduction <add>, %142, %cst_63 [1] : vector<8x32xf32> to vector<8xf32>
    %144 = vector.shape_cast %143 : vector<8xf32> to vector<8x1xf32>
    %cst_64 = arith.constant 3.200000e+01 : f32
    %145 = vector.broadcast %cst_64 : f32 to vector<8x1xf32>
    %146 = arith.divf %144, %145 : vector<8x1xf32>
    %147 = vector.broadcast %146 : vector<8x1xf32> to vector<8x32xf32>
    %148 = arith.subf %142, %147 : vector<8x32xf32>
    %149 = arith.mulf %148, %148 : vector<8x32xf32>
    %cst_65 = arith.constant dense<0.000000e+00> : vector<8xf32>
    %150 = vector.multi_reduction <add>, %149, %cst_65 [1] : vector<8x32xf32> to vector<8xf32>
    %151 = vector.shape_cast %150 : vector<8xf32> to vector<8x1xf32>
    %cst_66 = arith.constant 3.200000e+01 : f32
    %152 = vector.broadcast %cst_66 : f32 to vector<8x1xf32>
    %153 = arith.divf %151, %152 : vector<8x1xf32>
    %cst_67 = arith.constant 9.99999974E-6 : f32
    %154 = vector.broadcast %cst_67 : f32 to vector<8x1xf32>
    %155 = arith.addf %153, %154 : vector<8x1xf32>
    %156 = math.rsqrt %155 : vector<8x1xf32>
    %157 = vector.broadcast %156 : vector<8x1xf32> to vector<8x32xf32>
    %158 = arith.mulf %148, %157 : vector<8x32xf32>
    %c0_68 = arith.constant 0 : index
    %c0_69 = arith.constant 0 : index
    %159 = vector.load %arg21[%c0_68, %c0_69] : memref<1x32xf32, #tpu.memory_space<vmem>>, vector<1x32xf32>
    %160 = vector.broadcast %159 : vector<1x32xf32> to vector<8x32xf32>
    %161 = arith.mulf %158, %160 : vector<8x32xf32>
    %c0_70 = arith.constant 0 : index
    %c0_71 = arith.constant 0 : index
    %162 = vector.load %arg22[%c0_70, %c0_71] : memref<1x32xf32, #tpu.memory_space<vmem>>, vector<1x32xf32>
    %163 = vector.broadcast %162 : vector<1x32xf32> to vector<8x32xf32>
    %164 = arith.addf %161, %163 : vector<8x32xf32>
    %165 = arith.truncf %164 : vector<8x32xf32> to vector<8x32xbf16>
    %c0_72 = arith.constant 0 : index
    %c0_73 = arith.constant 0 : index
    %166 = vector.load %arg11[%c0_72, %c0_73] : memref<32x32xbf16, #tpu.memory_space<vmem>>, vector<32x32xbf16>
    %cst_74 = arith.constant dense<0.000000e+00> : vector<8x32xf32>
    %167 = tpu.matmul %165, %166, %cst_74 {dimension_numbers = #tpu.dot_dimension_numbers<[1], [0], [0], [1], [0, 0, 1, 1], [], []>} : vector<8x32xbf16>, vector<32x32xbf16>, vector<8x32xf32> -> vector<8x32xf32>
    %c0_75 = arith.constant 0 : index
    %c0_76 = arith.constant 0 : index
    %168 = vector.load %arg12[%c0_75, %c0_76] : memref<1x32xf32, #tpu.memory_space<vmem>>, vector<1x32xf32>
    %169 = vector.broadcast %168 : vector<1x32xf32> to vector<8x32xf32>
    %170 = arith.addf %167, %169 : vector<8x32xf32>
    %171 = arith.truncf %3 : vector<10x32xf32> to vector<10x32xbf16>
    %c0_77 = arith.constant 0 : index
    %c0_78 = arith.constant 0 : index
    %172 = vector.load %arg13[%c0_77, %c0_78] : memref<32x64xbf16, #tpu.memory_space<vmem>>, vector<32x64xbf16>
    %cst_79 = arith.constant dense<0.000000e+00> : vector<10x64xf32>
    %173 = tpu.matmul %171, %172, %cst_79 {dimension_numbers = #tpu.dot_dimension_numbers<[1], [0], [0], [1], [0, 0, 1, 1], [], []>} : vector<10x32xbf16>, vector<32x64xbf16>, vector<10x64xf32> -> vector<10x64xf32>
    %c0_80 = arith.constant 0 : index
    %c0_81 = arith.constant 0 : index
    %174 = vector.load %arg14[%c0_80, %c0_81] : memref<1x64xf32, #tpu.memory_space<vmem>>, vector<1x64xf32>
    %175 = vector.broadcast %174 : vector<1x64xf32> to vector<10x64xf32>
    %176 = arith.addf %173, %175 : vector<10x64xf32>
    %177 = vector.extract_strided_slice %170 {offsets = [0, 0], sizes = [8, 8], strides = [1, 1]} : vector<8x32xf32> to vector<8x8xf32>
    %178 = vector.extract_strided_slice %176 {offsets = [0, 0], sizes = [10, 8], strides = [1, 1]} : vector<10x64xf32> to vector<10x8xf32>
    %179 = vector.extract_strided_slice %176 {offsets = [0, 32], sizes = [10, 8], strides = [1, 1]} : vector<10x64xf32> to vector<10x8xf32>
    %180 = arith.truncf %177 : vector<8x8xf32> to vector<8x8xbf16>
    %181 = arith.truncf %178 : vector<10x8xf32> to vector<10x8xbf16>
    %cst_82 = arith.constant dense<0.000000e+00> : vector<8x10xf32>
    %182 = tpu.matmul %180, %181, %cst_82 {dimension_numbers = #tpu.dot_dimension_numbers<[1], [1], [0], [0], [0, 0, 1, 0], [], []>} : vector<8x8xbf16>, vector<10x8xbf16>, vector<8x10xf32> -> vector<8x10xf32>
    %cst_83 = arith.constant 0.353553385 : f32
    %183 = vector.broadcast %cst_83 : f32 to vector<8x10xf32>
    %184 = arith.mulf %182, %183 : vector<8x10xf32>
    %cst_84 = arith.constant 0.000000e+00 : f32
    %185 = vector.broadcast %cst_84 : f32 to vector<1x10xf32>
    %186 = arith.cmpf ogt, %7, %185 : vector<1x10xf32>
    %cst_85 = arith.constant -1.000000e+10 : f32
    %187 = vector.shape_cast %186 : vector<1x10xi1> to vector<1x10xi1>
    %188 = vector.broadcast %187 : vector<1x10xi1> to vector<8x10xi1>
    %189 = vector.broadcast %cst_85 : f32 to vector<8x10xf32>
    %190 = arith.select %188, %184, %189 : vector<8x10xi1>, vector<8x10xf32>
    %cst_86 = arith.constant dense<0xFF800000> : vector<8xf32>
    %191 = vector.multi_reduction <maximumf>, %190, %cst_86 [1] : vector<8x10xf32> to vector<8xf32>
    %192 = vector.shape_cast %191 : vector<8xf32> to vector<8x1xf32>
    %193 = vector.broadcast %192 : vector<8x1xf32> to vector<8x10xf32>
    %194 = arith.subf %190, %193 : vector<8x10xf32>
    %195 = math.exp %194 : vector<8x10xf32>
    %cst_87 = arith.constant dense<0.000000e+00> : vector<8xf32>
    %196 = vector.multi_reduction <add>, %195, %cst_87 [1] : vector<8x10xf32> to vector<8xf32>
    %197 = vector.shape_cast %196 : vector<8xf32> to vector<8x1xf32>
    %198 = tpu.reciprocal %197 : vector<8x1xf32> -> vector<8x1xf32>
    %199 = vector.broadcast %198 : vector<8x1xf32> to vector<8x10xf32>
    %200 = arith.mulf %195, %199 : vector<8x10xf32>
    %c0_88 = arith.constant 0 : index
    %c0_89 = arith.constant 0 : index
    %c0_90 = arith.constant 0 : index
    %c0_91 = arith.constant 0 : index
    %201 = vector.load %arg28[%c0_88, %c0_89, %c0_90, %c0_91] : memref<1x4x8x10xf32, #tpu.memory_space<vmem>>, vector<1x1x8x10xf32>
    %202 = vector.shape_cast %201 : vector<1x1x8x10xf32> to vector<8x10xf32>
    %203 = vector.shape_cast %200 : vector<8x10xf32> to vector<1x1x8x10xf32>
    tpu.vector_store %arg28[%c0_88, %c0_89, %c0_90, %c0_91], %203 {strides = array<i32>} : memref<1x4x8x10xf32, #tpu.memory_space<vmem>>, vector<1x1x8x10xf32>,
    %204 = arith.truncf %200 : vector<8x10xf32> to vector<8x10xbf16>
    %205 = arith.truncf %179 : vector<10x8xf32> to vector<10x8xbf16>
    %cst_92 = arith.constant dense<0.000000e+00> : vector<8x8xf32>
    %206 = tpu.matmul %204, %205, %cst_92 {dimension_numbers = #tpu.dot_dimension_numbers<[1], [0], [0], [1], [0, 0, 1, 1], [], []>} : vector<8x10xbf16>, vector<10x8xbf16>, vector<8x8xf32> -> vector<8x8xf32>
    %207 = arith.truncf %206 : vector<8x8xf32> to vector<8x8xbf16>
    %c0_93 = arith.constant 0 : index
    %c0_94 = arith.constant 0 : index
    %c0_95 = arith.constant 0 : index
    %208 = vector.load %arg15[%c0_93, %c0_94, %c0_95] : memref<4x8x32xbf16, #tpu.memory_space<vmem>>, vector<1x8x32xbf16>
    %209 = vector.shape_cast %208 : vector<1x8x32xbf16> to vector<8x32xbf16>
    %cst_96 = arith.constant dense<0.000000e+00> : vector<8x32xf32>
    %210 = tpu.matmul %207, %209, %cst_96 {dimension_numbers = #tpu.dot_dimension_numbers<[1], [0], [0], [1], [0, 0, 1, 1], [], []>} : vector<8x8xbf16>, vector<8x32xbf16>, vector<8x32xf32> -> vector<8x32xf32>
    %211 = vector.extract_strided_slice %170 {offsets = [0, 8], sizes = [8, 8], strides = [1, 1]} : vector<8x32xf32> to vector<8x8xf32>
    %212 = vector.extract_strided_slice %176 {offsets = [0, 8], sizes = [10, 8], strides = [1, 1]} : vector<10x64xf32> to vector<10x8xf32>
    %213 = vector.extract_strided_slice %176 {offsets = [0, 40], sizes = [10, 8], strides = [1, 1]} : vector<10x64xf32> to vector<10x8xf32>
    %214 = arith.truncf %211 : vector<8x8xf32> to vector<8x8xbf16>
    %215 = arith.truncf %212 : vector<10x8xf32> to vector<10x8xbf16>
    %cst_97 = arith.constant dense<0.000000e+00> : vector<8x10xf32>
    %216 = tpu.matmul %214, %215, %cst_97 {dimension_numbers = #tpu.dot_dimension_numbers<[1], [1], [0], [0], [0, 0, 1, 0], [], []>} : vector<8x8xbf16>, vector<10x8xbf16>, vector<8x10xf32> -> vector<8x10xf32>
    %cst_98 = arith.constant 0.353553385 : f32
    %217 = vector.broadcast %cst_98 : f32 to vector<8x10xf32>
    %218 = arith.mulf %216, %217 : vector<8x10xf32>
    %cst_99 = arith.constant 0.000000e+00 : f32
    %219 = vector.broadcast %cst_99 : f32 to vector<1x10xf32>
    %220 = arith.cmpf ogt, %7, %219 : vector<1x10xf32>
    %cst_100 = arith.constant -1.000000e+10 : f32
    %221 = vector.shape_cast %220 : vector<1x10xi1> to vector<1x10xi1>
    %222 = vector.broadcast %221 : vector<1x10xi1> to vector<8x10xi1>
    %223 = vector.broadcast %cst_100 : f32 to vector<8x10xf32>
    %224 = arith.select %222, %218, %223 : vector<8x10xi1>, vector<8x10xf32>
    %cst_101 = arith.constant dense<0xFF800000> : vector<8xf32>
    %225 = vector.multi_reduction <maximumf>, %224, %cst_101 [1] : vector<8x10xf32> to vector<8xf32>
    %226 = vector.shape_cast %225 : vector<8xf32> to vector<8x1xf32>
    %227 = vector.broadcast %226 : vector<8x1xf32> to vector<8x10xf32>
    %228 = arith.subf %224, %227 : vector<8x10xf32>
    %229 = math.exp %228 : vector<8x10xf32>
    %cst_102 = arith.constant dense<0.000000e+00> : vector<8xf32>
    %230 = vector.multi_reduction <add>, %229, %cst_102 [1] : vector<8x10xf32> to vector<8xf32>
    %231 = vector.shape_cast %230 : vector<8xf32> to vector<8x1xf32>
    %232 = tpu.reciprocal %231 : vector<8x1xf32> -> vector<8x1xf32>
    %233 = vector.broadcast %232 : vector<8x1xf32> to vector<8x10xf32>
    %234 = arith.mulf %229, %233 : vector<8x10xf32>
    %c0_103 = arith.constant 0 : index
    %c1_104 = arith.constant 1 : index
    %c0_105 = arith.constant 0 : index
    %c0_106 = arith.constant 0 : index
    %235 = vector.load %arg28[%c0_103, %c1_104, %c0_105, %c0_106] : memref<1x4x8x10xf32, #tpu.memory_space<vmem>>, vector<1x1x8x10xf32>
    %236 = vector.shape_cast %235 : vector<1x1x8x10xf32> to vector<8x10xf32>
    %237 = vector.shape_cast %234 : vector<8x10xf32> to vector<1x1x8x10xf32>
    tpu.vector_store %arg28[%c0_103, %c1_104, %c0_105, %c0_106], %237 {strides = array<i32>} : memref<1x4x8x10xf32, #tpu.memory_space<vmem>>, vector<1x1x8x10xf32>,
    %238 = arith.truncf %234 : vector<8x10xf32> to vector<8x10xbf16>
    %239 = arith.truncf %213 : vector<10x8xf32> to vector<10x8xbf16>
    %cst_107 = arith.constant dense<0.000000e+00> : vector<8x8xf32>
    %240 = tpu.matmul %238, %239, %cst_107 {dimension_numbers = #tpu.dot_dimension_numbers<[1], [0], [0], [1], [0, 0, 1, 1], [], []>} : vector<8x10xbf16>, vector<10x8xbf16>, vector<8x8xf32> -> vector<8x8xf32>
    %241 = arith.truncf %240 : vector<8x8xf32> to vector<8x8xbf16>
    %c1_108 = arith.constant 1 : index
    %c0_109 = arith.constant 0 : index
    %c0_110 = arith.constant 0 : index
    %242 = vector.load %arg15[%c1_108, %c0_109, %c0_110] : memref<4x8x32xbf16, #tpu.memory_space<vmem>>, vector<1x8x32xbf16>
    %243 = vector.shape_cast %242 : vector<1x8x32xbf16> to vector<8x32xbf16>
    %cst_111 = arith.constant dense<0.000000e+00> : vector<8x32xf32>
    %244 = tpu.matmul %241, %243, %cst_111 {dimension_numbers = #tpu.dot_dimension_numbers<[1], [0], [0], [1], [0, 0, 1, 1], [], []>} : vector<8x8xbf16>, vector<8x32xbf16>, vector<8x32xf32> -> vector<8x32xf32>
    %245 = arith.addf %210, %244 : vector<8x32xf32>
    %246 = vector.extract_strided_slice %170 {offsets = [0, 16], sizes = [8, 8], strides = [1, 1]} : vector<8x32xf32> to vector<8x8xf32>
    %247 = vector.extract_strided_slice %176 {offsets = [0, 16], sizes = [10, 8], strides = [1, 1]} : vector<10x64xf32> to vector<10x8xf32>
    %248 = vector.extract_strided_slice %176 {offsets = [0, 48], sizes = [10, 8], strides = [1, 1]} : vector<10x64xf32> to vector<10x8xf32>
    %249 = arith.truncf %246 : vector<8x8xf32> to vector<8x8xbf16>
    %250 = arith.truncf %247 : vector<10x8xf32> to vector<10x8xbf16>
    %cst_112 = arith.constant dense<0.000000e+00> : vector<8x10xf32>
    %251 = tpu.matmul %249, %250, %cst_112 {dimension_numbers = #tpu.dot_dimension_numbers<[1], [1], [0], [0], [0, 0, 1, 0], [], []>} : vector<8x8xbf16>, vector<10x8xbf16>, vector<8x10xf32> -> vector<8x10xf32>
    %cst_113 = arith.constant 0.353553385 : f32
    %252 = vector.broadcast %cst_113 : f32 to vector<8x10xf32>
    %253 = arith.mulf %251, %252 : vector<8x10xf32>
    %cst_114 = arith.constant 0.000000e+00 : f32
    %254 = vector.broadcast %cst_114 : f32 to vector<1x10xf32>
    %255 = arith.cmpf ogt, %7, %254 : vector<1x10xf32>
    %cst_115 = arith.constant -1.000000e+10 : f32
    %256 = vector.shape_cast %255 : vector<1x10xi1> to vector<1x10xi1>
    %257 = vector.broadcast %256 : vector<1x10xi1> to vector<8x10xi1>
    %258 = vector.broadcast %cst_115 : f32 to vector<8x10xf32>
    %259 = arith.select %257, %253, %258 : vector<8x10xi1>, vector<8x10xf32>
    %cst_116 = arith.constant dense<0xFF800000> : vector<8xf32>
    %260 = vector.multi_reduction <maximumf>, %259, %cst_116 [1] : vector<8x10xf32> to vector<8xf32>
    %261 = vector.shape_cast %260 : vector<8xf32> to vector<8x1xf32>
    %262 = vector.broadcast %261 : vector<8x1xf32> to vector<8x10xf32>
    %263 = arith.subf %259, %262 : vector<8x10xf32>
    %264 = math.exp %263 : vector<8x10xf32>
    %cst_117 = arith.constant dense<0.000000e+00> : vector<8xf32>
    %265 = vector.multi_reduction <add>, %264, %cst_117 [1] : vector<8x10xf32> to vector<8xf32>
    %266 = vector.shape_cast %265 : vector<8xf32> to vector<8x1xf32>
    %267 = tpu.reciprocal %266 : vector<8x1xf32> -> vector<8x1xf32>
    %268 = vector.broadcast %267 : vector<8x1xf32> to vector<8x10xf32>
    %269 = arith.mulf %264, %268 : vector<8x10xf32>
    %c0_118 = arith.constant 0 : index
    %c2_119 = arith.constant 2 : index
    %c0_120 = arith.constant 0 : index
    %c0_121 = arith.constant 0 : index
    %270 = vector.load %arg28[%c0_118, %c2_119, %c0_120, %c0_121] : memref<1x4x8x10xf32, #tpu.memory_space<vmem>>, vector<1x1x8x10xf32>
    %271 = vector.shape_cast %270 : vector<1x1x8x10xf32> to vector<8x10xf32>
    %272 = vector.shape_cast %269 : vector<8x10xf32> to vector<1x1x8x10xf32>
    tpu.vector_store %arg28[%c0_118, %c2_119, %c0_120, %c0_121], %272 {strides = array<i32>} : memref<1x4x8x10xf32, #tpu.memory_space<vmem>>, vector<1x1x8x10xf32>,
    %273 = arith.truncf %269 : vector<8x10xf32> to vector<8x10xbf16>
    %274 = arith.truncf %248 : vector<10x8xf32> to vector<10x8xbf16>
    %cst_122 = arith.constant dense<0.000000e+00> : vector<8x8xf32>
    %275 = tpu.matmul %273, %274, %cst_122 {dimension_numbers = #tpu.dot_dimension_numbers<[1], [0], [0], [1], [0, 0, 1, 1], [], []>} : vector<8x10xbf16>, vector<10x8xbf16>, vector<8x8xf32> -> vector<8x8xf32>
    %276 = arith.truncf %275 : vector<8x8xf32> to vector<8x8xbf16>
    %c2_123 = arith.constant 2 : index
    %c0_124 = arith.constant 0 : index
    %c0_125 = arith.constant 0 : index
    %277 = vector.load %arg15[%c2_123, %c0_124, %c0_125] : memref<4x8x32xbf16, #tpu.memory_space<vmem>>, vector<1x8x32xbf16>
    %278 = vector.shape_cast %277 : vector<1x8x32xbf16> to vector<8x32xbf16>
    %cst_126 = arith.constant dense<0.000000e+00> : vector<8x32xf32>
    %279 = tpu.matmul %276, %278, %cst_126 {dimension_numbers = #tpu.dot_dimension_numbers<[1], [0], [0], [1], [0, 0, 1, 1], [], []>} : vector<8x8xbf16>, vector<8x32xbf16>, vector<8x32xf32> -> vector<8x32xf32>
    %280 = arith.addf %245, %279 : vector<8x32xf32>
    %281 = vector.extract_strided_slice %170 {offsets = [0, 24], sizes = [8, 8], strides = [1, 1]} : vector<8x32xf32> to vector<8x8xf32>
    %282 = vector.extract_strided_slice %176 {offsets = [0, 24], sizes = [10, 8], strides = [1, 1]} : vector<10x64xf32> to vector<10x8xf32>
    %283 = vector.extract_strided_slice %176 {offsets = [0, 56], sizes = [10, 8], strides = [1, 1]} : vector<10x64xf32> to vector<10x8xf32>
    %284 = arith.truncf %281 : vector<8x8xf32> to vector<8x8xbf16>
    %285 = arith.truncf %282 : vector<10x8xf32> to vector<10x8xbf16>
    %cst_127 = arith.constant dense<0.000000e+00> : vector<8x10xf32>
    %286 = tpu.matmul %284, %285, %cst_127 {dimension_numbers = #tpu.dot_dimension_numbers<[1], [1], [0], [0], [0, 0, 1, 0], [], []>} : vector<8x8xbf16>, vector<10x8xbf16>, vector<8x10xf32> -> vector<8x10xf32>
    %cst_128 = arith.constant 0.353553385 : f32
    %287 = vector.broadcast %cst_128 : f32 to vector<8x10xf32>
    %288 = arith.mulf %286, %287 : vector<8x10xf32>
    %cst_129 = arith.constant 0.000000e+00 : f32
    %289 = vector.broadcast %cst_129 : f32 to vector<1x10xf32>
    %290 = arith.cmpf ogt, %7, %289 : vector<1x10xf32>
    %cst_130 = arith.constant -1.000000e+10 : f32
    %291 = vector.shape_cast %290 : vector<1x10xi1> to vector<1x10xi1>
    %292 = vector.broadcast %291 : vector<1x10xi1> to vector<8x10xi1>
    %293 = vector.broadcast %cst_130 : f32 to vector<8x10xf32>
    %294 = arith.select %292, %288, %293 : vector<8x10xi1>, vector<8x10xf32>
    %cst_131 = arith.constant dense<0xFF800000> : vector<8xf32>
    %295 = vector.multi_reduction <maximumf>, %294, %cst_131 [1] : vector<8x10xf32> to vector<8xf32>
    %296 = vector.shape_cast %295 : vector<8xf32> to vector<8x1xf32>
    %297 = vector.broadcast %296 : vector<8x1xf32> to vector<8x10xf32>
    %298 = arith.subf %294, %297 : vector<8x10xf32>
    %299 = math.exp %298 : vector<8x10xf32>
    %cst_132 = arith.constant dense<0.000000e+00> : vector<8xf32>
    %300 = vector.multi_reduction <add>, %299, %cst_132 [1] : vector<8x10xf32> to vector<8xf32>
    %301 = vector.shape_cast %300 : vector<8xf32> to vector<8x1xf32>
    %302 = tpu.reciprocal %301 : vector<8x1xf32> -> vector<8x1xf32>
    %303 = vector.broadcast %302 : vector<8x1xf32> to vector<8x10xf32>
    %304 = arith.mulf %299, %303 : vector<8x10xf32>
    %c0_133 = arith.constant 0 : index
    %c3_134 = arith.constant 3 : index
    %c0_135 = arith.constant 0 : index
    %c0_136 = arith.constant 0 : index
    %305 = vector.load %arg28[%c0_133, %c3_134, %c0_135, %c0_136] : memref<1x4x8x10xf32, #tpu.memory_space<vmem>>, vector<1x1x8x10xf32>
    %306 = vector.shape_cast %305 : vector<1x1x8x10xf32> to vector<8x10xf32>
    %307 = vector.shape_cast %304 : vector<8x10xf32> to vector<1x1x8x10xf32>
    tpu.vector_store %arg28[%c0_133, %c3_134, %c0_135, %c0_136], %307 {strides = array<i32>} : memref<1x4x8x10xf32, #tpu.memory_space<vmem>>, vector<1x1x8x10xf32>,
    %308 = arith.truncf %304 : vector<8x10xf32> to vector<8x10xbf16>
    %309 = arith.truncf %283 : vector<10x8xf32> to vector<10x8xbf16>
    %cst_137 = arith.constant dense<0.000000e+00> : vector<8x8xf32>
    %310 = tpu.matmul %308, %309, %cst_137 {dimension_numbers = #tpu.dot_dimension_numbers<[1], [0], [0], [1], [0, 0, 1, 1], [], []>} : vector<8x10xbf16>, vector<10x8xbf16>, vector<8x8xf32> -> vector<8x8xf32>
    %311 = arith.truncf %310 : vector<8x8xf32> to vector<8x8xbf16>
    %c3_138 = arith.constant 3 : index
    %c0_139 = arith.constant 0 : index
    %c0_140 = arith.constant 0 : index
    %312 = vector.load %arg15[%c3_138, %c0_139, %c0_140] : memref<4x8x32xbf16, #tpu.memory_space<vmem>>, vector<1x8x32xbf16>
    %313 = vector.shape_cast %312 : vector<1x8x32xbf16> to vector<8x32xbf16>
    %cst_141 = arith.constant dense<0.000000e+00> : vector<8x32xf32>
    %314 = tpu.matmul %311, %313, %cst_141 {dimension_numbers = #tpu.dot_dimension_numbers<[1], [0], [0], [1], [0, 0, 1, 1], [], []>} : vector<8x8xbf16>, vector<8x32xbf16>, vector<8x32xf32> -> vector<8x32xf32>
    %315 = arith.addf %280, %314 : vector<8x32xf32>
    %c0_142 = arith.constant 0 : index
    %c0_143 = arith.constant 0 : index
    %316 = vector.load %arg16[%c0_142, %c0_143] : memref<1x32xf32, #tpu.memory_space<vmem>>, vector<1x32xf32>
    %317 = vector.broadcast %316 : vector<1x32xf32> to vector<8x32xf32>
    %318 = arith.addf %315, %317 : vector<8x32xf32>
    %319 = arith.addf %164, %318 : vector<8x32xf32>
    %cst_144 = arith.constant dense<0.000000e+00> : vector<8xf32>
    %320 = vector.multi_reduction <add>, %319, %cst_144 [1] : vector<8x32xf32> to vector<8xf32>
    %321 = vector.shape_cast %320 : vector<8xf32> to vector<8x1xf32>
    %cst_145 = arith.constant 3.200000e+01 : f32
    %322 = vector.broadcast %cst_145 : f32 to vector<8x1xf32>
    %323 = arith.divf %321, %322 : vector<8x1xf32>
    %324 = vector.broadcast %323 : vector<8x1xf32> to vector<8x32xf32>
    %325 = arith.subf %319, %324 : vector<8x32xf32>
    %326 = arith.mulf %325, %325 : vector<8x32xf32>
    %cst_146 = arith.constant dense<0.000000e+00> : vector<8xf32>
    %327 = vector.multi_reduction <add>, %326, %cst_146 [1] : vector<8x32xf32> to vector<8xf32>
    %328 = vector.shape_cast %327 : vector<8xf32> to vector<8x1xf32>
    %cst_147 = arith.constant 3.200000e+01 : f32
    %329 = vector.broadcast %cst_147 : f32 to vector<8x1xf32>
    %330 = arith.divf %328, %329 : vector<8x1xf32>
    %cst_148 = arith.constant 9.99999974E-6 : f32
    %331 = vector.broadcast %cst_148 : f32 to vector<8x1xf32>
    %332 = arith.addf %330, %331 : vector<8x1xf32>
    %333 = math.rsqrt %332 : vector<8x1xf32>
    %334 = vector.broadcast %333 : vector<8x1xf32> to vector<8x32xf32>
    %335 = arith.mulf %325, %334 : vector<8x32xf32>
    %c0_149 = arith.constant 0 : index
    %c0_150 = arith.constant 0 : index
    %336 = vector.load %arg23[%c0_149, %c0_150] : memref<1x32xf32, #tpu.memory_space<vmem>>, vector<1x32xf32>
    %337 = vector.broadcast %336 : vector<1x32xf32> to vector<8x32xf32>
    %338 = arith.mulf %335, %337 : vector<8x32xf32>
    %c0_151 = arith.constant 0 : index
    %c0_152 = arith.constant 0 : index
    %339 = vector.load %arg24[%c0_151, %c0_152] : memref<1x32xf32, #tpu.memory_space<vmem>>, vector<1x32xf32>
    %340 = vector.broadcast %339 : vector<1x32xf32> to vector<8x32xf32>
    %341 = arith.addf %338, %340 : vector<8x32xf32>
    %342 = arith.truncf %341 : vector<8x32xf32> to vector<8x32xbf16>
    %c0_153 = arith.constant 0 : index
    %c0_154 = arith.constant 0 : index
    %343 = vector.load %arg17[%c0_153, %c0_154] : memref<32x64xbf16, #tpu.memory_space<vmem>>, vector<32x64xbf16>
    %cst_155 = arith.constant dense<0.000000e+00> : vector<8x64xf32>
    %344 = tpu.matmul %342, %343, %cst_155 {dimension_numbers = #tpu.dot_dimension_numbers<[1], [0], [0], [1], [0, 0, 1, 1], [], []>} : vector<8x32xbf16>, vector<32x64xbf16>, vector<8x64xf32> -> vector<8x64xf32>
    %c0_156 = arith.constant 0 : index
    %c0_157 = arith.constant 0 : index
    %345 = vector.load %arg18[%c0_156, %c0_157] : memref<1x64xf32, #tpu.memory_space<vmem>>, vector<1x64xf32>
    %346 = vector.broadcast %345 : vector<1x64xf32> to vector<8x64xf32>
    %347 = arith.addf %344, %346 : vector<8x64xf32>
    %cst_158 = arith.constant 0.000000e+00 : f32
    %348 = vector.broadcast %cst_158 : f32 to vector<8x64xf32>
    %349 = arith.maximumf %347, %348 : vector<8x64xf32>
    %350 = arith.truncf %349 : vector<8x64xf32> to vector<8x64xbf16>
    %c0_159 = arith.constant 0 : index
    %c0_160 = arith.constant 0 : index
    %351 = vector.load %arg19[%c0_159, %c0_160] : memref<64x32xbf16, #tpu.memory_space<vmem>>, vector<64x32xbf16>
    %cst_161 = arith.constant dense<0.000000e+00> : vector<8x32xf32>
    %352 = tpu.matmul %350, %351, %cst_161 {dimension_numbers = #tpu.dot_dimension_numbers<[1], [0], [0], [1], [0, 0, 1, 1], [], []>} : vector<8x64xbf16>, vector<64x32xbf16>, vector<8x32xf32> -> vector<8x32xf32>
    %c0_162 = arith.constant 0 : index
    %c0_163 = arith.constant 0 : index
    %353 = vector.load %arg20[%c0_162, %c0_163] : memref<1x32xf32, #tpu.memory_space<vmem>>, vector<1x32xf32>
    %354 = vector.broadcast %353 : vector<1x32xf32> to vector<8x32xf32>
    %355 = arith.addf %352, %354 : vector<8x32xf32>
    %356 = arith.addf %341, %355 : vector<8x32xf32>
    %cst_164 = arith.constant dense<0.000000e+00> : vector<8xf32>
    %357 = vector.multi_reduction <add>, %356, %cst_164 [1] : vector<8x32xf32> to vector<8xf32>
    %358 = vector.shape_cast %357 : vector<8xf32> to vector<8x1xf32>
    %cst_165 = arith.constant 3.200000e+01 : f32
    %359 = vector.broadcast %cst_165 : f32 to vector<8x1xf32>
    %360 = arith.divf %358, %359 : vector<8x1xf32>
    %361 = vector.broadcast %360 : vector<8x1xf32> to vector<8x32xf32>
    %362 = arith.subf %356, %361 : vector<8x32xf32>
    %363 = arith.mulf %362, %362 : vector<8x32xf32>
    %cst_166 = arith.constant dense<0.000000e+00> : vector<8xf32>
    %364 = vector.multi_reduction <add>, %363, %cst_166 [1] : vector<8x32xf32> to vector<8xf32>
    %365 = vector.shape_cast %364 : vector<8xf32> to vector<8x1xf32>
    %cst_167 = arith.constant 3.200000e+01 : f32
    %366 = vector.broadcast %cst_167 : f32 to vector<8x1xf32>
    %367 = arith.divf %365, %366 : vector<8x1xf32>
    %cst_168 = arith.constant 9.99999974E-6 : f32
    %368 = vector.broadcast %cst_168 : f32 to vector<8x1xf32>
    %369 = arith.addf %367, %368 : vector<8x1xf32>
    %370 = math.rsqrt %369 : vector<8x1xf32>
    %371 = vector.broadcast %370 : vector<8x1xf32> to vector<8x32xf32>
    %372 = arith.mulf %362, %371 : vector<8x32xf32>
    %c0_169 = arith.constant 0 : index
    %c0_170 = arith.constant 0 : index
    %373 = vector.load %arg25[%c0_169, %c0_170] : memref<1x32xf32, #tpu.memory_space<vmem>>, vector<1x32xf32>
    %374 = vector.broadcast %373 : vector<1x32xf32> to vector<8x32xf32>
    %375 = arith.mulf %372, %374 : vector<8x32xf32>
    %c0_171 = arith.constant 0 : index
    %c0_172 = arith.constant 0 : index
    %376 = vector.load %arg26[%c0_171, %c0_172] : memref<1x32xf32, #tpu.memory_space<vmem>>, vector<1x32xf32>
    %377 = vector.broadcast %376 : vector<1x32xf32> to vector<8x32xf32>
    %378 = arith.addf %375, %377 : vector<8x32xf32>
    %c0_173 = arith.constant 0 : index
    %c0_174 = arith.constant 0 : index
    %c0_175 = arith.constant 0 : index
    %379 = vector.load %arg27[%c0_173, %c0_174, %c0_175] : memref<1x8x32xf32, #tpu.memory_space<vmem>>, vector<1x8x32xf32>
    %380 = vector.shape_cast %379 : vector<1x8x32xf32> to vector<8x32xf32>
    %381 = vector.shape_cast %378 : vector<8x32xf32> to vector<1x8x32xf32>
    tpu.vector_store %arg27[%c0_173, %c0_174, %c0_175], %381 {strides = array<i32>} : memref<1x8x32xf32, #tpu.memory_space<vmem>>, vector<1x8x32xf32>,
    return
  }
  func.func @transform_0(%arg0: i32) -> (i32, i32, i32) {
    %c0_i32 = arith.constant 0 : i32
    %c0_i32_0 = arith.constant 0 : i32
    %c0_i32_1 = arith.constant 0 : i32
    return %arg0, %c0_i32, %c0_i32_0 : i32, i32, i32
  }
  func.func @transform_1(%arg0: i32) -> (i32, i32, i32) {
    %c0_i32 = arith.constant 0 : i32
    %c0_i32_0 = arith.constant 0 : i32
    %c0_i32_1 = arith.constant 0 : i32
    return %arg0, %c0_i32, %c0_i32_0 : i32, i32, i32
  }
  func.func @transform_2(%arg0: i32) -> (i32, i32, i32) {
    %c0_i32 = arith.constant 0 : i32
    %c0_i32_0 = arith.constant 0 : i32
    %c0_i32_1 = arith.constant 0 : i32
    return %arg0, %c0_i32, %c0_i32_0 : i32, i32, i32
  }
  func.func @transform_3(%arg0: i32) -> (i32, i32, i32) {
    %c0_i32 = arith.constant 0 : i32
    %c0_i32_0 = arith.constant 0 : i32
    %c0_i32_1 = arith.constant 0 : i32
    return %arg0, %c0_i32, %c0_i32_0 : i32, i32, i32
  }
  func.func @transform_4(%arg0: i32) -> (i32, i32) {
    %c0_i32 = arith.constant 0 : i32
    %c0_i32_0 = arith.constant 0 : i32
    %c0_i32_1 = arith.constant 0 : i32
    return %c0_i32, %c0_i32_0 : i32, i32
  }
  func.func @transform_5(%arg0: i32) -> (i32, i32) {
    %c0_i32 = arith.constant 0 : i32
    %c0_i32_0 = arith.constant 0 : i32
    %c0_i32_1 = arith.constant 0 : i32
    return %c0_i32, %c0_i32_0 : i32, i32
  }
  func.func @transform_6(%arg0: i32) -> (i32, i32) {
    %c0_i32 = arith.constant 0 : i32
    %c0_i32_0 = arith.constant 0 : i32
    %c0_i32_1 = arith.constant 0 : i32
    return %c0_i32, %c0_i32_0 : i32, i32
  }
  func.func @transform_7(%arg0: i32) -> (i32, i32) {
    %c0_i32 = arith.constant 0 : i32
    %c0_i32_0 = arith.constant 0 : i32
    %c0_i32_1 = arith.constant 0 : i32
    return %c0_i32, %c0_i32_0 : i32, i32
  }
  func.func @transform_8(%arg0: i32) -> (i32, i32, i32) {
    %c0_i32 = arith.constant 0 : i32
    %c0_i32_0 = arith.constant 0 : i32
    %c0_i32_1 = arith.constant 0 : i32
    %c0_i32_2 = arith.constant 0 : i32
    return %c0_i32, %c0_i32_0, %c0_i32_1 : i32, i32, i32
  }
  func.func @transform_9(%arg0: i32) -> (i32, i32) {
    %c0_i32 = arith.constant 0 : i32
    %c0_i32_0 = arith.constant 0 : i32
    %c0_i32_1 = arith.constant 0 : i32
    return %c0_i32, %c0_i32_0 : i32, i32
  }
  func.func @transform_10(%arg0: i32) -> (i32, i32) {
    %c0_i32 = arith.constant 0 : i32
    %c0_i32_0 = arith.constant 0 : i32
    %c0_i32_1 = arith.constant 0 : i32
    return %c0_i32, %c0_i32_0 : i32, i32
  }
  func.func @transform_11(%arg0: i32) -> (i32, i32) {
    %c0_i32 = arith.constant 0 : i32
    %c0_i32_0 = arith.constant 0 : i32
    %c0_i32_1 = arith.constant 0 : i32
    return %c0_i32, %c0_i32_0 : i32, i32
  }
  func.func @transform_12(%arg0: i32) -> (i32, i32) {
    %c0_i32 = arith.constant 0 : i32
    %c0_i32_0 = arith.constant 0 : i32
    %c0_i32_1 = arith.constant 0 : i32
    return %c0_i32, %c0_i32_0 : i32, i32
  }
  func.func @transform_13(%arg0: i32) -> (i32, i32) {
    %c0_i32 = arith.constant 0 : i32
    %c0_i32_0 = arith.constant 0 : i32
    %c0_i32_1 = arith.constant 0 : i32
    return %c0_i32, %c0_i32_0 : i32, i32
  }
  func.func @transform_14(%arg0: i32) -> (i32, i32, i32) {
    %c0_i32 = arith.constant 0 : i32
    %c0_i32_0 = arith.constant 0 : i32
    %c0_i32_1 = arith.constant 0 : i32
    %c0_i32_2 = arith.constant 0 : i32
    return %c0_i32, %c0_i32_0, %c0_i32_1 : i32, i32, i32
  }
  func.func @transform_15(%arg0: i32) -> (i32, i32) {
    %c0_i32 = arith.constant 0 : i32
    %c0_i32_0 = arith.constant 0 : i32
    %c0_i32_1 = arith.constant 0 : i32
    return %c0_i32, %c0_i32_0 : i32, i32
  }
  func.func @transform_16(%arg0: i32) -> (i32, i32) {
    %c0_i32 = arith.constant 0 : i32
    %c0_i32_0 = arith.constant 0 : i32
    %c0_i32_1 = arith.constant 0 : i32
    return %c0_i32, %c0_i32_0 : i32, i32
  }
  func.func @transform_17(%arg0: i32) -> (i32, i32) {
    %c0_i32 = arith.constant 0 : i32
    %c0_i32_0 = arith.constant 0 : i32
    %c0_i32_1 = arith.constant 0 : i32
    return %c0_i32, %c0_i32_0 : i32, i32
  }
  func.func @transform_18(%arg0: i32) -> (i32, i32) {
    %c0_i32 = arith.constant 0 : i32
    %c0_i32_0 = arith.constant 0 : i32
    %c0_i32_1 = arith.constant 0 : i32
    return %c0_i32, %c0_i32_0 : i32, i32
  }
  func.func @transform_19(%arg0: i32) -> (i32, i32) {
    %c0_i32 = arith.constant 0 : i32
    %c0_i32_0 = arith.constant 0 : i32
    %c0_i32_1 = arith.constant 0 : i32
    return %c0_i32, %c0_i32_0 : i32, i32
  }
  func.func @transform_20(%arg0: i32) -> (i32, i32) {
    %c0_i32 = arith.constant 0 : i32
    %c0_i32_0 = arith.constant 0 : i32
    %c0_i32_1 = arith.constant 0 : i32
    return %c0_i32, %c0_i32_0 : i32, i32
  }
  func.func @transform_21(%arg0: i32) -> (i32, i32) {
    %c0_i32 = arith.constant 0 : i32
    %c0_i32_0 = arith.constant 0 : i32
    %c0_i32_1 = arith.constant 0 : i32
    return %c0_i32, %c0_i32_0 : i32, i32
  }
  func.func @transform_22(%arg0: i32) -> (i32, i32) {
    %c0_i32 = arith.constant 0 : i32
    %c0_i32_0 = arith.constant 0 : i32
    %c0_i32_1 = arith.constant 0 : i32
    return %c0_i32, %c0_i32_0 : i32, i32
  }
  func.func @transform_23(%arg0: i32) -> (i32, i32) {
    %c0_i32 = arith.constant 0 : i32
    %c0_i32_0 = arith.constant 0 : i32
    %c0_i32_1 = arith.constant 0 : i32
    return %c0_i32, %c0_i32_0 : i32, i32
  }
  func.func @transform_24(%arg0: i32) -> (i32, i32) {
    %c0_i32 = arith.constant 0 : i32
    %c0_i32_0 = arith.constant 0 : i32
    %c0_i32_1 = arith.constant 0 : i32
    return %c0_i32, %c0_i32_0 : i32, i32
  }
  func.func @transform_25(%arg0: i32) -> (i32, i32) {
    %c0_i32 = arith.constant 0 : i32
    %c0_i32_0 = arith.constant 0 : i32
    %c0_i32_1 = arith.constant 0 : i32
    return %c0_i32, %c0_i32_0 : i32, i32
  }
  func.func @transform_26(%arg0: i32) -> (i32, i32, i32) {
    %c0_i32 = arith.constant 0 : i32
    %c0_i32_0 = arith.constant 0 : i32
    %c0_i32_1 = arith.constant 0 : i32
    return %arg0, %c0_i32, %c0_i32_0 : i32, i32, i32
  }
  func.func @transform_27(%arg0: i32) -> (i32, i32, i32, i32) {
    %c0_i32 = arith.constant 0 : i32
    %c0_i32_0 = arith.constant 0 : i32
    %c0_i32_1 = arith.constant 0 : i32
    %c0_i32_2 = arith.constant 0 : i32
    return %arg0, %c0_i32, %c0_i32_0, %c0_i32_1 : i32, i32, i32, i32
  }
}

module attributes {stable_mosaic.version = 11 : i64} {
  func.func @_decoder_layer_kernel(%arg0: i32, %arg1: memref<1x8x32xf32, #tpu.memory_space<vmem>>, %arg2: memref<1x10x32xf32, #tpu.memory_space<vmem>>, %arg3: memref<1x8x8xf32, #tpu.memory_space<vmem>>, %arg4: memref<1x1x10xf32, #tpu.memory_space<vmem>>, %arg5: memref<32x32xbf16, #tpu.memory_space<vmem>>, %arg6: memref<1x32xf32, #tpu.memory_space<vmem>>, %arg7: memref<32x64xbf16, #tpu.memory_space<vmem>>, %arg8: memref<1x64xf32, #tpu.memory_space<vmem>>, %arg9: memref<4x8x32xbf16, #tpu.memory_space<vmem>>, %arg10: memref<1x32xf32, #tpu.memory_space<vmem>>, %arg11: memref<32x32xbf16, #tpu.memory_space<vmem>>, %arg12: memref<1x32xf32, #tpu.memory_space<vmem>>, %arg13: memref<32x64xbf16, #tpu.memory_space<vmem>>, %arg14: memref<1x64xf32, #tpu.memory_space<vmem>>, %arg15: memref<4x8x32xbf16, #tpu.memory_space<vmem>>, %arg16: memref<1x32xf32, #tpu.memory_space<vmem>>, %arg17: memref<32x64xbf16, #tpu.memory_space<vmem>>, %arg18: memref<1x64xf32, #tpu.memory_space<vmem>>, %arg19: memref<64x32xbf16, #tpu.memory_space<vmem>>, %arg20: memref<1x32xf32, #tpu.memory_space<vmem>>, %arg21: memref<1x32xf32, #tpu.memory_space<vmem>>, %arg22: memref<1x32xf32, #tpu.memory_space<vmem>>, %arg23: memref<1x32xf32, #tpu.memory_space<vmem>>, %arg24: memref<1x32xf32, #tpu.memory_space<vmem>>, %arg25: memref<1x32xf32, #tpu.memory_space<vmem>>, %arg26: memref<1x32xf32, #tpu.memory_space<vmem>>, %arg27: memref<1x8x32xf32, #tpu.memory_space<vmem>>, %arg28: memref<1x4x8x10xf32, #tpu.memory_space<vmem>>) attributes {dimension_semantics = [#tpu.dimension_semantics<parallel>], iteration_bounds = array<i64: 2>, scalar_prefetch = 0 : i64, scratch_operands = 0 : i64, tpu.core_type = #tpu.core_type<tc>, window_params = [{transform_indices = @transform_0, window_bounds = array<i64: 1, 8, 32>}, {transform_indices = @transform_1, window_bounds = array<i64: 1, 10, 32>}, {transform_indices = @transform_2, window_bounds = array<i64: 1, 8, 8>}, {transform_indices = @transform_3, window_bounds = array<i64: 1, 1, 10>}, {pipeline_mode = #tpu.pipeline_mode<synchronous>, transform_indices = @transform_4, window_bounds = array<i64: 32, 32>}, {pipeline_mode = #tpu.pipeline_mode<synchronous>, transform_indices = @transform_5, window_bounds = array<i64: 1, 32>}, {pipeline_mode = #tpu.pipeline_mode<synchronous>, transform_indices = @transform_6, window_bounds = array<i64: 32, 64>}, {pipeline_mode = #tpu.pipeline_mode<synchronous>, transform_indices = @transform_7, window_bounds = array<i64: 1, 64>}, {pipeline_mode = #tpu.pipeline_mode<synchronous>, transform_indices = @transform_8, window_bounds = array<i64: 4, 8, 32>}, {pipeline_mode = #tpu.pipeline_mode<synchronous>, transform_indices = @transform_9, window_bounds = array<i64: 1, 32>}, {pipeline_mode = #tpu.pipeline_mode<synchronous>, transform_indices = @transform_10, window_bounds = array<i64: 32, 32>}, {pipeline_mode = #tpu.pipeline_mode<synchronous>, transform_indices = @transform_11, window_bounds = array<i64: 1, 32>}, {pipeline_mode = #tpu.pipeline_mode<synchronous>, transform_indices = @transform_12, window_bounds = array<i64: 32, 64>}, {pipeline_mode = #tpu.pipeline_mode<synchronous>, transform_indices = @transform_13, window_bounds = array<i64: 1, 64>}, {pipeline_mode = #tpu.pipeline_mode<synchronous>, transform_indices = @transform_14, window_bounds = array<i64: 4, 8, 32>}, {pipeline_mode = #tpu.pipeline_mode<synchronous>, transform_indices = @transform_15, window_bounds = array<i64: 1, 32>}, {pipeline_mode = #tpu.pipeline_mode<synchronous>, transform_indices = @transform_16, window_bounds = array<i64: 32, 64>}, {pipeline_mode = #tpu.pipeline_mode<synchronous>, transform_indices = @transform_17, window_bounds = array<i64: 1, 64>}, {pipeline_mode = #tpu.pipeline_mode<synchronous>, transform_indices = @transform_18, window_bounds = array<i64: 64, 32>}, {pipeline_mode = #tpu.pipeline_mode<synchronous>, transform_indices = @transform_19, window_bounds = array<i64: 1, 32>}, {pipeline_mode = #tpu.pipeline_mode<synchronous>, transform_indices = @transform_20, window_bounds = array<i64: 1, 32>}, {pipeline_mode = #tpu.pipeline_mode<synchronous>, transform_indices = @transform_21, window_bounds = array<i64: 1, 32>}, {pipeline_mode = #tpu.pipeline_mode<synchronous>, transform_indices = @transform_22, window_bounds = array<i64: 1, 32>}, {pipeline_mode = #tpu.pipeline_mode<synchronous>, transform_indices = @transform_23, window_bounds = array<i64: 1, 32>}, {pipeline_mode = #tpu.pipeline_mode<synchronous>, transform_indices = @transform_24, window_bounds = array<i64: 1, 32>}, {pipeline_mode = #tpu.pipeline_mode<synchronous>, transform_indices = @transform_25, window_bounds = array<i64: 1, 32>}, {transform_indices = @transform_26, window_bounds = array<i64: 1, 8, 32>}, {transform_indices = @transform_27, window_bounds = array<i64: 1, 4, 8, 10>}]} {
    %c0 = arith.constant 0 : index
    %c0_0 = arith.constant 0 : index
    %c0_1 = arith.constant 0 : index
    %0 = vector.load %arg1[%c0, %c0_0, %c0_1] : memref<1x8x32xf32, #tpu.memory_space<vmem>>, vector<1x8x32xf32>
    %1 = vector.shape_cast %0 : vector<1x8x32xf32> to vector<8x32xf32>
    %c0_2 = arith.constant 0 : index
    %c0_3 = arith.constant 0 : index
    %c0_4 = arith.constant 0 : index
    %2 = vector.load %arg2[%c0_2, %c0_3, %c0_4] : memref<1x10x32xf32, #tpu.memory_space<vmem>>, vector<1x10x32xf32>
    %3 = vector.shape_cast %2 : vector<1x10x32xf32> to vector<10x32xf32>
    %c0_5 = arith.constant 0 : index
    %c0_6 = arith.constant 0 : index
    %c0_7 = arith.constant 0 : index
    %4 = vector.load %arg3[%c0_5, %c0_6, %c0_7] : memref<1x8x8xf32, #tpu.memory_space<vmem>>, vector<1x8x8xf32>
    %5 = vector.shape_cast %4 : vector<1x8x8xf32> to vector<8x8xf32>
    %c0_8 = arith.constant 0 : index
    %c0_9 = arith.constant 0 : index
    %c0_10 = arith.constant 0 : index
    %6 = vector.load %arg4[%c0_8, %c0_9, %c0_10] : memref<1x1x10xf32, #tpu.memory_space<vmem>>, vector<1x1x10xf32>
    %7 = vector.shape_cast %6 : vector<1x1x10xf32> to vector<1x10xf32>
    %8 = arith.truncf %1 : vector<8x32xf32> to vector<8x32xbf16>
    %c0_11 = arith.constant 0 : index
    %c0_12 = arith.constant 0 : index
    %9 = vector.load %arg5[%c0_11, %c0_12] : memref<32x32xbf16, #tpu.memory_space<vmem>>, vector<32x32xbf16>
    %cst = arith.constant dense<0.000000e+00> : vector<8x32xf32>
    %10 = tpu.matmul %8, %9, %cst {dimension_numbers = #tpu.dot_dimension_numbers<[1], [0], [0], [1], [0, 0, 1, 1], [], []>} : vector<8x32xbf16>, vector<32x32xbf16>, vector<8x32xf32> -> vector<8x32xf32>
    %c0_13 = arith.constant 0 : index
    %c0_14 = arith.constant 0 : index
    %11 = vector.load %arg6[%c0_13, %c0_14] : memref<1x32xf32, #tpu.memory_space<vmem>>, vector<1x32xf32>
    %12 = vector.broadcast %11 : vector<1x32xf32> to vector<8x32xf32>
    %13 = arith.addf %10, %12 : vector<8x32xf32>
    %14 = arith.truncf %1 : vector<8x32xf32> to vector<8x32xbf16>
    %c0_15 = arith.constant 0 : index
    %c0_16 = arith.constant 0 : index
    %15 = vector.load %arg7[%c0_15, %c0_16] : memref<32x64xbf16, #tpu.memory_space<vmem>>, vector<32x64xbf16>
    %cst_17 = arith.constant dense<0.000000e+00> : vector<8x64xf32>
    %16 = tpu.matmul %14, %15, %cst_17 {dimension_numbers = #tpu.dot_dimension_numbers<[1], [0], [0], [1], [0, 0, 1, 1], [], []>} : vector<8x32xbf16>, vector<32x64xbf16>, vector<8x64xf32> -> vector<8x64xf32>
    %c0_18 = arith.constant 0 : index
    %c0_19 = arith.constant 0 : index
    %17 = vector.load %arg8[%c0_18, %c0_19] : memref<1x64xf32, #tpu.memory_space<vmem>>, vector<1x64xf32>
    %18 = vector.broadcast %17 : vector<1x64xf32> to vector<8x64xf32>
    %19 = arith.addf %16, %18 : vector<8x64xf32>
    %20 = vector.extract_strided_slice %13 {offsets = [0, 0], sizes = [8, 8], strides = [1, 1]} : vector<8x32xf32> to vector<8x8xf32>
    %21 = vector.extract_strided_slice %19 {offsets = [0, 0], sizes = [8, 8], strides = [1, 1]} : vector<8x64xf32> to vector<8x8xf32>
    %22 = vector.extract_strided_slice %19 {offsets = [0, 32], sizes = [8, 8], strides = [1, 1]} : vector<8x64xf32> to vector<8x8xf32>
    %23 = arith.truncf %20 : vector<8x8xf32> to vector<8x8xbf16>
    %24 = arith.truncf %21 : vector<8x8xf32> to vector<8x8xbf16>
    %cst_20 = arith.constant dense<0.000000e+00> : vector<8x8xf32>
    %25 = tpu.matmul %23, %24, %cst_20 {dimension_numbers = #tpu.dot_dimension_numbers<[1], [1], [0], [0], [0, 0, 1, 0], [], []>} : vector<8x8xbf16>, vector<8x8xbf16>, vector<8x8xf32> -> vector<8x8xf32>
    %cst_21 = arith.constant 0.353553385 : f32
    %26 = vector.broadcast %cst_21 : f32 to vector<8x8xf32>
    %27 = arith.mulf %25, %26 : vector<8x8xf32>
    %cst_22 = arith.constant 0.000000e+00 : f32
    %28 = vector.broadcast %cst_22 : f32 to vector<8x8xf32>
    %29 = arith.cmpf ogt, %5, %28 : vector<8x8xf32>
    %cst_23 = arith.constant -1.000000e+10 : f32
    %30 = vector.broadcast %cst_23 : f32 to vector<8x8xf32>
    %31 = arith.select %29, %27, %30 : vector<8x8xi1>, vector<8x8xf32>
    %cst_24 = arith.constant dense<0xFF800000> : vector<8xf32>
    %32 = vector.multi_reduction <maximumf>, %31, %cst_24 [1] : vector<8x8xf32> to vector<8xf32>
    %33 = vector.shape_cast %32 : vector<8xf32> to vector<8x1xf32>
    %34 = vector.broadcast %33 : vector<8x1xf32> to vector<8x8xf32>
    %35 = arith.subf %31, %34 : vector<8x8xf32>
    %36 = math.exp %35 : vector<8x8xf32>
    %cst_25 = arith.constant dense<0.000000e+00> : vector<8xf32>
    %37 = vector.multi_reduction <add>, %36, %cst_25 [1] : vector<8x8xf32> to vector<8xf32>
    %38 = vector.shape_cast %37 : vector<8xf32> to vector<8x1xf32>
    %39 = tpu.reciprocal %38 : vector<8x1xf32> -> vector<8x1xf32>
    %40 = vector.broadcast %39 : vector<8x1xf32> to vector<8x8xf32>
    %41 = arith.mulf %36, %40 : vector<8x8xf32>
    %42 = arith.truncf %41 : vector<8x8xf32> to vector<8x8xbf16>
    %43 = arith.truncf %22 : vector<8x8xf32> to vector<8x8xbf16>
    %cst_26 = arith.constant dense<0.000000e+00> : vector<8x8xf32>
    %44 = tpu.matmul %42, %43, %cst_26 {dimension_numbers = #tpu.dot_dimension_numbers<[1], [0], [0], [1], [0, 0, 1, 1], [], []>} : vector<8x8xbf16>, vector<8x8xbf16>, vector<8x8xf32> -> vector<8x8xf32>
    %45 = arith.truncf %44 : vector<8x8xf32> to vector<8x8xbf16>
    %c0_27 = arith.constant 0 : index
    %c0_28 = arith.constant 0 : index
    %c0_29 = arith.constant 0 : index
    %46 = vector.load %arg9[%c0_27, %c0_28, %c0_29] : memref<4x8x32xbf16, #tpu.memory_space<vmem>>, vector<1x8x32xbf16>
    %47 = vector.shape_cast %46 : vector<1x8x32xbf16> to vector<8x32xbf16>
    %cst_30 = arith.constant dense<0.000000e+00> : vector<8x32xf32>
    %48 = tpu.matmul %45, %47, %cst_30 {dimension_numbers = #tpu.dot_dimension_numbers<[1], [0], [0], [1], [0, 0, 1, 1], [], []>} : vector<8x8xbf16>, vector<8x32xbf16>, vector<8x32xf32> -> vector<8x32xf32>
    %49 = vector.extract_strided_slice %13 {offsets = [0, 8], sizes = [8, 8], strides = [1, 1]} : vector<8x32xf32> to vector<8x8xf32>
    %50 = vector.extract_strided_slice %19 {offsets = [0, 8], sizes = [8, 8], strides = [1, 1]} : vector<8x64xf32> to vector<8x8xf32>
    %51 = vector.extract_strided_slice %19 {offsets = [0, 40], sizes = [8, 8], strides = [1, 1]} : vector<8x64xf32> to vector<8x8xf32>
    %52 = arith.truncf %49 : vector<8x8xf32> to vector<8x8xbf16>
    %53 = arith.truncf %50 : vector<8x8xf32> to vector<8x8xbf16>
    %cst_31 = arith.constant dense<0.000000e+00> : vector<8x8xf32>
    %54 = tpu.matmul %52, %53, %cst_31 {dimension_numbers = #tpu.dot_dimension_numbers<[1], [1], [0], [0], [0, 0, 1, 0], [], []>} : vector<8x8xbf16>, vector<8x8xbf16>, vector<8x8xf32> -> vector<8x8xf32>
    %cst_32 = arith.constant 0.353553385 : f32
    %55 = vector.broadcast %cst_32 : f32 to vector<8x8xf32>
    %56 = arith.mulf %54, %55 : vector<8x8xf32>
    %cst_33 = arith.constant 0.000000e+00 : f32
    %57 = vector.broadcast %cst_33 : f32 to vector<8x8xf32>
    %58 = arith.cmpf ogt, %5, %57 : vector<8x8xf32>
    %cst_34 = arith.constant -1.000000e+10 : f32
    %59 = vector.broadcast %cst_34 : f32 to vector<8x8xf32>
    %60 = arith.select %58, %56, %59 : vector<8x8xi1>, vector<8x8xf32>
    %cst_35 = arith.constant dense<0xFF800000> : vector<8xf32>
    %61 = vector.multi_reduction <maximumf>, %60, %cst_35 [1] : vector<8x8xf32> to vector<8xf32>
    %62 = vector.shape_cast %61 : vector<8xf32> to vector<8x1xf32>
    %63 = vector.broadcast %62 : vector<8x1xf32> to vector<8x8xf32>
    %64 = arith.subf %60, %63 : vector<8x8xf32>
    %65 = math.exp %64 : vector<8x8xf32>
    %cst_36 = arith.constant dense<0.000000e+00> : vector<8xf32>
    %66 = vector.multi_reduction <add>, %65, %cst_36 [1] : vector<8x8xf32> to vector<8xf32>
    %67 = vector.shape_cast %66 : vector<8xf32> to vector<8x1xf32>
    %68 = tpu.reciprocal %67 : vector<8x1xf32> -> vector<8x1xf32>
    %69 = vector.broadcast %68 : vector<8x1xf32> to vector<8x8xf32>
    %70 = arith.mulf %65, %69 : vector<8x8xf32>
    %71 = arith.truncf %70 : vector<8x8xf32> to vector<8x8xbf16>
    %72 = arith.truncf %51 : vector<8x8xf32> to vector<8x8xbf16>
    %cst_37 = arith.constant dense<0.000000e+00> : vector<8x8xf32>
    %73 = tpu.matmul %71, %72, %cst_37 {dimension_numbers = #tpu.dot_dimension_numbers<[1], [0], [0], [1], [0, 0, 1, 1], [], []>} : vector<8x8xbf16>, vector<8x8xbf16>, vector<8x8xf32> -> vector<8x8xf32>
    %74 = arith.truncf %73 : vector<8x8xf32> to vector<8x8xbf16>
    %c1 = arith.constant 1 : index
    %c0_38 = arith.constant 0 : index
    %c0_39 = arith.constant 0 : index
    %75 = vector.load %arg9[%c1, %c0_38, %c0_39] : memref<4x8x32xbf16, #tpu.memory_space<vmem>>, vector<1x8x32xbf16>
    %76 = vector.shape_cast %75 : vector<1x8x32xbf16> to vector<8x32xbf16>
    %cst_40 = arith.constant dense<0.000000e+00> : vector<8x32xf32>
    %77 = tpu.matmul %74, %76, %cst_40 {dimension_numbers = #tpu.dot_dimension_numbers<[1], [0], [0], [1], [0, 0, 1, 1], [], []>} : vector<8x8xbf16>, vector<8x32xbf16>, vector<8x32xf32> -> vector<8x32xf32>
    %78 = arith.addf %48, %77 : vector<8x32xf32>
    %79 = vector.extract_strided_slice %13 {offsets = [0, 16], sizes = [8, 8], strides = [1, 1]} : vector<8x32xf32> to vector<8x8xf32>
    %80 = vector.extract_strided_slice %19 {offsets = [0, 16], sizes = [8, 8], strides = [1, 1]} : vector<8x64xf32> to vector<8x8xf32>
    %81 = vector.extract_strided_slice %19 {offsets = [0, 48], sizes = [8, 8], strides = [1, 1]} : vector<8x64xf32> to vector<8x8xf32>
    %82 = arith.truncf %79 : vector<8x8xf32> to vector<8x8xbf16>
    %83 = arith.truncf %80 : vector<8x8xf32> to vector<8x8xbf16>
    %cst_41 = arith.constant dense<0.000000e+00> : vector<8x8xf32>
    %84 = tpu.matmul %82, %83, %cst_41 {dimension_numbers = #tpu.dot_dimension_numbers<[1], [1], [0], [0], [0, 0, 1, 0], [], []>} : vector<8x8xbf16>, vector<8x8xbf16>, vector<8x8xf32> -> vector<8x8xf32>
    %cst_42 = arith.constant 0.353553385 : f32
    %85 = vector.broadcast %cst_42 : f32 to vector<8x8xf32>
    %86 = arith.mulf %84, %85 : vector<8x8xf32>
    %cst_43 = arith.constant 0.000000e+00 : f32
    %87 = vector.broadcast %cst_43 : f32 to vector<8x8xf32>
    %88 = arith.cmpf ogt, %5, %87 : vector<8x8xf32>
    %cst_44 = arith.constant -1.000000e+10 : f32
    %89 = vector.broadcast %cst_44 : f32 to vector<8x8xf32>
    %90 = arith.select %88, %86, %89 : vector<8x8xi1>, vector<8x8xf32>
    %cst_45 = arith.constant dense<0xFF800000> : vector<8xf32>
    %91 = vector.multi_reduction <maximumf>, %90, %cst_45 [1] : vector<8x8xf32> to vector<8xf32>
    %92 = vector.shape_cast %91 : vector<8xf32> to vector<8x1xf32>
    %93 = vector.broadcast %92 : vector<8x1xf32> to vector<8x8xf32>
    %94 = arith.subf %90, %93 : vector<8x8xf32>
    %95 = math.exp %94 : vector<8x8xf32>
    %cst_46 = arith.constant dense<0.000000e+00> : vector<8xf32>
    %96 = vector.multi_reduction <add>, %95, %cst_46 [1] : vector<8x8xf32> to vector<8xf32>
    %97 = vector.shape_cast %96 : vector<8xf32> to vector<8x1xf32>
    %98 = tpu.reciprocal %97 : vector<8x1xf32> -> vector<8x1xf32>
    %99 = vector.broadcast %98 : vector<8x1xf32> to vector<8x8xf32>
    %100 = arith.mulf %95, %99 : vector<8x8xf32>
    %101 = arith.truncf %100 : vector<8x8xf32> to vector<8x8xbf16>
    %102 = arith.truncf %81 : vector<8x8xf32> to vector<8x8xbf16>
    %cst_47 = arith.constant dense<0.000000e+00> : vector<8x8xf32>
    %103 = tpu.matmul %101, %102, %cst_47 {dimension_numbers = #tpu.dot_dimension_numbers<[1], [0], [0], [1], [0, 0, 1, 1], [], []>} : vector<8x8xbf16>, vector<8x8xbf16>, vector<8x8xf32> -> vector<8x8xf32>
    %104 = arith.truncf %103 : vector<8x8xf32> to vector<8x8xbf16>
    %c2 = arith.constant 2 : index
    %c0_48 = arith.constant 0 : index
    %c0_49 = arith.constant 0 : index
    %105 = vector.load %arg9[%c2, %c0_48, %c0_49] : memref<4x8x32xbf16, #tpu.memory_space<vmem>>, vector<1x8x32xbf16>
    %106 = vector.shape_cast %105 : vector<1x8x32xbf16> to vector<8x32xbf16>
    %cst_50 = arith.constant dense<0.000000e+00> : vector<8x32xf32>
    %107 = tpu.matmul %104, %106, %cst_50 {dimension_numbers = #tpu.dot_dimension_numbers<[1], [0], [0], [1], [0, 0, 1, 1], [], []>} : vector<8x8xbf16>, vector<8x32xbf16>, vector<8x32xf32> -> vector<8x32xf32>
    %108 = arith.addf %78, %107 : vector<8x32xf32>
    %109 = vector.extract_strided_slice %13 {offsets = [0, 24], sizes = [8, 8], strides = [1, 1]} : vector<8x32xf32> to vector<8x8xf32>
    %110 = vector.extract_strided_slice %19 {offsets = [0, 24], sizes = [8, 8], strides = [1, 1]} : vector<8x64xf32> to vector<8x8xf32>
    %111 = vector.extract_strided_slice %19 {offsets = [0, 56], sizes = [8, 8], strides = [1, 1]} : vector<8x64xf32> to vector<8x8xf32>
    %112 = arith.truncf %109 : vector<8x8xf32> to vector<8x8xbf16>
    %113 = arith.truncf %110 : vector<8x8xf32> to vector<8x8xbf16>
    %cst_51 = arith.constant dense<0.000000e+00> : vector<8x8xf32>
    %114 = tpu.matmul %112, %113, %cst_51 {dimension_numbers = #tpu.dot_dimension_numbers<[1], [1], [0], [0], [0, 0, 1, 0], [], []>} : vector<8x8xbf16>, vector<8x8xbf16>, vector<8x8xf32> -> vector<8x8xf32>
    %cst_52 = arith.constant 0.353553385 : f32
    %115 = vector.broadcast %cst_52 : f32 to vector<8x8xf32>
    %116 = arith.mulf %114, %115 : vector<8x8xf32>
    %cst_53 = arith.constant 0.000000e+00 : f32
    %117 = vector.broadcast %cst_53 : f32 to vector<8x8xf32>
    %118 = arith.cmpf ogt, %5, %117 : vector<8x8xf32>
    %cst_54 = arith.constant -1.000000e+10 : f32
    %119 = vector.broadcast %cst_54 : f32 to vector<8x8xf32>
    %120 = arith.select %118, %116, %119 : vector<8x8xi1>, vector<8x8xf32>
    %cst_55 = arith.constant dense<0xFF800000> : vector<8xf32>
    %121 = vector.multi_reduction <maximumf>, %120, %cst_55 [1] : vector<8x8xf32> to vector<8xf32>
    %122 = vector.shape_cast %121 : vector<8xf32> to vector<8x1xf32>
    %123 = vector.broadcast %122 : vector<8x1xf32> to vector<8x8xf32>
    %124 = arith.subf %120, %123 : vector<8x8xf32>
    %125 = math.exp %124 : vector<8x8xf32>
    %cst_56 = arith.constant dense<0.000000e+00> : vector<8xf32>
    %126 = vector.multi_reduction <add>, %125, %cst_56 [1] : vector<8x8xf32> to vector<8xf32>
    %127 = vector.shape_cast %126 : vector<8xf32> to vector<8x1xf32>
    %128 = tpu.reciprocal %127 : vector<8x1xf32> -> vector<8x1xf32>
    %129 = vector.broadcast %128 : vector<8x1xf32> to vector<8x8xf32>
    %130 = arith.mulf %125, %129 : vector<8x8xf32>
    %131 = arith.truncf %130 : vector<8x8xf32> to vector<8x8xbf16>
    %132 = arith.truncf %111 : vector<8x8xf32> to vector<8x8xbf16>
    %cst_57 = arith.constant dense<0.000000e+00> : vector<8x8xf32>
    %133 = tpu.matmul %131, %132, %cst_57 {dimension_numbers = #tpu.dot_dimension_numbers<[1], [0], [0], [1], [0, 0, 1, 1], [], []>} : vector<8x8xbf16>, vector<8x8xbf16>, vector<8x8xf32> -> vector<8x8xf32>
    %134 = arith.truncf %133 : vector<8x8xf32> to vector<8x8xbf16>
    %c3 = arith.constant 3 : index
    %c0_58 = arith.constant 0 : index
    %c0_59 = arith.constant 0 : index
    %135 = vector.load %arg9[%c3, %c0_58, %c0_59] : memref<4x8x32xbf16, #tpu.memory_space<vmem>>, vector<1x8x32xbf16>
    %136 = vector.shape_cast %135 : vector<1x8x32xbf16> to vector<8x32xbf16>
    %cst_60 = arith.constant dense<0.000000e+00> : vector<8x32xf32>
    %137 = tpu.matmul %134, %136, %cst_60 {dimension_numbers = #tpu.dot_dimension_numbers<[1], [0], [0], [1], [0, 0, 1, 1], [], []>} : vector<8x8xbf16>, vector<8x32xbf16>, vector<8x32xf32> -> vector<8x32xf32>
    %138 = arith.addf %108, %137 : vector<8x32xf32>
    %c0_61 = arith.constant 0 : index
    %c0_62 = arith.constant 0 : index
    %139 = vector.load %arg10[%c0_61, %c0_62] : memref<1x32xf32, #tpu.memory_space<vmem>>, vector<1x32xf32>
    %140 = vector.broadcast %139 : vector<1x32xf32> to vector<8x32xf32>
    %141 = arith.addf %138, %140 : vector<8x32xf32>
    %142 = arith.addf %1, %141 : vector<8x32xf32>
    %cst_63 = arith.constant dense<0.000000e+00> : vector<8xf32>
    %143 = vector.multi_reduction <add>, %142, %cst_63 [1] : vector<8x32xf32> to vector<8xf32>
    %144 = vector.shape_cast %143 : vector<8xf32> to vector<8x1xf32>
    %cst_64 = arith.constant 3.200000e+01 : f32
    %145 = vector.broadcast %cst_64 : f32 to vector<8x1xf32>
    %146 = arith.divf %144, %145 : vector<8x1xf32>
    %147 = vector.broadcast %146 : vector<8x1xf32> to vector<8x32xf32>
    %148 = arith.subf %142, %147 : vector<8x32xf32>
    %149 = arith.mulf %148, %148 : vector<8x32xf32>
    %cst_65 = arith.constant dense<0.000000e+00> : vector<8xf32>
    %150 = vector.multi_reduction <add>, %149, %cst_65 [1] : vector<8x32xf32> to vector<8xf32>
    %151 = vector.shape_cast %150 : vector<8xf32> to vector<8x1xf32>
    %cst_66 = arith.constant 3.200000e+01 : f32
    %152 = vector.broadcast %cst_66 : f32 to vector<8x1xf32>
    %153 = arith.divf %151, %152 : vector<8x1xf32>
    %cst_67 = arith.constant 9.99999974E-6 : f32
    %154 = vector.broadcast %cst_67 : f32 to vector<8x1xf32>
    %155 = arith.addf %153, %154 : vector<8x1xf32>
    %156 = math.rsqrt %155 : vector<8x1xf32>
    %157 = vector.broadcast %156 : vector<8x1xf32> to vector<8x32xf32>
    %158 = arith.mulf %148, %157 : vector<8x32xf32>
    %c0_68 = arith.constant 0 : index
    %c0_69 = arith.constant 0 : index
    %159 = vector.load %arg21[%c0_68, %c0_69] : memref<1x32xf32, #tpu.memory_space<vmem>>, vector<1x32xf32>
    %160 = vector.broadcast %159 : vector<1x32xf32> to vector<8x32xf32>
    %161 = arith.mulf %158, %160 : vector<8x32xf32>
    %c0_70 = arith.constant 0 : index
    %c0_71 = arith.constant 0 : index
    %162 = vector.load %arg22[%c0_70, %c0_71] : memref<1x32xf32, #tpu.memory_space<vmem>>, vector<1x32xf32>
    %163 = vector.broadcast %162 : vector<1x32xf32> to vector<8x32xf32>
    %164 = arith.addf %161, %163 : vector<8x32xf32>
    %165 = arith.truncf %164 : vector<8x32xf32> to vector<8x32xbf16>
    %c0_72 = arith.constant 0 : index
    %c0_73 = arith.constant 0 : index
    %166 = vector.load %arg11[%c0_72, %c0_73] : memref<32x32xbf16, #tpu.memory_space<vmem>>, vector<32x32xbf16>
    %cst_74 = arith.constant dense<0.000000e+00> : vector<8x32xf32>
    %167 = tpu.matmul %165, %166, %cst_74 {dimension_numbers = #tpu.dot_dimension_numbers<[1], [0], [0], [1], [0, 0, 1, 1], [], []>} : vector<8x32xbf16>, vector<32x32xbf16>, vector<8x32xf32> -> vector<8x32xf32>
    %c0_75 = arith.constant 0 : index
    %c0_76 = arith.constant 0 : index
    %168 = vector.load %arg12[%c0_75, %c0_76] : memref<1x32xf32, #tpu.memory_space<vmem>>, vector<1x32xf32>
    %169 = vector.broadcast %168 : vector<1x32xf32> to vector<8x32xf32>
    %170 = arith.addf %167, %169 : vector<8x32xf32>
    %171 = arith.truncf %3 : vector<10x32xf32> to vector<10x32xbf16>
    %c0_77 = arith.constant 0 : index
    %c0_78 = arith.constant 0 : index
    %172 = vector.load %arg13[%c0_77, %c0_78] : memref<32x64xbf16, #tpu.memory_space<vmem>>, vector<32x64xbf16>
    %cst_79 = arith.constant dense<0.000000e+00> : vector<10x64xf32>
    %173 = tpu.matmul %171, %172, %cst_79 {dimension_numbers = #tpu.dot_dimension_numbers<[1], [0], [0], [1], [0, 0, 1, 1], [], []>} : vector<10x32xbf16>, vector<32x64xbf16>, vector<10x64xf32> -> vector<10x64xf32>
    %c0_80 = arith.constant 0 : index
    %c0_81 = arith.constant 0 : index
    %174 = vector.load %arg14[%c0_80, %c0_81] : memref<1x64xf32, #tpu.memory_space<vmem>>, vector<1x64xf32>
    %175 = vector.broadcast %174 : vector<1x64xf32> to vector<10x64xf32>
    %176 = arith.addf %173, %175 : vector<10x64xf32>
    %177 = vector.extract_strided_slice %170 {offsets = [0, 0], sizes = [8, 8], strides = [1, 1]} : vector<8x32xf32> to vector<8x8xf32>
    %178 = vector.extract_strided_slice %176 {offsets = [0, 0], sizes = [10, 8], strides = [1, 1]} : vector<10x64xf32> to vector<10x8xf32>
    %179 = vector.extract_strided_slice %176 {offsets = [0, 32], sizes = [10, 8], strides = [1, 1]} : vector<10x64xf32> to vector<10x8xf32>
    %180 = arith.truncf %177 : vector<8x8xf32> to vector<8x8xbf16>
    %181 = arith.truncf %178 : vector<10x8xf32> to vector<10x8xbf16>
    %cst_82 = arith.constant dense<0.000000e+00> : vector<8x10xf32>
    %182 = tpu.matmul %180, %181, %cst_82 {dimension_numbers = #tpu.dot_dimension_numbers<[1], [1], [0], [0], [0, 0, 1, 0], [], []>} : vector<8x8xbf16>, vector<10x8xbf16>, vector<8x10xf32> -> vector<8x10xf32>
    %cst_83 = arith.constant 0.353553385 : f32
    %183 = vector.broadcast %cst_83 : f32 to vector<8x10xf32>
    %184 = arith.mulf %182, %183 : vector<8x10xf32>
    %cst_84 = arith.constant 0.000000e+00 : f32
    %185 = vector.broadcast %cst_84 : f32 to vector<1x10xf32>
    %186 = arith.cmpf ogt, %7, %185 : vector<1x10xf32>
    %cst_85 = arith.constant -1.000000e+10 : f32
    %187 = vector.shape_cast %186 : vector<1x10xi1> to vector<1x10xi1>
    %188 = vector.broadcast %187 : vector<1x10xi1> to vector<8x10xi1>
    %189 = vector.broadcast %cst_85 : f32 to vector<8x10xf32>
    %190 = arith.select %188, %184, %189 : vector<8x10xi1>, vector<8x10xf32>
    %cst_86 = arith.constant dense<0xFF800000> : vector<8xf32>
    %191 = vector.multi_reduction <maximumf>, %190, %cst_86 [1] : vector<8x10xf32> to vector<8xf32>
    %192 = vector.shape_cast %191 : vector<8xf32> to vector<8x1xf32>
    %193 = vector.broadcast %192 : vector<8x1xf32> to vector<8x10xf32>
    %194 = arith.subf %190, %193 : vector<8x10xf32>
    %195 = math.exp %194 : vector<8x10xf32>
    %cst_87 = arith.constant dense<0.000000e+00> : vector<8xf32>
    %196 = vector.multi_reduction <add>, %195, %cst_87 [1] : vector<8x10xf32> to vector<8xf32>
    %197 = vector.shape_cast %196 : vector<8xf32> to vector<8x1xf32>
    %198 = tpu.reciprocal %197 : vector<8x1xf32> -> vector<8x1xf32>
    %199 = vector.broadcast %198 : vector<8x1xf32> to vector<8x10xf32>
    %200 = arith.mulf %195, %199 : vector<8x10xf32>
    %c0_88 = arith.constant 0 : index
    %c0_89 = arith.constant 0 : index
    %c0_90 = arith.constant 0 : index
    %c0_91 = arith.constant 0 : index
    %201 = vector.load %arg28[%c0_88, %c0_89, %c0_90, %c0_91] : memref<1x4x8x10xf32, #tpu.memory_space<vmem>>, vector<1x1x8x10xf32>
    %202 = vector.shape_cast %201 : vector<1x1x8x10xf32> to vector<8x10xf32>
    %203 = vector.shape_cast %200 : vector<8x10xf32> to vector<1x1x8x10xf32>
    tpu.vector_store %arg28[%c0_88, %c0_89, %c0_90, %c0_91], %203 {strides = array<i32>} : memref<1x4x8x10xf32, #tpu.memory_space<vmem>>, vector<1x1x8x10xf32>,
    %204 = arith.truncf %200 : vector<8x10xf32> to vector<8x10xbf16>
    %205 = arith.truncf %179 : vector<10x8xf32> to vector<10x8xbf16>
    %cst_92 = arith.constant dense<0.000000e+00> : vector<8x8xf32>
    %206 = tpu.matmul %204, %205, %cst_92 {dimension_numbers = #tpu.dot_dimension_numbers<[1], [0], [0], [1], [0, 0, 1, 1], [], []>} : vector<8x10xbf16>, vector<10x8xbf16>, vector<8x8xf32> -> vector<8x8xf32>
    %207 = arith.truncf %206 : vector<8x8xf32> to vector<8x8xbf16>
    %c0_93 = arith.constant 0 : index
    %c0_94 = arith.constant 0 : index
    %c0_95 = arith.constant 0 : index
    %208 = vector.load %arg15[%c0_93, %c0_94, %c0_95] : memref<4x8x32xbf16, #tpu.memory_space<vmem>>, vector<1x8x32xbf16>
    %209 = vector.shape_cast %208 : vector<1x8x32xbf16> to vector<8x32xbf16>
    %cst_96 = arith.constant dense<0.000000e+00> : vector<8x32xf32>
    %210 = tpu.matmul %207, %209, %cst_96 {dimension_numbers = #tpu.dot_dimension_numbers<[1], [0], [0], [1], [0, 0, 1, 1], [], []>} : vector<8x8xbf16>, vector<8x32xbf16>, vector<8x32xf32> -> vector<8x32xf32>
    %211 = vector.extract_strided_slice %170 {offsets = [0, 8], sizes = [8, 8], strides = [1, 1]} : vector<8x32xf32> to vector<8x8xf32>
    %212 = vector.extract_strided_slice %176 {offsets = [0, 8], sizes = [10, 8], strides = [1, 1]} : vector<10x64xf32> to vector<10x8xf32>
    %213 = vector.extract_strided_slice %176 {offsets = [0, 40], sizes = [10, 8], strides = [1, 1]} : vector<10x64xf32> to vector<10x8xf32>
    %214 = arith.truncf %211 : vector<8x8xf32> to vector<8x8xbf16>
    %215 = arith.truncf %212 : vector<10x8xf32> to vector<10x8xbf16>
    %cst_97 = arith.constant dense<0.000000e+00> : vector<8x10xf32>
    %216 = tpu.matmul %214, %215, %cst_97 {dimension_numbers = #tpu.dot_dimension_numbers<[1], [1], [0], [0], [0, 0, 1, 0], [], []>} : vector<8x8xbf16>, vector<10x8xbf16>, vector<8x10xf32> -> vector<8x10xf32>
    %cst_98 = arith.constant 0.353553385 : f32
    %217 = vector.broadcast %cst_98 : f32 to vector<8x10xf32>
    %218 = arith.mulf %216, %217 : vector<8x10xf32>
    %cst_99 = arith.constant 0.000000e+00 : f32
    %219 = vector.broadcast %cst_99 : f32 to vector<1x10xf32>
    %220 = arith.cmpf ogt, %7, %219 : vector<1x10xf32>
    %cst_100 = arith.constant -1.000000e+10 : f32
    %221 = vector.shape_cast %220 : vector<1x10xi1> to vector<1x10xi1>
    %222 = vector.broadcast %221 : vector<1x10xi1> to vector<8x10xi1>
    %223 = vector.broadcast %cst_100 : f32 to vector<8x10xf32>
    %224 = arith.select %222, %218, %223 : vector<8x10xi1>, vector<8x10xf32>
    %cst_101 = arith.constant dense<0xFF800000> : vector<8xf32>
    %225 = vector.multi_reduction <maximumf>, %224, %cst_101 [1] : vector<8x10xf32> to vector<8xf32>
    %226 = vector.shape_cast %225 : vector<8xf32> to vector<8x1xf32>
    %227 = vector.broadcast %226 : vector<8x1xf32> to vector<8x10xf32>
    %228 = arith.subf %224, %227 : vector<8x10xf32>
    %229 = math.exp %228 : vector<8x10xf32>
    %cst_102 = arith.constant dense<0.000000e+00> : vector<8xf32>
    %230 = vector.multi_reduction <add>, %229, %cst_102 [1] : vector<8x10xf32> to vector<8xf32>
    %231 = vector.shape_cast %230 : vector<8xf32> to vector<8x1xf32>
    %232 = tpu.reciprocal %231 : vector<8x1xf32> -> vector<8x1xf32>
    %233 = vector.broadcast %232 : vector<8x1xf32> to vector<8x10xf32>
    %234 = arith.mulf %229, %233 : vector<8x10xf32>
    %c0_103 = arith.constant 0 : index
    %c1_104 = arith.constant 1 : index
    %c0_105 = arith.constant 0 : index
    %c0_106 = arith.constant 0 : index
    %235 = vector.load %arg28[%c0_103, %c1_104, %c0_105, %c0_106] : memref<1x4x8x10xf32, #tpu.memory_space<vmem>>, vector<1x1x8x10xf32>
    %236 = vector.shape_cast %235 : vector<1x1x8x10xf32> to vector<8x10xf32>
    %237 = vector.shape_cast %234 : vector<8x10xf32> to vector<1x1x8x10xf32>
    tpu.vector_store %arg28[%c0_103, %c1_104, %c0_105, %c0_106], %237 {strides = array<i32>} : memref<1x4x8x10xf32, #tpu.memory_space<vmem>>, vector<1x1x8x10xf32>,
    %238 = arith.truncf %234 : vector<8x10xf32> to vector<8x10xbf16>
    %239 = arith.truncf %213 : vector<10x8xf32> to vector<10x8xbf16>
    %cst_107 = arith.constant dense<0.000000e+00> : vector<8x8xf32>
    %240 = tpu.matmul %238, %239, %cst_107 {dimension_numbers = #tpu.dot_dimension_numbers<[1], [0], [0], [1], [0, 0, 1, 1], [], []>} : vector<8x10xbf16>, vector<10x8xbf16>, vector<8x8xf32> -> vector<8x8xf32>
    %241 = arith.truncf %240 : vector<8x8xf32> to vector<8x8xbf16>
    %c1_108 = arith.constant 1 : index
    %c0_109 = arith.constant 0 : index
    %c0_110 = arith.constant 0 : index
    %242 = vector.load %arg15[%c1_108, %c0_109, %c0_110] : memref<4x8x32xbf16, #tpu.memory_space<vmem>>, vector<1x8x32xbf16>
    %243 = vector.shape_cast %242 : vector<1x8x32xbf16> to vector<8x32xbf16>
    %cst_111 = arith.constant dense<0.000000e+00> : vector<8x32xf32>
    %244 = tpu.matmul %241, %243, %cst_111 {dimension_numbers = #tpu.dot_dimension_numbers<[1], [0], [0], [1], [0, 0, 1, 1], [], []>} : vector<8x8xbf16>, vector<8x32xbf16>, vector<8x32xf32> -> vector<8x32xf32>
    %245 = arith.addf %210, %244 : vector<8x32xf32>
    %246 = vector.extract_strided_slice %170 {offsets = [0, 16], sizes = [8, 8], strides = [1, 1]} : vector<8x32xf32> to vector<8x8xf32>
    %247 = vector.extract_strided_slice %176 {offsets = [0, 16], sizes = [10, 8], strides = [1, 1]} : vector<10x64xf32> to vector<10x8xf32>
    %248 = vector.extract_strided_slice %176 {offsets = [0, 48], sizes = [10, 8], strides = [1, 1]} : vector<10x64xf32> to vector<10x8xf32>
    %249 = arith.truncf %246 : vector<8x8xf32> to vector<8x8xbf16>
    %250 = arith.truncf %247 : vector<10x8xf32> to vector<10x8xbf16>
    %cst_112 = arith.constant dense<0.000000e+00> : vector<8x10xf32>
    %251 = tpu.matmul %249, %250, %cst_112 {dimension_numbers = #tpu.dot_dimension_numbers<[1], [1], [0], [0], [0, 0, 1, 0], [], []>} : vector<8x8xbf16>, vector<10x8xbf16>, vector<8x10xf32> -> vector<8x10xf32>
    %cst_113 = arith.constant 0.353553385 : f32
    %252 = vector.broadcast %cst_113 : f32 to vector<8x10xf32>
    %253 = arith.mulf %251, %252 : vector<8x10xf32>
    %cst_114 = arith.constant 0.000000e+00 : f32
    %254 = vector.broadcast %cst_114 : f32 to vector<1x10xf32>
    %255 = arith.cmpf ogt, %7, %254 : vector<1x10xf32>
    %cst_115 = arith.constant -1.000000e+10 : f32
    %256 = vector.shape_cast %255 : vector<1x10xi1> to vector<1x10xi1>
    %257 = vector.broadcast %256 : vector<1x10xi1> to vector<8x10xi1>
    %258 = vector.broadcast %cst_115 : f32 to vector<8x10xf32>
    %259 = arith.select %257, %253, %258 : vector<8x10xi1>, vector<8x10xf32>
    %cst_116 = arith.constant dense<0xFF800000> : vector<8xf32>
    %260 = vector.multi_reduction <maximumf>, %259, %cst_116 [1] : vector<8x10xf32> to vector<8xf32>
    %261 = vector.shape_cast %260 : vector<8xf32> to vector<8x1xf32>
    %262 = vector.broadcast %261 : vector<8x1xf32> to vector<8x10xf32>
    %263 = arith.subf %259, %262 : vector<8x10xf32>
    %264 = math.exp %263 : vector<8x10xf32>
    %cst_117 = arith.constant dense<0.000000e+00> : vector<8xf32>
    %265 = vector.multi_reduction <add>, %264, %cst_117 [1] : vector<8x10xf32> to vector<8xf32>
    %266 = vector.shape_cast %265 : vector<8xf32> to vector<8x1xf32>
    %267 = tpu.reciprocal %266 : vector<8x1xf32> -> vector<8x1xf32>
    %268 = vector.broadcast %267 : vector<8x1xf32> to vector<8x10xf32>
    %269 = arith.mulf %264, %268 : vector<8x10xf32>
    %c0_118 = arith.constant 0 : index
    %c2_119 = arith.constant 2 : index
    %c0_120 = arith.constant 0 : index
    %c0_121 = arith.constant 0 : index
    %270 = vector.load %arg28[%c0_118, %c2_119, %c0_120, %c0_121] : memref<1x4x8x10xf32, #tpu.memory_space<vmem>>, vector<1x1x8x10xf32>
    %271 = vector.shape_cast %270 : vector<1x1x8x10xf32> to vector<8x10xf32>
    %272 = vector.shape_cast %269 : vector<8x10xf32> to vector<1x1x8x10xf32>
    tpu.vector_store %arg28[%c0_118, %c2_119, %c0_120, %c0_121], %272 {strides = array<i32>} : memref<1x4x8x10xf32, #tpu.memory_space<vmem>>, vector<1x1x8x10xf32>,
    %273 = arith.truncf %269 : vector<8x10xf32> to vector<8x10xbf16>
    %274 = arith.truncf %248 : vector<10x8xf32> to vector<10x8xbf16>
    %cst_122 = arith.constant dense<0.000000e+00> : vector<8x8xf32>
    %275 = tpu.matmul %273, %274, %cst_122 {dimension_numbers = #tpu.dot_dimension_numbers<[1], [0], [0], [1], [0, 0, 1, 1], [], []>} : vector<8x10xbf16>, vector<10x8xbf16>, vector<8x8xf32> -> vector<8x8xf32>
    %276 = arith.truncf %275 : vector<8x8xf32> to vector<8x8xbf16>
    %c2_123 = arith.constant 2 : index
    %c0_124 = arith.constant 0 : index
    %c0_125 = arith.constant 0 : index
    %277 = vector.load %arg15[%c2_123, %c0_124, %c0_125] : memref<4x8x32xbf16, #tpu.memory_space<vmem>>, vector<1x8x32xbf16>
    %278 = vector.shape_cast %277 : vector<1x8x32xbf16> to vector<8x32xbf16>
    %cst_126 = arith.constant dense<0.000000e+00> : vector<8x32xf32>
    %279 = tpu.matmul %276, %278, %cst_126 {dimension_numbers = #tpu.dot_dimension_numbers<[1], [0], [0], [1], [0, 0, 1, 1], [], []>} : vector<8x8xbf16>, vector<8x32xbf16>, vector<8x32xf32> -> vector<8x32xf32>
    %280 = arith.addf %245, %279 : vector<8x32xf32>
    %281 = vector.extract_strided_slice %170 {offsets = [0, 24], sizes = [8, 8], strides = [1, 1]} : vector<8x32xf32> to vector<8x8xf32>
    %282 = vector.extract_strided_slice %176 {offsets = [0, 24], sizes = [10, 8], strides = [1, 1]} : vector<10x64xf32> to vector<10x8xf32>
    %283 = vector.extract_strided_slice %176 {offsets = [0, 56], sizes = [10, 8], strides = [1, 1]} : vector<10x64xf32> to vector<10x8xf32>
    %284 = arith.truncf %281 : vector<8x8xf32> to vector<8x8xbf16>
    %285 = arith.truncf %282 : vector<10x8xf32> to vector<10x8xbf16>
    %cst_127 = arith.constant dense<0.000000e+00> : vector<8x10xf32>
    %286 = tpu.matmul %284, %285, %cst_127 {dimension_numbers = #tpu.dot_dimension_numbers<[1], [1], [0], [0], [0, 0, 1, 0], [], []>} : vector<8x8xbf16>, vector<10x8xbf16>, vector<8x10xf32> -> vector<8x10xf32>
    %cst_128 = arith.constant 0.353553385 : f32
    %287 = vector.broadcast %cst_128 : f32 to vector<8x10xf32>
    %288 = arith.mulf %286, %287 : vector<8x10xf32>
    %cst_129 = arith.constant 0.000000e+00 : f32
    %289 = vector.broadcast %cst_129 : f32 to vector<1x10xf32>
    %290 = arith.cmpf ogt, %7, %289 : vector<1x10xf32>
    %cst_130 = arith.constant -1.000000e+10 : f32
    %291 = vector.shape_cast %290 : vector<1x10xi1> to vector<1x10xi1>
    %292 = vector.broadcast %291 : vector<1x10xi1> to vector<8x10xi1>
    %293 = vector.broadcast %cst_130 : f32 to vector<8x10xf32>
    %294 = arith.select %292, %288, %293 : vector<8x10xi1>, vector<8x10xf32>
    %cst_131 = arith.constant dense<0xFF800000> : vector<8xf32>
    %295 = vector.multi_reduction <maximumf>, %294, %cst_131 [1] : vector<8x10xf32> to vector<8xf32>
    %296 = vector.shape_cast %295 : vector<8xf32> to vector<8x1xf32>
    %297 = vector.broadcast %296 : vector<8x1xf32> to vector<8x10xf32>
    %298 = arith.subf %294, %297 : vector<8x10xf32>
    %299 = math.exp %298 : vector<8x10xf32>
    %cst_132 = arith.constant dense<0.000000e+00> : vector<8xf32>
    %300 = vector.multi_reduction <add>, %299, %cst_132 [1] : vector<8x10xf32> to vector<8xf32>
    %301 = vector.shape_cast %300 : vector<8xf32> to vector<8x1xf32>
    %302 = tpu.reciprocal %301 : vector<8x1xf32> -> vector<8x1xf32>
    %303 = vector.broadcast %302 : vector<8x1xf32> to vector<8x10xf32>
    %304 = arith.mulf %299, %303 : vector<8x10xf32>
    %c0_133 = arith.constant 0 : index
    %c3_134 = arith.constant 3 : index
    %c0_135 = arith.constant 0 : index
    %c0_136 = arith.constant 0 : index
    %305 = vector.load %arg28[%c0_133, %c3_134, %c0_135, %c0_136] : memref<1x4x8x10xf32, #tpu.memory_space<vmem>>, vector<1x1x8x10xf32>
    %306 = vector.shape_cast %305 : vector<1x1x8x10xf32> to vector<8x10xf32>
    %307 = vector.shape_cast %304 : vector<8x10xf32> to vector<1x1x8x10xf32>
    tpu.vector_store %arg28[%c0_133, %c3_134, %c0_135, %c0_136], %307 {strides = array<i32>} : memref<1x4x8x10xf32, #tpu.memory_space<vmem>>, vector<1x1x8x10xf32>,
    %308 = arith.truncf %304 : vector<8x10xf32> to vector<8x10xbf16>
    %309 = arith.truncf %283 : vector<10x8xf32> to vector<10x8xbf16>
    %cst_137 = arith.constant dense<0.000000e+00> : vector<8x8xf32>
    %310 = tpu.matmul %308, %309, %cst_137 {dimension_numbers = #tpu.dot_dimension_numbers<[1], [0], [0], [1], [0, 0, 1, 1], [], []>} : vector<8x10xbf16>, vector<10x8xbf16>, vector<8x8xf32> -> vector<8x8xf32>
    %311 = arith.truncf %310 : vector<8x8xf32> to vector<8x8xbf16>
    %c3_138 = arith.constant 3 : index
    %c0_139 = arith.constant 0 : index
    %c0_140 = arith.constant 0 : index
    %312 = vector.load %arg15[%c3_138, %c0_139, %c0_140] : memref<4x8x32xbf16, #tpu.memory_space<vmem>>, vector<1x8x32xbf16>
    %313 = vector.shape_cast %312 : vector<1x8x32xbf16> to vector<8x32xbf16>
    %cst_141 = arith.constant dense<0.000000e+00> : vector<8x32xf32>
    %314 = tpu.matmul %311, %313, %cst_141 {dimension_numbers = #tpu.dot_dimension_numbers<[1], [0], [0], [1], [0, 0, 1, 1], [], []>} : vector<8x8xbf16>, vector<8x32xbf16>, vector<8x32xf32> -> vector<8x32xf32>
    %315 = arith.addf %280, %314 : vector<8x32xf32>
    %c0_142 = arith.constant 0 : index
    %c0_143 = arith.constant 0 : index
    %316 = vector.load %arg16[%c0_142, %c0_143] : memref<1x32xf32, #tpu.memory_space<vmem>>, vector<1x32xf32>
    %317 = vector.broadcast %316 : vector<1x32xf32> to vector<8x32xf32>
    %318 = arith.addf %315, %317 : vector<8x32xf32>
    %319 = arith.addf %164, %318 : vector<8x32xf32>
    %cst_144 = arith.constant dense<0.000000e+00> : vector<8xf32>
    %320 = vector.multi_reduction <add>, %319, %cst_144 [1] : vector<8x32xf32> to vector<8xf32>
    %321 = vector.shape_cast %320 : vector<8xf32> to vector<8x1xf32>
    %cst_145 = arith.constant 3.200000e+01 : f32
    %322 = vector.broadcast %cst_145 : f32 to vector<8x1xf32>
    %323 = arith.divf %321, %322 : vector<8x1xf32>
    %324 = vector.broadcast %323 : vector<8x1xf32> to vector<8x32xf32>
    %325 = arith.subf %319, %324 : vector<8x32xf32>
    %326 = arith.mulf %325, %325 : vector<8x32xf32>
    %cst_146 = arith.constant dense<0.000000e+00> : vector<8xf32>
    %327 = vector.multi_reduction <add>, %326, %cst_146 [1] : vector<8x32xf32> to vector<8xf32>
    %328 = vector.shape_cast %327 : vector<8xf32> to vector<8x1xf32>
    %cst_147 = arith.constant 3.200000e+01 : f32
    %329 = vector.broadcast %cst_147 : f32 to vector<8x1xf32>
    %330 = arith.divf %328, %329 : vector<8x1xf32>
    %cst_148 = arith.constant 9.99999974E-6 : f32
    %331 = vector.broadcast %cst_148 : f32 to vector<8x1xf32>
    %332 = arith.addf %330, %331 : vector<8x1xf32>
    %333 = math.rsqrt %332 : vector<8x1xf32>
    %334 = vector.broadcast %333 : vector<8x1xf32> to vector<8x32xf32>
    %335 = arith.mulf %325, %334 : vector<8x32xf32>
    %c0_149 = arith.constant 0 : index
    %c0_150 = arith.constant 0 : index
    %336 = vector.load %arg23[%c0_149, %c0_150] : memref<1x32xf32, #tpu.memory_space<vmem>>, vector<1x32xf32>
    %337 = vector.broadcast %336 : vector<1x32xf32> to vector<8x32xf32>
    %338 = arith.mulf %335, %337 : vector<8x32xf32>
    %c0_151 = arith.constant 0 : index
    %c0_152 = arith.constant 0 : index
    %339 = vector.load %arg24[%c0_151, %c0_152] : memref<1x32xf32, #tpu.memory_space<vmem>>, vector<1x32xf32>
    %340 = vector.broadcast %339 : vector<1x32xf32> to vector<8x32xf32>
    %341 = arith.addf %338, %340 : vector<8x32xf32>
    %342 = arith.truncf %341 : vector<8x32xf32> to vector<8x32xbf16>
    %c0_153 = arith.constant 0 : index
    %c0_154 = arith.constant 0 : index
    %343 = vector.load %arg17[%c0_153, %c0_154] : memref<32x64xbf16, #tpu.memory_space<vmem>>, vector<32x64xbf16>
    %cst_155 = arith.constant dense<0.000000e+00> : vector<8x64xf32>
    %344 = tpu.matmul %342, %343, %cst_155 {dimension_numbers = #tpu.dot_dimension_numbers<[1], [0], [0], [1], [0, 0, 1, 1], [], []>} : vector<8x32xbf16>, vector<32x64xbf16>, vector<8x64xf32> -> vector<8x64xf32>
    %c0_156 = arith.constant 0 : index
    %c0_157 = arith.constant 0 : index
    %345 = vector.load %arg18[%c0_156, %c0_157] : memref<1x64xf32, #tpu.memory_space<vmem>>, vector<1x64xf32>
    %346 = vector.broadcast %345 : vector<1x64xf32> to vector<8x64xf32>
    %347 = arith.addf %344, %346 : vector<8x64xf32>
    %cst_158 = arith.constant 0.000000e+00 : f32
    %348 = vector.broadcast %cst_158 : f32 to vector<8x64xf32>
    %349 = arith.maximumf %347, %348 : vector<8x64xf32>
    %350 = arith.truncf %349 : vector<8x64xf32> to vector<8x64xbf16>
    %c0_159 = arith.constant 0 : index
    %c0_160 = arith.constant 0 : index
    %351 = vector.load %arg19[%c0_159, %c0_160] : memref<64x32xbf16, #tpu.memory_space<vmem>>, vector<64x32xbf16>
    %cst_161 = arith.constant dense<0.000000e+00> : vector<8x32xf32>
    %352 = tpu.matmul %350, %351, %cst_161 {dimension_numbers = #tpu.dot_dimension_numbers<[1], [0], [0], [1], [0, 0, 1, 1], [], []>} : vector<8x64xbf16>, vector<64x32xbf16>, vector<8x32xf32> -> vector<8x32xf32>
    %c0_162 = arith.constant 0 : index
    %c0_163 = arith.constant 0 : index
    %353 = vector.load %arg20[%c0_162, %c0_163] : memref<1x32xf32, #tpu.memory_space<vmem>>, vector<1x32xf32>
    %354 = vector.broadcast %353 : vector<1x32xf32> to vector<8x32xf32>
    %355 = arith.addf %352, %354 : vector<8x32xf32>
    %356 = arith.addf %341, %355 : vector<8x32xf32>
    %cst_164 = arith.constant dense<0.000000e+00> : vector<8xf32>
    %357 = vector.multi_reduction <add>, %356, %cst_164 [1] : vector<8x32xf32> to vector<8xf32>
    %358 = vector.shape_cast %357 : vector<8xf32> to vector<8x1xf32>
    %cst_165 = arith.constant 3.200000e+01 : f32
    %359 = vector.broadcast %cst_165 : f32 to vector<8x1xf32>
    %360 = arith.divf %358, %359 : vector<8x1xf32>
    %361 = vector.broadcast %360 : vector<8x1xf32> to vector<8x32xf32>
    %362 = arith.subf %356, %361 : vector<8x32xf32>
    %363 = arith.mulf %362, %362 : vector<8x32xf32>
    %cst_166 = arith.constant dense<0.000000e+00> : vector<8xf32>
    %364 = vector.multi_reduction <add>, %363, %cst_166 [1] : vector<8x32xf32> to vector<8xf32>
    %365 = vector.shape_cast %364 : vector<8xf32> to vector<8x1xf32>
    %cst_167 = arith.constant 3.200000e+01 : f32
    %366 = vector.broadcast %cst_167 : f32 to vector<8x1xf32>
    %367 = arith.divf %365, %366 : vector<8x1xf32>
    %cst_168 = arith.constant 9.99999974E-6 : f32
    %368 = vector.broadcast %cst_168 : f32 to vector<8x1xf32>
    %369 = arith.addf %367, %368 : vector<8x1xf32>
    %370 = math.rsqrt %369 : vector<8x1xf32>
    %371 = vector.broadcast %370 : vector<8x1xf32> to vector<8x32xf32>
    %372 = arith.mulf %362, %371 : vector<8x32xf32>
    %c0_169 = arith.constant 0 : index
    %c0_170 = arith.constant 0 : index
    %373 = vector.load %arg25[%c0_169, %c0_170] : memref<1x32xf32, #tpu.memory_space<vmem>>, vector<1x32xf32>
    %374 = vector.broadcast %373 : vector<1x32xf32> to vector<8x32xf32>
    %375 = arith.mulf %372, %374 : vector<8x32xf32>
    %c0_171 = arith.constant 0 : index
    %c0_172 = arith.constant 0 : index
    %376 = vector.load %arg26[%c0_171, %c0_172] : memref<1x32xf32, #tpu.memory_space<vmem>>, vector<1x32xf32>
    %377 = vector.broadcast %376 : vector<1x32xf32> to vector<8x32xf32>
    %378 = arith.addf %375, %377 : vector<8x32xf32>
    %c0_173 = arith.constant 0 : index
    %c0_174 = arith.constant 0 : index
    %c0_175 = arith.constant 0 : index
    %379 = vector.load %arg27[%c0_173, %c0_174, %c0_175] : memref<1x8x32xf32, #tpu.memory_space<vmem>>, vector<1x8x32xf32>
    %380 = vector.shape_cast %379 : vector<1x8x32xf32> to vector<8x32xf32>
    %381 = vector.shape_cast %378 : vector<8x32xf32> to vector<1x8x32xf32>
    tpu.vector_store %arg27[%c0_173, %c0_174, %c0_175], %381 {strides = array<i32>} : memref<1x8x32xf32, #tpu.memory_space<vmem>>, vector<1x8x32xf32>,
    return
  }
  func.func @transform_0(%arg0: i32) -> (i32, i32, i32) {
    %c0_i32 = arith.constant 0 : i32
    %c0_i32_0 = arith.constant 0 : i32
    %c0_i32_1 = arith.constant 0 : i32
    return %arg0, %c0_i32, %c0_i32_0 : i32, i32, i32
  }
  func.func @transform_1(%arg0: i32) -> (i32, i32, i32) {
    %c0_i32 = arith.constant 0 : i32
    %c0_i32_0 = arith.constant 0 : i32
    %c0_i32_1 = arith.constant 0 : i32
    return %arg0, %c0_i32, %c0_i32_0 : i32, i32, i32
  }
  func.func @transform_2(%arg0: i32) -> (i32, i32, i32) {
    %c0_i32 = arith.constant 0 : i32
    %c0_i32_0 = arith.constant 0 : i32
    %c0_i32_1 = arith.constant 0 : i32
    return %arg0, %c0_i32, %c0_i32_0 : i32, i32, i32
  }
  func.func @transform_3(%arg0: i32) -> (i32, i32, i32) {
    %c0_i32 = arith.constant 0 : i32
    %c0_i32_0 = arith.constant 0 : i32
    %c0_i32_1 = arith.constant 0 : i32
    return %arg0, %c0_i32, %c0_i32_0 : i32, i32, i32
  }
  func.func @transform_4(%arg0: i32) -> (i32, i32) {
    %c0_i32 = arith.constant 0 : i32
    %c0_i32_0 = arith.constant 0 : i32
    %c0_i32_1 = arith.constant 0 : i32
    return %c0_i32, %c0_i32_0 : i32, i32
  }
  func.func @transform_5(%arg0: i32) -> (i32, i32) {
    %c0_i32 = arith.constant 0 : i32
    %c0_i32_0 = arith.constant 0 : i32
    %c0_i32_1 = arith.constant 0 : i32
    return %c0_i32, %c0_i32_0 : i32, i32
  }
  func.func @transform_6(%arg0: i32) -> (i32, i32) {
    %c0_i32 = arith.constant 0 : i32
    %c0_i32_0 = arith.constant 0 : i32
    %c0_i32_1 = arith.constant 0 : i32
    return %c0_i32, %c0_i32_0 : i32, i32
  }
  func.func @transform_7(%arg0: i32) -> (i32, i32) {
    %c0_i32 = arith.constant 0 : i32
    %c0_i32_0 = arith.constant 0 : i32
    %c0_i32_1 = arith.constant 0 : i32
    return %c0_i32, %c0_i32_0 : i32, i32
  }
  func.func @transform_8(%arg0: i32) -> (i32, i32, i32) {
    %c0_i32 = arith.constant 0 : i32
    %c0_i32_0 = arith.constant 0 : i32
    %c0_i32_1 = arith.constant 0 : i32
    %c0_i32_2 = arith.constant 0 : i32
    return %c0_i32, %c0_i32_0, %c0_i32_1 : i32, i32, i32
  }
  func.func @transform_9(%arg0: i32) -> (i32, i32) {
    %c0_i32 = arith.constant 0 : i32
    %c0_i32_0 = arith.constant 0 : i32
    %c0_i32_1 = arith.constant 0 : i32
    return %c0_i32, %c0_i32_0 : i32, i32
  }
  func.func @transform_10(%arg0: i32) -> (i32, i32) {
    %c0_i32 = arith.constant 0 : i32
    %c0_i32_0 = arith.constant 0 : i32
    %c0_i32_1 = arith.constant 0 : i32
    return %c0_i32, %c0_i32_0 : i32, i32
  }
  func.func @transform_11(%arg0: i32) -> (i32, i32) {
    %c0_i32 = arith.constant 0 : i32
    %c0_i32_0 = arith.constant 0 : i32
    %c0_i32_1 = arith.constant 0 : i32
    return %c0_i32, %c0_i32_0 : i32, i32
  }
  func.func @transform_12(%arg0: i32) -> (i32, i32) {
    %c0_i32 = arith.constant 0 : i32
    %c0_i32_0 = arith.constant 0 : i32
    %c0_i32_1 = arith.constant 0 : i32
    return %c0_i32, %c0_i32_0 : i32, i32
  }
  func.func @transform_13(%arg0: i32) -> (i32, i32) {
    %c0_i32 = arith.constant 0 : i32
    %c0_i32_0 = arith.constant 0 : i32
    %c0_i32_1 = arith.constant 0 : i32
    return %c0_i32, %c0_i32_0 : i32, i32
  }
  func.func @transform_14(%arg0: i32) -> (i32, i32, i32) {
    %c0_i32 = arith.constant 0 : i32
    %c0_i32_0 = arith.constant 0 : i32
    %c0_i32_1 = arith.constant 0 : i32
    %c0_i32_2 = arith.constant 0 : i32
    return %c0_i32, %c0_i32_0, %c0_i32_1 : i32, i32, i32
  }
  func.func @transform_15(%arg0: i32) -> (i32, i32) {
    %c0_i32 = arith.constant 0 : i32
    %c0_i32_0 = arith.constant 0 : i32
    %c0_i32_1 = arith.constant 0 : i32
    return %c0_i32, %c0_i32_0 : i32, i32
  }
  func.func @transform_16(%arg0: i32) -> (i32, i32) {
    %c0_i32 = arith.constant 0 : i32
    %c0_i32_0 = arith.constant 0 : i32
    %c0_i32_1 = arith.constant 0 : i32
    return %c0_i32, %c0_i32_0 : i32, i32
  }
  func.func @transform_17(%arg0: i32) -> (i32, i32) {
    %c0_i32 = arith.constant 0 : i32
    %c0_i32_0 = arith.constant 0 : i32
    %c0_i32_1 = arith.constant 0 : i32
    return %c0_i32, %c0_i32_0 : i32, i32
  }
  func.func @transform_18(%arg0: i32) -> (i32, i32) {
    %c0_i32 = arith.constant 0 : i32
    %c0_i32_0 = arith.constant 0 : i32
    %c0_i32_1 = arith.constant 0 : i32
    return %c0_i32, %c0_i32_0 : i32, i32
  }
  func.func @transform_19(%arg0: i32) -> (i32, i32) {
    %c0_i32 = arith.constant 0 : i32
    %c0_i32_0 = arith.constant 0 : i32
    %c0_i32_1 = arith.constant 0 : i32
    return %c0_i32, %c0_i32_0 : i32, i32
  }
  func.func @transform_20(%arg0: i32) -> (i32, i32) {
    %c0_i32 = arith.constant 0 : i32
    %c0_i32_0 = arith.constant 0 : i32
    %c0_i32_1 = arith.constant 0 : i32
    return %c0_i32, %c0_i32_0 : i32, i32
  }
  func.func @transform_21(%arg0: i32) -> (i32, i32) {
    %c0_i32 = arith.constant 0 : i32
    %c0_i32_0 = arith.constant 0 : i32
    %c0_i32_1 = arith.constant 0 : i32
    return %c0_i32, %c0_i32_0 : i32, i32
  }
  func.func @transform_22(%arg0: i32) -> (i32, i32) {
    %c0_i32 = arith.constant 0 : i32
    %c0_i32_0 = arith.constant 0 : i32
    %c0_i32_1 = arith.constant 0 : i32
    return %c0_i32, %c0_i32_0 : i32, i32
  }
  func.func @transform_23(%arg0: i32) -> (i32, i32) {
    %c0_i32 = arith.constant 0 : i32
    %c0_i32_0 = arith.constant 0 : i32
    %c0_i32_1 = arith.constant 0 : i32
    return %c0_i32, %c0_i32_0 : i32, i32
  }
  func.func @transform_24(%arg0: i32) -> (i32, i32) {
    %c0_i32 = arith.constant 0 : i32
    %c0_i32_0 = arith.constant 0 : i32
    %c0_i32_1 = arith.constant 0 : i32
    return %c0_i32, %c0_i32_0 : i32, i32
  }
  func.func @transform_25(%arg0: i32) -> (i32, i32) {
    %c0_i32 = arith.constant 0 : i32
    %c0_i32_0 = arith.constant 0 : i32
    %c0_i32_1 = arith.constant 0 : i32
    return %c0_i32, %c0_i32_0 : i32, i32
  }
  func.func @transform_26(%arg0: i32) -> (i32, i32, i32) {
    %c0_i32 = arith.constant 0 : i32
    %c0_i32_0 = arith.constant 0 : i32
    %c0_i32_1 = arith.constant 0 : i32
    return %arg0, %c0_i32, %c0_i32_0 : i32, i32, i32
  }
  func.func @transform_27(%arg0: i32) -> (i32, i32, i32, i32) {
    %c0_i32 = arith.constant 0 : i32
    %c0_i32_0 = arith.constant 0 : i32
    %c0_i32_1 = arith.constant 0 : i32
    %c0_i32_2 = arith.constant 0 : i32
    return %arg0, %c0_i32, %c0_i32_0, %c0_i32_1 : i32, i32, i32, i32
  }
}

</mosaic_0001>

<llo_original>
// kernel: decoder_forward.5
$region0: #{decoder_forward.5}
  #allocation0 [shape = 'u32[]', space=smem, size = 0x4, offset = 0x4, fixed_abs, tag = 'smem constant byte address 0x4 - core index']
  #allocation1 [shape = 'u32[144,128]{1,0:T(1,128)}', space=vmem, size = 0x12000, scoped, tag = 'internal scratch']
  %s0 = inlined_call_operand.vmem [shape: f32[16,32], index: 0, kind: input, shape index: {}]
  %s1 = inlined_call_operand.vmem [shape: bf16[32,128], index: 1, kind: input, shape index: {}]
  %s2 = inlined_call_operand.vmem [shape: f32[1,128], index: 2, kind: input, shape index: {}]
  %s3 = inlined_call_operand.vmem [shape: f32[16,128], index: 3, kind: output, shape index: {}]
  %s4 = sld [smem:[#allocation0]]
  $region22: #{decoder_forward.5} parent=0
    _
  %s6 = ssub.s32 1, %s4
  %s7 = scalar_select 0, %s6, %s4
  // Predicated region
  $region2: #{decoder_forward.5} parent=0 // pred_check
    _
  $region3: #{decoder_forward.5} parent=0 // pred_check_branch
    %9 = sbr.rel (0) target = $region5
  $region4: #{decoder_forward.5} parent=0 // pred_region
    _
  $region5: #{decoder_forward.5} parent=0 // pred_fallthru
    _
  // Predicated region
  $region6: #{decoder_forward.5} parent=0 // pred_check
    _
  $region7: #{decoder_forward.5} parent=0 // pred_check_branch
    %11 = sbr.rel (0) target = $region9
  $region8: #{decoder_forward.5} parent=0 // pred_region
    _
  $region9: #{decoder_forward.5} parent=0 // pred_fallthru
    _
  // Predicated region
  $region10: #{decoder_forward.5} parent=0 // pred_check
    _
  $region11: #{decoder_forward.5} parent=0 // pred_check_branch
    %13 = sbr.rel (0) target = $region13
  $region12: #{decoder_forward.5} parent=0 // pred_region
    _
  $region13: #{decoder_forward.5} parent=0 // pred_fallthru
    _
  %v15 = vld [vmem:[%s0] sm:$0xff]
  %v16 = vld [vmem:[%s0 + $0x8] sm:$0xff]
  %v17 = vpack.c.bf16 %v16, %v15
  %v18 = vld [vmem:[%s1] sm:$0xf]
  %v19 = vld [vmem:[%s1 + $0x4] sm:$0xf]
  %v20 = vld [vmem:[%s1 + $0x8] sm:$0xf]
  %v21 = vld [vmem:[%s1 + $0xc] sm:$0xf]
  %v22 = vld [vmem:[%s2] sm:$0x1]
  %v24 = vlaneseq
  %v25 = vshrl.u32 %v24, 7
  %v26 = vsub.s32 0, %v25
  %v27 = vrot.slane %v22, %v26
  %v33 = vunpack.c.l.b16 %v18
  %v34 = vunpack.c.l.b16 %v19
  %v35 = vunpack.c.l.b16 %v20
  %v36 = vunpack.c.l.b16 %v21
  %v37 = vpack.c.b16 %v34, %v33
  %v38 = vpack.c.b16 %v36, %v35
  %vm41 = vcmask 261120
  %v43 = vsel %vm41, %v17, 0
  %45 = vmatprep.subr.bf16.mxu0 0
  %46 = vmatpush1.bf16.msra.mxu0 %v37
  %47 = vmatprep.subr.bf16.mxu0 0
  %48 = vmatpush1.bf16.msra.mxu0 %v38
  %49 = vmatprep.subr.bf16.mxu0 0
  %50 = vmatpush1.bf16.msra.mxu0 0
  %51 = vmatprep.subr.bf16.mxu0 0
  %52 = vmatpush1.bf16.msra.mxu0 0
  %53 = vmatprep.subr.bf16.mxu0 0
  %54 = vmatpush1.bf16.msra.mxu0 0
  %55 = vmatprep.subr.bf16.mxu0 0
  %56 = vmatpush1.bf16.msra.mxu0 0
  %57 = vmatprep.subr.bf16.mxu0 0
  %58 = vmatpush1.bf16.msra.mxu0 0
  %59 = vmatprep.subr.bf16.mxu0 0
  %60 = vmatpush1.bf16.msra.mxu0 0
  %61 = vmatprep.subr.bf16.mxu0 0
  %62 = vmatpush1.bf16.msra.mxu0 0
  %63 = vmatprep.subr.bf16.mxu0 0
  %64 = vmatpush1.bf16.msra.mxu0 0
  %65 = vmatprep.subr.bf16.mxu0 0
  %66 = vmatpush1.bf16.msra.mxu0 0
  %67 = vmatprep.subr.bf16.mxu0 0
  %68 = vmatpush1.bf16.msra.mxu0 0
  %69 = vmatprep.subr.bf16.mxu0 0
  %70 = vmatpush1.bf16.msra.mxu0 0
  %71 = vmatprep.subr.bf16.mxu0 0
  %72 = vmatpush1.bf16.msra.mxu0 0
  %73 = vmatprep.subr.bf16.mxu0 0
  %74 = vmatpush1.bf16.msra.mxu0 0
  %75 = vmatprep.subr.bf16.mxu0 0
  %76 = vmatpush1.bf16.msra.mxu0 0
  %77 = vmatprep.mubr.bf16.mxu0 0
  %78 = vmatmul.mubr.bf16.gmra.mrb[0].mxu0 %v43
  %v79 = vpop.f32.mrb[0].mxu0
  %v80 = vadd.f32 %v27, %v79
  %v81 = vpop.f32.mrb[0].mxu0
  %v82 = vpop.f32.mrb[0].mxu0
  %v83 = vadd.f32 %v27, %v82
  %v84 = vpop.f32.mrb[0].mxu0
  %85 = vdwg.mxu0
  %86 = vst [vmem:[%s3] sm:$0xff] %v80
  %87 = vst [vmem:[%s3 + $0x8] sm:$0xff] %v83
  // Predicated region
  $region14: #{decoder_forward.5} parent=0 // pred_check
    _
  $region15: #{decoder_forward.5} parent=0 // pred_check_branch
    %89 = sbr.rel (0) target = $region17
  $region16: #{decoder_forward.5} parent=0 // pred_region
    _
  $region17: #{decoder_forward.5} parent=0 // pred_fallthru
    _
  // Predicated region
  $region18: #{decoder_forward.5} parent=0 // pred_check
    _
  $region19: #{decoder_forward.5} parent=0 // pred_check_branch
    %91 = sbr.rel (0) target = $region21
  $region20: #{decoder_forward.5} parent=0 // pred_region
    _
  $region21: #{decoder_forward.5} parent=0 // pred_fallthru
    _

// kernel: decoder_forward.4
$region0: #{decoder_forward.4}
  #allocation0 [shape = 'u32[]', space=smem, size = 0x4, offset = 0x4, fixed_abs, tag = 'smem constant byte address 0x4 - core index']
  #allocation1 [shape = 'u32[144,128]{1,0:T(1,128)}', space=vmem, size = 0x12000, scoped, tag = 'internal scratch']
  %s0 = inlined_call_operand.vmem [shape: f32[2,8,32], index: 0, kind: input, shape index: {}]
  %s1 = inlined_call_operand.vmem [shape: f32[2,10,32], index: 1, kind: input, shape index: {}]
  %s2 = inlined_call_operand.vmem [shape: f32[2,8,8], index: 2, kind: input, shape index: {}]
  %s3 = inlined_call_operand.vmem [shape: f32[2,1,10], index: 3, kind: input, shape index: {}]
  %s4 = inlined_call_operand.vmem [shape: bf16[32,32], index: 4, kind: input, shape index: {}]
  %s5 = inlined_call_operand.vmem [shape: f32[1,32], index: 5, kind: input, shape index: {}]
  %s6 = inlined_call_operand.vmem [shape: bf16[32,64], index: 6, kind: input, shape index: {}]
  %s7 = inlined_call_operand.vmem [shape: f32[1,64], index: 7, kind: input, shape index: {}]
  %s8 = inlined_call_operand.vmem [shape: bf16[4,8,32], index: 8, kind: input, shape index: {}]
  %s9 = inlined_call_operand.vmem [shape: f32[1,32], index: 9, kind: input, shape index: {}]
  %s10 = inlined_call_operand.vmem [shape: bf16[32,32], index: 10, kind: input, shape index: {}]
  %s11 = inlined_call_operand.vmem [shape: f32[1,32], index: 11, kind: input, shape index: {}]
  %s12 = inlined_call_operand.vmem [shape: bf16[32,64], index: 12, kind: input, shape index: {}]
  %s13 = inlined_call_operand.vmem [shape: f32[1,64], index: 13, kind: input, shape index: {}]
  %s14 = inlined_call_operand.vmem [shape: bf16[4,8,32], index: 14, kind: input, shape index: {}]
  %s15 = inlined_call_operand.vmem [shape: f32[1,32], index: 15, kind: input, shape index: {}]
  %s16 = inlined_call_operand.vmem [shape: bf16[32,64], index: 16, kind: input, shape index: {}]
  %s17 = inlined_call_operand.vmem [shape: f32[1,64], index: 17, kind: input, shape index: {}]
  %s18 = inlined_call_operand.vmem [shape: bf16[64,32], index: 18, kind: input, shape index: {}]
  %s19 = inlined_call_operand.hbm [shape: f32[1,32], index: 19, kind: input, shape index: {}]
  %s20 = inlined_call_operand.hbm [shape: f32[1,32], index: 20, kind: input, shape index: {}]
  %s21 = inlined_call_operand.hbm [shape: f32[1,32], index: 21, kind: input, shape index: {}]
  %s22 = inlined_call_operand.hbm [shape: f32[1,32], index: 22, kind: input, shape index: {}]
  %s23 = inlined_call_operand.hbm [shape: f32[1,32], index: 23, kind: input, shape index: {}]
  %s24 = inlined_call_operand.hbm [shape: f32[1,32], index: 24, kind: input, shape index: {}]
  %s25 = inlined_call_operand.hbm [shape: f32[1,32], index: 25, kind: input, shape index: {}]
  %s26 = inlined_call_operand.vmem [shape: f32[2,8,32], index: 26, kind: output, shape index: {0}]
  %s27 = inlined_call_operand.hbm [shape: f32[2,4,8,10], index: 27, kind: output, shape index: {1}]
  %28 = xla_tuple %s26, %s27
  %s29 = sld [smem:[#allocation0]]
  $region173: #{decoder_forward.4} parent=0
    _
  %s31 = ssub.s32 1, %s29
  %s32 = scalar_select 0, %s31, %s29
  $region1: #{decoder_forward.4} parent=0
    #allocation2 [shape = 'u8[512]{0}', space=vmem, size = 0x400, scoped, tag = 'input window, operand 19, single buffered']
    #allocation3 [shape = 's32[2]{0}', space=sflag, size = 0x8, scoped, tag = 'scoped memory for decoder_forward.4']
    #allocation4 [shape = 's32[2]{0}', space=sflag, size = 0x8, scoped, tag = 'scoped memory for decoder_forward.4']
    #allocation5 [shape = 'u8[512]{0}', space=vmem, size = 0x400, scoped, tag = 'input window, operand 20, single buffered']
    #allocation6 [shape = 's32[1]{0}', space=sflag, size = 0x4, scoped, tag = 'scoped memory for decoder_forward.4']
    #allocation7 [shape = 'u8[512]{0}', space=vmem, size = 0x400, scoped, tag = 'input window, operand 21, single buffered']
    #allocation8 [shape = 'u8[512]{0}', space=vmem, size = 0x400, scoped, tag = 'input window, operand 22, single buffered']
    #allocation9 [shape = 's32[1]{0}', space=sflag, size = 0x4, scoped, tag = 'scoped memory for decoder_forward.4']
    #allocation10 [shape = 'u8[512]{0}', space=vmem, size = 0x400, scoped, tag = 'input window, operand 23, single buffered']
    #allocation11 [shape = 'u8[512]{0}', space=vmem, size = 0x400, scoped, tag = 'input window, operand 24, single buffered']
    #allocation12 [shape = 's32[1]{0}', space=sflag, size = 0x4, scoped, tag = 'scoped memory for decoder_forward.4']
    #allocation13 [shape = 'u8[512]{0}', space=vmem, size = 0x400, scoped, tag = 'input window, operand 25, single buffered']
    #allocation14 [shape = 'u8[32768]{0}', space=vmem, size = 0x8000, scoped, tag = 'output window, operand 1']
    %33 = vsyncpa [#allocation3], 0
    %34 = vsyncpa [#allocation6], 0
    %35 = vsyncpa [#allocation9], 0
    %36 = vsyncpa [#allocation12], 0
    %37 = vsyncpa [#allocation4], 0
    %s38 = scalar_lea.sflag [#allocation4], 1
    %39 = vsyncpa %s38, 0
    loop: start=0, step=1, limit=4
    $region2: #{decoder_forward.4} parent=1 // loop_pre_header
      _
    $region3: #{decoder_forward.4} parent=1 // loop_header
      %s41 = sphi 0, %s45
      %p42 = scmp.ge.s32.totalorder %s41, 4
      %s51 = sphi 0, %s53
      %s54 = sphi 0, %s51
      %s55 = sphi 0, %s54
      %s71 = sphi 0, %s55
      %s77 = sphi 0, %s79
      %s80 = sphi 0, %s77
      %s81 = sphi 0, %s80
      %s97 = sphi 0, %s81
      %s103 = sphi 0, %s105
      %s106 = sphi 0, %s103
      %s107 = sphi 0, %s106
      %s123 = sphi 0, %s107
      %s129 = sphi 0, %s131
      %s132 = sphi 0, %s129
      %s133 = sphi 0, %s132
      %s149 = sphi 0, %s133
      %s153 = sphi 0, %s153
      %s155 = sphi 0, %s153
      %s156 = sphi 0, %s155
      %s170 = sphi 0, %s156
      %s174 = sphi 0, %s174
      %s176 = sphi 0, %s174
      %s177 = sphi 0, %s176
      %s191 = sphi 0, %s177
      %s195 = sphi 0, %s195
      %s197 = sphi 0, %s195
      %s198 = sphi 0, %s197
      %s212 = sphi 0, %s198
      %s216 = sphi 0, %s216
      %s218 = sphi 0, %s216
      %s219 = sphi 0, %s218
      %s233 = sphi 0, %s219
      %s237 = sphi 0, %s237
      %s239 = sphi 0, %s237
      %s240 = sphi 0, %s239
      %s254 = sphi 0, %s240
      %s258 = sphi 0, %s258
      %s260 = sphi 0, %s258
      %s261 = sphi 0, %s260
      %s275 = sphi 0, %s261
      %s279 = sphi 0, %s279
      %s281 = sphi 0, %s279
      %s282 = sphi 0, %s281
      %s296 = sphi 0, %s282
      %s300 = sphi 0, %s300
      %s302 = sphi 0, %s300
      %s303 = sphi 0, %s302
      %s317 = sphi 0, %s303
      %s321 = sphi 0, %s321
      %s323 = sphi 0, %s321
      %s324 = sphi 0, %s323
      %s338 = sphi 0, %s324
      %s342 = sphi 0, %s342
      %s344 = sphi 0, %s342
      %s345 = sphi 0, %s344
      %s359 = sphi 0, %s345
      %s363 = sphi 0, %s363
      %s365 = sphi 0, %s363
      %s366 = sphi 0, %s365
      %s380 = sphi 0, %s366
      %s384 = sphi 0, %s384
      %s386 = sphi 0, %s384
      %s387 = sphi 0, %s386
      %s401 = sphi 0, %s387
      %s405 = sphi 0, %s405
      %s407 = sphi 0, %s405
      %s408 = sphi 0, %s407
      %s422 = sphi 0, %s408
      %s426 = sphi 0, %s426
      %s428 = sphi 0, %s426
      %s429 = sphi 0, %s428
      %s443 = sphi 0, %s429
      %s447 = sphi 0, %s447
      %s449 = sphi 0, %s447
      %s450 = sphi 0, %s449
      %s464 = sphi 0, %s450
      %s468 = sphi 0, %s468
      %s470 = sphi 0, %s468
      %s471 = sphi 0, %s470
      %s485 = sphi 0, %s471
      %s489 = sphi 0, %s489
      %s491 = sphi 0, %s489
      %s492 = sphi 0, %s491
      %s506 = sphi 0, %s492
      %s510 = sphi 0, %s510
      %s512 = sphi 0, %s510
      %s513 = sphi 0, %s512
      %s527 = sphi 0, %s513
      %s531 = sphi 0, %s531
      %s533 = sphi 0, %s531
      %s534 = sphi 0, %s533
      %s548 = sphi 0, %s534
      %s552 = sphi 0, %s552
      %s554 = sphi 0, %s552
      %s555 = sphi 0, %s554
      %s569 = sphi 0, %s555
      %s573 = sphi 0, %s573
      %s575 = sphi 0, %s573
      %s576 = sphi 0, %s575
      %s590 = sphi 0, %s576
      %s594 = sphi 0, %s594
      %s596 = sphi 0, %s594
      %s597 = sphi 0, %s596
      %s611 = sphi 0, %s597
      %s617 = sphi 0, %s619
      %s620 = sphi 0, %s617
      %s621 = sphi 0, %s620
      %s637 = sphi 0, %s621
      %s643 = sphi 0, %s645
      %s646 = sphi 0, %s643
      %s647 = sphi 0, %s646
      %s663 = sphi 0, %s647
    $region4: #{decoder_forward.4} parent=1 // loop_header_branch
      %44 = sbr.rel (%p42) target = $region8
    $region5: #{decoder_forward.4} parent=1 // loop_body
      %s46 = ssub.s32 %s41, 1
      %s47 = ssub.s32 %s41, 2
      %s48 = sadd.s32 %s41, 1
      %s49 = ssub.s32 %s41, %s48
      %p50 = scmp.eq.s32.totalorder %s49, 0
      %s52 = sadd.s32 %s51, 1
      %s53 = scalar_select %p50, %s51, %s52
      %p56 = pneg %p50
      %p57 = scmp.eq.s32.totalorder %s41, 1
      %p58 = por %p56, %p57
      %p59 = scmp.ne.s32.totalorder %s51, %s54
      %p60 = scmp.eq.s32.totalorder %s41, 0
      %p61 = por %p59, %p60
      %p62 = scmp.ne.s32.totalorder %s51, %s54
      %p63 = scmp.eq.s32.totalorder %s46, 1
      %p64 = por %p62, %p63
      %p65 = scmp.ne.s32.totalorder %s54, %s55
      %p66 = scmp.eq.s32.totalorder %s46, 0
      %p67 = por %p65, %p66
      %p68 = scmp.ne.s32.totalorder %s54, %s55
      %p69 = scmp.eq.s32.totalorder %s47, 1
      %p70 = por %p68, %p69
      %p72 = scmp.ne.s32.totalorder %s55, %s71
      %p73 = scmp.eq.s32.totalorder %s47, 0
      %p74 = por %p72, %p73
      %s75 = ssub.s32 %s41, %s48
      %p76 = scmp.eq.s32.totalorder %s75, 0
      %s78 = sadd.s32 %s77, 1
      %s79 = scalar_select %p76, %s77, %s78
      %p82 = pneg %p76
      %p83 = scmp.eq.s32.totalorder %s41, 1
      %p84 = por %p82, %p83
      %p85 = scmp.ne.s32.totalorder %s77, %s80
      %p86 = scmp.eq.s32.totalorder %s41, 0
      %p87 = por %p85, %p86
      %p88 = scmp.ne.s32.totalorder %s77, %s80
      %p89 = scmp.eq.s32.totalorder %s46, 1
      %p90 = por %p88, %p89
      %p91 = scmp.ne.s32.totalorder %s80, %s81
      %p92 = scmp.eq.s32.totalorder %s46, 0
      %p93 = por %p91, %p92
      %p94 = scmp.ne.s32.totalorder %s80, %s81
      %p95 = scmp.eq.s32.totalorder %s47, 1
      %p96 = por %p94, %p95
      %p98 = scmp.ne.s32.totalorder %s81, %s97
      %p99 = scmp.eq.s32.totalorder %s47, 0
      %p100 = por %p98, %p99
      %s101 = ssub.s32 %s41, %s48
      %p102 = scmp.eq.s32.totalorder %s101, 0
      %s104 = sadd.s32 %s103, 1
      %s105 = scalar_select %p102, %s103, %s104
      %p108 = pneg %p102
      %p109 = scmp.eq.s32.totalorder %s41, 1
      %p110 = por %p108, %p109
      %p111 = scmp.ne.s32.totalorder %s103, %s106
      %p112 = scmp.eq.s32.totalorder %s41, 0
      %p113 = por %p111, %p112
      %p114 = scmp.ne.s32.totalorder %s103, %s106
      %p115 = scmp.eq.s32.totalorder %s46, 1
      %p116 = por %p114, %p115
      %p117 = scmp.ne.s32.totalorder %s106, %s107
      %p118 = scmp.eq.s32.totalorder %s46, 0
      %p119 = por %p117, %p118
      %p120 = scmp.ne.s32.totalorder %s106, %s107
      %p121 = scmp.eq.s32.totalorder %s47, 1
      %p122 = por %p120, %p121
      %p124 = scmp.ne.s32.totalorder %s107, %s123
      %p125 = scmp.eq.s32.totalorder %s47, 0
      %p126 = por %p124, %p125
      %s127 = ssub.s32 %s41, %s48
      %p128 = scmp.eq.s32.totalorder %s127, 0
      %s130 = sadd.s32 %s129, 1
      %s131 = scalar_select %p128, %s129, %s130
      %p134 = pneg %p128
      %p135 = scmp.eq.s32.totalorder %s41, 1
      %p136 = por %p134, %p135
      %p137 = scmp.ne.s32.totalorder %s129, %s132
      %p138 = scmp.eq.s32.totalorder %s41, 0
      %p139 = por %p137, %p138
      %p140 = scmp.ne.s32.totalorder %s129, %s132
      %p141 = scmp.eq.s32.totalorder %s46, 1
      %p142 = por %p140, %p141
      %p143 = scmp.ne.s32.totalorder %s132, %s133
      %p144 = scmp.eq.s32.totalorder %s46, 0
      %p145 = por %p143, %p144
      %p146 = scmp.ne.s32.totalorder %s132, %s133
      %p147 = scmp.eq.s32.totalorder %s47, 1
      %p148 = por %p146, %p147
      %p150 = scmp.ne.s32.totalorder %s133, %s149
      %p151 = scmp.eq.s32.totalorder %s47, 0
      %p152 = por %p150, %p151
      %s154 = sadd.s32 %s153, 1
      %p157 = scmp.eq.s32.totalorder %s41, 1
      %p158 = scmp.ne.s32.totalorder %s153, %s155
      %p159 = scmp.eq.s32.totalorder %s41, 0
      %p160 = por %p158, %p159
      %p161 = scmp.ne.s32.totalorder %s153, %s155
      %p162 = scmp.eq.s32.totalorder %s46, 1
      %p163 = por %p161, %p162
      %p164 = scmp.ne.s32.totalorder %s155, %s156
      %p165 = scmp.eq.s32.totalorder %s46, 0
      %p166 = por %p164, %p165
      %p167 = scmp.ne.s32.totalorder %s155, %s156
      %p168 = scmp.eq.s32.totalorder %s47, 1
      %p169 = por %p167, %p168
      %p171 = scmp.ne.s32.totalorder %s156, %s170
      %p172 = scmp.eq.s32.totalorder %s47, 0
      %p173 = por %p171, %p172
      %s175 = sadd.s32 %s174, 1
      %p178 = scmp.eq.s32.totalorder %s41, 1
      %p179 = scmp.ne.s32.totalorder %s174, %s176
      %p180 = scmp.eq.s32.totalorder %s41, 0
      %p181 = por %p179, %p180
      %p182 = scmp.ne.s32.totalorder %s174, %s176
      %p183 = scmp.eq.s32.totalorder %s46, 1
      %p184 = por %p182, %p183
      %p185 = scmp.ne.s32.totalorder %s176, %s177
      %p186 = scmp.eq.s32.totalorder %s46, 0
      %p187 = por %p185, %p186
      %p188 = scmp.ne.s32.totalorder %s176, %s177
      %p189 = scmp.eq.s32.totalorder %s47, 1
      %p190 = por %p188, %p189
      %p192 = scmp.ne.s32.totalorder %s177, %s191
      %p193 = scmp.eq.s32.totalorder %s47, 0
      %p194 = por %p192, %p193
      %s196 = sadd.s32 %s195, 1
      %p199 = scmp.eq.s32.totalorder %s41, 1
      %p200 = scmp.ne.s32.totalorder %s195, %s197
      %p201 = scmp.eq.s32.totalorder %s41, 0
      %p202 = por %p200, %p201
      %p203 = scmp.ne.s32.totalorder %s195, %s197
      %p204 = scmp.eq.s32.totalorder %s46, 1
      %p205 = por %p203, %p204
      %p206 = scmp.ne.s32.totalorder %s197, %s198
      %p207 = scmp.eq.s32.totalorder %s46, 0
      %p208 = por %p206, %p207
      %p209 = scmp.ne.s32.totalorder %s197, %s198
      %p210 = scmp.eq.s32.totalorder %s47, 1
      %p211 = por %p209, %p210
      %p213 = scmp.ne.s32.totalorder %s198, %s212
      %p214 = scmp.eq.s32.totalorder %s47, 0
      %p215 = por %p213, %p214
      %s217 = sadd.s32 %s216, 1
      %p220 = scmp.eq.s32.totalorder %s41, 1
      %p221 = scmp.ne.s32.totalorder %s216, %s218
      %p222 = scmp.eq.s32.totalorder %s41, 0
      %p223 = por %p221, %p222
      %p224 = scmp.ne.s32.totalorder %s216, %s218
      %p225 = scmp.eq.s32.totalorder %s46, 1
      %p226 = por %p224, %p225
      %p227 = scmp.ne.s32.totalorder %s218, %s219
      %p228 = scmp.eq.s32.totalorder %s46, 0
      %p229 = por %p227, %p228
      %p230 = scmp.ne.s32.totalorder %s218, %s219
      %p231 = scmp.eq.s32.totalorder %s47, 1
      %p232 = por %p230, %p231
      %p234 = scmp.ne.s32.totalorder %s219, %s233
      %p235 = scmp.eq.s32.totalorder %s47, 0
      %p236 = por %p234, %p235
      %s238 = sadd.s32 %s237, 1
      %p241 = scmp.eq.s32.totalorder %s41, 1
      %p242 = scmp.ne.s32.totalorder %s237, %s239
      %p243 = scmp.eq.s32.totalorder %s41, 0
      %p244 = por %p242, %p243
      %p245 = scmp.ne.s32.totalorder %s237, %s239
      %p246 = scmp.eq.s32.totalorder %s46, 1
      %p247 = por %p245, %p246
      %p248 = scmp.ne.s32.totalorder %s239, %s240
      %p249 = scmp.eq.s32.totalorder %s46, 0
      %p250 = por %p248, %p249
      %p251 = scmp.ne.s32.totalorder %s239, %s240
      %p252 = scmp.eq.s32.totalorder %s47, 1
      %p253 = por %p251, %p252
      %p255 = scmp.ne.s32.totalorder %s240, %s254
      %p256 = scmp.eq.s32.totalorder %s47, 0
      %p257 = por %p255, %p256
      %s259 = sadd.s32 %s258, 1
      %p262 = scmp.eq.s32.totalorder %s41, 1
      %p263 = scmp.ne.s32.totalorder %s258, %s260
      %p264 = scmp.eq.s32.totalorder %s41, 0
      %p265 = por %p263, %p264
      %p266 = scmp.ne.s32.totalorder %s258, %s260
      %p267 = scmp.eq.s32.totalorder %s46, 1
      %p268 = por %p266, %p267
      %p269 = scmp.ne.s32.totalorder %s260, %s261
      %p270 = scmp.eq.s32.totalorder %s46, 0
      %p271 = por %p269, %p270
      %p272 = scmp.ne.s32.totalorder %s260, %s261
      %p273 = scmp.eq.s32.totalorder %s47, 1
      %p274 = por %p272, %p273
      %p276 = scmp.ne.s32.totalorder %s261, %s275
      %p277 = scmp.eq.s32.totalorder %s47, 0
      %p278 = por %p276, %p277
      %s280 = sadd.s32 %s279, 1
      %p283 = scmp.eq.s32.totalorder %s41, 1
      %p284 = scmp.ne.s32.totalorder %s279, %s281
      %p285 = scmp.eq.s32.totalorder %s41, 0
      %p286 = por %p284, %p285
      %p287 = scmp.ne.s32.totalorder %s279, %s281
      %p288 = scmp.eq.s32.totalorder %s46, 1
      %p289 = por %p287, %p288
      %p290 = scmp.ne.s32.totalorder %s281, %s282
      %p291 = scmp.eq.s32.totalorder %s46, 0
      %p292 = por %p290, %p291
      %p293 = scmp.ne.s32.totalorder %s281, %s282
      %p294 = scmp.eq.s32.totalorder %s47, 1
      %p295 = por %p293, %p294
      %p297 = scmp.ne.s32.totalorder %s282, %s296
      %p298 = scmp.eq.s32.totalorder %s47, 0
      %p299 = por %p297, %p298
      %s301 = sadd.s32 %s300, 1
      %p304 = scmp.eq.s32.totalorder %s41, 1
      %p305 = scmp.ne.s32.totalorder %s300, %s302
      %p306 = scmp.eq.s32.totalorder %s41, 0
      %p307 = por %p305, %p306
      %p308 = scmp.ne.s32.totalorder %s300, %s302
      %p309 = scmp.eq.s32.totalorder %s46, 1
      %p310 = por %p308, %p309
      %p311 = scmp.ne.s32.totalorder %s302, %s303
      %p312 = scmp.eq.s32.totalorder %s46, 0
      %p313 = por %p311, %p312
      %p314 = scmp.ne.s32.totalorder %s302, %s303
      %p315 = scmp.eq.s32.totalorder %s47, 1
      %p316 = por %p314, %p315
      %p318 = scmp.ne.s32.totalorder %s303, %s317
      %p319 = scmp.eq.s32.totalorder %s47, 0
      %p320 = por %p318, %p319
      %s322 = sadd.s32 %s321, 1
      %p325 = scmp.eq.s32.totalorder %s41, 1
      %p326 = scmp.ne.s32.totalorder %s321, %s323
      %p327 = scmp.eq.s32.totalorder %s41, 0
      %p328 = por %p326, %p327
      %p329 = scmp.ne.s32.totalorder %s321, %s323
      %p330 = scmp.eq.s32.totalorder %s46, 1
      %p331 = por %p329, %p330
      %p332 = scmp.ne.s32.totalorder %s323, %s324
      %p333 = scmp.eq.s32.totalorder %s46, 0
      %p334 = por %p332, %p333
      %p335 = scmp.ne.s32.totalorder %s323, %s324
      %p336 = scmp.eq.s32.totalorder %s47, 1
      %p337 = por %p335, %p336
      %p339 = scmp.ne.s32.totalorder %s324, %s338
      %p340 = scmp.eq.s32.totalorder %s47, 0
      %p341 = por %p339, %p340
      %s343 = sadd.s32 %s342, 1
      %p346 = scmp.eq.s32.totalorder %s41, 1
      %p347 = scmp.ne.s32.totalorder %s342, %s344
      %p348 = scmp.eq.s32.totalorder %s41, 0
      %p349 = por %p347, %p348
      %p350 = scmp.ne.s32.totalorder %s342, %s344
      %p351 = scmp.eq.s32.totalorder %s46, 1
      %p352 = por %p350, %p351
      %p353 = scmp.ne.s32.totalorder %s344, %s345
      %p354 = scmp.eq.s32.totalorder %s46, 0
      %p355 = por %p353, %p354
      %p356 = scmp.ne.s32.totalorder %s344, %s345
      %p357 = scmp.eq.s32.totalorder %s47, 1
      %p358 = por %p356, %p357
      %p360 = scmp.ne.s32.totalorder %s345, %s359
      %p361 = scmp.eq.s32.totalorder %s47, 0
      %p362 = por %p360, %p361
      %s364 = sadd.s32 %s363, 1
      %p367 = scmp.eq.s32.totalorder %s41, 1
      %p368 = scmp.ne.s32.totalorder %s363, %s365
      %p369 = scmp.eq.s32.totalorder %s41, 0
      %p370 = por %p368, %p369
      %p371 = scmp.ne.s32.totalorder %s363, %s365
      %p372 = scmp.eq.s32.totalorder %s46, 1
      %p373 = por %p371, %p372
      %p374 = scmp.ne.s32.totalorder %s365, %s366
      %p375 = scmp.eq.s32.totalorder %s46, 0
      %p376 = por %p374, %p375
      %p377 = scmp.ne.s32.totalorder %s365, %s366
      %p378 = scmp.eq.s32.totalorder %s47, 1
      %p379 = por %p377, %p378
      %p381 = scmp.ne.s32.totalorder %s366, %s380
      %p382 = scmp.eq.s32.totalorder %s47, 0
      %p383 = por %p381, %p382
      %s385 = sadd.s32 %s384, 1
      %p388 = scmp.eq.s32.totalorder %s41, 1
      %p389 = scmp.ne.s32.totalorder %s384, %s386
      %p390 = scmp.eq.s32.totalorder %s41, 0
      %p391 = por %p389, %p390
      %p392 = scmp.ne.s32.totalorder %s384, %s386
      %p393 = scmp.eq.s32.totalorder %s46, 1
      %p394 = por %p392, %p393
      %p395 = scmp.ne.s32.totalorder %s386, %s387
      %p396 = scmp.eq.s32.totalorder %s46, 0
      %p397 = por %p395, %p396
      %p398 = scmp.ne.s32.totalorder %s386, %s387
      %p399 = scmp.eq.s32.totalorder %s47, 1
      %p400 = por %p398, %p399
      %p402 = scmp.ne.s32.totalorder %s387, %s401
      %p403 = scmp.eq.s32.totalorder %s47, 0
      %p404 = por %p402, %p403
      %s406 = sadd.s32 %s405, 1
      %p409 = scmp.eq.s32.totalorder %s41, 1
      %p410 = scmp.ne.s32.totalorder %s405, %s407
      %p411 = scmp.eq.s32.totalorder %s41, 0
      %p412 = por %p410, %p411
      %p413 = scmp.ne.s32.totalorder %s405, %s407
      %p414 = scmp.eq.s32.totalorder %s46, 1
      %p415 = por %p413, %p414
      %p416 = scmp.ne.s32.totalorder %s407, %s408
      %p417 = scmp.eq.s32.totalorder %s46, 0
      %p418 = por %p416, %p417
      %p419 = scmp.ne.s32.totalorder %s407, %s408
      %p420 = scmp.eq.s32.totalorder %s47, 1
      %p421 = por %p419, %p420
      %p423 = scmp.ne.s32.totalorder %s408, %s422
      %p424 = scmp.eq.s32.totalorder %s47, 0
      %p425 = por %p423, %p424
      %s427 = sadd.s32 %s426, 1
      %p430 = scmp.eq.s32.totalorder %s41, 1
      %p431 = scmp.ne.s32.totalorder %s426, %s428
      %p432 = scmp.eq.s32.totalorder %s41, 0
      %p433 = por %p431, %p432
      %p434 = scmp.ne.s32.totalorder %s426, %s428
      %p435 = scmp.eq.s32.totalorder %s46, 1
      %p436 = por %p434, %p435
      %p437 = scmp.ne.s32.totalorder %s428, %s429
      %p438 = scmp.eq.s32.totalorder %s46, 0
      %p439 = por %p437, %p438
      %p440 = scmp.ne.s32.totalorder %s428, %s429
      %p441 = scmp.eq.s32.totalorder %s47, 1
      %p442 = por %p440, %p441
      %p444 = scmp.ne.s32.totalorder %s429, %s443
      %p445 = scmp.eq.s32.totalorder %s47, 0
      %p446 = por %p444, %p445
      %s448 = sadd.s32 %s447, 1
      %p451 = scmp.eq.s32.totalorder %s41, 1
      %p452 = scmp.ne.s32.totalorder %s447, %s449
      %p453 = scmp.eq.s32.totalorder %s41, 0
      %p454 = por %p452, %p453
      %p455 = scmp.ne.s32.totalorder %s447, %s449
      %p456 = scmp.eq.s32.totalorder %s46, 1
      %p457 = por %p455, %p456
      %p458 = scmp.ne.s32.totalorder %s449, %s450
      %p459 = scmp.eq.s32.totalorder %s46, 0
      %p460 = por %p458, %p459
      %p461 = scmp.ne.s32.totalorder %s449, %s450
      %p462 = scmp.eq.s32.totalorder %s47, 1
      %p463 = por %p461, %p462
      %p465 = scmp.ne.s32.totalorder %s450, %s464
      %p466 = scmp.eq.s32.totalorder %s47, 0
      %p467 = por %p465, %p466
      %s469 = sadd.s32 %s468, 1
      %p472 = scmp.eq.s32.totalorder %s41, 1
      %p473 = scmp.ne.s32.totalorder %s468, %s470
      %p474 = scmp.eq.s32.totalorder %s41, 0
      %p475 = por %p473, %p474
      %p476 = scmp.ne.s32.totalorder %s468, %s470
      %p477 = scmp.eq.s32.totalorder %s46, 1
      %p478 = por %p476, %p477
      %p479 = scmp.ne.s32.totalorder %s470, %s471
      %p480 = scmp.eq.s32.totalorder %s46, 0
      %p481 = por %p479, %p480
      %p482 = scmp.ne.s32.totalorder %s470, %s471
      %p483 = scmp.eq.s32.totalorder %s47, 1
      %p484 = por %p482, %p483
      %p486 = scmp.ne.s32.totalorder %s471, %s485
      %p487 = scmp.eq.s32.totalorder %s47, 0
      %p488 = por %p486, %p487
      %s490 = sadd.s32 %s489, 1
      %p493 = scmp.eq.s32.totalorder %s41, 1
      %p494 = scmp.ne.s32.totalorder %s489, %s491
      %p495 = scmp.eq.s32.totalorder %s41, 0
      %p496 = por %p494, %p495
      %p497 = scmp.ne.s32.totalorder %s489, %s491
      %p498 = scmp.eq.s32.totalorder %s46, 1
      %p499 = por %p497, %p498
      %p500 = scmp.ne.s32.totalorder %s491, %s492
      %p501 = scmp.eq.s32.totalorder %s46, 0
      %p502 = por %p500, %p501
      %p503 = scmp.ne.s32.totalorder %s491, %s492
      %p504 = scmp.eq.s32.totalorder %s47, 1
      %p505 = por %p503, %p504
      %p507 = scmp.ne.s32.totalorder %s492, %s506
      %p508 = scmp.eq.s32.totalorder %s47, 0
      %p509 = por %p507, %p508
      %s511 = sadd.s32 %s510, 1
      %p514 = scmp.eq.s32.totalorder %s41, 1
      %p515 = scmp.ne.s32.totalorder %s510, %s512
      %p516 = scmp.eq.s32.totalorder %s41, 0
      %p517 = por %p515, %p516
      %p518 = scmp.ne.s32.totalorder %s510, %s512
      %p519 = scmp.eq.s32.totalorder %s46, 1
      %p520 = por %p518, %p519
      %p521 = scmp.ne.s32.totalorder %s512, %s513
      %p522 = scmp.eq.s32.totalorder %s46, 0
      %p523 = por %p521, %p522
      %p524 = scmp.ne.s32.totalorder %s512, %s513
      %p525 = scmp.eq.s32.totalorder %s47, 1
      %p526 = por %p524, %p525
      %p528 = scmp.ne.s32.totalorder %s513, %s527
      %p529 = scmp.eq.s32.totalorder %s47, 0
      %p530 = por %p528, %p529
      %s532 = sadd.s32 %s531, 1
      %p535 = scmp.eq.s32.totalorder %s41, 1
      %p536 = scmp.ne.s32.totalorder %s531, %s533
      %p537 = scmp.eq.s32.totalorder %s41, 0
      %p538 = por %p536, %p537
      %p539 = scmp.ne.s32.totalorder %s531, %s533
      %p540 = scmp.eq.s32.totalorder %s46, 1
      %p541 = por %p539, %p540
      %p542 = scmp.ne.s32.totalorder %s533, %s534
      %p543 = scmp.eq.s32.totalorder %s46, 0
      %p544 = por %p542, %p543
      %p545 = scmp.ne.s32.totalorder %s533, %s534
      %p546 = scmp.eq.s32.totalorder %s47, 1
      %p547 = por %p545, %p546
      %p549 = scmp.ne.s32.totalorder %s534, %s548
      %p550 = scmp.eq.s32.totalorder %s47, 0
      %p551 = por %p549, %p550
      %s553 = sadd.s32 %s552, 1
      %p556 = scmp.eq.s32.totalorder %s41, 1
      %p557 = scmp.ne.s32.totalorder %s552, %s554
      %p558 = scmp.eq.s32.totalorder %s41, 0
      %p559 = por %p557, %p558
      %p560 = scmp.ne.s32.totalorder %s552, %s554
      %p561 = scmp.eq.s32.totalorder %s46, 1
      %p562 = por %p560, %p561
      %p563 = scmp.ne.s32.totalorder %s554, %s555
      %p564 = scmp.eq.s32.totalorder %s46, 0
      %p565 = por %p563, %p564
      %p566 = scmp.ne.s32.totalorder %s554, %s555
      %p567 = scmp.eq.s32.totalorder %s47, 1
      %p568 = por %p566, %p567
      %p570 = scmp.ne.s32.totalorder %s555, %s569
      %p571 = scmp.eq.s32.totalorder %s47, 0
      %p572 = por %p570, %p571
      %s574 = sadd.s32 %s573, 1
      %p577 = scmp.eq.s32.totalorder %s41, 1
      %p578 = scmp.ne.s32.totalorder %s573, %s575
      %p579 = scmp.eq.s32.totalorder %s41, 0
      %p580 = por %p578, %p579
      %p581 = scmp.ne.s32.totalorder %s573, %s575
      %p582 = scmp.eq.s32.totalorder %s46, 1
      %p583 = por %p581, %p582
      %p584 = scmp.ne.s32.totalorder %s575, %s576
      %p585 = scmp.eq.s32.totalorder %s46, 0
      %p586 = por %p584, %p585
      %p587 = scmp.ne.s32.totalorder %s575, %s576
      %p588 = scmp.eq.s32.totalorder %s47, 1
      %p589 = por %p587, %p588
      %p591 = scmp.ne.s32.totalorder %s576, %s590
      %p592 = scmp.eq.s32.totalorder %s47, 0
      %p593 = por %p591, %p592
      %s595 = sadd.s32 %s594, 1
      %p598 = scmp.eq.s32.totalorder %s41, 1
      %p599 = scmp.ne.s32.totalorder %s594, %s596
      %p600 = scmp.eq.s32.totalorder %s41, 0
      %p601 = por %p599, %p600
      %p602 = scmp.ne.s32.totalorder %s594, %s596
      %p603 = scmp.eq.s32.totalorder %s46, 1
      %p604 = por %p602, %p603
      %p605 = scmp.ne.s32.totalorder %s596, %s597
      %p606 = scmp.eq.s32.totalorder %s46, 0
      %p607 = por %p605, %p606
      %p608 = scmp.ne.s32.totalorder %s596, %s597
      %p609 = scmp.eq.s32.totalorder %s47, 1
      %p610 = por %p608, %p609
      %p612 = scmp.ne.s32.totalorder %s597, %s611
      %p613 = scmp.eq.s32.totalorder %s47, 0
      %p614 = por %p612, %p613
      %s615 = ssub.s32 %s41, %s48
      %p616 = scmp.eq.s32.totalorder %s615, 0
      %s618 = sadd.s32 %s617, 1
      %s619 = scalar_select %p616, %s617, %s618
      %p622 = pneg %p616
      %p623 = scmp.eq.s32.totalorder %s41, 1
      %p624 = por %p622, %p623
      %p625 = scmp.ne.s32.totalorder %s617, %s620
      %p626 = scmp.eq.s32.totalorder %s41, 0
      %p627 = por %p625, %p626
      %p628 = scmp.ne.s32.totalorder %s617, %s620
      %p629 = scmp.eq.s32.totalorder %s46, 1
      %p630 = por %p628, %p629
      %p631 = scmp.ne.s32.totalorder %s620, %s621
      %p632 = scmp.eq.s32.totalorder %s46, 0
      %p633 = por %p631, %p632
      %p634 = scmp.ne.s32.totalorder %s620, %s621
      %p635 = scmp.eq.s32.totalorder %s47, 1
      %p636 = por %p634, %p635
      %p638 = scmp.ne.s32.totalorder %s621, %s637
      %p639 = scmp.eq.s32.totalorder %s47, 0
      %p640 = por %p638, %p639
      %s641 = ssub.s32 %s41, %s48
      %p642 = scmp.eq.s32.totalorder %s641, 0
      %s644 = sadd.s32 %s643, 1
      %s645 = scalar_select %p642, %s643, %s644
      %p648 = pneg %p642
      %p649 = scmp.eq.s32.totalorder %s41, 1
      %p650 = por %p648, %p649
      %p651 = scmp.ne.s32.totalorder %s643, %s646
      %p652 = scmp.eq.s32.totalorder %s41, 0
      %p653 = por %p651, %p652
      %p654 = scmp.ne.s32.totalorder %s643, %s646
      %p655 = scmp.eq.s32.totalorder %s46, 1
      %p656 = por %p654, %p655
      %p657 = scmp.ne.s32.totalorder %s646, %s647
      %p658 = scmp.eq.s32.totalorder %s46, 0
      %p659 = por %p657, %p658
      %p660 = scmp.ne.s32.totalorder %s646, %s647
      %p661 = scmp.eq.s32.totalorder %s47, 1
      %p662 = por %p660, %p661
      %p664 = scmp.ne.s32.totalorder %s647, %s663
      %p665 = scmp.eq.s32.totalorder %s47, 0
      %p666 = por %p664, %p665
      %p667 = scmp.le.s32.totalorder 1, %s41
      %p668 = scmp.lt.s32.totalorder %s41, 3
      %p669 = pnand %p667, %p668
      %p670 = pneg %p669
      // Predicated region
      $region9: #{decoder_forward.4} parent=5 // pred_check
        _
      $region10: #{decoder_forward.4} parent=5 // pred_check_branch
        %672 = sbr.rel (%p669) target = $region12
      $region11: #{decoder_forward.4} parent=5 // pred_region
        %s673 = ssub.s32 %s41, 1
        // Predicated region
        $region13: #{decoder_forward.4} parent=11 // pred_check
          %p674 = pneg %p166
        $region14: #{decoder_forward.4} parent=11 // pred_check_branch
          %676 = sbr.rel (%p674) target = $region16
        $region15: #{decoder_forward.4} parent=11 // pred_region
          _
        $region16: #{decoder_forward.4} parent=11 // pred_fallthru
          _
        // Predicated region
        $region17: #{decoder_forward.4} parent=11 // pred_check
          %p677 = pneg %p187
        $region18: #{decoder_forward.4} parent=11 // pred_check_branch
          %679 = sbr.rel (%p677) target = $region20
        $region19: #{decoder_forward.4} parent=11 // pred_region
          _
        $region20: #{decoder_forward.4} parent=11 // pred_fallthru
          _
        // Predicated region
        $region21: #{decoder_forward.4} parent=11 // pred_check
          %p680 = pneg %p208
        $region22: #{decoder_forward.4} parent=11 // pred_check_branch
          %682 = sbr.rel (%p680) target = $region24
        $region23: #{decoder_forward.4} parent=11 // pred_region
          _
        $region24: #{decoder_forward.4} parent=11 // pred_fallthru
          _
        // Predicated region
        $region25: #{decoder_forward.4} parent=11 // pred_check
          %p683 = pneg %p229
        $region26: #{decoder_forward.4} parent=11 // pred_check_branch
          %685 = sbr.rel (%p683) target = $region28
        $region27: #{decoder_forward.4} parent=11 // pred_region
          _
        $region28: #{decoder_forward.4} parent=11 // pred_fallthru
          _
        // Predicated region
        $region29: #{decoder_forward.4} parent=11 // pred_check
          %p686 = pneg %p250
        $region30: #{decoder_forward.4} parent=11 // pred_check_branch
          %688 = sbr.rel (%p686) target = $region32
        $region31: #{decoder_forward.4} parent=11 // pred_region
          _
        $region32: #{decoder_forward.4} parent=11 // pred_fallthru
          _
        // Predicated region
        $region33: #{decoder_forward.4} parent=11 // pred_check
          %p689 = pneg %p271
        $region34: #{decoder_forward.4} parent=11 // pred_check_branch
          %691 = sbr.rel (%p689) target = $region36
        $region35: #{decoder_forward.4} parent=11 // pred_region
          _
        $region36: #{decoder_forward.4} parent=11 // pred_fallthru
          _
        // Predicated region
        $region37: #{decoder_forward.4} parent=11 // pred_check
          %p692 = pneg %p292
        $region38: #{decoder_forward.4} parent=11 // pred_check_branch
          %694 = sbr.rel (%p692) target = $region40
        $region39: #{decoder_forward.4} parent=11 // pred_region
          _
        $region40: #{decoder_forward.4} parent=11 // pred_fallthru
          _
        // Predicated region
        $region41: #{decoder_forward.4} parent=11 // pred_check
          %p695 = pneg %p313
        $region42: #{decoder_forward.4} parent=11 // pred_check_branch
          %697 = sbr.rel (%p695) target = $region44
        $region43: #{decoder_forward.4} parent=11 // pred_region
          _
        $region44: #{decoder_forward.4} parent=11 // pred_fallthru
          _
        // Predicated region
        $region45: #{decoder_forward.4} parent=11 // pred_check
          %p698 = pneg %p334
        $region46: #{decoder_forward.4} parent=11 // pred_check_branch
          %700 = sbr.rel (%p698) target = $region48
        $region47: #{decoder_forward.4} parent=11 // pred_region
          _
        $region48: #{decoder_forward.4} parent=11 // pred_fallthru
          _
        // Predicated region
        $region49: #{decoder_forward.4} parent=11 // pred_check
          %p701 = pneg %p355
        $region50: #{decoder_forward.4} parent=11 // pred_check_branch
          %703 = sbr.rel (%p701) target = $region52
        $region51: #{decoder_forward.4} parent=11 // pred_region
          _
        $region52: #{decoder_forward.4} parent=11 // pred_fallthru
          _
        // Predicated region
        $region53: #{decoder_forward.4} parent=11 // pred_check
          %p704 = pneg %p376
        $region54: #{decoder_forward.4} parent=11 // pred_check_branch
          %706 = sbr.rel (%p704) target = $region56
        $region55: #{decoder_forward.4} parent=11 // pred_region
          _
        $region56: #{decoder_forward.4} parent=11 // pred_fallthru
          _
        // Predicated region
        $region57: #{decoder_forward.4} parent=11 // pred_check
          %p707 = pneg %p397
        $region58: #{decoder_forward.4} parent=11 // pred_check_branch
          %709 = sbr.rel (%p707) target = $region60
        $region59: #{decoder_forward.4} parent=11 // pred_region
          _
        $region60: #{decoder_forward.4} parent=11 // pred_fallthru
          _
        // Predicated region
        $region61: #{decoder_forward.4} parent=11 // pred_check
          %p710 = pneg %p418
        $region62: #{decoder_forward.4} parent=11 // pred_check_branch
          %712 = sbr.rel (%p710) target = $region64
        $region63: #{decoder_forward.4} parent=11 // pred_region
          _
        $region64: #{decoder_forward.4} parent=11 // pred_fallthru
          _
        // Predicated region
        $region65: #{decoder_forward.4} parent=11 // pred_check
          %p713 = pneg %p439
        $region66: #{decoder_forward.4} parent=11 // pred_check_branch
          %715 = sbr.rel (%p713) target = $region68
        $region67: #{decoder_forward.4} parent=11 // pred_region
          _
        $region68: #{decoder_forward.4} parent=11 // pred_fallthru
          _
        // Predicated region
        $region69: #{decoder_forward.4} parent=11 // pred_check
          %p716 = pneg %p460
        $region70: #{decoder_forward.4} parent=11 // pred_check_branch
          %718 = sbr.rel (%p716) target = $region72
        $region71: #{decoder_forward.4} parent=11 // pred_region
          _
        $region72: #{decoder_forward.4} parent=11 // pred_fallthru
          _
        // Predicated region
        $region73: #{decoder_forward.4} parent=11 // pred_check
          %p719 = pneg %p481
        $region74: #{decoder_forward.4} parent=11 // pred_check_branch
          %721 = sbr.rel (%p719) target = $region76
        $region75: #{decoder_forward.4} parent=11 // pred_region
          %s723 = ssub.s32 16, 16
          %724 = vsyncadd [#allocation3], %s723
          %s726 = sshll.u32 [#allocation2], 4
          %s727 = int_to_ptr.vmem [resolvable:$true] %s726
          %729 = dma.hbm_to_vmem [thread:$0]  %s19, 16, %s727, [#allocation3]
        $region76: #{decoder_forward.4} parent=11 // pred_fallthru
          _
        // Predicated region
        $region77: #{decoder_forward.4} parent=11 // pred_check
          %p730 = pneg %p502
        $region78: #{decoder_forward.4} parent=11 // pred_check_branch
          %732 = sbr.rel (%p730) target = $region80
        $region79: #{decoder_forward.4} parent=11 // pred_region
          %s734 = ssub.s32 16, 16
          %735 = vsyncadd [#allocation6], %s734
          %s737 = sshll.u32 [#allocation5], 4
          %s738 = int_to_ptr.vmem [resolvable:$true] %s737
          %740 = dma.hbm_to_vmem [thread:$0]  %s20, 16, %s738, [#allocation6]
        $region80: #{decoder_forward.4} parent=11 // pred_fallthru
          _
        // Predicated region
        $region81: #{decoder_forward.4} parent=11 // pred_check
          %p741 = pneg %p523
        $region82: #{decoder_forward.4} parent=11 // pred_check_branch
          %743 = sbr.rel (%p741) target = $region84
        $region83: #{decoder_forward.4} parent=11 // pred_region
          %s745 = ssub.s32 16, 16
          %746 = vsyncadd [#allocation6], %s745
          %s748 = sshll.u32 [#allocation7], 4
          %s749 = int_to_ptr.vmem [resolvable:$true] %s748
          %751 = dma.hbm_to_vmem [thread:$0]  %s21, 16, %s749, [#allocation6]
        $region84: #{decoder_forward.4} parent=11 // pred_fallthru
          _
        // Predicated region
        $region85: #{decoder_forward.4} parent=11 // pred_check
          %p752 = pneg %p544
        $region86: #{decoder_forward.4} parent=11 // pred_check_branch
          %754 = sbr.rel (%p752) target = $region88
        $region87: #{decoder_forward.4} parent=11 // pred_region
          %s756 = ssub.s32 16, 16
          %757 = vsyncadd [#allocation9], %s756
          %s759 = sshll.u32 [#allocation8], 4
          %s760 = int_to_ptr.vmem [resolvable:$true] %s759
          %762 = dma.hbm_to_vmem [thread:$0]  %s22, 16, %s760, [#allocation9]
        $region88: #{decoder_forward.4} parent=11 // pred_fallthru
          _
        // Predicated region
        $region89: #{decoder_forward.4} parent=11 // pred_check
          %p763 = pneg %p565
        $region90: #{decoder_forward.4} parent=11 // pred_check_branch
          %765 = sbr.rel (%p763) target = $region92
        $region91: #{decoder_forward.4} parent=11 // pred_region
          %s767 = ssub.s32 16, 16
          %768 = vsyncadd [#allocation9], %s767
          %s770 = sshll.u32 [#allocation10], 4
          %s771 = int_to_ptr.vmem [resolvable:$true] %s770
          %773 = dma.hbm_to_vmem [thread:$0]  %s23, 16, %s771, [#allocation9]
        $region92: #{decoder_forward.4} parent=11 // pred_fallthru
          _
        // Predicated region
        $region93: #{decoder_forward.4} parent=11 // pred_check
          %p774 = pneg %p586
        $region94: #{decoder_forward.4} parent=11 // pred_check_branch
          %776 = sbr.rel (%p774) target = $region96
        $region95: #{decoder_forward.4} parent=11 // pred_region
          %s778 = ssub.s32 16, 16
          %779 = vsyncadd [#allocation12], %s778
          %s781 = sshll.u32 [#allocation11], 4
          %s782 = int_to_ptr.vmem [resolvable:$true] %s781
          %784 = dma.hbm_to_vmem [thread:$0]  %s24, 16, %s782, [#allocation12]
        $region96: #{decoder_forward.4} parent=11 // pred_fallthru
          _
        // Predicated region
        $region97: #{decoder_forward.4} parent=11 // pred_check
          %p785 = pneg %p607
        $region98: #{decoder_forward.4} parent=11 // pred_check_branch
          %787 = sbr.rel (%p785) target = $region100
        $region99: #{decoder_forward.4} parent=11 // pred_region
          %s789 = ssub.s32 16, 16
          %790 = vsyncadd [#allocation12], %s789
          %s792 = sshll.u32 [#allocation13], 4
          %s793 = int_to_ptr.vmem [resolvable:$true] %s792
          %795 = dma.hbm_to_vmem [thread:$0]  %s25, 16, %s793, [#allocation12]
        $region100: #{decoder_forward.4} parent=11 // pred_fallthru
          _
      $region12: #{decoder_forward.4} parent=5 // pred_fallthru
        _
      %p796 = scmp.lt.s32.totalorder %s41, 2
      // Predicated region
      $region101: #{decoder_forward.4} parent=5 // pred_check
        %p797 = pneg %p796
      $region102: #{decoder_forward.4} parent=5 // pred_check_branch
        %799 = sbr.rel (%p797) target = $region104
      $region103: #{decoder_forward.4} parent=5 // pred_region
        // Predicated region
        $region105: #{decoder_forward.4} parent=103 // pred_check
          %p800 = pneg %p61
        $region106: #{decoder_forward.4} parent=103 // pred_check_branch
          %802 = sbr.rel (%p800) target = $region108
        $region107: #{decoder_forward.4} parent=103 // pred_region
          %p803 = scmp.lt.s32.totalorder %s41, 1
          %s804 = scalar_select %p803, %s41, 1
          %s805 = smul.addr %s804, 8
          %s806 = scalar_lea.vmem %s0, %s805
        $region108: #{decoder_forward.4} parent=103 // pred_fallthru
          _
        // Predicated region
        $region109: #{decoder_forward.4} parent=103 // pred_check
          %p807 = pneg %p87
        $region110: #{decoder_forward.4} parent=103 // pred_check_branch
          %809 = sbr.rel (%p807) target = $region112
        $region111: #{decoder_forward.4} parent=103 // pred_region
          %p810 = scmp.lt.s32.totalorder %s41, 1
          %s811 = scalar_select %p810, %s41, 1
          %s812 = smul.addr %s811, 2
          %s813 = smul.addr %s812, 8
          %s814 = scalar_lea.vmem %s1, %s813
        $region112: #{decoder_forward.4} parent=103 // pred_fallthru
          _
        // Predicated region
        $region113: #{decoder_forward.4} parent=103 // pred_check
          %p815 = pneg %p113
        $region114: #{decoder_forward.4} parent=103 // pred_check_branch
          %817 = sbr.rel (%p815) target = $region116
        $region115: #{decoder_forward.4} parent=103 // pred_region
          %p818 = scmp.lt.s32.totalorder %s41, 1
          %s819 = scalar_select %p818, %s41, 1
          %s820 = smul.addr %s819, 8
          %s821 = scalar_lea.vmem %s2, %s820
        $region116: #{decoder_forward.4} parent=103 // pred_fallthru
          _
        // Predicated region
        $region117: #{decoder_forward.4} parent=103 // pred_check
          %p822 = pneg %p139
        $region118: #{decoder_forward.4} parent=103 // pred_check_branch
          %824 = sbr.rel (%p822) target = $region120
        $region119: #{decoder_forward.4} parent=103 // pred_region
          %p825 = scmp.lt.s32.totalorder %s41, 1
          %s826 = scalar_select %p825, %s41, 1
          %s827 = scalar_lea.vmem %s3, %s826
        $region120: #{decoder_forward.4} parent=103 // pred_fallthru
          _
      $region104: #{decoder_forward.4} parent=5 // pred_fallthru
        _
      %p828 = scmp.le.s32.totalorder 1, %s41
      %p829 = scmp.lt.s32.totalorder %s41, 3
      %p830 = pnand %p828, %p829
      %p831 = pneg %p830
      // Predicated region
      $region121: #{decoder_forward.4} parent=5 // pred_check
        _
      $region122: #{decoder_forward.4} parent=5 // pred_check_branch
        %833 = sbr.rel (%p830) target = $region124
      $region123: #{decoder_forward.4} parent=5 // pred_region
        %s834 = ssub.s32 %s41, 1
        // Predicated region
        $region125: #{decoder_forward.4} parent=123 // pred_check
          %p835 = pneg %p481
        $region126: #{decoder_forward.4} parent=123 // pred_check_branch
          %837 = sbr.rel (%p835) target = $region128
        $region127: #{decoder_forward.4} parent=123 // pred_region
          %838 = dma.done [#allocation3], 16
        $region128: #{decoder_forward.4} parent=123 // pred_fallthru
          _
        // Predicated region
        $region129: #{decoder_forward.4} parent=123 // pred_check
          %p839 = pneg %p502
        $region130: #{decoder_forward.4} parent=123 // pred_check_branch
          %841 = sbr.rel (%p839) target = $region132
        $region131: #{decoder_forward.4} parent=123 // pred_region
          %842 = dma.done [#allocation6], 16
        $region132: #{decoder_forward.4} parent=123 // pred_fallthru
          _
        // Predicated region
        $region133: #{decoder_forward.4} parent=123 // pred_check
          %p843 = pneg %p523
        $region134: #{decoder_forward.4} parent=123 // pred_check_branch
          %845 = sbr.rel (%p843) target = $region136
        $region135: #{decoder_forward.4} parent=123 // pred_region
          %846 = dma.done [#allocation6], 16
        $region136: #{decoder_forward.4} parent=123 // pred_fallthru
          _
        // Predicated region
        $region137: #{decoder_forward.4} parent=123 // pred_check
          %p847 = pneg %p544
        $region138: #{decoder_forward.4} parent=123 // pred_check_branch
          %849 = sbr.rel (%p847) target = $region140
        $region139: #{decoder_forward.4} parent=123 // pred_region
          %850 = dma.done [#allocation9], 16
        $region140: #{decoder_forward.4} parent=123 // pred_fallthru
          _
        // Predicated region
        $region141: #{decoder_forward.4} parent=123 // pred_check
          %p851 = pneg %p565
        $region142: #{decoder_forward.4} parent=123 // pred_check_branch
          %853 = sbr.rel (%p851) target = $region144
        $region143: #{decoder_forward.4} parent=123 // pred_region
          %854 = dma.done [#allocation9], 16
        $region144: #{decoder_forward.4} parent=123 // pred_fallthru
          _
        // Predicated region
        $region145: #{decoder_forward.4} parent=123 // pred_check
          %p855 = pneg %p586
        $region146: #{decoder_forward.4} parent=123 // pred_check_branch
          %857 = sbr.rel (%p855) target = $region148
        $region147: #{decoder_forward.4} parent=123 // pred_region
          %858 = dma.done [#allocation12], 16
        $region148: #{decoder_forward.4} parent=123 // pred_fallthru
          _
        // Predicated region
        $region149: #{decoder_forward.4} parent=123 // pred_check
          %p859 = pneg %p607
        $region150: #{decoder_forward.4} parent=123 // pred_check_branch
          %861 = sbr.rel (%p859) target = $region152
        $region151: #{decoder_forward.4} parent=123 // pred_region
          %862 = dma.done [#allocation12], 16
        $region152: #{decoder_forward.4} parent=123 // pred_fallthru
          _
        %p863 = scmp.lt.s32.totalorder %s46, 1
        %s864 = scalar_select %p863, %s46, 1
        %s865 = smul.addr %s864, 8
        %s866 = scalar_lea.vmem %s0, %s865
        %p867 = pneg %p67
        %p868 = pneg %p64
        %p869 = scmp.lt.s32.totalorder %s46, 1
        %s870 = scalar_select %p869, %s46, 1
        %s871 = smul.addr %s870, 2
        %s872 = smul.addr %s871, 8
        %s873 = scalar_lea.vmem %s1, %s872
        %p874 = pneg %p93
        %p875 = pneg %p90
        %p876 = scmp.lt.s32.totalorder %s46, 1
        %s877 = scalar_select %p876, %s46, 1
        %s878 = smul.addr %s877, 8
        %s879 = scalar_lea.vmem %s2, %s878
        %p880 = pneg %p119
        %p881 = pneg %p116
        %p882 = scmp.lt.s32.totalorder %s46, 1
        %s883 = scalar_select %p882, %s46, 1
        %s884 = scalar_lea.vmem %s3, %s883
        %p885 = pneg %p145
        %p886 = pneg %p142
        %p887 = pneg %p166
        %p888 = pneg %p163
        %p889 = pneg %p187
        %p890 = pneg %p184
        %p891 = pneg %p208
        %p892 = pneg %p205
        %p893 = pneg %p229
        %p894 = pneg %p226
        %p895 = pneg %p250
        %p896 = pneg %p247
        %p897 = pneg %p271
        %p898 = pneg %p268
        %p899 = pneg %p292
        %p900 = pneg %p289
        %p901 = pneg %p313
        %p902 = pneg %p310
        %p903 = pneg %p334
        %p904 = pneg %p331
        %p905 = pneg %p355
        %p906 = pneg %p352
        %p907 = pneg %p376
        %p908 = pneg %p373
        %p909 = pneg %p397
        %p910 = pneg %p394
        %p911 = pneg %p418
        %p912 = pneg %p415
        %p913 = pneg %p439
        %p914 = pneg %p436
        %p915 = pneg %p460
        %p916 = pneg %p457
        %p917 = pneg %p481
        %p918 = pneg %p478
        %p919 = pneg %p502
        %p920 = pneg %p499
        %p921 = pneg %p523
        %p922 = pneg %p520
        %p923 = pneg %p544
        %p924 = pneg %p541
        %p925 = pneg %p565
        %p926 = pneg %p562
        %p927 = pneg %p586
        %p928 = pneg %p583
        %p929 = pneg %p607
        %p930 = pneg %p604
        %p931 = pneg %p633
        %p932 = pneg %p630
        %p933 = scmp.lt.s32.totalorder %s46, 1
        %s934 = scalar_select %p933, %s46, 1
        %s935 = smul.addr %s934, 8
        %s936 = scalar_lea.vmem %s26, %s935
        %p937 = pneg %p659
        %p938 = pneg %p656
        %s939 = sand.u32 %s646, 1
        %s940 = scalar_lea.sflag [#allocation4], %s939
        %s941 = sand.u32 %s646, 1
        %s942 = smul.addr %s941, 32
        %s943 = scalar_lea.vmem [#allocation14], %s942
        %p944 = scmp.lt.s32.totalorder %s46, 1
        %s945 = scalar_select %p944, %s46, 1
        %s946 = smul.addr %s945, 8
        %s947 = scalar_lea.vmem %s0, %s946
        %p948 = scmp.lt.s32.totalorder %s46, 1
        %s949 = scalar_select %p948, %s46, 1
        %s950 = smul.addr %s949, 2
        %s951 = smul.addr %s950, 8
        %s952 = scalar_lea.vmem %s1, %s951
        %p953 = scmp.lt.s32.totalorder %s46, 1
        %s954 = scalar_select %p953, %s46, 1
        %s955 = smul.addr %s954, 8
        %s956 = scalar_lea.vmem %s2, %s955
        %p957 = scmp.lt.s32.totalorder %s46, 1
        %s958 = scalar_select %p957, %s46, 1
        %s959 = scalar_lea.vmem %s3, %s958
        %p960 = scmp.lt.s32.totalorder %s46, 1
        %s961 = scalar_select %p960, %s46, 1
        %s962 = smul.addr %s961, 8
        %s963 = scalar_lea.vmem %s26, %s962
        %v965 = vld [vmem:[%s947] sm:$0xff]
        %v966 = vld [vmem:[%s952] sm:$0xff]
        %v967 = vld [vmem:[%s952 + $0x8] sm:$0x3]
        %v968 = vld [vmem:[%s956] sm:$0xff]
        %v969 = vld [vmem:[%s959] sm:$0x1]
        %v970 = vpack.c.bf16 %v965, %v965
        %v971 = vld [vmem:[%s4] sm:$0xf]
        %v972 = vld [vmem:[%s4 + $0x4] sm:$0xf]
        %v973 = vld [vmem:[%s4 + $0x8] sm:$0xf]
        %v974 = vld [vmem:[%s4 + $0xc] sm:$0xf]
        %v975 = vld [vmem:[%s5] sm:$0x1]
        %v977 = vlaneseq
        %v978 = vshrl.u32 %v977, 7
        %v979 = vsub.s32 0, %v978
        %v980 = vrot.slane %v975, %v979
        %v986 = vunpack.c.l.b16 %v971
        %v987 = vunpack.c.l.b16 %v972
        %v988 = vunpack.c.l.b16 %v973
        %v989 = vunpack.c.l.b16 %v974
        %v990 = vpack.c.b16 %v987, %v986
        %v991 = vpack.c.b16 %v989, %v988
        %vm994 = vcmask 261120
        %v996 = vsel %vm994, %v970, 0
        %998 = vmatprep.subr.bf16.mxu0 0
        %999 = vmatpush1.bf16.msra.mxu0 %v990
        %1000 = vmatprep.subr.bf16.mxu0 0
        %1001 = vmatpush1.bf16.msra.mxu0 %v991
        %1002 = vmatprep.subr.bf16.mxu0 0
        %1003 = vmatpush1.bf16.msra.mxu0 0
        %1004 = vmatprep.subr.bf16.mxu0 0
        %1005 = vmatpush1.bf16.msra.mxu0 0
        %1006 = vmatprep.subr.bf16.mxu0 0
        %1007 = vmatpush1.bf16.msra.mxu0 0
        %1008 = vmatprep.subr.bf16.mxu0 0
        %1009 = vmatpush1.bf16.msra.mxu0 0
        %1010 = vmatprep.subr.bf16.mxu0 0
        %1011 = vmatpush1.bf16.msra.mxu0 0
        %1012 = vmatprep.subr.bf16.mxu0 0
        %1013 = vmatpush1.bf16.msra.mxu0 0
        %1014 = vmatprep.subr.bf16.mxu0 0
        %1015 = vmatpush1.bf16.msra.mxu0 0
        %1016 = vmatprep.subr.bf16.mxu0 0
        %1017 = vmatpush1.bf16.msra.mxu0 0
        %1018 = vmatprep.subr.bf16.mxu0 0
        %1019 = vmatpush1.bf16.msra.mxu0 0
        %1020 = vmatprep.subr.bf16.mxu0 0
        %1021 = vmatpush1.bf16.msra.mxu0 0
        %1022 = vmatprep.subr.bf16.mxu0 0
        %1023 = vmatpush1.bf16.msra.mxu0 0
        %1024 = vmatprep.subr.bf16.mxu0 0
        %1025 = vmatpush1.bf16.msra.mxu0 0
        %1026 = vmatprep.subr.bf16.mxu0 0
        %1027 = vmatpush1.bf16.msra.mxu0 0
        %1028 = vmatprep.subr.bf16.mxu0 0
        %1029 = vmatpush1.bf16.msra.mxu0 0
        %1030 = vmatprep.mubr.bf16.mxu0 0
        %1031 = vmatmul.mubr.bf16.gmra.mrb[0].mxu0 %v996
        %v1032 = vpop.f32.mrb[0].mxu0
        %v1033 = vadd.f32 %v980, %v1032
        %v1034 = vpop.f32.mrb[0].mxu0
        %v1035 = vpop.f32.mrb[0].mxu0
        %v1036 = vpop.f32.mrb[0].mxu0
        %1037 = vdwg.mxu0
        %v1038 = vld [vmem:[%s6] sm:$0xf]
        %v1039 = vld [vmem:[%s6 + $0x4] sm:$0xf]
        %v1040 = vld [vmem:[%s6 + $0x8] sm:$0xf]
        %v1041 = vld [vmem:[%s6 + $0xc] sm:$0xf]
        %v1042 = vld [vmem:[%s7] sm:$0x1]
        %v1044 = vlaneseq
        %v1045 = vshrl.u32 %v1044, 7
        %v1046 = vsub.s32 0, %v1045
        %v1047 = vrot.slane %v1042, %v1046
        %v1053 = vunpack.c.l.b16 %v1038
        %v1054 = vunpack.c.l.b16 %v1039
        %v1055 = vunpack.c.l.b16 %v1040
        %v1056 = vunpack.c.l.b16 %v1041
        %v1057 = vpack.c.b16 %v1054, %v1053
        %v1058 = vpack.c.b16 %v1056, %v1055
        %1061 = vmatprep.subr.bf16.mxu0 0
        %1062 = vmatpush1.bf16.msra.mxu0 %v1057
        %1063 = vmatprep.subr.bf16.mxu0 0
        %1064 = vmatpush1.bf16.msra.mxu0 %v1058
        %1065 = vmatprep.subr.bf16.mxu0 0
        %1066 = vmatpush1.bf16.msra.mxu0 0
        %1067 = vmatprep.subr.bf16.mxu0 0
        %1068 = vmatpush1.bf16.msra.mxu0 0
        %1069 = vmatprep.subr.bf16.mxu0 0
        %1070 = vmatpush1.bf16.msra.mxu0 0
        %1071 = vmatprep.subr.bf16.mxu0 0
        %1072 = vmatpush1.bf16.msra.mxu0 0
        %1073 = vmatprep.subr.bf16.mxu0 0
        %1074 = vmatpush1.bf16.msra.mxu0 0
        %1075 = vmatprep.subr.bf16.mxu0 0
        %1076 = vmatpush1.bf16.msra.mxu0 0
        %1077 = vmatprep.subr.bf16.mxu0 0
        %1078 = vmatpush1.bf16.msra.mxu0 0
        %1079 = vmatprep.subr.bf16.mxu0 0
        %1080 = vmatpush1.bf16.msra.mxu0 0
        %1081 = vmatprep.subr.bf16.mxu0 0
        %1082 = vmatpush1.bf16.msra.mxu0 0
        %1083 = vmatprep.subr.bf16.mxu0 0
        %1084 = vmatpush1.bf16.msra.mxu0 0
        %1085 = vmatprep.subr.bf16.mxu0 0
        %1086 = vmatpush1.bf16.msra.mxu0 0
        %1087 = vmatprep.subr.bf16.mxu0 0
        %1088 = vmatpush1.bf16.msra.mxu0 0
        %1089 = vmatprep.subr.bf16.mxu0 0
        %1090 = vmatpush1.bf16.msra.mxu0 0
        %1091 = vmatprep.subr.bf16.mxu0 0
        %1092 = vmatpush1.bf16.msra.mxu0 0
        %1093 = vmatprep.mubr.bf16.mxu0 0
        %1094 = vmatmul.mubr.bf16.gmra.mrb[0].mxu0 %v996
        %v1095 = vpop.f32.mrb[0].mxu0
        %v1096 = vadd.f32 %v1047, %v1095
        %v1097 = vpop.f32.mrb[0].mxu0
        %v1098 = vpop.f32.mrb[0].mxu0
        %v1099 = vpop.f32.mrb[0].mxu0
        %1100 = vdwg.mxu0
        %v1101 = vpack.c.bf16 %v1033, %v1033
        %v1102 = vpack.c.bf16 %v1096, %v1096
        %vm1103 = vcmask 64512
        %v1105 = vsel %vm1103, %v1101, 0
        %v1108 = vsel %vm1103, %v1102, 0
        %1110 = vmatprep.subr.bf16.mxu0 0
        %1111 = vmatpush1.bf16.xpose.msra.mxu0 %v1108
        %1112 = vmatprep.subr.bf16.mxu0 0
        %1113 = vmatpush1.bf16.xpose.msra.mxu0 0
        %1114 = vmatprep.subr.bf16.mxu0 0
        %1115 = vmatpush1.bf16.xpose.msra.mxu0 0
        %1116 = vmatprep.subr.bf16.mxu0 0
        %1117 = vmatpush1.bf16.xpose.msra.mxu0 0
        %1118 = vmatprep.subr.bf16.mxu0 0
        %1119 = vmatpush1.bf16.xpose.msra.mxu0 0
        %1120 = vmatprep.subr.bf16.mxu0 0
        %1121 = vmatpush1.bf16.xpose.msra.mxu0 0
        %1122 = vmatprep.subr.bf16.mxu0 0
        %1123 = vmatpush1.bf16.xpose.msra.mxu0 0
        %1124 = vmatprep.subr.bf16.mxu0 0
        %1125 = vmatpush1.bf16.xpose.msra.mxu0 0
        %1126 = vmatprep.subr.bf16.mxu0 0
        %1127 = vmatpush1.bf16.xpose.msra.mxu0 0
        %1128 = vmatprep.subr.bf16.mxu0 0
        %1129 = vmatpush1.bf16.xpose.msra.mxu0 0
        %1130 = vmatprep.subr.bf16.mxu0 0
        %1131 = vmatpush1.bf16.xpose.msra.mxu0 0
        %1132 = vmatprep.subr.bf16.mxu0 0
        %1133 = vmatpush1.bf16.xpose.msra.mxu0 0
        %1134 = vmatprep.subr.bf16.mxu0 0
        %1135 = vmatpush1.bf16.xpose.msra.mxu0 0
        %1136 = vmatprep.subr.bf16.mxu0 0
        %1137 = vmatpush1.bf16.xpose.msra.mxu0 0
        %1138 = vmatprep.subr.bf16.mxu0 0
        %1139 = vmatpush1.bf16.xpose.msra.mxu0 0
        %1140 = vmatprep.subr.bf16.mxu0 0
        %1141 = vmatpush1.bf16.xpose.msra.mxu0 0
        %1142 = vmatprep.mubr.bf16.mxu0 0
        %1143 = vmatmul.mubr.bf16.gmra.mrb[0].mxu0 %v1105
        %v1144 = vpop.f32.mrb[0].mxu0
        %v1145 = vadd.f32 0.0, %v1144
        %v1146 = vpop.f32.mrb[0].mxu0
        %v1147 = vpop.f32.mrb[0].mxu0
        %v1148 = vpop.f32.mrb[0].mxu0
        %1149 = vdwg.mxu0
        %v1150 = vmul.f32 %v1145, 0.35355338
        %vm1151 = vcmp.gt.f32.partialorder %v968, 0.0
        %v1152 = vsel %vm1151, %v1150, -1e+10
        %v1153 = vsel %vm1103, %v1152, -inf
        %1154 = vmax.xlane.f32.xlu0 %v1153
        %v1155 = vpop.xlane.xlu0 %1154
        %v1156 = vsub.f32 %v1152, %v1155
        %v1157 = vmul.f32 %v1156, 1.442695
        %v1158 = vpow.pop %v1157
        %v1159 = vsel %vm1103, %v1158, 0.0
        %1160 = vadd.xlane.f32.xlu0 %v1159
        %v1161 = vpop.xlane.xlu0 %1160
        %v1162 = vrcp.pop %v1161
        %v1163 = vmul.f32 %v1158, %v1162
        %v1164 = vpack.c.bf16 %v1163, %v1163
        %1166 = vrot.lane.b32.xlu0 %v1102, 96
        %v1167 = vpop.permute.xlu0 %1166
        %v1169 = vsel %vm1103, %v1164, 0
        %vm1171 = vcmask 1043456
        %v1173 = vsel %vm1171, %v1167, 0
        %1175 = vmatprep.subr.bf16.mxu0 0
        %1176 = vmatpush1.bf16.msra.mxu0 %v1173
        %1177 = vmatprep.subr.bf16.mxu0 0
        %1178 = vmatpush1.bf16.msra.mxu0 0
        %1179 = vmatprep.subr.bf16.mxu0 0
        %1180 = vmatpush1.bf16.msra.mxu0 0
        %1181 = vmatprep.subr.bf16.mxu0 0
        %1182 = vmatpush1.bf16.msra.mxu0 0
        %1183 = vmatprep.subr.bf16.mxu0 0
        %1184 = vmatpush1.bf16.msra.mxu0 0
        %1185 = vmatprep.subr.bf16.mxu0 0
        %1186 = vmatpush1.bf16.msra.mxu0 0
        %1187 = vmatprep.subr.bf16.mxu0 0
        %1188 = vmatpush1.bf16.msra.mxu0 0
        %1189 = vmatprep.subr.bf16.mxu0 0
        %1190 = vmatpush1.bf16.msra.mxu0 0
        %1191 = vmatprep.subr.bf16.mxu0 0
        %1192 = vmatpush1.bf16.msra.mxu0 0
        %1193 = vmatprep.subr.bf16.mxu0 0
        %1194 = vmatpush1.bf16.msra.mxu0 0
        %1195 = vmatprep.subr.bf16.mxu0 0
        %1196 = vmatpush1.bf16.msra.mxu0 0
        %1197 = vmatprep.subr.bf16.mxu0 0
        %1198 = vmatpush1.bf16.msra.mxu0 0
        %1199 = vmatprep.subr.bf16.mxu0 0
        %1200 = vmatpush1.bf16.msra.mxu0 0
        %1201 = vmatprep.subr.bf16.mxu0 0
        %1202 = vmatpush1.bf16.msra.mxu0 0
        %1203 = vmatprep.subr.bf16.mxu0 0
        %1204 = vmatpush1.bf16.msra.mxu0 0
        %1205 = vmatprep.subr.bf16.mxu0 0
        %1206 = vmatpush1.bf16.msra.mxu0 0
        %1207 = vmatprep.mubr.bf16.mxu0 0
        %1208 = vmatmul.mubr.bf16.gmra.mrb[0].mxu0 %v1169
        %v1209 = vpop.f32.mrb[0].mxu0
        %v1210 = vadd.f32 0.0, %v1209
        %v1211 = vpop.f32.mrb[0].mxu0
        %v1212 = vpop.f32.mrb[0].mxu0
        %v1213 = vpop.f32.mrb[0].mxu0
        %1214 = vdwg.mxu0
        %v1215 = vpack.c.bf16 %v1210, %v1210
        %v1216 = vld [vmem:[%s8] sm:$0xf]
        %1218 = vrot.lane.b32.xlu0 %v1101, 120
        %v1219 = vpop.permute.xlu0 %1218
        %1220 = vrot.lane.b32.xlu0 %v1102, 120
        %v1221 = vpop.permute.xlu0 %1220
        %v1223 = vsel %vm1103, %v1219, 0
        %v1226 = vsel %vm1103, %v1221, 0
        %1228 = vmatprep.subr.bf16.mxu0 0
        %1229 = vmatpush1.bf16.xpose.msra.mxu0 %v1226
        %1230 = vmatprep.subr.bf16.mxu0 0
        %1231 = vmatpush1.bf16.xpose.msra.mxu0 0
        %1232 = vmatprep.subr.bf16.mxu0 0
        %1233 = vmatpush1.bf16.xpose.msra.mxu0 0
        %1234 = vmatprep.subr.bf16.mxu0 0
        %1235 = vmatpush1.bf16.xpose.msra.mxu0 0
        %1236 = vmatprep.subr.bf16.mxu0 0
        %1237 = vmatpush1.bf16.xpose.msra.mxu0 0
        %1238 = vmatprep.subr.bf16.mxu0 0
        %1239 = vmatpush1.bf16.xpose.msra.mxu0 0
        %1240 = vmatprep.subr.bf16.mxu0 0
        %1241 = vmatpush1.bf16.xpose.msra.mxu0 0
        %1242 = vmatprep.subr.bf16.mxu0 0
        %1243 = vmatpush1.bf16.xpose.msra.mxu0 0
        %1244 = vmatprep.subr.bf16.mxu0 0
        %1245 = vmatpush1.bf16.xpose.msra.mxu0 0
        %1246 = vmatprep.subr.bf16.mxu0 0
        %1247 = vmatpush1.bf16.xpose.msra.mxu0 0
        %1248 = vmatprep.subr.bf16.mxu0 0
        %1249 = vmatpush1.bf16.xpose.msra.mxu0 0
        %1250 = vmatprep.subr.bf16.mxu0 0
        %1251 = vmatpush1.bf16.xpose.msra.mxu0 0
        %1252 = vmatprep.subr.bf16.mxu0 0
        %1253 = vmatpush1.bf16.xpose.msra.mxu0 0
        %1254 = vmatprep.subr.bf16.mxu0 0
        %1255 = vmatpush1.bf16.xpose.msra.mxu0 0
        %1256 = vmatprep.subr.bf16.mxu0 0
        %1257 = vmatpush1.bf16.xpose.msra.mxu0 0
        %1258 = vmatprep.subr.bf16.mxu0 0
        %1259 = vmatpush1.bf16.xpose.msra.mxu0 0
        %1260 = vmatprep.mubr.bf16.mxu0 0
        %1261 = vmatmul.mubr.bf16.gmra.mrb[0].mxu0 %v1223
        %v1262 = vpop.f32.mrb[0].mxu0
        %v1263 = vadd.f32 0.0, %v1262
        %v1264 = vpop.f32.mrb[0].mxu0
        %v1265 = vpop.f32.mrb[0].mxu0
        %v1266 = vpop.f32.mrb[0].mxu0
        %1267 = vdwg.mxu0
        %v1268 = vmul.f32 %v1263, 0.35355338
        %v1269 = vsel %vm1151, %v1268, -1e+10
        %v1270 = vsel %vm1103, %v1269, -inf
        %1271 = vmax.xlane.f32.xlu0 %v1270
        %v1272 = vpop.xlane.xlu0 %1271
        %v1273 = vsub.f32 %v1269, %v1272
        %v1274 = vmul.f32 %v1273, 1.442695
        %v1275 = vpow.pop %v1274
        %v1276 = vsel %vm1103, %v1275, 0.0
        %1277 = vadd.xlane.f32.xlu0 %v1276
        %v1278 = vpop.xlane.xlu0 %1277
        %v1279 = vrcp.pop %v1278
        %v1280 = vmul.f32 %v1275, %v1279
        %v1281 = vpack.c.bf16 %v1280, %v1280
        %1282 = vrot.lane.b32.xlu0 %v1102, 88
        %v1283 = vpop.permute.xlu0 %1282
        %v1285 = vsel %vm1103, %v1281, 0
        %v1288 = vsel %vm1171, %v1283, 0
        %1290 = vmatprep.subr.bf16.mxu0 0
        %1291 = vmatpush1.bf16.msra.mxu0 %v1288
        %1292 = vmatprep.subr.bf16.mxu0 0
        %1293 = vmatpush1.bf16.msra.mxu0 0
        %1294 = vmatprep.subr.bf16.mxu0 0
        %1295 = vmatpush1.bf16.msra.mxu0 0
        %1296 = vmatprep.subr.bf16.mxu0 0
        %1297 = vmatpush1.bf16.msra.mxu0 0
        %1298 = vmatprep.subr.bf16.mxu0 0
        %1299 = vmatpush1.bf16.msra.mxu0 0
        %1300 = vmatprep.subr.bf16.mxu0 0
        %1301 = vmatpush1.bf16.msra.mxu0 0
        %1302 = vmatprep.subr.bf16.mxu0 0
        %1303 = vmatpush1.bf16.msra.mxu0 0
        %1304 = vmatprep.subr.bf16.mxu0 0
        %1305 = vmatpush1.bf16.msra.mxu0 0
        %1306 = vmatprep.subr.bf16.mxu0 0
        %1307 = vmatpush1.bf16.msra.mxu0 0
        %1308 = vmatprep.subr.bf16.mxu0 0
        %1309 = vmatpush1.bf16.msra.mxu0 0
        %1310 = vmatprep.subr.bf16.mxu0 0
        %1311 = vmatpush1.bf16.msra.mxu0 0
        %1312 = vmatprep.subr.bf16.mxu0 0
        %1313 = vmatpush1.bf16.msra.mxu0 0
        %1314 = vmatprep.subr.bf16.mxu0 0
        %1315 = vmatpush1.bf16.msra.mxu0 0
        %1316 = vmatprep.subr.bf16.mxu0 0
        %1317 = vmatpush1.bf16.msra.mxu0 0
        %1318 = vmatprep.subr.bf16.mxu0 0
        %1319 = vmatpush1.bf16.msra.mxu0 0
        %1320 = vmatprep.subr.bf16.mxu0 0
        %1321 = vmatpush1.bf16.msra.mxu0 0
        %1322 = vmatprep.mubr.bf16.mxu0 0
        %1323 = vmatmul.mubr.bf16.gmra.mrb[0].mxu0 %v1285
        %v1324 = vpop.f32.mrb[0].mxu0
        %v1325 = vadd.f32 0.0, %v1324
        %v1326 = vpop.f32.mrb[0].mxu0
        %v1327 = vpop.f32.mrb[0].mxu0
        %v1328 = vpop.f32.mrb[0].mxu0
        %1329 = vdwg.mxu0
        %v1330 = vpack.c.bf16 %v1325, %v1325
        %s1331 = scalar_lea.vmem %s8, 4
        %v1332 = vld [vmem:[%s1331] sm:$0xf]
        %v1334 = vsel %vm1103, %v1330, 0
        %v1337 = vsel %vm1171, %v1332, 0
        %1339 = vmatprep.subr.bf16.mxu0 0
        %1340 = vmatpush1.bf16.msra.mxu0 %v1337
        %1341 = vmatprep.subr.bf16.mxu0 0
        %1342 = vmatpush1.bf16.msra.mxu0 0
        %1343 = vmatprep.subr.bf16.mxu0 0
        %1344 = vmatpush1.bf16.msra.mxu0 0
        %1345 = vmatprep.subr.bf16.mxu0 0
        %1346 = vmatpush1.bf16.msra.mxu0 0
        %1347 = vmatprep.subr.bf16.mxu0 0
        %1348 = vmatpush1.bf16.msra.mxu0 0
        %1349 = vmatprep.subr.bf16.mxu0 0
        %1350 = vmatpush1.bf16.msra.mxu0 0
        %1351 = vmatprep.subr.bf16.mxu0 0
        %1352 = vmatpush1.bf16.msra.mxu0 0
        %1353 = vmatprep.subr.bf16.mxu0 0
        %1354 = vmatpush1.bf16.msra.mxu0 0
        %1355 = vmatprep.subr.bf16.mxu0 0
        %1356 = vmatpush1.bf16.msra.mxu0 0
        %1357 = vmatprep.subr.bf16.mxu0 0
        %1358 = vmatpush1.bf16.msra.mxu0 0
        %1359 = vmatprep.subr.bf16.mxu0 0
        %1360 = vmatpush1.bf16.msra.mxu0 0
        %1361 = vmatprep.subr.bf16.mxu0 0
        %1362 = vmatpush1.bf16.msra.mxu0 0
        %1363 = vmatprep.subr.bf16.mxu0 0
        %1364 = vmatpush1.bf16.msra.mxu0 0
        %1365 = vmatprep.subr.bf16.mxu0 0
        %1366 = vmatpush1.bf16.msra.mxu0 0
        %1367 = vmatprep.subr.bf16.mxu0 0
        %1368 = vmatpush1.bf16.msra.mxu0 0
        %1369 = vmatprep.subr.bf16.mxu0 0
        %1370 = vmatpush1.bf16.msra.mxu0 0
        %1371 = vmatprep.mubr.bf16.mxu0 0
        %1372 = vmatmul.mubr.bf16.gmra.mrb[0].mxu0 %v1334
        %v1373 = vpop.f32.mrb[0].mxu0
        %v1374 = vadd.f32 0.0, %v1373
        %v1375 = vpop.f32.mrb[0].mxu0
        %v1376 = vpop.f32.mrb[0].mxu0
        %v1377 = vpop.f32.mrb[0].mxu0
        %1378 = vdwg.mxu0
        %v1380 = vsel %vm1103, %v1215, 0
        %v1383 = vsel %vm1171, %v1216, 0
        %1385 = vmatprep.subr.bf16.mxu0 0
        %1386 = vmatpush1.bf16.msra.mxu0 %v1383
        %1387 = vmatprep.subr.bf16.mxu0 0
        %1388 = vmatpush1.bf16.msra.mxu0 0
        %1389 = vmatprep.subr.bf16.mxu0 0
        %1390 = vmatpush1.bf16.msra.mxu0 0
        %1391 = vmatprep.subr.bf16.mxu0 0
        %1392 = vmatpush1.bf16.msra.mxu0 0
        %1393 = vmatprep.subr.bf16.mxu0 0
        %1394 = vmatpush1.bf16.msra.mxu0 0
        %1395 = vmatprep.subr.bf16.mxu0 0
        %1396 = vmatpush1.bf16.msra.mxu0 0
        %1397 = vmatprep.subr.bf16.mxu0 0
        %1398 = vmatpush1.bf16.msra.mxu0 0
        %1399 = vmatprep.subr.bf16.mxu0 0
        %1400 = vmatpush1.bf16.msra.mxu0 0
        %1401 = vmatprep.subr.bf16.mxu0 0
        %1402 = vmatpush1.bf16.msra.mxu0 0
        %1403 = vmatprep.subr.bf16.mxu0 0
        %1404 = vmatpush1.bf16.msra.mxu0 0
        %1405 = vmatprep.subr.bf16.mxu0 0
        %1406 = vmatpush1.bf16.msra.mxu0 0
        %1407 = vmatprep.subr.bf16.mxu0 0
        %1408 = vmatpush1.bf16.msra.mxu0 0
        %1409 = vmatprep.subr.bf16.mxu0 0
        %1410 = vmatpush1.bf16.msra.mxu0 0
        %1411 = vmatprep.subr.bf16.mxu0 0
        %1412 = vmatpush1.bf16.msra.mxu0 0
        %1413 = vmatprep.subr.bf16.mxu0 0
        %1414 = vmatpush1.bf16.msra.mxu0 0
        %1415 = vmatprep.subr.bf16.mxu0 0
        %1416 = vmatpush1.bf16.msra.mxu0 0
        %1417 = vmatprep.mubr.bf16.mxu0 0
        %1418 = vmatmul.mubr.bf16.gmra.mrb[0].mxu0 %v1380
        %v1419 = vpop.f32.mrb[0].mxu0
        %v1420 = vadd.f32 %v1374, %v1419
        %v1421 = vpop.f32.mrb[0].mxu0
        %v1422 = vpop.f32.mrb[0].mxu0
        %v1423 = vpop.f32.mrb[0].mxu0
        %1424 = vdwg.mxu0
        %1425 = vrot.lane.b32.xlu0 %v1101, 112
        %v1426 = vpop.permute.xlu0 %1425
        %1427 = vrot.lane.b32.xlu0 %v1102, 112
        %v1428 = vpop.permute.xlu0 %1427
        %v1430 = vsel %vm1103, %v1426, 0
        %v1433 = vsel %vm1103, %v1428, 0
        %1435 = vmatprep.subr.bf16.mxu0 0
        %1436 = vmatpush1.bf16.xpose.msra.mxu0 %v1433
        %1437 = vmatprep.subr.bf16.mxu0 0
        %1438 = vmatpush1.bf16.xpose.msra.mxu0 0
        %1439 = vmatprep.subr.bf16.mxu0 0
        %1440 = vmatpush1.bf16.xpose.msra.mxu0 0
        %1441 = vmatprep.subr.bf16.mxu0 0
        %1442 = vmatpush1.bf16.xpose.msra.mxu0 0
        %1443 = vmatprep.subr.bf16.mxu0 0
        %1444 = vmatpush1.bf16.xpose.msra.mxu0 0
        %1445 = vmatprep.subr.bf16.mxu0 0
        %1446 = vmatpush1.bf16.xpose.msra.mxu0 0
        %1447 = vmatprep.subr.bf16.mxu0 0
        %1448 = vmatpush1.bf16.xpose.msra.mxu0 0
        %1449 = vmatprep.subr.bf16.mxu0 0
        %1450 = vmatpush1.bf16.xpose.msra.mxu0 0
        %1451 = vmatprep.subr.bf16.mxu0 0
        %1452 = vmatpush1.bf16.xpose.msra.mxu0 0
        %1453 = vmatprep.subr.bf16.mxu0 0
        %1454 = vmatpush1.bf16.xpose.msra.mxu0 0
        %1455 = vmatprep.subr.bf16.mxu0 0
        %1456 = vmatpush1.bf16.xpose.msra.mxu0 0
        %1457 = vmatprep.subr.bf16.mxu0 0
        %1458 = vmatpush1.bf16.xpose.msra.mxu0 0
        %1459 = vmatprep.subr.bf16.mxu0 0
        %1460 = vmatpush1.bf16.xpose.msra.mxu0 0
        %1461 = vmatprep.subr.bf16.mxu0 0
        %1462 = vmatpush1.bf16.xpose.msra.mxu0 0
        %1463 = vmatprep.subr.bf16.mxu0 0
        %1464 = vmatpush1.bf16.xpose.msra.mxu0 0
        %1465 = vmatprep.subr.bf16.mxu0 0
        %1466 = vmatpush1.bf16.xpose.msra.mxu0 0
        %1467 = vmatprep.mubr.bf16.mxu0 0
        %1468 = vmatmul.mubr.bf16.gmra.mrb[0].mxu0 %v1430
        %v1469 = vpop.f32.mrb[0].mxu0
        %v1470 = vadd.f32 0.0, %v1469
        %v1471 = vpop.f32.mrb[0].mxu0
        %v1472 = vpop.f32.mrb[0].mxu0
        %v1473 = vpop.f32.mrb[0].mxu0
        %1474 = vdwg.mxu0
        %v1475 = vmul.f32 %v1470, 0.35355338
        %v1476 = vsel %vm1151, %v1475, -1e+10
        %v1477 = vsel %vm1103, %v1476, -inf
        %1478 = vmax.xlane.f32.xlu0 %v1477
        %v1479 = vpop.xlane.xlu0 %1478
        %v1480 = vsub.f32 %v1476, %v1479
        %v1481 = vmul.f32 %v1480, 1.442695
        %v1482 = vpow.pop %v1481
        %v1483 = vsel %vm1103, %v1482, 0.0
        %1484 = vadd.xlane.f32.xlu0 %v1483
        %v1485 = vpop.xlane.xlu0 %1484
        %v1486 = vrcp.pop %v1485
        %v1487 = vmul.f32 %v1482, %v1486
        %v1488 = vpack.c.bf16 %v1487, %v1487
        %1489 = vrot.lane.b32.xlu0 %v1102, 80
        %v1490 = vpop.permute.xlu0 %1489
        %v1492 = vsel %vm1103, %v1488, 0
        %v1495 = vsel %vm1171, %v1490, 0
        %1497 = vmatprep.subr.bf16.mxu0 0
        %1498 = vmatpush1.bf16.msra.mxu0 %v1495
        %1499 = vmatprep.subr.bf16.mxu0 0
        %1500 = vmatpush1.bf16.msra.mxu0 0
        %1501 = vmatprep.subr.bf16.mxu0 0
        %1502 = vmatpush1.bf16.msra.mxu0 0
        %1503 = vmatprep.subr.bf16.mxu0 0
        %1504 = vmatpush1.bf16.msra.mxu0 0
        %1505 = vmatprep.subr.bf16.mxu0 0
        %1506 = vmatpush1.bf16.msra.mxu0 0
        %1507 = vmatprep.subr.bf16.mxu0 0
        %1508 = vmatpush1.bf16.msra.mxu0 0
        %1509 = vmatprep.subr.bf16.mxu0 0
        %1510 = vmatpush1.bf16.msra.mxu0 0
        %1511 = vmatprep.subr.bf16.mxu0 0
        %1512 = vmatpush1.bf16.msra.mxu0 0
        %1513 = vmatprep.subr.bf16.mxu0 0
        %1514 = vmatpush1.bf16.msra.mxu0 0
        %1515 = vmatprep.subr.bf16.mxu0 0
        %1516 = vmatpush1.bf16.msra.mxu0 0
        %1517 = vmatprep.subr.bf16.mxu0 0
        %1518 = vmatpush1.bf16.msra.mxu0 0
        %1519 = vmatprep.subr.bf16.mxu0 0
        %1520 = vmatpush1.bf16.msra.mxu0 0
        %1521 = vmatprep.subr.bf16.mxu0 0
        %1522 = vmatpush1.bf16.msra.mxu0 0
        %1523 = vmatprep.subr.bf16.mxu0 0
        %1524 = vmatpush1.bf16.msra.mxu0 0
        %1525 = vmatprep.subr.bf16.mxu0 0
        %1526 = vmatpush1.bf16.msra.mxu0 0
        %1527 = vmatprep.subr.bf16.mxu0 0
        %1528 = vmatpush1.bf16.msra.mxu0 0
        %1529 = vmatprep.mubr.bf16.mxu0 0
        %1530 = vmatmul.mubr.bf16.gmra.mrb[0].mxu0 %v1492
        %v1531 = vpop.f32.mrb[0].mxu0
        %v1532 = vadd.f32 0.0, %v1531
        %v1533 = vpop.f32.mrb[0].mxu0
        %v1534 = vpop.f32.mrb[0].mxu0
        %v1535 = vpop.f32.mrb[0].mxu0
        %1536 = vdwg.mxu0
        %v1537 = vpack.c.bf16 %v1532, %v1532
        %s1538 = scalar_lea.vmem %s8, 8
        %v1539 = vld [vmem:[%s1538] sm:$0xf]
        %v1541 = vsel %vm1103, %v1537, 0
        %v1544 = vsel %vm1171, %v1539, 0
        %1546 = vmatprep.subr.bf16.mxu0 0
        %1547 = vmatpush1.bf16.msra.mxu0 %v1544
        %1548 = vmatprep.subr.bf16.mxu0 0
        %1549 = vmatpush1.bf16.msra.mxu0 0
        %1550 = vmatprep.subr.bf16.mxu0 0
        %1551 = vmatpush1.bf16.msra.mxu0 0
        %1552 = vmatprep.subr.bf16.mxu0 0
        %1553 = vmatpush1.bf16.msra.mxu0 0
        %1554 = vmatprep.subr.bf16.mxu0 0
        %1555 = vmatpush1.bf16.msra.mxu0 0
        %1556 = vmatprep.subr.bf16.mxu0 0
        %1557 = vmatpush1.bf16.msra.mxu0 0
        %1558 = vmatprep.subr.bf16.mxu0 0
        %1559 = vmatpush1.bf16.msra.mxu0 0
        %1560 = vmatprep.subr.bf16.mxu0 0
        %1561 = vmatpush1.bf16.msra.mxu0 0
        %1562 = vmatprep.subr.bf16.mxu0 0
        %1563 = vmatpush1.bf16.msra.mxu0 0
        %1564 = vmatprep.subr.bf16.mxu0 0
        %1565 = vmatpush1.bf16.msra.mxu0 0
        %1566 = vmatprep.subr.bf16.mxu0 0
        %1567 = vmatpush1.bf16.msra.mxu0 0
        %1568 = vmatprep.subr.bf16.mxu0 0
        %1569 = vmatpush1.bf16.msra.mxu0 0
        %1570 = vmatprep.subr.bf16.mxu0 0
        %1571 = vmatpush1.bf16.msra.mxu0 0
        %1572 = vmatprep.subr.bf16.mxu0 0
        %1573 = vmatpush1.bf16.msra.mxu0 0
        %1574 = vmatprep.subr.bf16.mxu0 0
        %1575 = vmatpush1.bf16.msra.mxu0 0
        %1576 = vmatprep.subr.bf16.mxu0 0
        %1577 = vmatpush1.bf16.msra.mxu0 0
        %1578 = vmatprep.mubr.bf16.mxu0 0
        %1579 = vmatmul.mubr.bf16.gmra.mrb[0].mxu0 %v1541
        %v1580 = vpop.f32.mrb[0].mxu0
        %v1581 = vadd.f32 0.0, %v1580
        %v1582 = vpop.f32.mrb[0].mxu0
        %v1583 = vpop.f32.mrb[0].mxu0
        %v1584 = vpop.f32.mrb[0].mxu0
        %1585 = vdwg.mxu0
        %v1586 = vadd.f32 %v1420, %v1581
        %1587 = vrot.lane.b32.xlu0 %v1101, 104
        %v1588 = vpop.permute.xlu0 %1587
        %1589 = vrot.lane.b32.xlu0 %v1102, 104
        %v1590 = vpop.permute.xlu0 %1589
        %v1592 = vsel %vm1103, %v1588, 0
        %v1595 = vsel %vm1103, %v1590, 0
        %1597 = vmatprep.subr.bf16.mxu0 0
        %1598 = vmatpush1.bf16.xpose.msra.mxu0 %v1595
        %1599 = vmatprep.subr.bf16.mxu0 0
        %1600 = vmatpush1.bf16.xpose.msra.mxu0 0
        %1601 = vmatprep.subr.bf16.mxu0 0
        %1602 = vmatpush1.bf16.xpose.msra.mxu0 0
        %1603 = vmatprep.subr.bf16.mxu0 0
        %1604 = vmatpush1.bf16.xpose.msra.mxu0 0
        %1605 = vmatprep.subr.bf16.mxu0 0
        %1606 = vmatpush1.bf16.xpose.msra.mxu0 0
        %1607 = vmatprep.subr.bf16.mxu0 0
        %1608 = vmatpush1.bf16.xpose.msra.mxu0 0
        %1609 = vmatprep.subr.bf16.mxu0 0
        %1610 = vmatpush1.bf16.xpose.msra.mxu0 0
        %1611 = vmatprep.subr.bf16.mxu0 0
        %1612 = vmatpush1.bf16.xpose.msra.mxu0 0
        %1613 = vmatprep.subr.bf16.mxu0 0
        %1614 = vmatpush1.bf16.xpose.msra.mxu0 0
        %1615 = vmatprep.subr.bf16.mxu0 0
        %1616 = vmatpush1.bf16.xpose.msra.mxu0 0
        %1617 = vmatprep.subr.bf16.mxu0 0
        %1618 = vmatpush1.bf16.xpose.msra.mxu0 0
        %1619 = vmatprep.subr.bf16.mxu0 0
        %1620 = vmatpush1.bf16.xpose.msra.mxu0 0
        %1621 = vmatprep.subr.bf16.mxu0 0
        %1622 = vmatpush1.bf16.xpose.msra.mxu0 0
        %1623 = vmatprep.subr.bf16.mxu0 0
        %1624 = vmatpush1.bf16.xpose.msra.mxu0 0
        %1625 = vmatprep.subr.bf16.mxu0 0
        %1626 = vmatpush1.bf16.xpose.msra.mxu0 0
        %1627 = vmatprep.subr.bf16.mxu0 0
        %1628 = vmatpush1.bf16.xpose.msra.mxu0 0
        %1629 = vmatprep.mubr.bf16.mxu0 0
        %1630 = vmatmul.mubr.bf16.gmra.mrb[0].mxu0 %v1592
        %v1631 = vpop.f32.mrb[0].mxu0
        %v1632 = vadd.f32 0.0, %v1631
        %v1633 = vpop.f32.mrb[0].mxu0
        %v1634 = vpop.f32.mrb[0].mxu0
        %v1635 = vpop.f32.mrb[0].mxu0
        %1636 = vdwg.mxu0
        %v1637 = vmul.f32 %v1632, 0.35355338
        %v1638 = vsel %vm1151, %v1637, -1e+10
        %v1639 = vsel %vm1103, %v1638, -inf
        %1640 = vmax.xlane.f32.xlu0 %v1639
        %v1641 = vpop.xlane.xlu0 %1640
        %v1642 = vsub.f32 %v1638, %v1641
        %v1643 = vmul.f32 %v1642, 1.442695
        %v1644 = vpow.pop %v1643
        %v1645 = vsel %vm1103, %v1644, 0.0
        %1646 = vadd.xlane.f32.xlu0 %v1645
        %v1647 = vpop.xlane.xlu0 %1646
        %v1648 = vrcp.pop %v1647
        %v1649 = vmul.f32 %v1644, %v1648
        %v1650 = vpack.c.bf16 %v1649, %v1649
        %1651 = vrot.lane.b32.xlu0 %v1102, 72
        %v1652 = vpop.permute.xlu0 %1651
        %v1654 = vsel %vm1103, %v1650, 0
        %v1657 = vsel %vm1171, %v1652, 0
        %1659 = vmatprep.subr.bf16.mxu0 0
        %1660 = vmatpush1.bf16.msra.mxu0 %v1657
        %1661 = vmatprep.subr.bf16.mxu0 0
        %1662 = vmatpush1.bf16.msra.mxu0 0
        %1663 = vmatprep.subr.bf16.mxu0 0
        %1664 = vmatpush1.bf16.msra.mxu0 0
        %1665 = vmatprep.subr.bf16.mxu0 0
        %1666 = vmatpush1.bf16.msra.mxu0 0
        %1667 = vmatprep.subr.bf16.mxu0 0
        %1668 = vmatpush1.bf16.msra.mxu0 0
        %1669 = vmatprep.subr.bf16.mxu0 0
        %1670 = vmatpush1.bf16.msra.mxu0 0
        %1671 = vmatprep.subr.bf16.mxu0 0
        %1672 = vmatpush1.bf16.msra.mxu0 0
        %1673 = vmatprep.subr.bf16.mxu0 0
        %1674 = vmatpush1.bf16.msra.mxu0 0
        %1675 = vmatprep.subr.bf16.mxu0 0
        %1676 = vmatpush1.bf16.msra.mxu0 0
        %1677 = vmatprep.subr.bf16.mxu0 0
        %1678 = vmatpush1.bf16.msra.mxu0 0
        %1679 = vmatprep.subr.bf16.mxu0 0
        %1680 = vmatpush1.bf16.msra.mxu0 0
        %1681 = vmatprep.subr.bf16.mxu0 0
        %1682 = vmatpush1.bf16.msra.mxu0 0
        %1683 = vmatprep.subr.bf16.mxu0 0
        %1684 = vmatpush1.bf16.msra.mxu0 0
        %1685 = vmatprep.subr.bf16.mxu0 0
        %1686 = vmatpush1.bf16.msra.mxu0 0
        %1687 = vmatprep.subr.bf16.mxu0 0
        %1688 = vmatpush1.bf16.msra.mxu0 0
        %1689 = vmatprep.subr.bf16.mxu0 0
        %1690 = vmatpush1.bf16.msra.mxu0 0
        %1691 = vmatprep.mubr.bf16.mxu0 0
        %1692 = vmatmul.mubr.bf16.gmra.mrb[0].mxu0 %v1654
        %v1693 = vpop.f32.mrb[0].mxu0
        %v1694 = vadd.f32 0.0, %v1693
        %v1695 = vpop.f32.mrb[0].mxu0
        %v1696 = vpop.f32.mrb[0].mxu0
        %v1697 = vpop.f32.mrb[0].mxu0
        %1698 = vdwg.mxu0
        %v1699 = vpack.c.bf16 %v1694, %v1694
        %s1700 = scalar_lea.vmem %s8, 12
        %v1701 = vld [vmem:[%s1700] sm:$0xf]
        %v1703 = vsel %vm1103, %v1699, 0
        %v1706 = vsel %vm1171, %v1701, 0
        %1708 = vmatprep.subr.bf16.mxu0 0
        %1709 = vmatpush1.bf16.msra.mxu0 %v1706
        %1710 = vmatprep.subr.bf16.mxu0 0
        %1711 = vmatpush1.bf16.msra.mxu0 0
        %1712 = vmatprep.subr.bf16.mxu0 0
        %1713 = vmatpush1.bf16.msra.mxu0 0
        %1714 = vmatprep.subr.bf16.mxu0 0
        %1715 = vmatpush1.bf16.msra.mxu0 0
        %1716 = vmatprep.subr.bf16.mxu0 0
        %1717 = vmatpush1.bf16.msra.mxu0 0
        %1718 = vmatprep.subr.bf16.mxu0 0
        %1719 = vmatpush1.bf16.msra.mxu0 0
        %1720 = vmatprep.subr.bf16.mxu0 0
        %1721 = vmatpush1.bf16.msra.mxu0 0
        %1722 = vmatprep.subr.bf16.mxu0 0
        %1723 = vmatpush1.bf16.msra.mxu0 0
        %1724 = vmatprep.subr.bf16.mxu0 0
        %1725 = vmatpush1.bf16.msra.mxu0 0
        %1726 = vmatprep.subr.bf16.mxu0 0
        %1727 = vmatpush1.bf16.msra.mxu0 0
        %1728 = vmatprep.subr.bf16.mxu0 0
        %1729 = vmatpush1.bf16.msra.mxu0 0
        %1730 = vmatprep.subr.bf16.mxu0 0
        %1731 = vmatpush1.bf16.msra.mxu0 0
        %1732 = vmatprep.subr.bf16.mxu0 0
        %1733 = vmatpush1.bf16.msra.mxu0 0
        %1734 = vmatprep.subr.bf16.mxu0 0
        %1735 = vmatpush1.bf16.msra.mxu0 0
        %1736 = vmatprep.subr.bf16.mxu0 0
        %1737 = vmatpush1.bf16.msra.mxu0 0
        %1738 = vmatprep.subr.bf16.mxu0 0
        %1739 = vmatpush1.bf16.msra.mxu0 0
        %1740 = vmatprep.mubr.bf16.mxu0 0
        %1741 = vmatmul.mubr.bf16.gmra.mrb[0].mxu0 %v1703
        %v1742 = vpop.f32.mrb[0].mxu0
        %v1743 = vadd.f32 0.0, %v1742
        %v1744 = vpop.f32.mrb[0].mxu0
        %v1745 = vpop.f32.mrb[0].mxu0
        %v1746 = vpop.f32.mrb[0].mxu0
        %1747 = vdwg.mxu0
        %v1748 = vadd.f32 %v1586, %v1743
        %v1749 = vld [vmem:[%s9] sm:$0x1]
        %v1751 = vlaneseq
        %v1752 = vshrl.u32 %v1751, 7
        %v1753 = vsub.s32 0, %v1752
        %v1754 = vrot.slane %v1749, %v1753
        %v1756 = vadd.f32 %v1748, %v1754
        %v1757 = vadd.f32 %v965, %v1756
        %v1758 = vsel %vm994, %v1757, 0.0
        %1759 = vadd.xlane.f32.xlu0 %v1758
        %v1760 = vpop.xlane.xlu0 %1759
        %v1761 = vrcp.pop 32.0
        %v1762 = vmul.f32 %v1760, %v1761
        %v1763 = vsub.f32 %v1757, %v1762
        %v1764 = vmul.f32 %v1763, %v1763
        %v1765 = vsel %vm994, %v1764, 0.0
        %1766 = vadd.xlane.f32.xlu0 %v1765
        %v1767 = vpop.xlane.xlu0 %1766
        %v1768 = vmul.f32 %v1767, %v1761
        %v1769 = vadd.f32 %v1768, 1e-05
        %v1770 = vrsqrt.pop %v1769
        %v1771 = vmul.f32 %v1763, %v1770
        %v1772 = vld [vmem:[#allocation5] sm:$0x1]
        %v1774 = vlaneseq
        %v1775 = vshrl.u32 %v1774, 7
        %v1776 = vsub.s32 0, %v1775
        %v1777 = vrot.slane %v1772, %v1776
        %v1779 = vmul.f32 %v1771, %v1777
        %v1780 = vld [vmem:[#allocation7] sm:$0x1]
        %v1782 = vlaneseq
        %v1783 = vshrl.u32 %v1782, 7
        %v1784 = vsub.s32 0, %v1783
        %v1785 = vrot.slane %v1780, %v1784
        %v1787 = vadd.f32 %v1779, %v1785
        %v1788 = vpack.c.bf16 %v1787, %v1787
        %v1789 = vld [vmem:[%s10] sm:$0xf]
        %v1790 = vld [vmem:[%s10 + $0x4] sm:$0xf]
        %v1791 = vld [vmem:[%s10 + $0x8] sm:$0xf]
        %v1792 = vld [vmem:[%s10 + $0xc] sm:$0xf]
        %v1793 = vld [vmem:[%s11] sm:$0x1]
        %v1795 = vlaneseq
        %v1796 = vshrl.u32 %v1795, 7
        %v1797 = vsub.s32 0, %v1796
        %v1798 = vrot.slane %v1793, %v1797
        %v1804 = vunpack.c.l.b16 %v1789
        %v1805 = vunpack.c.l.b16 %v1790
        %v1806 = vunpack.c.l.b16 %v1791
        %v1807 = vunpack.c.l.b16 %v1792
        %v1808 = vpack.c.b16 %v1805, %v1804
        %v1809 = vpack.c.b16 %v1807, %v1806
        %v1813 = vsel %vm994, %v1788, 0
        %1815 = vmatprep.subr.bf16.mxu0 0
        %1816 = vmatpush1.bf16.msra.mxu0 %v1808
        %1817 = vmatprep.subr.bf16.mxu0 0
        %1818 = vmatpush1.bf16.msra.mxu0 %v1809
        %1819 = vmatprep.subr.bf16.mxu0 0
        %1820 = vmatpush1.bf16.msra.mxu0 0
        %1821 = vmatprep.subr.bf16.mxu0 0
        %1822 = vmatpush1.bf16.msra.mxu0 0
        %1823 = vmatprep.subr.bf16.mxu0 0
        %1824 = vmatpush1.bf16.msra.mxu0 0
        %1825 = vmatprep.subr.bf16.mxu0 0
        %1826 = vmatpush1.bf16.msra.mxu0 0
        %1827 = vmatprep.subr.bf16.mxu0 0
        %1828 = vmatpush1.bf16.msra.mxu0 0
        %1829 = vmatprep.subr.bf16.mxu0 0
        %1830 = vmatpush1.bf16.msra.mxu0 0
        %1831 = vmatprep.subr.bf16.mxu0 0
        %1832 = vmatpush1.bf16.msra.mxu0 0
        %1833 = vmatprep.subr.bf16.mxu0 0
        %1834 = vmatpush1.bf16.msra.mxu0 0
        %1835 = vmatprep.subr.bf16.mxu0 0
        %1836 = vmatpush1.bf16.msra.mxu0 0
        %1837 = vmatprep.subr.bf16.mxu0 0
        %1838 = vmatpush1.bf16.msra.mxu0 0
        %1839 = vmatprep.subr.bf16.mxu0 0
        %1840 = vmatpush1.bf16.msra.mxu0 0
        %1841 = vmatprep.subr.bf16.mxu0 0
        %1842 = vmatpush1.bf16.msra.mxu0 0
        %1843 = vmatprep.subr.bf16.mxu0 0
        %1844 = vmatpush1.bf16.msra.mxu0 0
        %1845 = vmatprep.subr.bf16.mxu0 0
        %1846 = vmatpush1.bf16.msra.mxu0 0
        %1847 = vmatprep.mubr.bf16.mxu0 0
        %1848 = vmatmul.mubr.bf16.gmra.mrb[0].mxu0 %v1813
        %v1849 = vpop.f32.mrb[0].mxu0
        %v1850 = vadd.f32 %v1798, %v1849
        %v1851 = vpop.f32.mrb[0].mxu0
        %v1852 = vpop.f32.mrb[0].mxu0
        %v1853 = vpop.f32.mrb[0].mxu0
        %1854 = vdwg.mxu0
        %v1855 = vpack.c.bf16 %v967, %v966
        %v1856 = vld [vmem:[%s12] sm:$0xf]
        %v1857 = vld [vmem:[%s12 + $0x4] sm:$0xf]
        %v1858 = vld [vmem:[%s12 + $0x8] sm:$0xf]
        %v1859 = vld [vmem:[%s12 + $0xc] sm:$0xf]
        %v1860 = vld [vmem:[%s13] sm:$0x1]
        %v1862 = vlaneseq
        %v1863 = vshrl.u32 %v1862, 7
        %v1864 = vsub.s32 0, %v1863
        %v1865 = vrot.slane %v1860, %v1864
        %v1871 = vunpack.c.l.b16 %v1856
        %v1872 = vunpack.c.l.b16 %v1857
        %v1873 = vunpack.c.l.b16 %v1858
        %v1874 = vunpack.c.l.b16 %v1859
        %v1875 = vpack.c.b16 %v1872, %v1871
        %v1876 = vpack.c.b16 %v1874, %v1873
        %v1880 = vsel %vm994, %v1855, 0
        %1882 = vmatprep.subr.bf16.mxu0 0
        %1883 = vmatpush1.bf16.msra.mxu0 %v1875
        %1884 = vmatprep.subr.bf16.mxu0 0
        %1885 = vmatpush1.bf16.msra.mxu0 %v1876
        %1886 = vmatprep.subr.bf16.mxu0 0
        %1887 = vmatpush1.bf16.msra.mxu0 0
        %1888 = vmatprep.subr.bf16.mxu0 0
        %1889 = vmatpush1.bf16.msra.mxu0 0
        %1890 = vmatprep.subr.bf16.mxu0 0
        %1891 = vmatpush1.bf16.msra.mxu0 0
        %1892 = vmatprep.subr.bf16.mxu0 0
        %1893 = vmatpush1.bf16.msra.mxu0 0
        %1894 = vmatprep.subr.bf16.mxu0 0
        %1895 = vmatpush1.bf16.msra.mxu0 0
        %1896 = vmatprep.subr.bf16.mxu0 0
        %1897 = vmatpush1.bf16.msra.mxu0 0
        %1898 = vmatprep.subr.bf16.mxu0 0
        %1899 = vmatpush1.bf16.msra.mxu0 0
        %1900 = vmatprep.subr.bf16.mxu0 0
        %1901 = vmatpush1.bf16.msra.mxu0 0
        %1902 = vmatprep.subr.bf16.mxu0 0
        %1903 = vmatpush1.bf16.msra.mxu0 0
        %1904 = vmatprep.subr.bf16.mxu0 0
        %1905 = vmatpush1.bf16.msra.mxu0 0
        %1906 = vmatprep.subr.bf16.mxu0 0
        %1907 = vmatpush1.bf16.msra.mxu0 0
        %1908 = vmatprep.subr.bf16.mxu0 0
        %1909 = vmatpush1.bf16.msra.mxu0 0
        %1910 = vmatprep.subr.bf16.mxu0 0
        %1911 = vmatpush1.bf16.msra.mxu0 0
        %1912 = vmatprep.subr.bf16.mxu0 0
        %1913 = vmatpush1.bf16.msra.mxu0 0
        %1914 = vmatprep.mubr.bf16.mxu0 0
        %1915 = vmatmul.mubr.bf16.gmra.mrb[0].mxu0 %v1880
        %v1916 = vpop.f32.mrb[0].mxu0
        %v1917 = vadd.f32 %v1865, %v1916
        %v1918 = vpop.f32.mrb[0].mxu0
        %v1919 = vpop.f32.mrb[0].mxu0
        %v1920 = vadd.f32 %v1865, %v1919
        %v1921 = vpop.f32.mrb[0].mxu0
        %1922 = vdwg.mxu0
        %v1923 = vpack.c.bf16 %v1850, %v1850
        %v1924 = vpack.c.bf16 %v1920, %v1917
        %v1926 = vsel %vm1103, %v1923, 0
        %v1929 = vsel %vm1103, %v1924, 0
        %1931 = vmatprep.subr.bf16.mxu0 0
        %1932 = vmatpush1.bf16.xpose.msra.mxu0 %v1929
        %1933 = vmatprep.subr.bf16.mxu0 0
        %1934 = vmatpush1.bf16.xpose.msra.mxu0 0
        %1935 = vmatprep.subr.bf16.mxu0 0
        %1936 = vmatpush1.bf16.xpose.msra.mxu0 0
        %1937 = vmatprep.subr.bf16.mxu0 0
        %1938 = vmatpush1.bf16.xpose.msra.mxu0 0
        %1939 = vmatprep.subr.bf16.mxu0 0
        %1940 = vmatpush1.bf16.xpose.msra.mxu0 0
        %1941 = vmatprep.subr.bf16.mxu0 0
        %1942 = vmatpush1.bf16.xpose.msra.mxu0 0
        %1943 = vmatprep.subr.bf16.mxu0 0
        %1944 = vmatpush1.bf16.xpose.msra.mxu0 0
        %1945 = vmatprep.subr.bf16.mxu0 0
        %1946 = vmatpush1.bf16.xpose.msra.mxu0 0
        %1947 = vmatprep.subr.bf16.mxu0 0
        %1948 = vmatpush1.bf16.xpose.msra.mxu0 0
        %1949 = vmatprep.subr.bf16.mxu0 0
        %1950 = vmatpush1.bf16.xpose.msra.mxu0 0
        %1951 = vmatprep.subr.bf16.mxu0 0
        %1952 = vmatpush1.bf16.xpose.msra.mxu0 0
        %1953 = vmatprep.subr.bf16.mxu0 0
        %1954 = vmatpush1.bf16.xpose.msra.mxu0 0
        %1955 = vmatprep.subr.bf16.mxu0 0
        %1956 = vmatpush1.bf16.xpose.msra.mxu0 0
        %1957 = vmatprep.subr.bf16.mxu0 0
        %1958 = vmatpush1.bf16.xpose.msra.mxu0 0
        %1959 = vmatprep.subr.bf16.mxu0 0
        %1960 = vmatpush1.bf16.xpose.msra.mxu0 0
        %1961 = vmatprep.subr.bf16.mxu0 0
        %1962 = vmatpush1.bf16.xpose.msra.mxu0 0
        %1963 = vmatprep.mubr.bf16.mxu0 0
        %1964 = vmatmul.mubr.bf16.gmra.mrb[0].mxu0 %v1926
        %v1965 = vpop.f32.mrb[0].mxu0
        %v1966 = vadd.f32 0.0, %v1965
        %v1967 = vpop.f32.mrb[0].mxu0
        %v1968 = vpop.f32.mrb[0].mxu0
        %v1969 = vpop.f32.mrb[0].mxu0
        %1970 = vdwg.mxu0
        %v1971 = vmul.f32 %v1966, 0.35355338
        %vm1972 = vcmp.gt.f32.partialorder %v969, 0.0
        %v1973 = vsel %vm1972, 1, 0
        %v1974 = vlaneseq
        %v1975 = vshrl.u32 %v1974, 7
        %v1976 = vsub.s32 0, %v1975
        %v1977 = vrot.slane %v1973, %v1976
        %vm1978 = vcmp.eq.s32.totalorder %v1977, 1
        %v1979 = vsel %vm1978, %v1971, -1e+10
        %vm1980 = vcmask 80896
        %v1981 = vsel %vm1980, %v1979, -inf
        %1982 = vmax.xlane.f32.xlu0 %v1981
        %v1983 = vpop.xlane.xlu0 %1982
        %v1984 = vsub.f32 %v1979, %v1983
        %v1985 = vmul.f32 %v1984, 1.442695
        %v1986 = vpow.pop %v1985
        %v1987 = vsel %vm1980, %v1986, 0.0
        %1988 = vadd.xlane.f32.xlu0 %v1987
        %v1989 = vpop.xlane.xlu0 %1988
        %v1990 = vrcp.pop %v1989
        %v1991 = vmul.f32 %v1986, %v1990
        %1992 = vst.msk [vmem:[%s943] sm:$0xff] %vm1980, %v1991
        %v1993 = vpack.c.bf16 %v1991, %v1991
        %1995 = vrot.lane.b32.xlu0 %v1924, 96
        %v1996 = vpop.permute.xlu0 %1995
        %v1998 = vsel %vm1980, %v1993, 0
        %vm2000 = vcmask 1044480
        %v2002 = vsel %vm2000, %v1996, 0
        %2004 = vmatprep.subr.bf16.mxu0 0
        %2005 = vmatpush1.bf16.msra.mxu0 %v2002
        %2006 = vmatprep.subr.bf16.mxu0 0
        %2007 = vmatpush1.bf16.msra.mxu0 0
        %2008 = vmatprep.subr.bf16.mxu0 0
        %2009 = vmatpush1.bf16.msra.mxu0 0
        %2010 = vmatprep.subr.bf16.mxu0 0
        %2011 = vmatpush1.bf16.msra.mxu0 0
        %2012 = vmatprep.subr.bf16.mxu0 0
        %2013 = vmatpush1.bf16.msra.mxu0 0
        %2014 = vmatprep.subr.bf16.mxu0 0
        %2015 = vmatpush1.bf16.msra.mxu0 0
        %2016 = vmatprep.subr.bf16.mxu0 0
        %2017 = vmatpush1.bf16.msra.mxu0 0
        %2018 = vmatprep.subr.bf16.mxu0 0
        %2019 = vmatpush1.bf16.msra.mxu0 0
        %2020 = vmatprep.subr.bf16.mxu0 0
        %2021 = vmatpush1.bf16.msra.mxu0 0
        %2022 = vmatprep.subr.bf16.mxu0 0
        %2023 = vmatpush1.bf16.msra.mxu0 0
        %2024 = vmatprep.subr.bf16.mxu0 0
        %2025 = vmatpush1.bf16.msra.mxu0 0
        %2026 = vmatprep.subr.bf16.mxu0 0
        %2027 = vmatpush1.bf16.msra.mxu0 0
        %2028 = vmatprep.subr.bf16.mxu0 0
        %2029 = vmatpush1.bf16.msra.mxu0 0
        %2030 = vmatprep.subr.bf16.mxu0 0
        %2031 = vmatpush1.bf16.msra.mxu0 0
        %2032 = vmatprep.subr.bf16.mxu0 0
        %2033 = vmatpush1.bf16.msra.mxu0 0
        %2034 = vmatprep.subr.bf16.mxu0 0
        %2035 = vmatpush1.bf16.msra.mxu0 0
        %2036 = vmatprep.mubr.bf16.mxu0 0
        %2037 = vmatmul.mubr.bf16.gmra.mrb[0].mxu0 %v1998
        %v2038 = vpop.f32.mrb[0].mxu0
        %v2039 = vadd.f32 0.0, %v2038
        %v2040 = vpop.f32.mrb[0].mxu0
        %v2041 = vpop.f32.mrb[0].mxu0
        %v2042 = vpop.f32.mrb[0].mxu0
        %2043 = vdwg.mxu0
        %v2044 = vpack.c.bf16 %v2039, %v2039
        %v2045 = vld [vmem:[%s14] sm:$0xf]
        %2047 = vrot.lane.b32.xlu0 %v1923, 120
        %v2048 = vpop.permute.xlu0 %2047
        %2049 = vrot.lane.b32.xlu0 %v1924, 120
        %v2050 = vpop.permute.xlu0 %2049
        %v2052 = vsel %vm1103, %v2048, 0
        %v2055 = vsel %vm1103, %v2050, 0
        %2057 = vmatprep.subr.bf16.mxu0 0
        %2058 = vmatpush1.bf16.xpose.msra.mxu0 %v2055
        %2059 = vmatprep.subr.bf16.mxu0 0
        %2060 = vmatpush1.bf16.xpose.msra.mxu0 0
        %2061 = vmatprep.subr.bf16.mxu0 0
        %2062 = vmatpush1.bf16.xpose.msra.mxu0 0
        %2063 = vmatprep.subr.bf16.mxu0 0
        %2064 = vmatpush1.bf16.xpose.msra.mxu0 0
        %2065 = vmatprep.subr.bf16.mxu0 0
        %2066 = vmatpush1.bf16.xpose.msra.mxu0 0
        %2067 = vmatprep.subr.bf16.mxu0 0
        %2068 = vmatpush1.bf16.xpose.msra.mxu0 0
        %2069 = vmatprep.subr.bf16.mxu0 0
        %2070 = vmatpush1.bf16.xpose.msra.mxu0 0
        %2071 = vmatprep.subr.bf16.mxu0 0
        %2072 = vmatpush1.bf16.xpose.msra.mxu0 0
        %2073 = vmatprep.subr.bf16.mxu0 0
        %2074 = vmatpush1.bf16.xpose.msra.mxu0 0
        %2075 = vmatprep.subr.bf16.mxu0 0
        %2076 = vmatpush1.bf16.xpose.msra.mxu0 0
        %2077 = vmatprep.subr.bf16.mxu0 0
        %2078 = vmatpush1.bf16.xpose.msra.mxu0 0
        %2079 = vmatprep.subr.bf16.mxu0 0
        %2080 = vmatpush1.bf16.xpose.msra.mxu0 0
        %2081 = vmatprep.subr.bf16.mxu0 0
        %2082 = vmatpush1.bf16.xpose.msra.mxu0 0
        %2083 = vmatprep.subr.bf16.mxu0 0
        %2084 = vmatpush1.bf16.xpose.msra.mxu0 0
        %2085 = vmatprep.subr.bf16.mxu0 0
        %2086 = vmatpush1.bf16.xpose.msra.mxu0 0
        %2087 = vmatprep.subr.bf16.mxu0 0
        %2088 = vmatpush1.bf16.xpose.msra.mxu0 0
        %2089 = vmatprep.mubr.bf16.mxu0 0
        %2090 = vmatmul.mubr.bf16.gmra.mrb[0].mxu0 %v2052
        %v2091 = vpop.f32.mrb[0].mxu0
        %v2092 = vadd.f32 0.0, %v2091
        %v2093 = vpop.f32.mrb[0].mxu0
        %v2094 = vpop.f32.mrb[0].mxu0
        %v2095 = vpop.f32.mrb[0].mxu0
        %2096 = vdwg.mxu0
        %v2097 = vmul.f32 %v2092, 0.35355338
        %v2098 = vsel %vm1978, %v2097, -1e+10
        %v2099 = vsel %vm1980, %v2098, -inf
        %2100 = vmax.xlane.f32.xlu0 %v2099
        %v2101 = vpop.xlane.xlu0 %2100
        %v2102 = vsub.f32 %v2098, %v2101
        %v2103 = vmul.f32 %v2102, 1.442695
        %v2104 = vpow.pop %v2103
        %v2105 = vsel %vm1980, %v2104, 0.0
        %2106 = vadd.xlane.f32.xlu0 %v2105
        %v2107 = vpop.xlane.xlu0 %2106
        %v2108 = vrcp.pop %v2107
        %v2109 = vmul.f32 %v2104, %v2108
        %s2110 = scalar_lea.vmem %s943, 8 [#allocation14]
        %2111 = vst.msk [vmem:[%s2110] sm:$0xff] %vm1980, %v2109
        %v2112 = vpack.c.bf16 %v2109, %v2109
        %2113 = vrot.lane.b32.xlu0 %v1924, 88
        %v2114 = vpop.permute.xlu0 %2113
        %v2116 = vsel %vm1980, %v2112, 0
        %v2119 = vsel %vm2000, %v2114, 0
        %2121 = vmatprep.subr.bf16.mxu0 0
        %2122 = vmatpush1.bf16.msra.mxu0 %v2119
        %2123 = vmatprep.subr.bf16.mxu0 0
        %2124 = vmatpush1.bf16.msra.mxu0 0
        %2125 = vmatprep.subr.bf16.mxu0 0
        %2126 = vmatpush1.bf16.msra.mxu0 0
        %2127 = vmatprep.subr.bf16.mxu0 0
        %2128 = vmatpush1.bf16.msra.mxu0 0
        %2129 = vmatprep.subr.bf16.mxu0 0
        %2130 = vmatpush1.bf16.msra.mxu0 0
        %2131 = vmatprep.subr.bf16.mxu0 0
        %2132 = vmatpush1.bf16.msra.mxu0 0
        %2133 = vmatprep.subr.bf16.mxu0 0
        %2134 = vmatpush1.bf16.msra.mxu0 0
        %2135 = vmatprep.subr.bf16.mxu0 0
        %2136 = vmatpush1.bf16.msra.mxu0 0
        %2137 = vmatprep.subr.bf16.mxu0 0
        %2138 = vmatpush1.bf16.msra.mxu0 0
        %2139 = vmatprep.subr.bf16.mxu0 0
        %2140 = vmatpush1.bf16.msra.mxu0 0
        %2141 = vmatprep.subr.bf16.mxu0 0
        %2142 = vmatpush1.bf16.msra.mxu0 0
        %2143 = vmatprep.subr.bf16.mxu0 0
        %2144 = vmatpush1.bf16.msra.mxu0 0
        %2145 = vmatprep.subr.bf16.mxu0 0
        %2146 = vmatpush1.bf16.msra.mxu0 0
        %2147 = vmatprep.subr.bf16.mxu0 0
        %2148 = vmatpush1.bf16.msra.mxu0 0
        %2149 = vmatprep.subr.bf16.mxu0 0
        %2150 = vmatpush1.bf16.msra.mxu0 0
        %2151 = vmatprep.subr.bf16.mxu0 0
        %2152 = vmatpush1.bf16.msra.mxu0 0
        %2153 = vmatprep.mubr.bf16.mxu0 0
        %2154 = vmatmul.mubr.bf16.gmra.mrb[0].mxu0 %v2116
        %v2155 = vpop.f32.mrb[0].mxu0
        %v2156 = vadd.f32 0.0, %v2155
        %v2157 = vpop.f32.mrb[0].mxu0
        %v2158 = vpop.f32.mrb[0].mxu0
        %v2159 = vpop.f32.mrb[0].mxu0
        %2160 = vdwg.mxu0
        %v2161 = vpack.c.bf16 %v2156, %v2156
        %s2162 = scalar_lea.vmem %s14, 4
        %v2163 = vld [vmem:[%s2162] sm:$0xf]
        %v2165 = vsel %vm1103, %v2161, 0
        %v2168 = vsel %vm1171, %v2163, 0
        %2170 = vmatprep.subr.bf16.mxu0 0
        %2171 = vmatpush1.bf16.msra.mxu0 %v2168
        %2172 = vmatprep.subr.bf16.mxu0 0
        %2173 = vmatpush1.bf16.msra.mxu0 0
        %2174 = vmatprep.subr.bf16.mxu0 0
        %2175 = vmatpush1.bf16.msra.mxu0 0
        %2176 = vmatprep.subr.bf16.mxu0 0
        %2177 = vmatpush1.bf16.msra.mxu0 0
        %2178 = vmatprep.subr.bf16.mxu0 0
        %2179 = vmatpush1.bf16.msra.mxu0 0
        %2180 = vmatprep.subr.bf16.mxu0 0
        %2181 = vmatpush1.bf16.msra.mxu0 0
        %2182 = vmatprep.subr.bf16.mxu0 0
        %2183 = vmatpush1.bf16.msra.mxu0 0
        %2184 = vmatprep.subr.bf16.mxu0 0
        %2185 = vmatpush1.bf16.msra.mxu0 0
        %2186 = vmatprep.subr.bf16.mxu0 0
        %2187 = vmatpush1.bf16.msra.mxu0 0
        %2188 = vmatprep.subr.bf16.mxu0 0
        %2189 = vmatpush1.bf16.msra.mxu0 0
        %2190 = vmatprep.subr.bf16.mxu0 0
        %2191 = vmatpush1.bf16.msra.mxu0 0
        %2192 = vmatprep.subr.bf16.mxu0 0
        %2193 = vmatpush1.bf16.msra.mxu0 0
        %2194 = vmatprep.subr.bf16.mxu0 0
        %2195 = vmatpush1.bf16.msra.mxu0 0
        %2196 = vmatprep.subr.bf16.mxu0 0
        %2197 = vmatpush1.bf16.msra.mxu0 0
        %2198 = vmatprep.subr.bf16.mxu0 0
        %2199 = vmatpush1.bf16.msra.mxu0 0
        %2200 = vmatprep.subr.bf16.mxu0 0
        %2201 = vmatpush1.bf16.msra.mxu0 0
        %2202 = vmatprep.mubr.bf16.mxu0 0
        %2203 = vmatmul.mubr.bf16.gmra.mrb[0].mxu0 %v2165
        %v2204 = vpop.f32.mrb[0].mxu0
        %v2205 = vadd.f32 0.0, %v2204
        %v2206 = vpop.f32.mrb[0].mxu0
        %v2207 = vpop.f32.mrb[0].mxu0
        %v2208 = vpop.f32.mrb[0].mxu0
        %2209 = vdwg.mxu0
        %v2211 = vsel %vm1103, %v2044, 0
        %v2214 = vsel %vm1171, %v2045, 0
        %2216 = vmatprep.subr.bf16.mxu0 0
        %2217 = vmatpush1.bf16.msra.mxu0 %v2214
        %2218 = vmatprep.subr.bf16.mxu0 0
        %2219 = vmatpush1.bf16.msra.mxu0 0
        %2220 = vmatprep.subr.bf16.mxu0 0
        %2221 = vmatpush1.bf16.msra.mxu0 0
        %2222 = vmatprep.subr.bf16.mxu0 0
        %2223 = vmatpush1.bf16.msra.mxu0 0
        %2224 = vmatprep.subr.bf16.mxu0 0
        %2225 = vmatpush1.bf16.msra.mxu0 0
        %2226 = vmatprep.subr.bf16.mxu0 0
        %2227 = vmatpush1.bf16.msra.mxu0 0
        %2228 = vmatprep.subr.bf16.mxu0 0
        %2229 = vmatpush1.bf16.msra.mxu0 0
        %2230 = vmatprep.subr.bf16.mxu0 0
        %2231 = vmatpush1.bf16.msra.mxu0 0
        %2232 = vmatprep.subr.bf16.mxu0 0
        %2233 = vmatpush1.bf16.msra.mxu0 0
        %2234 = vmatprep.subr.bf16.mxu0 0
        %2235 = vmatpush1.bf16.msra.mxu0 0
        %2236 = vmatprep.subr.bf16.mxu0 0
        %2237 = vmatpush1.bf16.msra.mxu0 0
        %2238 = vmatprep.subr.bf16.mxu0 0
        %2239 = vmatpush1.bf16.msra.mxu0 0
        %2240 = vmatprep.subr.bf16.mxu0 0
        %2241 = vmatpush1.bf16.msra.mxu0 0
        %2242 = vmatprep.subr.bf16.mxu0 0
        %2243 = vmatpush1.bf16.msra.mxu0 0
        %2244 = vmatprep.subr.bf16.mxu0 0
        %2245 = vmatpush1.bf16.msra.mxu0 0
        %2246 = vmatprep.subr.bf16.mxu0 0
        %2247 = vmatpush1.bf16.msra.mxu0 0
        %2248 = vmatprep.mubr.bf16.mxu0 0
        %2249 = vmatmul.mubr.bf16.gmra.mrb[0].mxu0 %v2211
        %v2250 = vpop.f32.mrb[0].mxu0
        %v2251 = vadd.f32 %v2205, %v2250
        %v2252 = vpop.f32.mrb[0].mxu0
        %v2253 = vpop.f32.mrb[0].mxu0
        %v2254 = vpop.f32.mrb[0].mxu0
        %2255 = vdwg.mxu0
        %2256 = vrot.lane.b32.xlu0 %v1923, 112
        %v2257 = vpop.permute.xlu0 %2256
        %2258 = vrot.lane.b32.xlu0 %v1924, 112
        %v2259 = vpop.permute.xlu0 %2258
        %v2261 = vsel %vm1103, %v2257, 0
        %v2264 = vsel %vm1103, %v2259, 0
        %2266 = vmatprep.subr.bf16.mxu0 0
        %2267 = vmatpush1.bf16.xpose.msra.mxu0 %v2264
        %2268 = vmatprep.subr.bf16.mxu0 0
        %2269 = vmatpush1.bf16.xpose.msra.mxu0 0
        %2270 = vmatprep.subr.bf16.mxu0 0
        %2271 = vmatpush1.bf16.xpose.msra.mxu0 0
        %2272 = vmatprep.subr.bf16.mxu0 0
        %2273 = vmatpush1.bf16.xpose.msra.mxu0 0
        %2274 = vmatprep.subr.bf16.mxu0 0
        %2275 = vmatpush1.bf16.xpose.msra.mxu0 0
        %2276 = vmatprep.subr.bf16.mxu0 0
        %2277 = vmatpush1.bf16.xpose.msra.mxu0 0
        %2278 = vmatprep.subr.bf16.mxu0 0
        %2279 = vmatpush1.bf16.xpose.msra.mxu0 0
        %2280 = vmatprep.subr.bf16.mxu0 0
        %2281 = vmatpush1.bf16.xpose.msra.mxu0 0
        %2282 = vmatprep.subr.bf16.mxu0 0
        %2283 = vmatpush1.bf16.xpose.msra.mxu0 0
        %2284 = vmatprep.subr.bf16.mxu0 0
        %2285 = vmatpush1.bf16.xpose.msra.mxu0 0
        %2286 = vmatprep.subr.bf16.mxu0 0
        %2287 = vmatpush1.bf16.xpose.msra.mxu0 0
        %2288 = vmatprep.subr.bf16.mxu0 0
        %2289 = vmatpush1.bf16.xpose.msra.mxu0 0
        %2290 = vmatprep.subr.bf16.mxu0 0
        %2291 = vmatpush1.bf16.xpose.msra.mxu0 0
        %2292 = vmatprep.subr.bf16.mxu0 0
        %2293 = vmatpush1.bf16.xpose.msra.mxu0 0
        %2294 = vmatprep.subr.bf16.mxu0 0
        %2295 = vmatpush1.bf16.xpose.msra.mxu0 0
        %2296 = vmatprep.subr.bf16.mxu0 0
        %2297 = vmatpush1.bf16.xpose.msra.mxu0 0
        %2298 = vmatprep.mubr.bf16.mxu0 0
        %2299 = vmatmul.mubr.bf16.gmra.mrb[0].mxu0 %v2261
        %v2300 = vpop.f32.mrb[0].mxu0
        %v2301 = vadd.f32 0.0, %v2300
        %v2302 = vpop.f32.mrb[0].mxu0
        %v2303 = vpop.f32.mrb[0].mxu0
        %v2304 = vpop.f32.mrb[0].mxu0
        %2305 = vdwg.mxu0
        %v2306 = vmul.f32 %v2301, 0.35355338
        %v2307 = vsel %vm1978, %v2306, -1e+10
        %v2308 = vsel %vm1980, %v2307, -inf
        %2309 = vmax.xlane.f32.xlu0 %v2308
        %v2310 = vpop.xlane.xlu0 %2309
        %v2311 = vsub.f32 %v2307, %v2310
        %v2312 = vmul.f32 %v2311, 1.442695
        %v2313 = vpow.pop %v2312
        %v2314 = vsel %vm1980, %v2313, 0.0
        %2315 = vadd.xlane.f32.xlu0 %v2314
        %v2316 = vpop.xlane.xlu0 %2315
        %v2317 = vrcp.pop %v2316
        %v2318 = vmul.f32 %v2313, %v2317
        %s2319 = scalar_lea.vmem %s943, 16 [#allocation14]
        %2320 = vst.msk [vmem:[%s2319] sm:$0xff] %vm1980, %v2318
        %v2321 = vpack.c.bf16 %v2318, %v2318
        %2322 = vrot.lane.b32.xlu0 %v1924, 80
        %v2323 = vpop.permute.xlu0 %2322
        %v2325 = vsel %vm1980, %v2321, 0
        %v2328 = vsel %vm2000, %v2323, 0
        %2330 = vmatprep.subr.bf16.mxu0 0
        %2331 = vmatpush1.bf16.msra.mxu0 %v2328
        %2332 = vmatprep.subr.bf16.mxu0 0
        %2333 = vmatpush1.bf16.msra.mxu0 0
        %2334 = vmatprep.subr.bf16.mxu0 0
        %2335 = vmatpush1.bf16.msra.mxu0 0
        %2336 = vmatprep.subr.bf16.mxu0 0
        %2337 = vmatpush1.bf16.msra.mxu0 0
        %2338 = vmatprep.subr.bf16.mxu0 0
        %2339 = vmatpush1.bf16.msra.mxu0 0
        %2340 = vmatprep.subr.bf16.mxu0 0
        %2341 = vmatpush1.bf16.msra.mxu0 0
        %2342 = vmatprep.subr.bf16.mxu0 0
        %2343 = vmatpush1.bf16.msra.mxu0 0
        %2344 = vmatprep.subr.bf16.mxu0 0
        %2345 = vmatpush1.bf16.msra.mxu0 0
        %2346 = vmatprep.subr.bf16.mxu0 0
        %2347 = vmatpush1.bf16.msra.mxu0 0
        %2348 = vmatprep.subr.bf16.mxu0 0
        %2349 = vmatpush1.bf16.msra.mxu0 0
        %2350 = vmatprep.subr.bf16.mxu0 0
        %2351 = vmatpush1.bf16.msra.mxu0 0
        %2352 = vmatprep.subr.bf16.mxu0 0
        %2353 = vmatpush1.bf16.msra.mxu0 0
        %2354 = vmatprep.subr.bf16.mxu0 0
        %2355 = vmatpush1.bf16.msra.mxu0 0
        %2356 = vmatprep.subr.bf16.mxu0 0
        %2357 = vmatpush1.bf16.msra.mxu0 0
        %2358 = vmatprep.subr.bf16.mxu0 0
        %2359 = vmatpush1.bf16.msra.mxu0 0
        %2360 = vmatprep.subr.bf16.mxu0 0
        %2361 = vmatpush1.bf16.msra.mxu0 0
        %2362 = vmatprep.mubr.bf16.mxu0 0
        %2363 = vmatmul.mubr.bf16.gmra.mrb[0].mxu0 %v2325
        %v2364 = vpop.f32.mrb[0].mxu0
        %v2365 = vadd.f32 0.0, %v2364
        %v2366 = vpop.f32.mrb[0].mxu0
        %v2367 = vpop.f32.mrb[0].mxu0
        %v2368 = vpop.f32.mrb[0].mxu0
        %2369 = vdwg.mxu0
        %v2370 = vpack.c.bf16 %v2365, %v2365
        %s2371 = scalar_lea.vmem %s14, 8
        %v2372 = vld [vmem:[%s2371] sm:$0xf]
        %v2374 = vsel %vm1103, %v2370, 0
        %v2377 = vsel %vm1171, %v2372, 0
        %2379 = vmatprep.subr.bf16.mxu0 0
        %2380 = vmatpush1.bf16.msra.mxu0 %v2377
        %2381 = vmatprep.subr.bf16.mxu0 0
        %2382 = vmatpush1.bf16.msra.mxu0 0
        %2383 = vmatprep.subr.bf16.mxu0 0
        %2384 = vmatpush1.bf16.msra.mxu0 0
        %2385 = vmatprep.subr.bf16.mxu0 0
        %2386 = vmatpush1.bf16.msra.mxu0 0
        %2387 = vmatprep.subr.bf16.mxu0 0
        %2388 = vmatpush1.bf16.msra.mxu0 0
        %2389 = vmatprep.subr.bf16.mxu0 0
        %2390 = vmatpush1.bf16.msra.mxu0 0
        %2391 = vmatprep.subr.bf16.mxu0 0
        %2392 = vmatpush1.bf16.msra.mxu0 0
        %2393 = vmatprep.subr.bf16.mxu0 0
        %2394 = vmatpush1.bf16.msra.mxu0 0
        %2395 = vmatprep.subr.bf16.mxu0 0
        %2396 = vmatpush1.bf16.msra.mxu0 0
        %2397 = vmatprep.subr.bf16.mxu0 0
        %2398 = vmatpush1.bf16.msra.mxu0 0
        %2399 = vmatprep.subr.bf16.mxu0 0
        %2400 = vmatpush1.bf16.msra.mxu0 0
        %2401 = vmatprep.subr.bf16.mxu0 0
        %2402 = vmatpush1.bf16.msra.mxu0 0
        %2403 = vmatprep.subr.bf16.mxu0 0
        %2404 = vmatpush1.bf16.msra.mxu0 0
        %2405 = vmatprep.subr.bf16.mxu0 0
        %2406 = vmatpush1.bf16.msra.mxu0 0
        %2407 = vmatprep.subr.bf16.mxu0 0
        %2408 = vmatpush1.bf16.msra.mxu0 0
        %2409 = vmatprep.subr.bf16.mxu0 0
        %2410 = vmatpush1.bf16.msra.mxu0 0
        %2411 = vmatprep.mubr.bf16.mxu0 0
        %2412 = vmatmul.mubr.bf16.gmra.mrb[0].mxu0 %v2374
        %v2413 = vpop.f32.mrb[0].mxu0
        %v2414 = vadd.f32 0.0, %v2413
        %v2415 = vpop.f32.mrb[0].mxu0
        %v2416 = vpop.f32.mrb[0].mxu0
        %v2417 = vpop.f32.mrb[0].mxu0
        %2418 = vdwg.mxu0
        %v2419 = vadd.f32 %v2251, %v2414
        %2420 = vrot.lane.b32.xlu0 %v1923, 104
        %v2421 = vpop.permute.xlu0 %2420
        %2422 = vrot.lane.b32.xlu0 %v1924, 104
        %v2423 = vpop.permute.xlu0 %2422
        %v2425 = vsel %vm1103, %v2421, 0
        %v2428 = vsel %vm1103, %v2423, 0
        %2430 = vmatprep.subr.bf16.mxu0 0
        %2431 = vmatpush1.bf16.xpose.msra.mxu0 %v2428
        %2432 = vmatprep.subr.bf16.mxu0 0
        %2433 = vmatpush1.bf16.xpose.msra.mxu0 0
        %2434 = vmatprep.subr.bf16.mxu0 0
        %2435 = vmatpush1.bf16.xpose.msra.mxu0 0
        %2436 = vmatprep.subr.bf16.mxu0 0
        %2437 = vmatpush1.bf16.xpose.msra.mxu0 0
        %2438 = vmatprep.subr.bf16.mxu0 0
        %2439 = vmatpush1.bf16.xpose.msra.mxu0 0
        %2440 = vmatprep.subr.bf16.mxu0 0
        %2441 = vmatpush1.bf16.xpose.msra.mxu0 0
        %2442 = vmatprep.subr.bf16.mxu0 0
        %2443 = vmatpush1.bf16.xpose.msra.mxu0 0
        %2444 = vmatprep.subr.bf16.mxu0 0
        %2445 = vmatpush1.bf16.xpose.msra.mxu0 0
        %2446 = vmatprep.subr.bf16.mxu0 0
        %2447 = vmatpush1.bf16.xpose.msra.mxu0 0
        %2448 = vmatprep.subr.bf16.mxu0 0
        %2449 = vmatpush1.bf16.xpose.msra.mxu0 0
        %2450 = vmatprep.subr.bf16.mxu0 0
        %2451 = vmatpush1.bf16.xpose.msra.mxu0 0
        %2452 = vmatprep.subr.bf16.mxu0 0
        %2453 = vmatpush1.bf16.xpose.msra.mxu0 0
        %2454 = vmatprep.subr.bf16.mxu0 0
        %2455 = vmatpush1.bf16.xpose.msra.mxu0 0
        %2456 = vmatprep.subr.bf16.mxu0 0
        %2457 = vmatpush1.bf16.xpose.msra.mxu0 0
        %2458 = vmatprep.subr.bf16.mxu0 0
        %2459 = vmatpush1.bf16.xpose.msra.mxu0 0
        %2460 = vmatprep.subr.bf16.mxu0 0
        %2461 = vmatpush1.bf16.xpose.msra.mxu0 0
        %2462 = vmatprep.mubr.bf16.mxu0 0
        %2463 = vmatmul.mubr.bf16.gmra.mrb[0].mxu0 %v2425
        %v2464 = vpop.f32.mrb[0].mxu0
        %v2465 = vadd.f32 0.0, %v2464
        %v2466 = vpop.f32.mrb[0].mxu0
        %v2467 = vpop.f32.mrb[0].mxu0
        %v2468 = vpop.f32.mrb[0].mxu0
        %2469 = vdwg.mxu0
        %v2470 = vmul.f32 %v2465, 0.35355338
        %v2471 = vsel %vm1978, %v2470, -1e+10
        %v2472 = vsel %vm1980, %v2471, -inf
        %2473 = vmax.xlane.f32.xlu0 %v2472
        %v2474 = vpop.xlane.xlu0 %2473
        %v2475 = vsub.f32 %v2471, %v2474
        %v2476 = vmul.f32 %v2475, 1.442695
        %v2477 = vpow.pop %v2476
        %v2478 = vsel %vm1980, %v2477, 0.0
        %2479 = vadd.xlane.f32.xlu0 %v2478
        %v2480 = vpop.xlane.xlu0 %2479
        %v2481 = vrcp.pop %v2480
        %v2482 = vmul.f32 %v2477, %v2481
        %s2483 = scalar_lea.vmem %s943, 24 [#allocation14]
        %2484 = vst.msk [vmem:[%s2483] sm:$0xff] %vm1980, %v2482
        %v2485 = vpack.c.bf16 %v2482, %v2482
        %2486 = vrot.lane.b32.xlu0 %v1924, 72
        %v2487 = vpop.permute.xlu0 %2486
        %v2489 = vsel %vm1980, %v2485, 0
        %v2492 = vsel %vm2000, %v2487, 0
        %2494 = vmatprep.subr.bf16.mxu0 0
        %2495 = vmatpush1.bf16.msra.mxu0 %v2492
        %2496 = vmatprep.subr.bf16.mxu0 0
        %2497 = vmatpush1.bf16.msra.mxu0 0
        %2498 = vmatprep.subr.bf16.mxu0 0
        %2499 = vmatpush1.bf16.msra.mxu0 0
        %2500 = vmatprep.subr.bf16.mxu0 0
        %2501 = vmatpush1.bf16.msra.mxu0 0
        %2502 = vmatprep.subr.bf16.mxu0 0
        %2503 = vmatpush1.bf16.msra.mxu0 0
        %2504 = vmatprep.subr.bf16.mxu0 0
        %2505 = vmatpush1.bf16.msra.mxu0 0
        %2506 = vmatprep.subr.bf16.mxu0 0
        %2507 = vmatpush1.bf16.msra.mxu0 0
        %2508 = vmatprep.subr.bf16.mxu0 0
        %2509 = vmatpush1.bf16.msra.mxu0 0
        %2510 = vmatprep.subr.bf16.mxu0 0
        %2511 = vmatpush1.bf16.msra.mxu0 0
        %2512 = vmatprep.subr.bf16.mxu0 0
        %2513 = vmatpush1.bf16.msra.mxu0 0
        %2514 = vmatprep.subr.bf16.mxu0 0
        %2515 = vmatpush1.bf16.msra.mxu0 0
        %2516 = vmatprep.subr.bf16.mxu0 0
        %2517 = vmatpush1.bf16.msra.mxu0 0
        %2518 = vmatprep.subr.bf16.mxu0 0
        %2519 = vmatpush1.bf16.msra.mxu0 0
        %2520 = vmatprep.subr.bf16.mxu0 0
        %2521 = vmatpush1.bf16.msra.mxu0 0
        %2522 = vmatprep.subr.bf16.mxu0 0
        %2523 = vmatpush1.bf16.msra.mxu0 0
        %2524 = vmatprep.subr.bf16.mxu0 0
        %2525 = vmatpush1.bf16.msra.mxu0 0
        %2526 = vmatprep.mubr.bf16.mxu0 0
        %2527 = vmatmul.mubr.bf16.gmra.mrb[0].mxu0 %v2489
        %v2528 = vpop.f32.mrb[0].mxu0
        %v2529 = vadd.f32 0.0, %v2528
        %v2530 = vpop.f32.mrb[0].mxu0
        %v2531 = vpop.f32.mrb[0].mxu0
        %v2532 = vpop.f32.mrb[0].mxu0
        %2533 = vdwg.mxu0
        %v2534 = vpack.c.bf16 %v2529, %v2529
        %s2535 = scalar_lea.vmem %s14, 12
        %v2536 = vld [vmem:[%s2535] sm:$0xf]
        %v2538 = vsel %vm1103, %v2534, 0
        %v2541 = vsel %vm1171, %v2536, 0
        %2543 = vmatprep.subr.bf16.mxu0 0
        %2544 = vmatpush1.bf16.msra.mxu0 %v2541
        %2545 = vmatprep.subr.bf16.mxu0 0
        %2546 = vmatpush1.bf16.msra.mxu0 0
        %2547 = vmatprep.subr.bf16.mxu0 0
        %2548 = vmatpush1.bf16.msra.mxu0 0
        %2549 = vmatprep.subr.bf16.mxu0 0
        %2550 = vmatpush1.bf16.msra.mxu0 0
        %2551 = vmatprep.subr.bf16.mxu0 0
        %2552 = vmatpush1.bf16.msra.mxu0 0
        %2553 = vmatprep.subr.bf16.mxu0 0
        %2554 = vmatpush1.bf16.msra.mxu0 0
        %2555 = vmatprep.subr.bf16.mxu0 0
        %2556 = vmatpush1.bf16.msra.mxu0 0
        %2557 = vmatprep.subr.bf16.mxu0 0
        %2558 = vmatpush1.bf16.msra.mxu0 0
        %2559 = vmatprep.subr.bf16.mxu0 0
        %2560 = vmatpush1.bf16.msra.mxu0 0
        %2561 = vmatprep.subr.bf16.mxu0 0
        %2562 = vmatpush1.bf16.msra.mxu0 0
        %2563 = vmatprep.subr.bf16.mxu0 0
        %2564 = vmatpush1.bf16.msra.mxu0 0
        %2565 = vmatprep.subr.bf16.mxu0 0
        %2566 = vmatpush1.bf16.msra.mxu0 0
        %2567 = vmatprep.subr.bf16.mxu0 0
        %2568 = vmatpush1.bf16.msra.mxu0 0
        %2569 = vmatprep.subr.bf16.mxu0 0
        %2570 = vmatpush1.bf16.msra.mxu0 0
        %2571 = vmatprep.subr.bf16.mxu0 0
        %2572 = vmatpush1.bf16.msra.mxu0 0
        %2573 = vmatprep.subr.bf16.mxu0 0
        %2574 = vmatpush1.bf16.msra.mxu0 0
        %2575 = vmatprep.mubr.bf16.mxu0 0
        %2576 = vmatmul.mubr.bf16.gmra.mrb[0].mxu0 %v2538
        %v2577 = vpop.f32.mrb[0].mxu0
        %v2578 = vadd.f32 0.0, %v2577
        %v2579 = vpop.f32.mrb[0].mxu0
        %v2580 = vpop.f32.mrb[0].mxu0
        %v2581 = vpop.f32.mrb[0].mxu0
        %2582 = vdwg.mxu0
        %v2583 = vadd.f32 %v2419, %v2578
        %v2584 = vld [vmem:[%s15] sm:$0x1]
        %v2586 = vlaneseq
        %v2587 = vshrl.u32 %v2586, 7
        %v2588 = vsub.s32 0, %v2587
        %v2589 = vrot.slane %v2584, %v2588
        %v2591 = vadd.f32 %v2583, %v2589
        %v2592 = vadd.f32 %v1787, %v2591
        %v2593 = vsel %vm994, %v2592, 0.0
        %2594 = vadd.xlane.f32.xlu0 %v2593
        %v2595 = vpop.xlane.xlu0 %2594
        %v2596 = vmul.f32 %v2595, %v1761
        %v2597 = vsub.f32 %v2592, %v2596
        %v2598 = vmul.f32 %v2597, %v2597
        %v2599 = vsel %vm994, %v2598, 0.0
        %2600 = vadd.xlane.f32.xlu0 %v2599
        %v2601 = vpop.xlane.xlu0 %2600
        %v2602 = vmul.f32 %v2601, %v1761
        %v2603 = vadd.f32 %v2602, 1e-05
        %v2604 = vrsqrt.pop %v2603
        %v2605 = vmul.f32 %v2597, %v2604
        %v2606 = vld [vmem:[#allocation8] sm:$0x1]
        %v2608 = vlaneseq
        %v2609 = vshrl.u32 %v2608, 7
        %v2610 = vsub.s32 0, %v2609
        %v2611 = vrot.slane %v2606, %v2610
        %v2613 = vmul.f32 %v2605, %v2611
        %v2614 = vld [vmem:[#allocation10] sm:$0x1]
        %v2616 = vlaneseq
        %v2617 = vshrl.u32 %v2616, 7
        %v2618 = vsub.s32 0, %v2617
        %v2619 = vrot.slane %v2614, %v2618
        %v2621 = vadd.f32 %v2613, %v2619
        %v2622 = vpack.c.bf16 %v2621, %v2621
        %v2623 = vld [vmem:[%s16] sm:$0xf]
        %v2624 = vld [vmem:[%s16 + $0x4] sm:$0xf]
        %v2625 = vld [vmem:[%s16 + $0x8] sm:$0xf]
        %v2626 = vld [vmem:[%s16 + $0xc] sm:$0xf]
        %v2627 = vld [vmem:[%s17] sm:$0x1]
        %v2629 = vlaneseq
        %v2630 = vshrl.u32 %v2629, 7
        %v2631 = vsub.s32 0, %v2630
        %v2632 = vrot.slane %v2627, %v2631
        %v2638 = vunpack.c.l.b16 %v2623
        %v2639 = vunpack.c.l.b16 %v2624
        %v2640 = vunpack.c.l.b16 %v2625
        %v2641 = vunpack.c.l.b16 %v2626
        %v2642 = vpack.c.b16 %v2639, %v2638
        %v2643 = vpack.c.b16 %v2641, %v2640
        %v2647 = vsel %vm994, %v2622, 0
        %2649 = vmatprep.subr.bf16.mxu0 0
        %2650 = vmatpush1.bf16.msra.mxu0 %v2642
        %2651 = vmatprep.subr.bf16.mxu0 0
        %2652 = vmatpush1.bf16.msra.mxu0 %v2643
        %2653 = vmatprep.subr.bf16.mxu0 0
        %2654 = vmatpush1.bf16.msra.mxu0 0
        %2655 = vmatprep.subr.bf16.mxu0 0
        %2656 = vmatpush1.bf16.msra.mxu0 0
        %2657 = vmatprep.subr.bf16.mxu0 0
        %2658 = vmatpush1.bf16.msra.mxu0 0
        %2659 = vmatprep.subr.bf16.mxu0 0
        %2660 = vmatpush1.bf16.msra.mxu0 0
        %2661 = vmatprep.subr.bf16.mxu0 0
        %2662 = vmatpush1.bf16.msra.mxu0 0
        %2663 = vmatprep.subr.bf16.mxu0 0
        %2664 = vmatpush1.bf16.msra.mxu0 0
        %2665 = vmatprep.subr.bf16.mxu0 0
        %2666 = vmatpush1.bf16.msra.mxu0 0
        %2667 = vmatprep.subr.bf16.mxu0 0
        %2668 = vmatpush1.bf16.msra.mxu0 0
        %2669 = vmatprep.subr.bf16.mxu0 0
        %2670 = vmatpush1.bf16.msra.mxu0 0
        %2671 = vmatprep.subr.bf16.mxu0 0
        %2672 = vmatpush1.bf16.msra.mxu0 0
        %2673 = vmatprep.subr.bf16.mxu0 0
        %2674 = vmatpush1.bf16.msra.mxu0 0
        %2675 = vmatprep.subr.bf16.mxu0 0
        %2676 = vmatpush1.bf16.msra.mxu0 0
        %2677 = vmatprep.subr.bf16.mxu0 0
        %2678 = vmatpush1.bf16.msra.mxu0 0
        %2679 = vmatprep.subr.bf16.mxu0 0
        %2680 = vmatpush1.bf16.msra.mxu0 0
        %2681 = vmatprep.mubr.bf16.mxu0 0
        %2682 = vmatmul.mubr.bf16.gmra.mrb[0].mxu0 %v2647
        %v2683 = vpop.f32.mrb[0].mxu0
        %v2684 = vadd.f32 %v2632, %v2683
        %v2685 = vpop.f32.mrb[0].mxu0
        %v2686 = vpop.f32.mrb[0].mxu0
        %v2687 = vpop.f32.mrb[0].mxu0
        %2688 = vdwg.mxu0
        %v2689 = vmax.f32 %v2684, 0.0
        %v2690 = vpack.c.bf16 %v2689, %v2689
        %v2691 = vld [vmem:[%s18] sm:$0xf]
        %v2692 = vld [vmem:[%s18 + $0x4] sm:$0xf]
        %v2693 = vld [vmem:[%s18 + $0x8] sm:$0xf]
        %v2694 = vld [vmem:[%s18 + $0xc] sm:$0xf]
        %v2695 = vld [vmem:[%s18 + $0x10] sm:$0xf]
        %v2696 = vld [vmem:[%s18 + $0x14] sm:$0xf]
        %v2697 = vld [vmem:[%s18 + $0x18] sm:$0xf]
        %v2698 = vld [vmem:[%s18 + $0x1c] sm:$0xf]
        %v2699 = vld [vmem:[#allocation2] sm:$0x1]
        %v2701 = vlaneseq
        %v2702 = vshrl.u32 %v2701, 7
        %v2703 = vsub.s32 0, %v2702
        %v2704 = vrot.slane %v2699, %v2703
        %v2714 = vunpack.c.l.b16 %v2691
        %v2715 = vunpack.c.l.b16 %v2692
        %v2716 = vunpack.c.l.b16 %v2693
        %v2717 = vunpack.c.l.b16 %v2694
        %v2718 = vunpack.c.l.b16 %v2695
        %v2719 = vunpack.c.l.b16 %v2696
        %v2720 = vunpack.c.l.b16 %v2697
        %v2721 = vunpack.c.l.b16 %v2698
        %v2722 = vpack.c.b16 %v2715, %v2714
        %v2723 = vpack.c.b16 %v2717, %v2716
        %v2724 = vpack.c.b16 %v2719, %v2718
        %v2725 = vpack.c.b16 %v2721, %v2720
        %vm2730 = vcmask 523264
        %v2732 = vsel %vm2730, %v2690, 0
        %2734 = vmatprep.subr.bf16.mxu0 0
        %2735 = vmatpush1.bf16.msra.mxu0 %v2722
        %2736 = vmatprep.subr.bf16.mxu0 0
        %2737 = vmatpush1.bf16.msra.mxu0 %v2723
        %2738 = vmatprep.subr.bf16.mxu0 0
        %2739 = vmatpush1.bf16.msra.mxu0 %v2724
        %2740 = vmatprep.subr.bf16.mxu0 0
        %2741 = vmatpush1.bf16.msra.mxu0 %v2725
        %2742 = vmatprep.subr.bf16.mxu0 0
        %2743 = vmatpush1.bf16.msra.mxu0 0
        %2744 = vmatprep.subr.bf16.mxu0 0
        %2745 = vmatpush1.bf16.msra.mxu0 0
        %2746 = vmatprep.subr.bf16.mxu0 0
        %2747 = vmatpush1.bf16.msra.mxu0 0
        %2748 = vmatprep.subr.bf16.mxu0 0
        %2749 = vmatpush1.bf16.msra.mxu0 0
        %2750 = vmatprep.subr.bf16.mxu0 0
        %2751 = vmatpush1.bf16.msra.mxu0 0
        %2752 = vmatprep.subr.bf16.mxu0 0
        %2753 = vmatpush1.bf16.msra.mxu0 0
        %2754 = vmatprep.subr.bf16.mxu0 0
        %2755 = vmatpush1.bf16.msra.mxu0 0
        %2756 = vmatprep.subr.bf16.mxu0 0
        %2757 = vmatpush1.bf16.msra.mxu0 0
        %2758 = vmatprep.subr.bf16.mxu0 0
        %2759 = vmatpush1.bf16.msra.mxu0 0
        %2760 = vmatprep.subr.bf16.mxu0 0
        %2761 = vmatpush1.bf16.msra.mxu0 0
        %2762 = vmatprep.subr.bf16.mxu0 0
        %2763 = vmatpush1.bf16.msra.mxu0 0
        %2764 = vmatprep.subr.bf16.mxu0 0
        %2765 = vmatpush1.bf16.msra.mxu0 0
        %2766 = vmatprep.mubr.bf16.mxu0 0
        %2767 = vmatmul.mubr.bf16.gmra.mrb[0].mxu0 %v2732
        %v2768 = vpop.f32.mrb[0].mxu0
        %v2769 = vadd.f32 %v2704, %v2768
        %v2770 = vpop.f32.mrb[0].mxu0
        %v2771 = vpop.f32.mrb[0].mxu0
        %v2772 = vpop.f32.mrb[0].mxu0
        %2773 = vdwg.mxu0
        %v2774 = vadd.f32 %v2621, %v2769
        %v2775 = vsel %vm994, %v2774, 0.0
        %2776 = vadd.xlane.f32.xlu0 %v2775
        %v2777 = vpop.xlane.xlu0 %2776
        %v2778 = vmul.f32 %v2777, %v1761
        %v2779 = vsub.f32 %v2774, %v2778
        %v2780 = vmul.f32 %v2779, %v2779
        %v2781 = vsel %vm994, %v2780, 0.0
        %2782 = vadd.xlane.f32.xlu0 %v2781
        %v2783 = vpop.xlane.xlu0 %2782
        %v2784 = vmul.f32 %v2783, %v1761
        %v2785 = vadd.f32 %v2784, 1e-05
        %v2786 = vrsqrt.pop %v2785
        %v2787 = vmul.f32 %v2779, %v2786
        %v2788 = vld [vmem:[#allocation11] sm:$0x1]
        %v2790 = vlaneseq
        %v2791 = vshrl.u32 %v2790, 7
        %v2792 = vsub.s32 0, %v2791
        %v2793 = vrot.slane %v2788, %v2792
        %v2795 = vmul.f32 %v2787, %v2793
        %v2796 = vld [vmem:[#allocation13] sm:$0x1]
        %v2798 = vlaneseq
        %v2799 = vshrl.u32 %v2798, 7
        %v2800 = vsub.s32 0, %v2799
        %v2801 = vrot.slane %v2796, %v2800
        %v2803 = vadd.f32 %v2795, %v2801
        %2804 = vst.msk [vmem:[%s963] sm:$0xff] %vm994, %v2803
        %p2805 = scmp.lt.s32.totalorder %s46, 1
        %s2806 = scalar_select %p2805, %s46, 1
        %s2807 = smul.addr %s2806, 8
        %s2808 = scalar_lea.vmem %s26, %s2807
        %s2809 = sand.u32 %s646, 1
        %s2810 = scalar_lea.sflag [#allocation4], %s2809
        %s2811 = sand.u32 %s646, 1
        %s2812 = smul.addr %s2811, 32
        %s2813 = scalar_lea.vmem [#allocation14], %s2812
        // Predicated region
        $region153: #{decoder_forward.4} parent=123 // pred_check
          %p2814 = pneg %p630
        $region154: #{decoder_forward.4} parent=123 // pred_check_branch
          %2816 = sbr.rel (%p2814) target = $region156
        $region155: #{decoder_forward.4} parent=123 // pred_region
          _
        $region156: #{decoder_forward.4} parent=123 // pred_fallthru
          _
        // Predicated region
        $region157: #{decoder_forward.4} parent=123 // pred_check
          %p2817 = pneg %p656
        $region158: #{decoder_forward.4} parent=123 // pred_check_branch
          %2819 = sbr.rel (%p2817) target = $region160
        $region159: #{decoder_forward.4} parent=123 // pred_region
          %s2821 = ssub.s32 512, 512
          %2822 = vsyncadd %s2810, %s2821
          %s2823 = smul.addr %s46, 4
          %s2824 = smul.addr %s2823, 128
          %s2825 = scalar_lea.hbm %s27, %s2824
          %s2826 = sshll.u32 %s2813, 4
          %s2827 = int_to_ptr.vmem [resolvable:$true] %s2826
          %2832 = dma.vmem_to_hbm [thread:$0]  %s2827, 512, %s2825, %s2810, 128, 128, 8
        $region160: #{decoder_forward.4} parent=123 // pred_fallthru
          _
      $region124: #{decoder_forward.4} parent=5 // pred_fallthru
        _
      %p2833 = scmp.le.s32.totalorder 2, %s41
      // Predicated region
      $region161: #{decoder_forward.4} parent=5 // pred_check
        %p2834 = pneg %p2833
      $region162: #{decoder_forward.4} parent=5 // pred_check_branch
        %2836 = sbr.rel (%p2834) target = $region164
      $region163: #{decoder_forward.4} parent=5 // pred_region
        %s2837 = ssub.s32 %s41, 2
        // Predicated region
        $region165: #{decoder_forward.4} parent=163 // pred_check
          %p2838 = pneg %p636
        $region166: #{decoder_forward.4} parent=163 // pred_check_branch
          %2840 = sbr.rel (%p2838) target = $region168
        $region167: #{decoder_forward.4} parent=163 // pred_region
          %p2841 = scmp.lt.s32.totalorder %s47, 1
          %s2842 = scalar_select %p2841, %s47, 1
          %s2843 = smul.addr %s2842, 8
          %s2844 = scalar_lea.vmem %s26, %s2843
        $region168: #{decoder_forward.4} parent=163 // pred_fallthru
          _
        // Predicated region
        $region169: #{decoder_forward.4} parent=163 // pred_check
          %p2845 = pneg %p662
        $region170: #{decoder_forward.4} parent=163 // pred_check_branch
          %2847 = sbr.rel (%p2845) target = $region172
        $region171: #{decoder_forward.4} parent=163 // pred_region
          %s2848 = sand.u32 %s647, 1
          %s2849 = scalar_lea.sflag [#allocation4], %s2848
          %s2850 = sand.u32 %s647, 1
          %s2851 = smul.addr %s2850, 32
          %s2852 = scalar_lea.vmem [#allocation14], %s2851
          %2853 = dma.done %s2849, 512
        $region172: #{decoder_forward.4} parent=163 // pred_fallthru
          _
      $region164: #{decoder_forward.4} parent=5 // pred_fallthru
        _
    $region6: #{decoder_forward.4} parent=1 // loop_footer
      %s45 = sadd.s32 1, %s41
    $region7: #{decoder_forward.4} parent=1 // loop_footer_branch
      %40 = sbr.rel target = $region3
    $region8: #{decoder_forward.4} parent=1 // loop_exit
      _
    %2854 = vsyncpa [#allocation3], 1
    %s2855 = scalar_lea.sflag [#allocation3], 1
    %2856 = vsyncpa %s2855, 1
    %2857 = vsyncpa [#allocation6], 1
    %2858 = vsyncpa [#allocation9], 1
    %2859 = vsyncpa [#allocation12], 1
    %2860 = vsyncpa [#allocation4], 1
    %s2861 = scalar_lea.sflag [#allocation4], 1
    %2862 = vsyncpa %s2861, 1

// kernel: decoder_forward.3
$region0: #{decoder_forward.3}
  #allocation0 [shape = 'u32[]', space=smem, size = 0x4, offset = 0x4, fixed_abs, tag = 'smem constant byte address 0x4 - core index']
  #allocation1 [shape = 'u32[144,128]{1,0:T(1,128)}', space=vmem, size = 0x12000, scoped, tag = 'internal scratch']
  %s0 = inlined_call_operand.vmem [shape: f32[2,8,32], index: 0, kind: input, shape index: {}]
  %s1 = inlined_call_operand.vmem [shape: f32[2,10,32], index: 1, kind: input, shape index: {}]
  %s2 = inlined_call_operand.vmem [shape: f32[2,8,8], index: 2, kind: input, shape index: {}]
  %s3 = inlined_call_operand.vmem [shape: f32[2,1,10], index: 3, kind: input, shape index: {}]
  %s4 = inlined_call_operand.vmem [shape: bf16[32,32], index: 4, kind: input, shape index: {}]
  %s5 = inlined_call_operand.vmem [shape: f32[1,32], index: 5, kind: input, shape index: {}]
  %s6 = inlined_call_operand.vmem [shape: bf16[32,64], index: 6, kind: input, shape index: {}]
  %s7 = inlined_call_operand.vmem [shape: f32[1,64], index: 7, kind: input, shape index: {}]
  %s8 = inlined_call_operand.vmem [shape: bf16[4,8,32], index: 8, kind: input, shape index: {}]
  %s9 = inlined_call_operand.vmem [shape: f32[1,32], index: 9, kind: input, shape index: {}]
  %s10 = inlined_call_operand.vmem [shape: bf16[32,32], index: 10, kind: input, shape index: {}]
  %s11 = inlined_call_operand.vmem [shape: f32[1,32], index: 11, kind: input, shape index: {}]
  %s12 = inlined_call_operand.vmem [shape: bf16[32,64], index: 12, kind: input, shape index: {}]
  %s13 = inlined_call_operand.vmem [shape: f32[1,64], index: 13, kind: input, shape index: {}]
  %s14 = inlined_call_operand.vmem [shape: bf16[4,8,32], index: 14, kind: input, shape index: {}]
  %s15 = inlined_call_operand.vmem [shape: f32[1,32], index: 15, kind: input, shape index: {}]
  %s16 = inlined_call_operand.vmem [shape: bf16[32,64], index: 16, kind: input, shape index: {}]
  %s17 = inlined_call_operand.vmem [shape: f32[1,64], index: 17, kind: input, shape index: {}]
  %s18 = inlined_call_operand.vmem [shape: bf16[64,32], index: 18, kind: input, shape index: {}]
  %s19 = inlined_call_operand.vmem [shape: f32[1,32], index: 19, kind: input, shape index: {}]
  %s20 = inlined_call_operand.vmem [shape: f32[1,32], index: 20, kind: input, shape index: {}]
  %s21 = inlined_call_operand.vmem [shape: f32[1,32], index: 21, kind: input, shape index: {}]
  %s22 = inlined_call_operand.vmem [shape: f32[1,32], index: 22, kind: input, shape index: {}]
  %s23 = inlined_call_operand.vmem [shape: f32[1,32], index: 23, kind: input, shape index: {}]
  %s24 = inlined_call_operand.vmem [shape: f32[1,32], index: 24, kind: input, shape index: {}]
  %s25 = inlined_call_operand.vmem [shape: f32[1,32], index: 25, kind: input, shape index: {}]
  %s26 = inlined_call_operand.vmem [shape: f32[2,8,32], index: 26, kind: output, shape index: {0}]
  %s27 = inlined_call_operand.hbm [shape: f32[2,4,8,10], index: 27, kind: output, shape index: {1}]
  %28 = xla_tuple %s26, %s27
  %s29 = sld [smem:[#allocation0]]
  $region145: #{decoder_forward.3} parent=0
    _
  %s31 = ssub.s32 1, %s29
  %s32 = scalar_select 0, %s31, %s29
  $region1: #{decoder_forward.3} parent=0
    #allocation2 [shape = 'u8[32768]{0}', space=vmem, size = 0x8000, scoped, tag = 'output window, operand 1']
    #allocation3 [shape = 's32[2]{0}', space=sflag, size = 0x8, scoped, tag = 'scoped memory for decoder_forward.3']
    %33 = vsyncpa [#allocation3], 0
    %s34 = scalar_lea.sflag [#allocation3], 1
    %35 = vsyncpa %s34, 0
    loop: start=0, step=1, limit=4
    $region2: #{decoder_forward.3} parent=1 // loop_pre_header
      _
    $region3: #{decoder_forward.3} parent=1 // loop_header
      %s37 = sphi 0, %s41
      %p38 = scmp.ge.s32.totalorder %s37, 4
      %s47 = sphi 0, %s49
      %s50 = sphi 0, %s47
      %s51 = sphi 0, %s50
      %s67 = sphi 0, %s51
      %s73 = sphi 0, %s75
      %s76 = sphi 0, %s73
      %s77 = sphi 0, %s76
      %s93 = sphi 0, %s77
      %s99 = sphi 0, %s101
      %s102 = sphi 0, %s99
      %s103 = sphi 0, %s102
      %s119 = sphi 0, %s103
      %s125 = sphi 0, %s127
      %s128 = sphi 0, %s125
      %s129 = sphi 0, %s128
      %s145 = sphi 0, %s129
      %s149 = sphi 0, %s149
      %s151 = sphi 0, %s149
      %s152 = sphi 0, %s151
      %s166 = sphi 0, %s152
      %s170 = sphi 0, %s170
      %s172 = sphi 0, %s170
      %s173 = sphi 0, %s172
      %s187 = sphi 0, %s173
      %s191 = sphi 0, %s191
      %s193 = sphi 0, %s191
      %s194 = sphi 0, %s193
      %s208 = sphi 0, %s194
      %s212 = sphi 0, %s212
      %s214 = sphi 0, %s212
      %s215 = sphi 0, %s214
      %s229 = sphi 0, %s215
      %s233 = sphi 0, %s233
      %s235 = sphi 0, %s233
      %s236 = sphi 0, %s235
      %s250 = sphi 0, %s236
      %s254 = sphi 0, %s254
      %s256 = sphi 0, %s254
      %s257 = sphi 0, %s256
      %s271 = sphi 0, %s257
      %s275 = sphi 0, %s275
      %s277 = sphi 0, %s275
      %s278 = sphi 0, %s277
      %s292 = sphi 0, %s278
      %s296 = sphi 0, %s296
      %s298 = sphi 0, %s296
      %s299 = sphi 0, %s298
      %s313 = sphi 0, %s299
      %s317 = sphi 0, %s317
      %s319 = sphi 0, %s317
      %s320 = sphi 0, %s319
      %s334 = sphi 0, %s320
      %s338 = sphi 0, %s338
      %s340 = sphi 0, %s338
      %s341 = sphi 0, %s340
      %s355 = sphi 0, %s341
      %s359 = sphi 0, %s359
      %s361 = sphi 0, %s359
      %s362 = sphi 0, %s361
      %s376 = sphi 0, %s362
      %s380 = sphi 0, %s380
      %s382 = sphi 0, %s380
      %s383 = sphi 0, %s382
      %s397 = sphi 0, %s383
      %s401 = sphi 0, %s401
      %s403 = sphi 0, %s401
      %s404 = sphi 0, %s403
      %s418 = sphi 0, %s404
      %s422 = sphi 0, %s422
      %s424 = sphi 0, %s422
      %s425 = sphi 0, %s424
      %s439 = sphi 0, %s425
      %s443 = sphi 0, %s443
      %s445 = sphi 0, %s443
      %s446 = sphi 0, %s445
      %s460 = sphi 0, %s446
      %s464 = sphi 0, %s464
      %s466 = sphi 0, %s464
      %s467 = sphi 0, %s466
      %s481 = sphi 0, %s467
      %s485 = sphi 0, %s485
      %s487 = sphi 0, %s485
      %s488 = sphi 0, %s487
      %s502 = sphi 0, %s488
      %s506 = sphi 0, %s506
      %s508 = sphi 0, %s506
      %s509 = sphi 0, %s508
      %s523 = sphi 0, %s509
      %s527 = sphi 0, %s527
      %s529 = sphi 0, %s527
      %s530 = sphi 0, %s529
      %s544 = sphi 0, %s530
      %s548 = sphi 0, %s548
      %s550 = sphi 0, %s548
      %s551 = sphi 0, %s550
      %s565 = sphi 0, %s551
      %s569 = sphi 0, %s569
      %s571 = sphi 0, %s569
      %s572 = sphi 0, %s571
      %s586 = sphi 0, %s572
      %s590 = sphi 0, %s590
      %s592 = sphi 0, %s590
      %s593 = sphi 0, %s592
      %s607 = sphi 0, %s593
      %s613 = sphi 0, %s615
      %s616 = sphi 0, %s613
      %s617 = sphi 0, %s616
      %s633 = sphi 0, %s617
      %s639 = sphi 0, %s641
      %s642 = sphi 0, %s639
      %s643 = sphi 0, %s642
      %s659 = sphi 0, %s643
    $region4: #{decoder_forward.3} parent=1 // loop_header_branch
      %40 = sbr.rel (%p38) target = $region8
    $region5: #{decoder_forward.3} parent=1 // loop_body
      %s42 = ssub.s32 %s37, 1
      %s43 = ssub.s32 %s37, 2
      %s44 = sadd.s32 %s37, 1
      %s45 = ssub.s32 %s37, %s44
      %p46 = scmp.eq.s32.totalorder %s45, 0
      %s48 = sadd.s32 %s47, 1
      %s49 = scalar_select %p46, %s47, %s48
      %p52 = pneg %p46
      %p53 = scmp.eq.s32.totalorder %s37, 1
      %p54 = por %p52, %p53
      %p55 = scmp.ne.s32.totalorder %s47, %s50
      %p56 = scmp.eq.s32.totalorder %s37, 0
      %p57 = por %p55, %p56
      %p58 = scmp.ne.s32.totalorder %s47, %s50
      %p59 = scmp.eq.s32.totalorder %s42, 1
      %p60 = por %p58, %p59
      %p61 = scmp.ne.s32.totalorder %s50, %s51
      %p62 = scmp.eq.s32.totalorder %s42, 0
      %p63 = por %p61, %p62
      %p64 = scmp.ne.s32.totalorder %s50, %s51
      %p65 = scmp.eq.s32.totalorder %s43, 1
      %p66 = por %p64, %p65
      %p68 = scmp.ne.s32.totalorder %s51, %s67
      %p69 = scmp.eq.s32.totalorder %s43, 0
      %p70 = por %p68, %p69
      %s71 = ssub.s32 %s37, %s44
      %p72 = scmp.eq.s32.totalorder %s71, 0
      %s74 = sadd.s32 %s73, 1
      %s75 = scalar_select %p72, %s73, %s74
      %p78 = pneg %p72
      %p79 = scmp.eq.s32.totalorder %s37, 1
      %p80 = por %p78, %p79
      %p81 = scmp.ne.s32.totalorder %s73, %s76
      %p82 = scmp.eq.s32.totalorder %s37, 0
      %p83 = por %p81, %p82
      %p84 = scmp.ne.s32.totalorder %s73, %s76
      %p85 = scmp.eq.s32.totalorder %s42, 1
      %p86 = por %p84, %p85
      %p87 = scmp.ne.s32.totalorder %s76, %s77
      %p88 = scmp.eq.s32.totalorder %s42, 0
      %p89 = por %p87, %p88
      %p90 = scmp.ne.s32.totalorder %s76, %s77
      %p91 = scmp.eq.s32.totalorder %s43, 1
      %p92 = por %p90, %p91
      %p94 = scmp.ne.s32.totalorder %s77, %s93
      %p95 = scmp.eq.s32.totalorder %s43, 0
      %p96 = por %p94, %p95
      %s97 = ssub.s32 %s37, %s44
      %p98 = scmp.eq.s32.totalorder %s97, 0
      %s100 = sadd.s32 %s99, 1
      %s101 = scalar_select %p98, %s99, %s100
      %p104 = pneg %p98
      %p105 = scmp.eq.s32.totalorder %s37, 1
      %p106 = por %p104, %p105
      %p107 = scmp.ne.s32.totalorder %s99, %s102
      %p108 = scmp.eq.s32.totalorder %s37, 0
      %p109 = por %p107, %p108
      %p110 = scmp.ne.s32.totalorder %s99, %s102
      %p111 = scmp.eq.s32.totalorder %s42, 1
      %p112 = por %p110, %p111
      %p113 = scmp.ne.s32.totalorder %s102, %s103
      %p114 = scmp.eq.s32.totalorder %s42, 0
      %p115 = por %p113, %p114
      %p116 = scmp.ne.s32.totalorder %s102, %s103
      %p117 = scmp.eq.s32.totalorder %s43, 1
      %p118 = por %p116, %p117
      %p120 = scmp.ne.s32.totalorder %s103, %s119
      %p121 = scmp.eq.s32.totalorder %s43, 0
      %p122 = por %p120, %p121
      %s123 = ssub.s32 %s37, %s44
      %p124 = scmp.eq.s32.totalorder %s123, 0
      %s126 = sadd.s32 %s125, 1
      %s127 = scalar_select %p124, %s125, %s126
      %p130 = pneg %p124
      %p131 = scmp.eq.s32.totalorder %s37, 1
      %p132 = por %p130, %p131
      %p133 = scmp.ne.s32.totalorder %s125, %s128
      %p134 = scmp.eq.s32.totalorder %s37, 0
      %p135 = por %p133, %p134
      %p136 = scmp.ne.s32.totalorder %s125, %s128
      %p137 = scmp.eq.s32.totalorder %s42, 1
      %p138 = por %p136, %p137
      %p139 = scmp.ne.s32.totalorder %s128, %s129
      %p140 = scmp.eq.s32.totalorder %s42, 0
      %p141 = por %p139, %p140
      %p142 = scmp.ne.s32.totalorder %s128, %s129
      %p143 = scmp.eq.s32.totalorder %s43, 1
      %p144 = por %p142, %p143
      %p146 = scmp.ne.s32.totalorder %s129, %s145
      %p147 = scmp.eq.s32.totalorder %s43, 0
      %p148 = por %p146, %p147
      %s150 = sadd.s32 %s149, 1
      %p153 = scmp.eq.s32.totalorder %s37, 1
      %p154 = scmp.ne.s32.totalorder %s149, %s151
      %p155 = scmp.eq.s32.totalorder %s37, 0
      %p156 = por %p154, %p155
      %p157 = scmp.ne.s32.totalorder %s149, %s151
      %p158 = scmp.eq.s32.totalorder %s42, 1
      %p159 = por %p157, %p158
      %p160 = scmp.ne.s32.totalorder %s151, %s152
      %p161 = scmp.eq.s32.totalorder %s42, 0
      %p162 = por %p160, %p161
      %p163 = scmp.ne.s32.totalorder %s151, %s152
      %p164 = scmp.eq.s32.totalorder %s43, 1
      %p165 = por %p163, %p164
      %p167 = scmp.ne.s32.totalorder %s152, %s166
      %p168 = scmp.eq.s32.totalorder %s43, 0
      %p169 = por %p167, %p168
      %s171 = sadd.s32 %s170, 1
      %p174 = scmp.eq.s32.totalorder %s37, 1
      %p175 = scmp.ne.s32.totalorder %s170, %s172
      %p176 = scmp.eq.s32.totalorder %s37, 0
      %p177 = por %p175, %p176
      %p178 = scmp.ne.s32.totalorder %s170, %s172
      %p179 = scmp.eq.s32.totalorder %s42, 1
      %p180 = por %p178, %p179
      %p181 = scmp.ne.s32.totalorder %s172, %s173
      %p182 = scmp.eq.s32.totalorder %s42, 0
      %p183 = por %p181, %p182
      %p184 = scmp.ne.s32.totalorder %s172, %s173
      %p185 = scmp.eq.s32.totalorder %s43, 1
      %p186 = por %p184, %p185
      %p188 = scmp.ne.s32.totalorder %s173, %s187
      %p189 = scmp.eq.s32.totalorder %s43, 0
      %p190 = por %p188, %p189
      %s192 = sadd.s32 %s191, 1
      %p195 = scmp.eq.s32.totalorder %s37, 1
      %p196 = scmp.ne.s32.totalorder %s191, %s193
      %p197 = scmp.eq.s32.totalorder %s37, 0
      %p198 = por %p196, %p197
      %p199 = scmp.ne.s32.totalorder %s191, %s193
      %p200 = scmp.eq.s32.totalorder %s42, 1
      %p201 = por %p199, %p200
      %p202 = scmp.ne.s32.totalorder %s193, %s194
      %p203 = scmp.eq.s32.totalorder %s42, 0
      %p204 = por %p202, %p203
      %p205 = scmp.ne.s32.totalorder %s193, %s194
      %p206 = scmp.eq.s32.totalorder %s43, 1
      %p207 = por %p205, %p206
      %p209 = scmp.ne.s32.totalorder %s194, %s208
      %p210 = scmp.eq.s32.totalorder %s43, 0
      %p211 = por %p209, %p210
      %s213 = sadd.s32 %s212, 1
      %p216 = scmp.eq.s32.totalorder %s37, 1
      %p217 = scmp.ne.s32.totalorder %s212, %s214
      %p218 = scmp.eq.s32.totalorder %s37, 0
      %p219 = por %p217, %p218
      %p220 = scmp.ne.s32.totalorder %s212, %s214
      %p221 = scmp.eq.s32.totalorder %s42, 1
      %p222 = por %p220, %p221
      %p223 = scmp.ne.s32.totalorder %s214, %s215
      %p224 = scmp.eq.s32.totalorder %s42, 0
      %p225 = por %p223, %p224
      %p226 = scmp.ne.s32.totalorder %s214, %s215
      %p227 = scmp.eq.s32.totalorder %s43, 1
      %p228 = por %p226, %p227
      %p230 = scmp.ne.s32.totalorder %s215, %s229
      %p231 = scmp.eq.s32.totalorder %s43, 0
      %p232 = por %p230, %p231
      %s234 = sadd.s32 %s233, 1
      %p237 = scmp.eq.s32.totalorder %s37, 1
      %p238 = scmp.ne.s32.totalorder %s233, %s235
      %p239 = scmp.eq.s32.totalorder %s37, 0
      %p240 = por %p238, %p239
      %p241 = scmp.ne.s32.totalorder %s233, %s235
      %p242 = scmp.eq.s32.totalorder %s42, 1
      %p243 = por %p241, %p242
      %p244 = scmp.ne.s32.totalorder %s235, %s236
      %p245 = scmp.eq.s32.totalorder %s42, 0
      %p246 = por %p244, %p245
      %p247 = scmp.ne.s32.totalorder %s235, %s236
      %p248 = scmp.eq.s32.totalorder %s43, 1
      %p249 = por %p247, %p248
      %p251 = scmp.ne.s32.totalorder %s236, %s250
      %p252 = scmp.eq.s32.totalorder %s43, 0
      %p253 = por %p251, %p252
      %s255 = sadd.s32 %s254, 1
      %p258 = scmp.eq.s32.totalorder %s37, 1
      %p259 = scmp.ne.s32.totalorder %s254, %s256
      %p260 = scmp.eq.s32.totalorder %s37, 0
      %p261 = por %p259, %p260
      %p262 = scmp.ne.s32.totalorder %s254, %s256
      %p263 = scmp.eq.s32.totalorder %s42, 1
      %p264 = por %p262, %p263
      %p265 = scmp.ne.s32.totalorder %s256, %s257
      %p266 = scmp.eq.s32.totalorder %s42, 0
      %p267 = por %p265, %p266
      %p268 = scmp.ne.s32.totalorder %s256, %s257
      %p269 = scmp.eq.s32.totalorder %s43, 1
      %p270 = por %p268, %p269
      %p272 = scmp.ne.s32.totalorder %s257, %s271
      %p273 = scmp.eq.s32.totalorder %s43, 0
      %p274 = por %p272, %p273
      %s276 = sadd.s32 %s275, 1
      %p279 = scmp.eq.s32.totalorder %s37, 1
      %p280 = scmp.ne.s32.totalorder %s275, %s277
      %p281 = scmp.eq.s32.totalorder %s37, 0
      %p282 = por %p280, %p281
      %p283 = scmp.ne.s32.totalorder %s275, %s277
      %p284 = scmp.eq.s32.totalorder %s42, 1
      %p285 = por %p283, %p284
      %p286 = scmp.ne.s32.totalorder %s277, %s278
      %p287 = scmp.eq.s32.totalorder %s42, 0
      %p288 = por %p286, %p287
      %p289 = scmp.ne.s32.totalorder %s277, %s278
      %p290 = scmp.eq.s32.totalorder %s43, 1
      %p291 = por %p289, %p290
      %p293 = scmp.ne.s32.totalorder %s278, %s292
      %p294 = scmp.eq.s32.totalorder %s43, 0
      %p295 = por %p293, %p294
      %s297 = sadd.s32 %s296, 1
      %p300 = scmp.eq.s32.totalorder %s37, 1
      %p301 = scmp.ne.s32.totalorder %s296, %s298
      %p302 = scmp.eq.s32.totalorder %s37, 0
      %p303 = por %p301, %p302
      %p304 = scmp.ne.s32.totalorder %s296, %s298
      %p305 = scmp.eq.s32.totalorder %s42, 1
      %p306 = por %p304, %p305
      %p307 = scmp.ne.s32.totalorder %s298, %s299
      %p308 = scmp.eq.s32.totalorder %s42, 0
      %p309 = por %p307, %p308
      %p310 = scmp.ne.s32.totalorder %s298, %s299
      %p311 = scmp.eq.s32.totalorder %s43, 1
      %p312 = por %p310, %p311
      %p314 = scmp.ne.s32.totalorder %s299, %s313
      %p315 = scmp.eq.s32.totalorder %s43, 0
      %p316 = por %p314, %p315
      %s318 = sadd.s32 %s317, 1
      %p321 = scmp.eq.s32.totalorder %s37, 1
      %p322 = scmp.ne.s32.totalorder %s317, %s319
      %p323 = scmp.eq.s32.totalorder %s37, 0
      %p324 = por %p322, %p323
      %p325 = scmp.ne.s32.totalorder %s317, %s319
      %p326 = scmp.eq.s32.totalorder %s42, 1
      %p327 = por %p325, %p326
      %p328 = scmp.ne.s32.totalorder %s319, %s320
      %p329 = scmp.eq.s32.totalorder %s42, 0
      %p330 = por %p328, %p329
      %p331 = scmp.ne.s32.totalorder %s319, %s320
      %p332 = scmp.eq.s32.totalorder %s43, 1
      %p333 = por %p331, %p332
      %p335 = scmp.ne.s32.totalorder %s320, %s334
      %p336 = scmp.eq.s32.totalorder %s43, 0
      %p337 = por %p335, %p336
      %s339 = sadd.s32 %s338, 1
      %p342 = scmp.eq.s32.totalorder %s37, 1
      %p343 = scmp.ne.s32.totalorder %s338, %s340
      %p344 = scmp.eq.s32.totalorder %s37, 0
      %p345 = por %p343, %p344
      %p346 = scmp.ne.s32.totalorder %s338, %s340
      %p347 = scmp.eq.s32.totalorder %s42, 1
      %p348 = por %p346, %p347
      %p349 = scmp.ne.s32.totalorder %s340, %s341
      %p350 = scmp.eq.s32.totalorder %s42, 0
      %p351 = por %p349, %p350
      %p352 = scmp.ne.s32.totalorder %s340, %s341
      %p353 = scmp.eq.s32.totalorder %s43, 1
      %p354 = por %p352, %p353
      %p356 = scmp.ne.s32.totalorder %s341, %s355
      %p357 = scmp.eq.s32.totalorder %s43, 0
      %p358 = por %p356, %p357
      %s360 = sadd.s32 %s359, 1
      %p363 = scmp.eq.s32.totalorder %s37, 1
      %p364 = scmp.ne.s32.totalorder %s359, %s361
      %p365 = scmp.eq.s32.totalorder %s37, 0
      %p366 = por %p364, %p365
      %p367 = scmp.ne.s32.totalorder %s359, %s361
      %p368 = scmp.eq.s32.totalorder %s42, 1
      %p369 = por %p367, %p368
      %p370 = scmp.ne.s32.totalorder %s361, %s362
      %p371 = scmp.eq.s32.totalorder %s42, 0
      %p372 = por %p370, %p371
      %p373 = scmp.ne.s32.totalorder %s361, %s362
      %p374 = scmp.eq.s32.totalorder %s43, 1
      %p375 = por %p373, %p374
      %p377 = scmp.ne.s32.totalorder %s362, %s376
      %p378 = scmp.eq.s32.totalorder %s43, 0
      %p379 = por %p377, %p378
      %s381 = sadd.s32 %s380, 1
      %p384 = scmp.eq.s32.totalorder %s37, 1
      %p385 = scmp.ne.s32.totalorder %s380, %s382
      %p386 = scmp.eq.s32.totalorder %s37, 0
      %p387 = por %p385, %p386
      %p388 = scmp.ne.s32.totalorder %s380, %s382
      %p389 = scmp.eq.s32.totalorder %s42, 1
      %p390 = por %p388, %p389
      %p391 = scmp.ne.s32.totalorder %s382, %s383
      %p392 = scmp.eq.s32.totalorder %s42, 0
      %p393 = por %p391, %p392
      %p394 = scmp.ne.s32.totalorder %s382, %s383
      %p395 = scmp.eq.s32.totalorder %s43, 1
      %p396 = por %p394, %p395
      %p398 = scmp.ne.s32.totalorder %s383, %s397
      %p399 = scmp.eq.s32.totalorder %s43, 0
      %p400 = por %p398, %p399
      %s402 = sadd.s32 %s401, 1
      %p405 = scmp.eq.s32.totalorder %s37, 1
      %p406 = scmp.ne.s32.totalorder %s401, %s403
      %p407 = scmp.eq.s32.totalorder %s37, 0
      %p408 = por %p406, %p407
      %p409 = scmp.ne.s32.totalorder %s401, %s403
      %p410 = scmp.eq.s32.totalorder %s42, 1
      %p411 = por %p409, %p410
      %p412 = scmp.ne.s32.totalorder %s403, %s404
      %p413 = scmp.eq.s32.totalorder %s42, 0
      %p414 = por %p412, %p413
      %p415 = scmp.ne.s32.totalorder %s403, %s404
      %p416 = scmp.eq.s32.totalorder %s43, 1
      %p417 = por %p415, %p416
      %p419 = scmp.ne.s32.totalorder %s404, %s418
      %p420 = scmp.eq.s32.totalorder %s43, 0
      %p421 = por %p419, %p420
      %s423 = sadd.s32 %s422, 1
      %p426 = scmp.eq.s32.totalorder %s37, 1
      %p427 = scmp.ne.s32.totalorder %s422, %s424
      %p428 = scmp.eq.s32.totalorder %s37, 0
      %p429 = por %p427, %p428
      %p430 = scmp.ne.s32.totalorder %s422, %s424
      %p431 = scmp.eq.s32.totalorder %s42, 1
      %p432 = por %p430, %p431
      %p433 = scmp.ne.s32.totalorder %s424, %s425
      %p434 = scmp.eq.s32.totalorder %s42, 0
      %p435 = por %p433, %p434
      %p436 = scmp.ne.s32.totalorder %s424, %s425
      %p437 = scmp.eq.s32.totalorder %s43, 1
      %p438 = por %p436, %p437
      %p440 = scmp.ne.s32.totalorder %s425, %s439
      %p441 = scmp.eq.s32.totalorder %s43, 0
      %p442 = por %p440, %p441
      %s444 = sadd.s32 %s443, 1
      %p447 = scmp.eq.s32.totalorder %s37, 1
      %p448 = scmp.ne.s32.totalorder %s443, %s445
      %p449 = scmp.eq.s32.totalorder %s37, 0
      %p450 = por %p448, %p449
      %p451 = scmp.ne.s32.totalorder %s443, %s445
      %p452 = scmp.eq.s32.totalorder %s42, 1
      %p453 = por %p451, %p452
      %p454 = scmp.ne.s32.totalorder %s445, %s446
      %p455 = scmp.eq.s32.totalorder %s42, 0
      %p456 = por %p454, %p455
      %p457 = scmp.ne.s32.totalorder %s445, %s446
      %p458 = scmp.eq.s32.totalorder %s43, 1
      %p459 = por %p457, %p458
      %p461 = scmp.ne.s32.totalorder %s446, %s460
      %p462 = scmp.eq.s32.totalorder %s43, 0
      %p463 = por %p461, %p462
      %s465 = sadd.s32 %s464, 1
      %p468 = scmp.eq.s32.totalorder %s37, 1
      %p469 = scmp.ne.s32.totalorder %s464, %s466
      %p470 = scmp.eq.s32.totalorder %s37, 0
      %p471 = por %p469, %p470
      %p472 = scmp.ne.s32.totalorder %s464, %s466
      %p473 = scmp.eq.s32.totalorder %s42, 1
      %p474 = por %p472, %p473
      %p475 = scmp.ne.s32.totalorder %s466, %s467
      %p476 = scmp.eq.s32.totalorder %s42, 0
      %p477 = por %p475, %p476
      %p478 = scmp.ne.s32.totalorder %s466, %s467
      %p479 = scmp.eq.s32.totalorder %s43, 1
      %p480 = por %p478, %p479
      %p482 = scmp.ne.s32.totalorder %s467, %s481
      %p483 = scmp.eq.s32.totalorder %s43, 0
      %p484 = por %p482, %p483
      %s486 = sadd.s32 %s485, 1
      %p489 = scmp.eq.s32.totalorder %s37, 1
      %p490 = scmp.ne.s32.totalorder %s485, %s487
      %p491 = scmp.eq.s32.totalorder %s37, 0
      %p492 = por %p490, %p491
      %p493 = scmp.ne.s32.totalorder %s485, %s487
      %p494 = scmp.eq.s32.totalorder %s42, 1
      %p495 = por %p493, %p494
      %p496 = scmp.ne.s32.totalorder %s487, %s488
      %p497 = scmp.eq.s32.totalorder %s42, 0
      %p498 = por %p496, %p497
      %p499 = scmp.ne.s32.totalorder %s487, %s488
      %p500 = scmp.eq.s32.totalorder %s43, 1
      %p501 = por %p499, %p500
      %p503 = scmp.ne.s32.totalorder %s488, %s502
      %p504 = scmp.eq.s32.totalorder %s43, 0
      %p505 = por %p503, %p504
      %s507 = sadd.s32 %s506, 1
      %p510 = scmp.eq.s32.totalorder %s37, 1
      %p511 = scmp.ne.s32.totalorder %s506, %s508
      %p512 = scmp.eq.s32.totalorder %s37, 0
      %p513 = por %p511, %p512
      %p514 = scmp.ne.s32.totalorder %s506, %s508
      %p515 = scmp.eq.s32.totalorder %s42, 1
      %p516 = por %p514, %p515
      %p517 = scmp.ne.s32.totalorder %s508, %s509
      %p518 = scmp.eq.s32.totalorder %s42, 0
      %p519 = por %p517, %p518
      %p520 = scmp.ne.s32.totalorder %s508, %s509
      %p521 = scmp.eq.s32.totalorder %s43, 1
      %p522 = por %p520, %p521
      %p524 = scmp.ne.s32.totalorder %s509, %s523
      %p525 = scmp.eq.s32.totalorder %s43, 0
      %p526 = por %p524, %p525
      %s528 = sadd.s32 %s527, 1
      %p531 = scmp.eq.s32.totalorder %s37, 1
      %p532 = scmp.ne.s32.totalorder %s527, %s529
      %p533 = scmp.eq.s32.totalorder %s37, 0
      %p534 = por %p532, %p533
      %p535 = scmp.ne.s32.totalorder %s527, %s529
      %p536 = scmp.eq.s32.totalorder %s42, 1
      %p537 = por %p535, %p536
      %p538 = scmp.ne.s32.totalorder %s529, %s530
      %p539 = scmp.eq.s32.totalorder %s42, 0
      %p540 = por %p538, %p539
      %p541 = scmp.ne.s32.totalorder %s529, %s530
      %p542 = scmp.eq.s32.totalorder %s43, 1
      %p543 = por %p541, %p542
      %p545 = scmp.ne.s32.totalorder %s530, %s544
      %p546 = scmp.eq.s32.totalorder %s43, 0
      %p547 = por %p545, %p546
      %s549 = sadd.s32 %s548, 1
      %p552 = scmp.eq.s32.totalorder %s37, 1
      %p553 = scmp.ne.s32.totalorder %s548, %s550
      %p554 = scmp.eq.s32.totalorder %s37, 0
      %p555 = por %p553, %p554
      %p556 = scmp.ne.s32.totalorder %s548, %s550
      %p557 = scmp.eq.s32.totalorder %s42, 1
      %p558 = por %p556, %p557
      %p559 = scmp.ne.s32.totalorder %s550, %s551
      %p560 = scmp.eq.s32.totalorder %s42, 0
      %p561 = por %p559, %p560
      %p562 = scmp.ne.s32.totalorder %s550, %s551
      %p563 = scmp.eq.s32.totalorder %s43, 1
      %p564 = por %p562, %p563
      %p566 = scmp.ne.s32.totalorder %s551, %s565
      %p567 = scmp.eq.s32.totalorder %s43, 0
      %p568 = por %p566, %p567
      %s570 = sadd.s32 %s569, 1
      %p573 = scmp.eq.s32.totalorder %s37, 1
      %p574 = scmp.ne.s32.totalorder %s569, %s571
      %p575 = scmp.eq.s32.totalorder %s37, 0
      %p576 = por %p574, %p575
      %p577 = scmp.ne.s32.totalorder %s569, %s571
      %p578 = scmp.eq.s32.totalorder %s42, 1
      %p579 = por %p577, %p578
      %p580 = scmp.ne.s32.totalorder %s571, %s572
      %p581 = scmp.eq.s32.totalorder %s42, 0
      %p582 = por %p580, %p581
      %p583 = scmp.ne.s32.totalorder %s571, %s572
      %p584 = scmp.eq.s32.totalorder %s43, 1
      %p585 = por %p583, %p584
      %p587 = scmp.ne.s32.totalorder %s572, %s586
      %p588 = scmp.eq.s32.totalorder %s43, 0
      %p589 = por %p587, %p588
      %s591 = sadd.s32 %s590, 1
      %p594 = scmp.eq.s32.totalorder %s37, 1
      %p595 = scmp.ne.s32.totalorder %s590, %s592
      %p596 = scmp.eq.s32.totalorder %s37, 0
      %p597 = por %p595, %p596
      %p598 = scmp.ne.s32.totalorder %s590, %s592
      %p599 = scmp.eq.s32.totalorder %s42, 1
      %p600 = por %p598, %p599
      %p601 = scmp.ne.s32.totalorder %s592, %s593
      %p602 = scmp.eq.s32.totalorder %s42, 0
      %p603 = por %p601, %p602
      %p604 = scmp.ne.s32.totalorder %s592, %s593
      %p605 = scmp.eq.s32.totalorder %s43, 1
      %p606 = por %p604, %p605
      %p608 = scmp.ne.s32.totalorder %s593, %s607
      %p609 = scmp.eq.s32.totalorder %s43, 0
      %p610 = por %p608, %p609
      %s611 = ssub.s32 %s37, %s44
      %p612 = scmp.eq.s32.totalorder %s611, 0
      %s614 = sadd.s32 %s613, 1
      %s615 = scalar_select %p612, %s613, %s614
      %p618 = pneg %p612
      %p619 = scmp.eq.s32.totalorder %s37, 1
      %p620 = por %p618, %p619
      %p621 = scmp.ne.s32.totalorder %s613, %s616
      %p622 = scmp.eq.s32.totalorder %s37, 0
      %p623 = por %p621, %p622
      %p624 = scmp.ne.s32.totalorder %s613, %s616
      %p625 = scmp.eq.s32.totalorder %s42, 1
      %p626 = por %p624, %p625
      %p627 = scmp.ne.s32.totalorder %s616, %s617
      %p628 = scmp.eq.s32.totalorder %s42, 0
      %p629 = por %p627, %p628
      %p630 = scmp.ne.s32.totalorder %s616, %s617
      %p631 = scmp.eq.s32.totalorder %s43, 1
      %p632 = por %p630, %p631
      %p634 = scmp.ne.s32.totalorder %s617, %s633
      %p635 = scmp.eq.s32.totalorder %s43, 0
      %p636 = por %p634, %p635
      %s637 = ssub.s32 %s37, %s44
      %p638 = scmp.eq.s32.totalorder %s637, 0
      %s640 = sadd.s32 %s639, 1
      %s641 = scalar_select %p638, %s639, %s640
      %p644 = pneg %p638
      %p645 = scmp.eq.s32.totalorder %s37, 1
      %p646 = por %p644, %p645
      %p647 = scmp.ne.s32.totalorder %s639, %s642
      %p648 = scmp.eq.s32.totalorder %s37, 0
      %p649 = por %p647, %p648
      %p650 = scmp.ne.s32.totalorder %s639, %s642
      %p651 = scmp.eq.s32.totalorder %s42, 1
      %p652 = por %p650, %p651
      %p653 = scmp.ne.s32.totalorder %s642, %s643
      %p654 = scmp.eq.s32.totalorder %s42, 0
      %p655 = por %p653, %p654
      %p656 = scmp.ne.s32.totalorder %s642, %s643
      %p657 = scmp.eq.s32.totalorder %s43, 1
      %p658 = por %p656, %p657
      %p660 = scmp.ne.s32.totalorder %s643, %s659
      %p661 = scmp.eq.s32.totalorder %s43, 0
      %p662 = por %p660, %p661
      %p663 = scmp.le.s32.totalorder 1, %s37
      %p664 = scmp.lt.s32.totalorder %s37, 3
      %p665 = pnand %p663, %p664
      %p666 = pneg %p665
      // Predicated region
      $region9: #{decoder_forward.3} parent=5 // pred_check
        _
      $region10: #{decoder_forward.3} parent=5 // pred_check_branch
        %668 = sbr.rel (%p665) target = $region12
      $region11: #{decoder_forward.3} parent=5 // pred_region
        %s669 = ssub.s32 %s37, 1
        // Predicated region
        $region13: #{decoder_forward.3} parent=11 // pred_check
          %p670 = pneg %p162
        $region14: #{decoder_forward.3} parent=11 // pred_check_branch
          %672 = sbr.rel (%p670) target = $region16
        $region15: #{decoder_forward.3} parent=11 // pred_region
          _
        $region16: #{decoder_forward.3} parent=11 // pred_fallthru
          _
        // Predicated region
        $region17: #{decoder_forward.3} parent=11 // pred_check
          %p673 = pneg %p183
        $region18: #{decoder_forward.3} parent=11 // pred_check_branch
          %675 = sbr.rel (%p673) target = $region20
        $region19: #{decoder_forward.3} parent=11 // pred_region
          _
        $region20: #{decoder_forward.3} parent=11 // pred_fallthru
          _
        // Predicated region
        $region21: #{decoder_forward.3} parent=11 // pred_check
          %p676 = pneg %p204
        $region22: #{decoder_forward.3} parent=11 // pred_check_branch
          %678 = sbr.rel (%p676) target = $region24
        $region23: #{decoder_forward.3} parent=11 // pred_region
          _
        $region24: #{decoder_forward.3} parent=11 // pred_fallthru
          _
        // Predicated region
        $region25: #{decoder_forward.3} parent=11 // pred_check
          %p679 = pneg %p225
        $region26: #{decoder_forward.3} parent=11 // pred_check_branch
          %681 = sbr.rel (%p679) target = $region28
        $region27: #{decoder_forward.3} parent=11 // pred_region
          _
        $region28: #{decoder_forward.3} parent=11 // pred_fallthru
          _
        // Predicated region
        $region29: #{decoder_forward.3} parent=11 // pred_check
          %p682 = pneg %p246
        $region30: #{decoder_forward.3} parent=11 // pred_check_branch
          %684 = sbr.rel (%p682) target = $region32
        $region31: #{decoder_forward.3} parent=11 // pred_region
          _
        $region32: #{decoder_forward.3} parent=11 // pred_fallthru
          _
        // Predicated region
        $region33: #{decoder_forward.3} parent=11 // pred_check
          %p685 = pneg %p267
        $region34: #{decoder_forward.3} parent=11 // pred_check_branch
          %687 = sbr.rel (%p685) target = $region36
        $region35: #{decoder_forward.3} parent=11 // pred_region
          _
        $region36: #{decoder_forward.3} parent=11 // pred_fallthru
          _
        // Predicated region
        $region37: #{decoder_forward.3} parent=11 // pred_check
          %p688 = pneg %p288
        $region38: #{decoder_forward.3} parent=11 // pred_check_branch
          %690 = sbr.rel (%p688) target = $region40
        $region39: #{decoder_forward.3} parent=11 // pred_region
          _
        $region40: #{decoder_forward.3} parent=11 // pred_fallthru
          _
        // Predicated region
        $region41: #{decoder_forward.3} parent=11 // pred_check
          %p691 = pneg %p309
        $region42: #{decoder_forward.3} parent=11 // pred_check_branch
          %693 = sbr.rel (%p691) target = $region44
        $region43: #{decoder_forward.3} parent=11 // pred_region
          _
        $region44: #{decoder_forward.3} parent=11 // pred_fallthru
          _
        // Predicated region
        $region45: #{decoder_forward.3} parent=11 // pred_check
          %p694 = pneg %p330
        $region46: #{decoder_forward.3} parent=11 // pred_check_branch
          %696 = sbr.rel (%p694) target = $region48
        $region47: #{decoder_forward.3} parent=11 // pred_region
          _
        $region48: #{decoder_forward.3} parent=11 // pred_fallthru
          _
        // Predicated region
        $region49: #{decoder_forward.3} parent=11 // pred_check
          %p697 = pneg %p351
        $region50: #{decoder_forward.3} parent=11 // pred_check_branch
          %699 = sbr.rel (%p697) target = $region52
        $region51: #{decoder_forward.3} parent=11 // pred_region
          _
        $region52: #{decoder_forward.3} parent=11 // pred_fallthru
          _
        // Predicated region
        $region53: #{decoder_forward.3} parent=11 // pred_check
          %p700 = pneg %p372
        $region54: #{decoder_forward.3} parent=11 // pred_check_branch
          %702 = sbr.rel (%p700) target = $region56
        $region55: #{decoder_forward.3} parent=11 // pred_region
          _
        $region56: #{decoder_forward.3} parent=11 // pred_fallthru
          _
        // Predicated region
        $region57: #{decoder_forward.3} parent=11 // pred_check
          %p703 = pneg %p393
        $region58: #{decoder_forward.3} parent=11 // pred_check_branch
          %705 = sbr.rel (%p703) target = $region60
        $region59: #{decoder_forward.3} parent=11 // pred_region
          _
        $region60: #{decoder_forward.3} parent=11 // pred_fallthru
          _
        // Predicated region
        $region61: #{decoder_forward.3} parent=11 // pred_check
          %p706 = pneg %p414
        $region62: #{decoder_forward.3} parent=11 // pred_check_branch
          %708 = sbr.rel (%p706) target = $region64
        $region63: #{decoder_forward.3} parent=11 // pred_region
          _
        $region64: #{decoder_forward.3} parent=11 // pred_fallthru
          _
        // Predicated region
        $region65: #{decoder_forward.3} parent=11 // pred_check
          %p709 = pneg %p435
        $region66: #{decoder_forward.3} parent=11 // pred_check_branch
          %711 = sbr.rel (%p709) target = $region68
        $region67: #{decoder_forward.3} parent=11 // pred_region
          _
        $region68: #{decoder_forward.3} parent=11 // pred_fallthru
          _
        // Predicated region
        $region69: #{decoder_forward.3} parent=11 // pred_check
          %p712 = pneg %p456
        $region70: #{decoder_forward.3} parent=11 // pred_check_branch
          %714 = sbr.rel (%p712) target = $region72
        $region71: #{decoder_forward.3} parent=11 // pred_region
          _
        $region72: #{decoder_forward.3} parent=11 // pred_fallthru
          _
        // Predicated region
        $region73: #{decoder_forward.3} parent=11 // pred_check
          %p715 = pneg %p477
        $region74: #{decoder_forward.3} parent=11 // pred_check_branch
          %717 = sbr.rel (%p715) target = $region76
        $region75: #{decoder_forward.3} parent=11 // pred_region
          _
        $region76: #{decoder_forward.3} parent=11 // pred_fallthru
          _
        // Predicated region
        $region77: #{decoder_forward.3} parent=11 // pred_check
          %p718 = pneg %p498
        $region78: #{decoder_forward.3} parent=11 // pred_check_branch
          %720 = sbr.rel (%p718) target = $region80
        $region79: #{decoder_forward.3} parent=11 // pred_region
          _
        $region80: #{decoder_forward.3} parent=11 // pred_fallthru
          _
        // Predicated region
        $region81: #{decoder_forward.3} parent=11 // pred_check
          %p721 = pneg %p519
        $region82: #{decoder_forward.3} parent=11 // pred_check_branch
          %723 = sbr.rel (%p721) target = $region84
        $region83: #{decoder_forward.3} parent=11 // pred_region
          _
        $region84: #{decoder_forward.3} parent=11 // pred_fallthru
          _
        // Predicated region
        $region85: #{decoder_forward.3} parent=11 // pred_check
          %p724 = pneg %p540
        $region86: #{decoder_forward.3} parent=11 // pred_check_branch
          %726 = sbr.rel (%p724) target = $region88
        $region87: #{decoder_forward.3} parent=11 // pred_region
          _
        $region88: #{decoder_forward.3} parent=11 // pred_fallthru
          _
        // Predicated region
        $region89: #{decoder_forward.3} parent=11 // pred_check
          %p727 = pneg %p561
        $region90: #{decoder_forward.3} parent=11 // pred_check_branch
          %729 = sbr.rel (%p727) target = $region92
        $region91: #{decoder_forward.3} parent=11 // pred_region
          _
        $region92: #{decoder_forward.3} parent=11 // pred_fallthru
          _
        // Predicated region
        $region93: #{decoder_forward.3} parent=11 // pred_check
          %p730 = pneg %p582
        $region94: #{decoder_forward.3} parent=11 // pred_check_branch
          %732 = sbr.rel (%p730) target = $region96
        $region95: #{decoder_forward.3} parent=11 // pred_region
          _
        $region96: #{decoder_forward.3} parent=11 // pred_fallthru
          _
        // Predicated region
        $region97: #{decoder_forward.3} parent=11 // pred_check
          %p733 = pneg %p603
        $region98: #{decoder_forward.3} parent=11 // pred_check_branch
          %735 = sbr.rel (%p733) target = $region100
        $region99: #{decoder_forward.3} parent=11 // pred_region
          _
        $region100: #{decoder_forward.3} parent=11 // pred_fallthru
          _
      $region12: #{decoder_forward.3} parent=5 // pred_fallthru
        _
      %p736 = scmp.lt.s32.totalorder %s37, 2
      // Predicated region
      $region101: #{decoder_forward.3} parent=5 // pred_check
        %p737 = pneg %p736
      $region102: #{decoder_forward.3} parent=5 // pred_check_branch
        %739 = sbr.rel (%p737) target = $region104
      $region103: #{decoder_forward.3} parent=5 // pred_region
        // Predicated region
        $region105: #{decoder_forward.3} parent=103 // pred_check
          %p740 = pneg %p57
        $region106: #{decoder_forward.3} parent=103 // pred_check_branch
          %742 = sbr.rel (%p740) target = $region108
        $region107: #{decoder_forward.3} parent=103 // pred_region
          %p743 = scmp.lt.s32.totalorder %s37, 1
          %s744 = scalar_select %p743, %s37, 1
          %s745 = smul.addr %s744, 8
          %s746 = scalar_lea.vmem %s0, %s745
        $region108: #{decoder_forward.3} parent=103 // pred_fallthru
          _
        // Predicated region
        $region109: #{decoder_forward.3} parent=103 // pred_check
          %p747 = pneg %p83
        $region110: #{decoder_forward.3} parent=103 // pred_check_branch
          %749 = sbr.rel (%p747) target = $region112
        $region111: #{decoder_forward.3} parent=103 // pred_region
          %p750 = scmp.lt.s32.totalorder %s37, 1
          %s751 = scalar_select %p750, %s37, 1
          %s752 = smul.addr %s751, 2
          %s753 = smul.addr %s752, 8
          %s754 = scalar_lea.vmem %s1, %s753
        $region112: #{decoder_forward.3} parent=103 // pred_fallthru
          _
        // Predicated region
        $region113: #{decoder_forward.3} parent=103 // pred_check
          %p755 = pneg %p109
        $region114: #{decoder_forward.3} parent=103 // pred_check_branch
          %757 = sbr.rel (%p755) target = $region116
        $region115: #{decoder_forward.3} parent=103 // pred_region
          %p758 = scmp.lt.s32.totalorder %s37, 1
          %s759 = scalar_select %p758, %s37, 1
          %s760 = smul.addr %s759, 8
          %s761 = scalar_lea.vmem %s2, %s760
        $region116: #{decoder_forward.3} parent=103 // pred_fallthru
          _
        // Predicated region
        $region117: #{decoder_forward.3} parent=103 // pred_check
          %p762 = pneg %p135
        $region118: #{decoder_forward.3} parent=103 // pred_check_branch
          %764 = sbr.rel (%p762) target = $region120
        $region119: #{decoder_forward.3} parent=103 // pred_region
          %p765 = scmp.lt.s32.totalorder %s37, 1
          %s766 = scalar_select %p765, %s37, 1
          %s767 = scalar_lea.vmem %s3, %s766
        $region120: #{decoder_forward.3} parent=103 // pred_fallthru
          _
      $region104: #{decoder_forward.3} parent=5 // pred_fallthru
        _
      %p768 = scmp.le.s32.totalorder 1, %s37
      %p769 = scmp.lt.s32.totalorder %s37, 3
      %p770 = pnand %p768, %p769
      %p771 = pneg %p770
      // Predicated region
      $region121: #{decoder_forward.3} parent=5 // pred_check
        _
      $region122: #{decoder_forward.3} parent=5 // pred_check_branch
        %773 = sbr.rel (%p770) target = $region124
      $region123: #{decoder_forward.3} parent=5 // pred_region
        %s774 = ssub.s32 %s37, 1
        %p775 = scmp.lt.s32.totalorder %s42, 1
        %s776 = scalar_select %p775, %s42, 1
        %s777 = smul.addr %s776, 8
        %s778 = scalar_lea.vmem %s0, %s777
        %p779 = pneg %p63
        %p780 = pneg %p60
        %p781 = scmp.lt.s32.totalorder %s42, 1
        %s782 = scalar_select %p781, %s42, 1
        %s783 = smul.addr %s782, 2
        %s784 = smul.addr %s783, 8
        %s785 = scalar_lea.vmem %s1, %s784
        %p786 = pneg %p89
        %p787 = pneg %p86
        %p788 = scmp.lt.s32.totalorder %s42, 1
        %s789 = scalar_select %p788, %s42, 1
        %s790 = smul.addr %s789, 8
        %s791 = scalar_lea.vmem %s2, %s790
        %p792 = pneg %p115
        %p793 = pneg %p112
        %p794 = scmp.lt.s32.totalorder %s42, 1
        %s795 = scalar_select %p794, %s42, 1
        %s796 = scalar_lea.vmem %s3, %s795
        %p797 = pneg %p141
        %p798 = pneg %p138
        %p799 = pneg %p162
        %p800 = pneg %p159
        %p801 = pneg %p183
        %p802 = pneg %p180
        %p803 = pneg %p204
        %p804 = pneg %p201
        %p805 = pneg %p225
        %p806 = pneg %p222
        %p807 = pneg %p246
        %p808 = pneg %p243
        %p809 = pneg %p267
        %p810 = pneg %p264
        %p811 = pneg %p288
        %p812 = pneg %p285
        %p813 = pneg %p309
        %p814 = pneg %p306
        %p815 = pneg %p330
        %p816 = pneg %p327
        %p817 = pneg %p351
        %p818 = pneg %p348
        %p819 = pneg %p372
        %p820 = pneg %p369
        %p821 = pneg %p393
        %p822 = pneg %p390
        %p823 = pneg %p414
        %p824 = pneg %p411
        %p825 = pneg %p435
        %p826 = pneg %p432
        %p827 = pneg %p456
        %p828 = pneg %p453
        %p829 = pneg %p477
        %p830 = pneg %p474
        %p831 = pneg %p498
        %p832 = pneg %p495
        %p833 = pneg %p519
        %p834 = pneg %p516
        %p835 = pneg %p540
        %p836 = pneg %p537
        %p837 = pneg %p561
        %p838 = pneg %p558
        %p839 = pneg %p582
        %p840 = pneg %p579
        %p841 = pneg %p603
        %p842 = pneg %p600
        %p843 = pneg %p629
        %p844 = pneg %p626
        %p845 = scmp.lt.s32.totalorder %s42, 1
        %s846 = scalar_select %p845, %s42, 1
        %s847 = smul.addr %s846, 8
        %s848 = scalar_lea.vmem %s26, %s847
        %p849 = pneg %p655
        %p850 = pneg %p652
        %s851 = sand.u32 %s642, 1
        %s852 = scalar_lea.sflag [#allocation3], %s851
        %s853 = sand.u32 %s642, 1
        %s854 = smul.addr %s853, 32
        %s855 = scalar_lea.vmem [#allocation2], %s854
        %p856 = scmp.lt.s32.totalorder %s42, 1
        %s857 = scalar_select %p856, %s42, 1
        %s858 = smul.addr %s857, 8
        %s859 = scalar_lea.vmem %s0, %s858
        %p860 = scmp.lt.s32.totalorder %s42, 1
        %s861 = scalar_select %p860, %s42, 1
        %s862 = smul.addr %s861, 2
        %s863 = smul.addr %s862, 8
        %s864 = scalar_lea.vmem %s1, %s863
        %p865 = scmp.lt.s32.totalorder %s42, 1
        %s866 = scalar_select %p865, %s42, 1
        %s867 = smul.addr %s866, 8
        %s868 = scalar_lea.vmem %s2, %s867
        %p869 = scmp.lt.s32.totalorder %s42, 1
        %s870 = scalar_select %p869, %s42, 1
        %s871 = scalar_lea.vmem %s3, %s870
        %p872 = scmp.lt.s32.totalorder %s42, 1
        %s873 = scalar_select %p872, %s42, 1
        %s874 = smul.addr %s873, 8
        %s875 = scalar_lea.vmem %s26, %s874
        %v877 = vld [vmem:[%s859] sm:$0xff]
        %v878 = vld [vmem:[%s864] sm:$0xff]
        %v879 = vld [vmem:[%s864 + $0x8] sm:$0x3]
        %v880 = vld [vmem:[%s868] sm:$0xff]
        %v881 = vld [vmem:[%s871] sm:$0x1]
        %v882 = vpack.c.bf16 %v877, %v877
        %v883 = vld [vmem:[%s4] sm:$0xf]
        %v884 = vld [vmem:[%s4 + $0x4] sm:$0xf]
        %v885 = vld [vmem:[%s4 + $0x8] sm:$0xf]
        %v886 = vld [vmem:[%s4 + $0xc] sm:$0xf]
        %v887 = vld [vmem:[%s5] sm:$0x1]
        %v889 = vlaneseq
        %v890 = vshrl.u32 %v889, 7
        %v891 = vsub.s32 0, %v890
        %v892 = vrot.slane %v887, %v891
        %v898 = vunpack.c.l.b16 %v883
        %v899 = vunpack.c.l.b16 %v884
        %v900 = vunpack.c.l.b16 %v885
        %v901 = vunpack.c.l.b16 %v886
        %v902 = vpack.c.b16 %v899, %v898
        %v903 = vpack.c.b16 %v901, %v900
        %vm906 = vcmask 261120
        %v908 = vsel %vm906, %v882, 0
        %910 = vmatprep.subr.bf16.mxu0 0
        %911 = vmatpush1.bf16.msra.mxu0 %v902
        %912 = vmatprep.subr.bf16.mxu0 0
        %913 = vmatpush1.bf16.msra.mxu0 %v903
        %914 = vmatprep.subr.bf16.mxu0 0
        %915 = vmatpush1.bf16.msra.mxu0 0
        %916 = vmatprep.subr.bf16.mxu0 0
        %917 = vmatpush1.bf16.msra.mxu0 0
        %918 = vmatprep.subr.bf16.mxu0 0
        %919 = vmatpush1.bf16.msra.mxu0 0
        %920 = vmatprep.subr.bf16.mxu0 0
        %921 = vmatpush1.bf16.msra.mxu0 0
        %922 = vmatprep.subr.bf16.mxu0 0
        %923 = vmatpush1.bf16.msra.mxu0 0
        %924 = vmatprep.subr.bf16.mxu0 0
        %925 = vmatpush1.bf16.msra.mxu0 0
        %926 = vmatprep.subr.bf16.mxu0 0
        %927 = vmatpush1.bf16.msra.mxu0 0
        %928 = vmatprep.subr.bf16.mxu0 0
        %929 = vmatpush1.bf16.msra.mxu0 0
        %930 = vmatprep.subr.bf16.mxu0 0
        %931 = vmatpush1.bf16.msra.mxu0 0
        %932 = vmatprep.subr.bf16.mxu0 0
        %933 = vmatpush1.bf16.msra.mxu0 0
        %934 = vmatprep.subr.bf16.mxu0 0
        %935 = vmatpush1.bf16.msra.mxu0 0
        %936 = vmatprep.subr.bf16.mxu0 0
        %937 = vmatpush1.bf16.msra.mxu0 0
        %938 = vmatprep.subr.bf16.mxu0 0
        %939 = vmatpush1.bf16.msra.mxu0 0
        %940 = vmatprep.subr.bf16.mxu0 0
        %941 = vmatpush1.bf16.msra.mxu0 0
        %942 = vmatprep.mubr.bf16.mxu0 0
        %943 = vmatmul.mubr.bf16.gmra.mrb[0].mxu0 %v908
        %v944 = vpop.f32.mrb[0].mxu0
        %v945 = vadd.f32 %v892, %v944
        %v946 = vpop.f32.mrb[0].mxu0
        %v947 = vpop.f32.mrb[0].mxu0
        %v948 = vpop.f32.mrb[0].mxu0
        %949 = vdwg.mxu0
        %v950 = vld [vmem:[%s6] sm:$0xf]
        %v951 = vld [vmem:[%s6 + $0x4] sm:$0xf]
        %v952 = vld [vmem:[%s6 + $0x8] sm:$0xf]
        %v953 = vld [vmem:[%s6 + $0xc] sm:$0xf]
        %v954 = vld [vmem:[%s7] sm:$0x1]
        %v956 = vlaneseq
        %v957 = vshrl.u32 %v956, 7
        %v958 = vsub.s32 0, %v957
        %v959 = vrot.slane %v954, %v958
        %v965 = vunpack.c.l.b16 %v950
        %v966 = vunpack.c.l.b16 %v951
        %v967 = vunpack.c.l.b16 %v952
        %v968 = vunpack.c.l.b16 %v953
        %v969 = vpack.c.b16 %v966, %v965
        %v970 = vpack.c.b16 %v968, %v967
        %973 = vmatprep.subr.bf16.mxu0 0
        %974 = vmatpush1.bf16.msra.mxu0 %v969
        %975 = vmatprep.subr.bf16.mxu0 0
        %976 = vmatpush1.bf16.msra.mxu0 %v970
        %977 = vmatprep.subr.bf16.mxu0 0
        %978 = vmatpush1.bf16.msra.mxu0 0
        %979 = vmatprep.subr.bf16.mxu0 0
        %980 = vmatpush1.bf16.msra.mxu0 0
        %981 = vmatprep.subr.bf16.mxu0 0
        %982 = vmatpush1.bf16.msra.mxu0 0
        %983 = vmatprep.subr.bf16.mxu0 0
        %984 = vmatpush1.bf16.msra.mxu0 0
        %985 = vmatprep.subr.bf16.mxu0 0
        %986 = vmatpush1.bf16.msra.mxu0 0
        %987 = vmatprep.subr.bf16.mxu0 0
        %988 = vmatpush1.bf16.msra.mxu0 0
        %989 = vmatprep.subr.bf16.mxu0 0
        %990 = vmatpush1.bf16.msra.mxu0 0
        %991 = vmatprep.subr.bf16.mxu0 0
        %992 = vmatpush1.bf16.msra.mxu0 0
        %993 = vmatprep.subr.bf16.mxu0 0
        %994 = vmatpush1.bf16.msra.mxu0 0
        %995 = vmatprep.subr.bf16.mxu0 0
        %996 = vmatpush1.bf16.msra.mxu0 0
        %997 = vmatprep.subr.bf16.mxu0 0
        %998 = vmatpush1.bf16.msra.mxu0 0
        %999 = vmatprep.subr.bf16.mxu0 0
        %1000 = vmatpush1.bf16.msra.mxu0 0
        %1001 = vmatprep.subr.bf16.mxu0 0
        %1002 = vmatpush1.bf16.msra.mxu0 0
        %1003 = vmatprep.subr.bf16.mxu0 0
        %1004 = vmatpush1.bf16.msra.mxu0 0
        %1005 = vmatprep.mubr.bf16.mxu0 0
        %1006 = vmatmul.mubr.bf16.gmra.mrb[0].mxu0 %v908
        %v1007 = vpop.f32.mrb[0].mxu0
        %v1008 = vadd.f32 %v959, %v1007
        %v1009 = vpop.f32.mrb[0].mxu0
        %v1010 = vpop.f32.mrb[0].mxu0
        %v1011 = vpop.f32.mrb[0].mxu0
        %1012 = vdwg.mxu0
        %v1013 = vpack.c.bf16 %v945, %v945
        %v1014 = vpack.c.bf16 %v1008, %v1008
        %vm1015 = vcmask 64512
        %v1017 = vsel %vm1015, %v1013, 0
        %v1020 = vsel %vm1015, %v1014, 0
        %1022 = vmatprep.subr.bf16.mxu0 0
        %1023 = vmatpush1.bf16.xpose.msra.mxu0 %v1020
        %1024 = vmatprep.subr.bf16.mxu0 0
        %1025 = vmatpush1.bf16.xpose.msra.mxu0 0
        %1026 = vmatprep.subr.bf16.mxu0 0
        %1027 = vmatpush1.bf16.xpose.msra.mxu0 0
        %1028 = vmatprep.subr.bf16.mxu0 0
        %1029 = vmatpush1.bf16.xpose.msra.mxu0 0
        %1030 = vmatprep.subr.bf16.mxu0 0
        %1031 = vmatpush1.bf16.xpose.msra.mxu0 0
        %1032 = vmatprep.subr.bf16.mxu0 0
        %1033 = vmatpush1.bf16.xpose.msra.mxu0 0
        %1034 = vmatprep.subr.bf16.mxu0 0
        %1035 = vmatpush1.bf16.xpose.msra.mxu0 0
        %1036 = vmatprep.subr.bf16.mxu0 0
        %1037 = vmatpush1.bf16.xpose.msra.mxu0 0
        %1038 = vmatprep.subr.bf16.mxu0 0
        %1039 = vmatpush1.bf16.xpose.msra.mxu0 0
        %1040 = vmatprep.subr.bf16.mxu0 0
        %1041 = vmatpush1.bf16.xpose.msra.mxu0 0
        %1042 = vmatprep.subr.bf16.mxu0 0
        %1043 = vmatpush1.bf16.xpose.msra.mxu0 0
        %1044 = vmatprep.subr.bf16.mxu0 0
        %1045 = vmatpush1.bf16.xpose.msra.mxu0 0
        %1046 = vmatprep.subr.bf16.mxu0 0
        %1047 = vmatpush1.bf16.xpose.msra.mxu0 0
        %1048 = vmatprep.subr.bf16.mxu0 0
        %1049 = vmatpush1.bf16.xpose.msra.mxu0 0
        %1050 = vmatprep.subr.bf16.mxu0 0
        %1051 = vmatpush1.bf16.xpose.msra.mxu0 0
        %1052 = vmatprep.subr.bf16.mxu0 0
        %1053 = vmatpush1.bf16.xpose.msra.mxu0 0
        %1054 = vmatprep.mubr.bf16.mxu0 0
        %1055 = vmatmul.mubr.bf16.gmra.mrb[0].mxu0 %v1017
        %v1056 = vpop.f32.mrb[0].mxu0
        %v1057 = vadd.f32 0.0, %v1056
        %v1058 = vpop.f32.mrb[0].mxu0
        %v1059 = vpop.f32.mrb[0].mxu0
        %v1060 = vpop.f32.mrb[0].mxu0
        %1061 = vdwg.mxu0
        %v1062 = vmul.f32 %v1057, 0.35355338
        %vm1063 = vcmp.gt.f32.partialorder %v880, 0.0
        %v1064 = vsel %vm1063, %v1062, -1e+10
        %v1065 = vsel %vm1015, %v1064, -inf
        %1066 = vmax.xlane.f32.xlu0 %v1065
        %v1067 = vpop.xlane.xlu0 %1066
        %v1068 = vsub.f32 %v1064, %v1067
        %v1069 = vmul.f32 %v1068, 1.442695
        %v1070 = vpow.pop %v1069
        %v1071 = vsel %vm1015, %v1070, 0.0
        %1072 = vadd.xlane.f32.xlu0 %v1071
        %v1073 = vpop.xlane.xlu0 %1072
        %v1074 = vrcp.pop %v1073
        %v1075 = vmul.f32 %v1070, %v1074
        %v1076 = vpack.c.bf16 %v1075, %v1075
        %1078 = vrot.lane.b32.xlu0 %v1014, 96
        %v1079 = vpop.permute.xlu0 %1078
        %v1081 = vsel %vm1015, %v1076, 0
        %vm1083 = vcmask 1043456
        %v1085 = vsel %vm1083, %v1079, 0
        %1087 = vmatprep.subr.bf16.mxu0 0
        %1088 = vmatpush1.bf16.msra.mxu0 %v1085
        %1089 = vmatprep.subr.bf16.mxu0 0
        %1090 = vmatpush1.bf16.msra.mxu0 0
        %1091 = vmatprep.subr.bf16.mxu0 0
        %1092 = vmatpush1.bf16.msra.mxu0 0
        %1093 = vmatprep.subr.bf16.mxu0 0
        %1094 = vmatpush1.bf16.msra.mxu0 0
        %1095 = vmatprep.subr.bf16.mxu0 0
        %1096 = vmatpush1.bf16.msra.mxu0 0
        %1097 = vmatprep.subr.bf16.mxu0 0
        %1098 = vmatpush1.bf16.msra.mxu0 0
        %1099 = vmatprep.subr.bf16.mxu0 0
        %1100 = vmatpush1.bf16.msra.mxu0 0
        %1101 = vmatprep.subr.bf16.mxu0 0
        %1102 = vmatpush1.bf16.msra.mxu0 0
        %1103 = vmatprep.subr.bf16.mxu0 0
        %1104 = vmatpush1.bf16.msra.mxu0 0
        %1105 = vmatprep.subr.bf16.mxu0 0
        %1106 = vmatpush1.bf16.msra.mxu0 0
        %1107 = vmatprep.subr.bf16.mxu0 0
        %1108 = vmatpush1.bf16.msra.mxu0 0
        %1109 = vmatprep.subr.bf16.mxu0 0
        %1110 = vmatpush1.bf16.msra.mxu0 0
        %1111 = vmatprep.subr.bf16.mxu0 0
        %1112 = vmatpush1.bf16.msra.mxu0 0
        %1113 = vmatprep.subr.bf16.mxu0 0
        %1114 = vmatpush1.bf16.msra.mxu0 0
        %1115 = vmatprep.subr.bf16.mxu0 0
        %1116 = vmatpush1.bf16.msra.mxu0 0
        %1117 = vmatprep.subr.bf16.mxu0 0
        %1118 = vmatpush1.bf16.msra.mxu0 0
        %1119 = vmatprep.mubr.bf16.mxu0 0
        %1120 = vmatmul.mubr.bf16.gmra.mrb[0].mxu0 %v1081
        %v1121 = vpop.f32.mrb[0].mxu0
        %v1122 = vadd.f32 0.0, %v1121
        %v1123 = vpop.f32.mrb[0].mxu0
        %v1124 = vpop.f32.mrb[0].mxu0
        %v1125 = vpop.f32.mrb[0].mxu0
        %1126 = vdwg.mxu0
        %v1127 = vpack.c.bf16 %v1122, %v1122
        %v1128 = vld [vmem:[%s8] sm:$0xf]
        %1130 = vrot.lane.b32.xlu0 %v1013, 120
        %v1131 = vpop.permute.xlu0 %1130
        %1132 = vrot.lane.b32.xlu0 %v1014, 120
        %v1133 = vpop.permute.xlu0 %1132
        %v1135 = vsel %vm1015, %v1131, 0
        %v1138 = vsel %vm1015, %v1133, 0
        %1140 = vmatprep.subr.bf16.mxu0 0
        %1141 = vmatpush1.bf16.xpose.msra.mxu0 %v1138
        %1142 = vmatprep.subr.bf16.mxu0 0
        %1143 = vmatpush1.bf16.xpose.msra.mxu0 0
        %1144 = vmatprep.subr.bf16.mxu0 0
        %1145 = vmatpush1.bf16.xpose.msra.mxu0 0
        %1146 = vmatprep.subr.bf16.mxu0 0
        %1147 = vmatpush1.bf16.xpose.msra.mxu0 0
        %1148 = vmatprep.subr.bf16.mxu0 0
        %1149 = vmatpush1.bf16.xpose.msra.mxu0 0
        %1150 = vmatprep.subr.bf16.mxu0 0
        %1151 = vmatpush1.bf16.xpose.msra.mxu0 0
        %1152 = vmatprep.subr.bf16.mxu0 0
        %1153 = vmatpush1.bf16.xpose.msra.mxu0 0
        %1154 = vmatprep.subr.bf16.mxu0 0
        %1155 = vmatpush1.bf16.xpose.msra.mxu0 0
        %1156 = vmatprep.subr.bf16.mxu0 0
        %1157 = vmatpush1.bf16.xpose.msra.mxu0 0
        %1158 = vmatprep.subr.bf16.mxu0 0
        %1159 = vmatpush1.bf16.xpose.msra.mxu0 0
        %1160 = vmatprep.subr.bf16.mxu0 0
        %1161 = vmatpush1.bf16.xpose.msra.mxu0 0
        %1162 = vmatprep.subr.bf16.mxu0 0
        %1163 = vmatpush1.bf16.xpose.msra.mxu0 0
        %1164 = vmatprep.subr.bf16.mxu0 0
        %1165 = vmatpush1.bf16.xpose.msra.mxu0 0
        %1166 = vmatprep.subr.bf16.mxu0 0
        %1167 = vmatpush1.bf16.xpose.msra.mxu0 0
        %1168 = vmatprep.subr.bf16.mxu0 0
        %1169 = vmatpush1.bf16.xpose.msra.mxu0 0
        %1170 = vmatprep.subr.bf16.mxu0 0
        %1171 = vmatpush1.bf16.xpose.msra.mxu0 0
        %1172 = vmatprep.mubr.bf16.mxu0 0
        %1173 = vmatmul.mubr.bf16.gmra.mrb[0].mxu0 %v1135
        %v1174 = vpop.f32.mrb[0].mxu0
        %v1175 = vadd.f32 0.0, %v1174
        %v1176 = vpop.f32.mrb[0].mxu0
        %v1177 = vpop.f32.mrb[0].mxu0
        %v1178 = vpop.f32.mrb[0].mxu0
        %1179 = vdwg.mxu0
        %v1180 = vmul.f32 %v1175, 0.35355338
        %v1181 = vsel %vm1063, %v1180, -1e+10
        %v1182 = vsel %vm1015, %v1181, -inf
        %1183 = vmax.xlane.f32.xlu0 %v1182
        %v1184 = vpop.xlane.xlu0 %1183
        %v1185 = vsub.f32 %v1181, %v1184
        %v1186 = vmul.f32 %v1185, 1.442695
        %v1187 = vpow.pop %v1186
        %v1188 = vsel %vm1015, %v1187, 0.0
        %1189 = vadd.xlane.f32.xlu0 %v1188
        %v1190 = vpop.xlane.xlu0 %1189
        %v1191 = vrcp.pop %v1190
        %v1192 = vmul.f32 %v1187, %v1191
        %v1193 = vpack.c.bf16 %v1192, %v1192
        %1194 = vrot.lane.b32.xlu0 %v1014, 88
        %v1195 = vpop.permute.xlu0 %1194
        %v1197 = vsel %vm1015, %v1193, 0
        %v1200 = vsel %vm1083, %v1195, 0
        %1202 = vmatprep.subr.bf16.mxu0 0
        %1203 = vmatpush1.bf16.msra.mxu0 %v1200
        %1204 = vmatprep.subr.bf16.mxu0 0
        %1205 = vmatpush1.bf16.msra.mxu0 0
        %1206 = vmatprep.subr.bf16.mxu0 0
        %1207 = vmatpush1.bf16.msra.mxu0 0
        %1208 = vmatprep.subr.bf16.mxu0 0
        %1209 = vmatpush1.bf16.msra.mxu0 0
        %1210 = vmatprep.subr.bf16.mxu0 0
        %1211 = vmatpush1.bf16.msra.mxu0 0
        %1212 = vmatprep.subr.bf16.mxu0 0
        %1213 = vmatpush1.bf16.msra.mxu0 0
        %1214 = vmatprep.subr.bf16.mxu0 0
        %1215 = vmatpush1.bf16.msra.mxu0 0
        %1216 = vmatprep.subr.bf16.mxu0 0
        %1217 = vmatpush1.bf16.msra.mxu0 0
        %1218 = vmatprep.subr.bf16.mxu0 0
        %1219 = vmatpush1.bf16.msra.mxu0 0
        %1220 = vmatprep.subr.bf16.mxu0 0
        %1221 = vmatpush1.bf16.msra.mxu0 0
        %1222 = vmatprep.subr.bf16.mxu0 0
        %1223 = vmatpush1.bf16.msra.mxu0 0
        %1224 = vmatprep.subr.bf16.mxu0 0
        %1225 = vmatpush1.bf16.msra.mxu0 0
        %1226 = vmatprep.subr.bf16.mxu0 0
        %1227 = vmatpush1.bf16.msra.mxu0 0
        %1228 = vmatprep.subr.bf16.mxu0 0
        %1229 = vmatpush1.bf16.msra.mxu0 0
        %1230 = vmatprep.subr.bf16.mxu0 0
        %1231 = vmatpush1.bf16.msra.mxu0 0
        %1232 = vmatprep.subr.bf16.mxu0 0
        %1233 = vmatpush1.bf16.msra.mxu0 0
        %1234 = vmatprep.mubr.bf16.mxu0 0
        %1235 = vmatmul.mubr.bf16.gmra.mrb[0].mxu0 %v1197
        %v1236 = vpop.f32.mrb[0].mxu0
        %v1237 = vadd.f32 0.0, %v1236
        %v1238 = vpop.f32.mrb[0].mxu0
        %v1239 = vpop.f32.mrb[0].mxu0
        %v1240 = vpop.f32.mrb[0].mxu0
        %1241 = vdwg.mxu0
        %v1242 = vpack.c.bf16 %v1237, %v1237
        %s1243 = scalar_lea.vmem %s8, 4
        %v1244 = vld [vmem:[%s1243] sm:$0xf]
        %v1246 = vsel %vm1015, %v1242, 0
        %v1249 = vsel %vm1083, %v1244, 0
        %1251 = vmatprep.subr.bf16.mxu0 0
        %1252 = vmatpush1.bf16.msra.mxu0 %v1249
        %1253 = vmatprep.subr.bf16.mxu0 0
        %1254 = vmatpush1.bf16.msra.mxu0 0
        %1255 = vmatprep.subr.bf16.mxu0 0
        %1256 = vmatpush1.bf16.msra.mxu0 0
        %1257 = vmatprep.subr.bf16.mxu0 0
        %1258 = vmatpush1.bf16.msra.mxu0 0
        %1259 = vmatprep.subr.bf16.mxu0 0
        %1260 = vmatpush1.bf16.msra.mxu0 0
        %1261 = vmatprep.subr.bf16.mxu0 0
        %1262 = vmatpush1.bf16.msra.mxu0 0
        %1263 = vmatprep.subr.bf16.mxu0 0
        %1264 = vmatpush1.bf16.msra.mxu0 0
        %1265 = vmatprep.subr.bf16.mxu0 0
        %1266 = vmatpush1.bf16.msra.mxu0 0
        %1267 = vmatprep.subr.bf16.mxu0 0
        %1268 = vmatpush1.bf16.msra.mxu0 0
        %1269 = vmatprep.subr.bf16.mxu0 0
        %1270 = vmatpush1.bf16.msra.mxu0 0
        %1271 = vmatprep.subr.bf16.mxu0 0
        %1272 = vmatpush1.bf16.msra.mxu0 0
        %1273 = vmatprep.subr.bf16.mxu0 0
        %1274 = vmatpush1.bf16.msra.mxu0 0
        %1275 = vmatprep.subr.bf16.mxu0 0
        %1276 = vmatpush1.bf16.msra.mxu0 0
        %1277 = vmatprep.subr.bf16.mxu0 0
        %1278 = vmatpush1.bf16.msra.mxu0 0
        %1279 = vmatprep.subr.bf16.mxu0 0
        %1280 = vmatpush1.bf16.msra.mxu0 0
        %1281 = vmatprep.subr.bf16.mxu0 0
        %1282 = vmatpush1.bf16.msra.mxu0 0
        %1283 = vmatprep.mubr.bf16.mxu0 0
        %1284 = vmatmul.mubr.bf16.gmra.mrb[0].mxu0 %v1246
        %v1285 = vpop.f32.mrb[0].mxu0
        %v1286 = vadd.f32 0.0, %v1285
        %v1287 = vpop.f32.mrb[0].mxu0
        %v1288 = vpop.f32.mrb[0].mxu0
        %v1289 = vpop.f32.mrb[0].mxu0
        %1290 = vdwg.mxu0
        %v1292 = vsel %vm1015, %v1127, 0
        %v1295 = vsel %vm1083, %v1128, 0
        %1297 = vmatprep.subr.bf16.mxu0 0
        %1298 = vmatpush1.bf16.msra.mxu0 %v1295
        %1299 = vmatprep.subr.bf16.mxu0 0
        %1300 = vmatpush1.bf16.msra.mxu0 0
        %1301 = vmatprep.subr.bf16.mxu0 0
        %1302 = vmatpush1.bf16.msra.mxu0 0
        %1303 = vmatprep.subr.bf16.mxu0 0
        %1304 = vmatpush1.bf16.msra.mxu0 0
        %1305 = vmatprep.subr.bf16.mxu0 0
        %1306 = vmatpush1.bf16.msra.mxu0 0
        %1307 = vmatprep.subr.bf16.mxu0 0
        %1308 = vmatpush1.bf16.msra.mxu0 0
        %1309 = vmatprep.subr.bf16.mxu0 0
        %1310 = vmatpush1.bf16.msra.mxu0 0
        %1311 = vmatprep.subr.bf16.mxu0 0
        %1312 = vmatpush1.bf16.msra.mxu0 0
        %1313 = vmatprep.subr.bf16.mxu0 0
        %1314 = vmatpush1.bf16.msra.mxu0 0
        %1315 = vmatprep.subr.bf16.mxu0 0
        %1316 = vmatpush1.bf16.msra.mxu0 0
        %1317 = vmatprep.subr.bf16.mxu0 0
        %1318 = vmatpush1.bf16.msra.mxu0 0
        %1319 = vmatprep.subr.bf16.mxu0 0
        %1320 = vmatpush1.bf16.msra.mxu0 0
        %1321 = vmatprep.subr.bf16.mxu0 0
        %1322 = vmatpush1.bf16.msra.mxu0 0
        %1323 = vmatprep.subr.bf16.mxu0 0
        %1324 = vmatpush1.bf16.msra.mxu0 0
        %1325 = vmatprep.subr.bf16.mxu0 0
        %1326 = vmatpush1.bf16.msra.mxu0 0
        %1327 = vmatprep.subr.bf16.mxu0 0
        %1328 = vmatpush1.bf16.msra.mxu0 0
        %1329 = vmatprep.mubr.bf16.mxu0 0
        %1330 = vmatmul.mubr.bf16.gmra.mrb[0].mxu0 %v1292
        %v1331 = vpop.f32.mrb[0].mxu0
        %v1332 = vadd.f32 %v1286, %v1331
        %v1333 = vpop.f32.mrb[0].mxu0
        %v1334 = vpop.f32.mrb[0].mxu0
        %v1335 = vpop.f32.mrb[0].mxu0
        %1336 = vdwg.mxu0
        %1337 = vrot.lane.b32.xlu0 %v1013, 112
        %v1338 = vpop.permute.xlu0 %1337
        %1339 = vrot.lane.b32.xlu0 %v1014, 112
        %v1340 = vpop.permute.xlu0 %1339
        %v1342 = vsel %vm1015, %v1338, 0
        %v1345 = vsel %vm1015, %v1340, 0
        %1347 = vmatprep.subr.bf16.mxu0 0
        %1348 = vmatpush1.bf16.xpose.msra.mxu0 %v1345
        %1349 = vmatprep.subr.bf16.mxu0 0
        %1350 = vmatpush1.bf16.xpose.msra.mxu0 0
        %1351 = vmatprep.subr.bf16.mxu0 0
        %1352 = vmatpush1.bf16.xpose.msra.mxu0 0
        %1353 = vmatprep.subr.bf16.mxu0 0
        %1354 = vmatpush1.bf16.xpose.msra.mxu0 0
        %1355 = vmatprep.subr.bf16.mxu0 0
        %1356 = vmatpush1.bf16.xpose.msra.mxu0 0
        %1357 = vmatprep.subr.bf16.mxu0 0
        %1358 = vmatpush1.bf16.xpose.msra.mxu0 0
        %1359 = vmatprep.subr.bf16.mxu0 0
        %1360 = vmatpush1.bf16.xpose.msra.mxu0 0
        %1361 = vmatprep.subr.bf16.mxu0 0
        %1362 = vmatpush1.bf16.xpose.msra.mxu0 0
        %1363 = vmatprep.subr.bf16.mxu0 0
        %1364 = vmatpush1.bf16.xpose.msra.mxu0 0
        %1365 = vmatprep.subr.bf16.mxu0 0
        %1366 = vmatpush1.bf16.xpose.msra.mxu0 0
        %1367 = vmatprep.subr.bf16.mxu0 0
        %1368 = vmatpush1.bf16.xpose.msra.mxu0 0
        %1369 = vmatprep.subr.bf16.mxu0 0
        %1370 = vmatpush1.bf16.xpose.msra.mxu0 0
        %1371 = vmatprep.subr.bf16.mxu0 0
        %1372 = vmatpush1.bf16.xpose.msra.mxu0 0
        %1373 = vmatprep.subr.bf16.mxu0 0
        %1374 = vmatpush1.bf16.xpose.msra.mxu0 0
        %1375 = vmatprep.subr.bf16.mxu0 0
        %1376 = vmatpush1.bf16.xpose.msra.mxu0 0
        %1377 = vmatprep.subr.bf16.mxu0 0
        %1378 = vmatpush1.bf16.xpose.msra.mxu0 0
        %1379 = vmatprep.mubr.bf16.mxu0 0
        %1380 = vmatmul.mubr.bf16.gmra.mrb[0].mxu0 %v1342
        %v1381 = vpop.f32.mrb[0].mxu0
        %v1382 = vadd.f32 0.0, %v1381
        %v1383 = vpop.f32.mrb[0].mxu0
        %v1384 = vpop.f32.mrb[0].mxu0
        %v1385 = vpop.f32.mrb[0].mxu0
        %1386 = vdwg.mxu0
        %v1387 = vmul.f32 %v1382, 0.35355338
        %v1388 = vsel %vm1063, %v1387, -1e+10
        %v1389 = vsel %vm1015, %v1388, -inf
        %1390 = vmax.xlane.f32.xlu0 %v1389
        %v1391 = vpop.xlane.xlu0 %1390
        %v1392 = vsub.f32 %v1388, %v1391
        %v1393 = vmul.f32 %v1392, 1.442695
        %v1394 = vpow.pop %v1393
        %v1395 = vsel %vm1015, %v1394, 0.0
        %1396 = vadd.xlane.f32.xlu0 %v1395
        %v1397 = vpop.xlane.xlu0 %1396
        %v1398 = vrcp.pop %v1397
        %v1399 = vmul.f32 %v1394, %v1398
        %v1400 = vpack.c.bf16 %v1399, %v1399
        %1401 = vrot.lane.b32.xlu0 %v1014, 80
        %v1402 = vpop.permute.xlu0 %1401
        %v1404 = vsel %vm1015, %v1400, 0
        %v1407 = vsel %vm1083, %v1402, 0
        %1409 = vmatprep.subr.bf16.mxu0 0
        %1410 = vmatpush1.bf16.msra.mxu0 %v1407
        %1411 = vmatprep.subr.bf16.mxu0 0
        %1412 = vmatpush1.bf16.msra.mxu0 0
        %1413 = vmatprep.subr.bf16.mxu0 0
        %1414 = vmatpush1.bf16.msra.mxu0 0
        %1415 = vmatprep.subr.bf16.mxu0 0
        %1416 = vmatpush1.bf16.msra.mxu0 0
        %1417 = vmatprep.subr.bf16.mxu0 0
        %1418 = vmatpush1.bf16.msra.mxu0 0
        %1419 = vmatprep.subr.bf16.mxu0 0
        %1420 = vmatpush1.bf16.msra.mxu0 0
        %1421 = vmatprep.subr.bf16.mxu0 0
        %1422 = vmatpush1.bf16.msra.mxu0 0
        %1423 = vmatprep.subr.bf16.mxu0 0
        %1424 = vmatpush1.bf16.msra.mxu0 0
        %1425 = vmatprep.subr.bf16.mxu0 0
        %1426 = vmatpush1.bf16.msra.mxu0 0
        %1427 = vmatprep.subr.bf16.mxu0 0
        %1428 = vmatpush1.bf16.msra.mxu0 0
        %1429 = vmatprep.subr.bf16.mxu0 0
        %1430 = vmatpush1.bf16.msra.mxu0 0
        %1431 = vmatprep.subr.bf16.mxu0 0
        %1432 = vmatpush1.bf16.msra.mxu0 0
        %1433 = vmatprep.subr.bf16.mxu0 0
        %1434 = vmatpush1.bf16.msra.mxu0 0
        %1435 = vmatprep.subr.bf16.mxu0 0
        %1436 = vmatpush1.bf16.msra.mxu0 0
        %1437 = vmatprep.subr.bf16.mxu0 0
        %1438 = vmatpush1.bf16.msra.mxu0 0
        %1439 = vmatprep.subr.bf16.mxu0 0
        %1440 = vmatpush1.bf16.msra.mxu0 0
        %1441 = vmatprep.mubr.bf16.mxu0 0
        %1442 = vmatmul.mubr.bf16.gmra.mrb[0].mxu0 %v1404
        %v1443 = vpop.f32.mrb[0].mxu0
        %v1444 = vadd.f32 0.0, %v1443
        %v1445 = vpop.f32.mrb[0].mxu0
        %v1446 = vpop.f32.mrb[0].mxu0
        %v1447 = vpop.f32.mrb[0].mxu0
        %1448 = vdwg.mxu0
        %v1449 = vpack.c.bf16 %v1444, %v1444
        %s1450 = scalar_lea.vmem %s8, 8
        %v1451 = vld [vmem:[%s1450] sm:$0xf]
        %v1453 = vsel %vm1015, %v1449, 0
        %v1456 = vsel %vm1083, %v1451, 0
        %1458 = vmatprep.subr.bf16.mxu0 0
        %1459 = vmatpush1.bf16.msra.mxu0 %v1456
        %1460 = vmatprep.subr.bf16.mxu0 0
        %1461 = vmatpush1.bf16.msra.mxu0 0
        %1462 = vmatprep.subr.bf16.mxu0 0
        %1463 = vmatpush1.bf16.msra.mxu0 0
        %1464 = vmatprep.subr.bf16.mxu0 0
        %1465 = vmatpush1.bf16.msra.mxu0 0
        %1466 = vmatprep.subr.bf16.mxu0 0
        %1467 = vmatpush1.bf16.msra.mxu0 0
        %1468 = vmatprep.subr.bf16.mxu0 0
        %1469 = vmatpush1.bf16.msra.mxu0 0
        %1470 = vmatprep.subr.bf16.mxu0 0
        %1471 = vmatpush1.bf16.msra.mxu0 0
        %1472 = vmatprep.subr.bf16.mxu0 0
        %1473 = vmatpush1.bf16.msra.mxu0 0
        %1474 = vmatprep.subr.bf16.mxu0 0
        %1475 = vmatpush1.bf16.msra.mxu0 0
        %1476 = vmatprep.subr.bf16.mxu0 0
        %1477 = vmatpush1.bf16.msra.mxu0 0
        %1478 = vmatprep.subr.bf16.mxu0 0
        %1479 = vmatpush1.bf16.msra.mxu0 0
        %1480 = vmatprep.subr.bf16.mxu0 0
        %1481 = vmatpush1.bf16.msra.mxu0 0
        %1482 = vmatprep.subr.bf16.mxu0 0
        %1483 = vmatpush1.bf16.msra.mxu0 0
        %1484 = vmatprep.subr.bf16.mxu0 0
        %1485 = vmatpush1.bf16.msra.mxu0 0
        %1486 = vmatprep.subr.bf16.mxu0 0
        %1487 = vmatpush1.bf16.msra.mxu0 0
        %1488 = vmatprep.subr.bf16.mxu0 0
        %1489 = vmatpush1.bf16.msra.mxu0 0
        %1490 = vmatprep.mubr.bf16.mxu0 0
        %1491 = vmatmul.mubr.bf16.gmra.mrb[0].mxu0 %v1453
        %v1492 = vpop.f32.mrb[0].mxu0
        %v1493 = vadd.f32 0.0, %v1492
        %v1494 = vpop.f32.mrb[0].mxu0
        %v1495 = vpop.f32.mrb[0].mxu0
        %v1496 = vpop.f32.mrb[0].mxu0
        %1497 = vdwg.mxu0
        %v1498 = vadd.f32 %v1332, %v1493
        %1499 = vrot.lane.b32.xlu0 %v1013, 104
        %v1500 = vpop.permute.xlu0 %1499
        %1501 = vrot.lane.b32.xlu0 %v1014, 104
        %v1502 = vpop.permute.xlu0 %1501
        %v1504 = vsel %vm1015, %v1500, 0
        %v1507 = vsel %vm1015, %v1502, 0
        %1509 = vmatprep.subr.bf16.mxu0 0
        %1510 = vmatpush1.bf16.xpose.msra.mxu0 %v1507
        %1511 = vmatprep.subr.bf16.mxu0 0
        %1512 = vmatpush1.bf16.xpose.msra.mxu0 0
        %1513 = vmatprep.subr.bf16.mxu0 0
        %1514 = vmatpush1.bf16.xpose.msra.mxu0 0
        %1515 = vmatprep.subr.bf16.mxu0 0
        %1516 = vmatpush1.bf16.xpose.msra.mxu0 0
        %1517 = vmatprep.subr.bf16.mxu0 0
        %1518 = vmatpush1.bf16.xpose.msra.mxu0 0
        %1519 = vmatprep.subr.bf16.mxu0 0
        %1520 = vmatpush1.bf16.xpose.msra.mxu0 0
        %1521 = vmatprep.subr.bf16.mxu0 0
        %1522 = vmatpush1.bf16.xpose.msra.mxu0 0
        %1523 = vmatprep.subr.bf16.mxu0 0
        %1524 = vmatpush1.bf16.xpose.msra.mxu0 0
        %1525 = vmatprep.subr.bf16.mxu0 0
        %1526 = vmatpush1.bf16.xpose.msra.mxu0 0
        %1527 = vmatprep.subr.bf16.mxu0 0
        %1528 = vmatpush1.bf16.xpose.msra.mxu0 0
        %1529 = vmatprep.subr.bf16.mxu0 0
        %1530 = vmatpush1.bf16.xpose.msra.mxu0 0
        %1531 = vmatprep.subr.bf16.mxu0 0
        %1532 = vmatpush1.bf16.xpose.msra.mxu0 0
        %1533 = vmatprep.subr.bf16.mxu0 0
        %1534 = vmatpush1.bf16.xpose.msra.mxu0 0
        %1535 = vmatprep.subr.bf16.mxu0 0
        %1536 = vmatpush1.bf16.xpose.msra.mxu0 0
        %1537 = vmatprep.subr.bf16.mxu0 0
        %1538 = vmatpush1.bf16.xpose.msra.mxu0 0
        %1539 = vmatprep.subr.bf16.mxu0 0
        %1540 = vmatpush1.bf16.xpose.msra.mxu0 0
        %1541 = vmatprep.mubr.bf16.mxu0 0
        %1542 = vmatmul.mubr.bf16.gmra.mrb[0].mxu0 %v1504
        %v1543 = vpop.f32.mrb[0].mxu0
        %v1544 = vadd.f32 0.0, %v1543
        %v1545 = vpop.f32.mrb[0].mxu0
        %v1546 = vpop.f32.mrb[0].mxu0
        %v1547 = vpop.f32.mrb[0].mxu0
        %1548 = vdwg.mxu0
        %v1549 = vmul.f32 %v1544, 0.35355338
        %v1550 = vsel %vm1063, %v1549, -1e+10
        %v1551 = vsel %vm1015, %v1550, -inf
        %1552 = vmax.xlane.f32.xlu0 %v1551
        %v1553 = vpop.xlane.xlu0 %1552
        %v1554 = vsub.f32 %v1550, %v1553
        %v1555 = vmul.f32 %v1554, 1.442695
        %v1556 = vpow.pop %v1555
        %v1557 = vsel %vm1015, %v1556, 0.0
        %1558 = vadd.xlane.f32.xlu0 %v1557
        %v1559 = vpop.xlane.xlu0 %1558
        %v1560 = vrcp.pop %v1559
        %v1561 = vmul.f32 %v1556, %v1560
        %v1562 = vpack.c.bf16 %v1561, %v1561
        %1563 = vrot.lane.b32.xlu0 %v1014, 72
        %v1564 = vpop.permute.xlu0 %1563
        %v1566 = vsel %vm1015, %v1562, 0
        %v1569 = vsel %vm1083, %v1564, 0
        %1571 = vmatprep.subr.bf16.mxu0 0
        %1572 = vmatpush1.bf16.msra.mxu0 %v1569
        %1573 = vmatprep.subr.bf16.mxu0 0
        %1574 = vmatpush1.bf16.msra.mxu0 0
        %1575 = vmatprep.subr.bf16.mxu0 0
        %1576 = vmatpush1.bf16.msra.mxu0 0
        %1577 = vmatprep.subr.bf16.mxu0 0
        %1578 = vmatpush1.bf16.msra.mxu0 0
        %1579 = vmatprep.subr.bf16.mxu0 0
        %1580 = vmatpush1.bf16.msra.mxu0 0
        %1581 = vmatprep.subr.bf16.mxu0 0
        %1582 = vmatpush1.bf16.msra.mxu0 0
        %1583 = vmatprep.subr.bf16.mxu0 0
        %1584 = vmatpush1.bf16.msra.mxu0 0
        %1585 = vmatprep.subr.bf16.mxu0 0
        %1586 = vmatpush1.bf16.msra.mxu0 0
        %1587 = vmatprep.subr.bf16.mxu0 0
        %1588 = vmatpush1.bf16.msra.mxu0 0
        %1589 = vmatprep.subr.bf16.mxu0 0
        %1590 = vmatpush1.bf16.msra.mxu0 0
        %1591 = vmatprep.subr.bf16.mxu0 0
        %1592 = vmatpush1.bf16.msra.mxu0 0
        %1593 = vmatprep.subr.bf16.mxu0 0
        %1594 = vmatpush1.bf16.msra.mxu0 0
        %1595 = vmatprep.subr.bf16.mxu0 0
        %1596 = vmatpush1.bf16.msra.mxu0 0
        %1597 = vmatprep.subr.bf16.mxu0 0
        %1598 = vmatpush1.bf16.msra.mxu0 0
        %1599 = vmatprep.subr.bf16.mxu0 0
        %1600 = vmatpush1.bf16.msra.mxu0 0
        %1601 = vmatprep.subr.bf16.mxu0 0
        %1602 = vmatpush1.bf16.msra.mxu0 0
        %1603 = vmatprep.mubr.bf16.mxu0 0
        %1604 = vmatmul.mubr.bf16.gmra.mrb[0].mxu0 %v1566
        %v1605 = vpop.f32.mrb[0].mxu0
        %v1606 = vadd.f32 0.0, %v1605
        %v1607 = vpop.f32.mrb[0].mxu0
        %v1608 = vpop.f32.mrb[0].mxu0
        %v1609 = vpop.f32.mrb[0].mxu0
        %1610 = vdwg.mxu0
        %v1611 = vpack.c.bf16 %v1606, %v1606
        %s1612 = scalar_lea.vmem %s8, 12
        %v1613 = vld [vmem:[%s1612] sm:$0xf]
        %v1615 = vsel %vm1015, %v1611, 0
        %v1618 = vsel %vm1083, %v1613, 0
        %1620 = vmatprep.subr.bf16.mxu0 0
        %1621 = vmatpush1.bf16.msra.mxu0 %v1618
        %1622 = vmatprep.subr.bf16.mxu0 0
        %1623 = vmatpush1.bf16.msra.mxu0 0
        %1624 = vmatprep.subr.bf16.mxu0 0
        %1625 = vmatpush1.bf16.msra.mxu0 0
        %1626 = vmatprep.subr.bf16.mxu0 0
        %1627 = vmatpush1.bf16.msra.mxu0 0
        %1628 = vmatprep.subr.bf16.mxu0 0
        %1629 = vmatpush1.bf16.msra.mxu0 0
        %1630 = vmatprep.subr.bf16.mxu0 0
        %1631 = vmatpush1.bf16.msra.mxu0 0
        %1632 = vmatprep.subr.bf16.mxu0 0
        %1633 = vmatpush1.bf16.msra.mxu0 0
        %1634 = vmatprep.subr.bf16.mxu0 0
        %1635 = vmatpush1.bf16.msra.mxu0 0
        %1636 = vmatprep.subr.bf16.mxu0 0
        %1637 = vmatpush1.bf16.msra.mxu0 0
        %1638 = vmatprep.subr.bf16.mxu0 0
        %1639 = vmatpush1.bf16.msra.mxu0 0
        %1640 = vmatprep.subr.bf16.mxu0 0
        %1641 = vmatpush1.bf16.msra.mxu0 0
        %1642 = vmatprep.subr.bf16.mxu0 0
        %1643 = vmatpush1.bf16.msra.mxu0 0
        %1644 = vmatprep.subr.bf16.mxu0 0
        %1645 = vmatpush1.bf16.msra.mxu0 0
        %1646 = vmatprep.subr.bf16.mxu0 0
        %1647 = vmatpush1.bf16.msra.mxu0 0
        %1648 = vmatprep.subr.bf16.mxu0 0
        %1649 = vmatpush1.bf16.msra.mxu0 0
        %1650 = vmatprep.subr.bf16.mxu0 0
        %1651 = vmatpush1.bf16.msra.mxu0 0
        %1652 = vmatprep.mubr.bf16.mxu0 0
        %1653 = vmatmul.mubr.bf16.gmra.mrb[0].mxu0 %v1615
        %v1654 = vpop.f32.mrb[0].mxu0
        %v1655 = vadd.f32 0.0, %v1654
        %v1656 = vpop.f32.mrb[0].mxu0
        %v1657 = vpop.f32.mrb[0].mxu0
        %v1658 = vpop.f32.mrb[0].mxu0
        %1659 = vdwg.mxu0
        %v1660 = vadd.f32 %v1498, %v1655
        %v1661 = vld [vmem:[%s9] sm:$0x1]
        %v1663 = vlaneseq
        %v1664 = vshrl.u32 %v1663, 7
        %v1665 = vsub.s32 0, %v1664
        %v1666 = vrot.slane %v1661, %v1665
        %v1668 = vadd.f32 %v1660, %v1666
        %v1669 = vadd.f32 %v877, %v1668
        %v1670 = vsel %vm906, %v1669, 0.0
        %1671 = vadd.xlane.f32.xlu0 %v1670
        %v1672 = vpop.xlane.xlu0 %1671
        %v1673 = vrcp.pop 32.0
        %v1674 = vmul.f32 %v1672, %v1673
        %v1675 = vsub.f32 %v1669, %v1674
        %v1676 = vmul.f32 %v1675, %v1675
        %v1677 = vsel %vm906, %v1676, 0.0
        %1678 = vadd.xlane.f32.xlu0 %v1677
        %v1679 = vpop.xlane.xlu0 %1678
        %v1680 = vmul.f32 %v1679, %v1673
        %v1681 = vadd.f32 %v1680, 1e-05
        %v1682 = vrsqrt.pop %v1681
        %v1683 = vmul.f32 %v1675, %v1682
        %v1684 = vld [vmem:[%s20] sm:$0x1]
        %v1686 = vlaneseq
        %v1687 = vshrl.u32 %v1686, 7
        %v1688 = vsub.s32 0, %v1687
        %v1689 = vrot.slane %v1684, %v1688
        %v1691 = vmul.f32 %v1683, %v1689
        %v1692 = vld [vmem:[%s21] sm:$0x1]
        %v1694 = vlaneseq
        %v1695 = vshrl.u32 %v1694, 7
        %v1696 = vsub.s32 0, %v1695
        %v1697 = vrot.slane %v1692, %v1696
        %v1699 = vadd.f32 %v1691, %v1697
        %v1700 = vpack.c.bf16 %v1699, %v1699
        %v1701 = vld [vmem:[%s10] sm:$0xf]
        %v1702 = vld [vmem:[%s10 + $0x4] sm:$0xf]
        %v1703 = vld [vmem:[%s10 + $0x8] sm:$0xf]
        %v1704 = vld [vmem:[%s10 + $0xc] sm:$0xf]
        %v1705 = vld [vmem:[%s11] sm:$0x1]
        %v1707 = vlaneseq
        %v1708 = vshrl.u32 %v1707, 7
        %v1709 = vsub.s32 0, %v1708
        %v1710 = vrot.slane %v1705, %v1709
        %v1716 = vunpack.c.l.b16 %v1701
        %v1717 = vunpack.c.l.b16 %v1702
        %v1718 = vunpack.c.l.b16 %v1703
        %v1719 = vunpack.c.l.b16 %v1704
        %v1720 = vpack.c.b16 %v1717, %v1716
        %v1721 = vpack.c.b16 %v1719, %v1718
        %v1725 = vsel %vm906, %v1700, 0
        %1727 = vmatprep.subr.bf16.mxu0 0
        %1728 = vmatpush1.bf16.msra.mxu0 %v1720
        %1729 = vmatprep.subr.bf16.mxu0 0
        %1730 = vmatpush1.bf16.msra.mxu0 %v1721
        %1731 = vmatprep.subr.bf16.mxu0 0
        %1732 = vmatpush1.bf16.msra.mxu0 0
        %1733 = vmatprep.subr.bf16.mxu0 0
        %1734 = vmatpush1.bf16.msra.mxu0 0
        %1735 = vmatprep.subr.bf16.mxu0 0
        %1736 = vmatpush1.bf16.msra.mxu0 0
        %1737 = vmatprep.subr.bf16.mxu0 0
        %1738 = vmatpush1.bf16.msra.mxu0 0
        %1739 = vmatprep.subr.bf16.mxu0 0
        %1740 = vmatpush1.bf16.msra.mxu0 0
        %1741 = vmatprep.subr.bf16.mxu0 0
        %1742 = vmatpush1.bf16.msra.mxu0 0
        %1743 = vmatprep.subr.bf16.mxu0 0
        %1744 = vmatpush1.bf16.msra.mxu0 0
        %1745 = vmatprep.subr.bf16.mxu0 0
        %1746 = vmatpush1.bf16.msra.mxu0 0
        %1747 = vmatprep.subr.bf16.mxu0 0
        %1748 = vmatpush1.bf16.msra.mxu0 0
        %1749 = vmatprep.subr.bf16.mxu0 0
        %1750 = vmatpush1.bf16.msra.mxu0 0
        %1751 = vmatprep.subr.bf16.mxu0 0
        %1752 = vmatpush1.bf16.msra.mxu0 0
        %1753 = vmatprep.subr.bf16.mxu0 0
        %1754 = vmatpush1.bf16.msra.mxu0 0
        %1755 = vmatprep.subr.bf16.mxu0 0
        %1756 = vmatpush1.bf16.msra.mxu0 0
        %1757 = vmatprep.subr.bf16.mxu0 0
        %1758 = vmatpush1.bf16.msra.mxu0 0
        %1759 = vmatprep.mubr.bf16.mxu0 0
        %1760 = vmatmul.mubr.bf16.gmra.mrb[0].mxu0 %v1725
        %v1761 = vpop.f32.mrb[0].mxu0
        %v1762 = vadd.f32 %v1710, %v1761
        %v1763 = vpop.f32.mrb[0].mxu0
        %v1764 = vpop.f32.mrb[0].mxu0
        %v1765 = vpop.f32.mrb[0].mxu0
        %1766 = vdwg.mxu0
        %v1767 = vpack.c.bf16 %v879, %v878
        %v1768 = vld [vmem:[%s12] sm:$0xf]
        %v1769 = vld [vmem:[%s12 + $0x4] sm:$0xf]
        %v1770 = vld [vmem:[%s12 + $0x8] sm:$0xf]
        %v1771 = vld [vmem:[%s12 + $0xc] sm:$0xf]
        %v1772 = vld [vmem:[%s13] sm:$0x1]
        %v1774 = vlaneseq
        %v1775 = vshrl.u32 %v1774, 7
        %v1776 = vsub.s32 0, %v1775
        %v1777 = vrot.slane %v1772, %v1776
        %v1783 = vunpack.c.l.b16 %v1768
        %v1784 = vunpack.c.l.b16 %v1769
        %v1785 = vunpack.c.l.b16 %v1770
        %v1786 = vunpack.c.l.b16 %v1771
        %v1787 = vpack.c.b16 %v1784, %v1783
        %v1788 = vpack.c.b16 %v1786, %v1785
        %v1792 = vsel %vm906, %v1767, 0
        %1794 = vmatprep.subr.bf16.mxu0 0
        %1795 = vmatpush1.bf16.msra.mxu0 %v1787
        %1796 = vmatprep.subr.bf16.mxu0 0
        %1797 = vmatpush1.bf16.msra.mxu0 %v1788
        %1798 = vmatprep.subr.bf16.mxu0 0
        %1799 = vmatpush1.bf16.msra.mxu0 0
        %1800 = vmatprep.subr.bf16.mxu0 0
        %1801 = vmatpush1.bf16.msra.mxu0 0
        %1802 = vmatprep.subr.bf16.mxu0 0
        %1803 = vmatpush1.bf16.msra.mxu0 0
        %1804 = vmatprep.subr.bf16.mxu0 0
        %1805 = vmatpush1.bf16.msra.mxu0 0
        %1806 = vmatprep.subr.bf16.mxu0 0
        %1807 = vmatpush1.bf16.msra.mxu0 0
        %1808 = vmatprep.subr.bf16.mxu0 0
        %1809 = vmatpush1.bf16.msra.mxu0 0
        %1810 = vmatprep.subr.bf16.mxu0 0
        %1811 = vmatpush1.bf16.msra.mxu0 0
        %1812 = vmatprep.subr.bf16.mxu0 0
        %1813 = vmatpush1.bf16.msra.mxu0 0
        %1814 = vmatprep.subr.bf16.mxu0 0
        %1815 = vmatpush1.bf16.msra.mxu0 0
        %1816 = vmatprep.subr.bf16.mxu0 0
        %1817 = vmatpush1.bf16.msra.mxu0 0
        %1818 = vmatprep.subr.bf16.mxu0 0
        %1819 = vmatpush1.bf16.msra.mxu0 0
        %1820 = vmatprep.subr.bf16.mxu0 0
        %1821 = vmatpush1.bf16.msra.mxu0 0
        %1822 = vmatprep.subr.bf16.mxu0 0
        %1823 = vmatpush1.bf16.msra.mxu0 0
        %1824 = vmatprep.subr.bf16.mxu0 0
        %1825 = vmatpush1.bf16.msra.mxu0 0
        %1826 = vmatprep.mubr.bf16.mxu0 0
        %1827 = vmatmul.mubr.bf16.gmra.mrb[0].mxu0 %v1792
        %v1828 = vpop.f32.mrb[0].mxu0
        %v1829 = vadd.f32 %v1777, %v1828
        %v1830 = vpop.f32.mrb[0].mxu0
        %v1831 = vpop.f32.mrb[0].mxu0
        %v1832 = vadd.f32 %v1777, %v1831
        %v1833 = vpop.f32.mrb[0].mxu0
        %1834 = vdwg.mxu0
        %v1835 = vpack.c.bf16 %v1762, %v1762
        %v1836 = vpack.c.bf16 %v1832, %v1829
        %v1838 = vsel %vm1015, %v1835, 0
        %v1841 = vsel %vm1015, %v1836, 0
        %1843 = vmatprep.subr.bf16.mxu0 0
        %1844 = vmatpush1.bf16.xpose.msra.mxu0 %v1841
        %1845 = vmatprep.subr.bf16.mxu0 0
        %1846 = vmatpush1.bf16.xpose.msra.mxu0 0
        %1847 = vmatprep.subr.bf16.mxu0 0
        %1848 = vmatpush1.bf16.xpose.msra.mxu0 0
        %1849 = vmatprep.subr.bf16.mxu0 0
        %1850 = vmatpush1.bf16.xpose.msra.mxu0 0
        %1851 = vmatprep.subr.bf16.mxu0 0
        %1852 = vmatpush1.bf16.xpose.msra.mxu0 0
        %1853 = vmatprep.subr.bf16.mxu0 0
        %1854 = vmatpush1.bf16.xpose.msra.mxu0 0
        %1855 = vmatprep.subr.bf16.mxu0 0
        %1856 = vmatpush1.bf16.xpose.msra.mxu0 0
        %1857 = vmatprep.subr.bf16.mxu0 0
        %1858 = vmatpush1.bf16.xpose.msra.mxu0 0
        %1859 = vmatprep.subr.bf16.mxu0 0
        %1860 = vmatpush1.bf16.xpose.msra.mxu0 0
        %1861 = vmatprep.subr.bf16.mxu0 0
        %1862 = vmatpush1.bf16.xpose.msra.mxu0 0
        %1863 = vmatprep.subr.bf16.mxu0 0
        %1864 = vmatpush1.bf16.xpose.msra.mxu0 0
        %1865 = vmatprep.subr.bf16.mxu0 0
        %1866 = vmatpush1.bf16.xpose.msra.mxu0 0
        %1867 = vmatprep.subr.bf16.mxu0 0
        %1868 = vmatpush1.bf16.xpose.msra.mxu0 0
        %1869 = vmatprep.subr.bf16.mxu0 0
        %1870 = vmatpush1.bf16.xpose.msra.mxu0 0
        %1871 = vmatprep.subr.bf16.mxu0 0
        %1872 = vmatpush1.bf16.xpose.msra.mxu0 0
        %1873 = vmatprep.subr.bf16.mxu0 0
        %1874 = vmatpush1.bf16.xpose.msra.mxu0 0
        %1875 = vmatprep.mubr.bf16.mxu0 0
        %1876 = vmatmul.mubr.bf16.gmra.mrb[0].mxu0 %v1838
        %v1877 = vpop.f32.mrb[0].mxu0
        %v1878 = vadd.f32 0.0, %v1877
        %v1879 = vpop.f32.mrb[0].mxu0
        %v1880 = vpop.f32.mrb[0].mxu0
        %v1881 = vpop.f32.mrb[0].mxu0
        %1882 = vdwg.mxu0
        %v1883 = vmul.f32 %v1878, 0.35355338
        %vm1884 = vcmp.gt.f32.partialorder %v881, 0.0
        %v1885 = vsel %vm1884, 1, 0
        %v1886 = vlaneseq
        %v1887 = vshrl.u32 %v1886, 7
        %v1888 = vsub.s32 0, %v1887
        %v1889 = vrot.slane %v1885, %v1888
        %vm1890 = vcmp.eq.s32.totalorder %v1889, 1
        %v1891 = vsel %vm1890, %v1883, -1e+10
        %vm1892 = vcmask 80896
        %v1893 = vsel %vm1892, %v1891, -inf
        %1894 = vmax.xlane.f32.xlu0 %v1893
        %v1895 = vpop.xlane.xlu0 %1894
        %v1896 = vsub.f32 %v1891, %v1895
        %v1897 = vmul.f32 %v1896, 1.442695
        %v1898 = vpow.pop %v1897
        %v1899 = vsel %vm1892, %v1898, 0.0
        %1900 = vadd.xlane.f32.xlu0 %v1899
        %v1901 = vpop.xlane.xlu0 %1900
        %v1902 = vrcp.pop %v1901
        %v1903 = vmul.f32 %v1898, %v1902
        %1904 = vst.msk [vmem:[%s855] sm:$0xff] %vm1892, %v1903
        %v1905 = vpack.c.bf16 %v1903, %v1903
        %1907 = vrot.lane.b32.xlu0 %v1836, 96
        %v1908 = vpop.permute.xlu0 %1907
        %v1910 = vsel %vm1892, %v1905, 0
        %vm1912 = vcmask 1044480
        %v1914 = vsel %vm1912, %v1908, 0
        %1916 = vmatprep.subr.bf16.mxu0 0
        %1917 = vmatpush1.bf16.msra.mxu0 %v1914
        %1918 = vmatprep.subr.bf16.mxu0 0
        %1919 = vmatpush1.bf16.msra.mxu0 0
        %1920 = vmatprep.subr.bf16.mxu0 0
        %1921 = vmatpush1.bf16.msra.mxu0 0
        %1922 = vmatprep.subr.bf16.mxu0 0
        %1923 = vmatpush1.bf16.msra.mxu0 0
        %1924 = vmatprep.subr.bf16.mxu0 0
        %1925 = vmatpush1.bf16.msra.mxu0 0
        %1926 = vmatprep.subr.bf16.mxu0 0
        %1927 = vmatpush1.bf16.msra.mxu0 0
        %1928 = vmatprep.subr.bf16.mxu0 0
        %1929 = vmatpush1.bf16.msra.mxu0 0
        %1930 = vmatprep.subr.bf16.mxu0 0
        %1931 = vmatpush1.bf16.msra.mxu0 0
        %1932 = vmatprep.subr.bf16.mxu0 0
        %1933 = vmatpush1.bf16.msra.mxu0 0
        %1934 = vmatprep.subr.bf16.mxu0 0
        %1935 = vmatpush1.bf16.msra.mxu0 0
        %1936 = vmatprep.subr.bf16.mxu0 0
        %1937 = vmatpush1.bf16.msra.mxu0 0
        %1938 = vmatprep.subr.bf16.mxu0 0
        %1939 = vmatpush1.bf16.msra.mxu0 0
        %1940 = vmatprep.subr.bf16.mxu0 0
        %1941 = vmatpush1.bf16.msra.mxu0 0
        %1942 = vmatprep.subr.bf16.mxu0 0
        %1943 = vmatpush1.bf16.msra.mxu0 0
        %1944 = vmatprep.subr.bf16.mxu0 0
        %1945 = vmatpush1.bf16.msra.mxu0 0
        %1946 = vmatprep.subr.bf16.mxu0 0
        %1947 = vmatpush1.bf16.msra.mxu0 0
        %1948 = vmatprep.mubr.bf16.mxu0 0
        %1949 = vmatmul.mubr.bf16.gmra.mrb[0].mxu0 %v1910
        %v1950 = vpop.f32.mrb[0].mxu0
        %v1951 = vadd.f32 0.0, %v1950
        %v1952 = vpop.f32.mrb[0].mxu0
        %v1953 = vpop.f32.mrb[0].mxu0
        %v1954 = vpop.f32.mrb[0].mxu0
        %1955 = vdwg.mxu0
        %v1956 = vpack.c.bf16 %v1951, %v1951
        %v1957 = vld [vmem:[%s14] sm:$0xf]
        %1959 = vrot.lane.b32.xlu0 %v1835, 120
        %v1960 = vpop.permute.xlu0 %1959
        %1961 = vrot.lane.b32.xlu0 %v1836, 120
        %v1962 = vpop.permute.xlu0 %1961
        %v1964 = vsel %vm1015, %v1960, 0
        %v1967 = vsel %vm1015, %v1962, 0
        %1969 = vmatprep.subr.bf16.mxu0 0
        %1970 = vmatpush1.bf16.xpose.msra.mxu0 %v1967
        %1971 = vmatprep.subr.bf16.mxu0 0
        %1972 = vmatpush1.bf16.xpose.msra.mxu0 0
        %1973 = vmatprep.subr.bf16.mxu0 0
        %1974 = vmatpush1.bf16.xpose.msra.mxu0 0
        %1975 = vmatprep.subr.bf16.mxu0 0
        %1976 = vmatpush1.bf16.xpose.msra.mxu0 0
        %1977 = vmatprep.subr.bf16.mxu0 0
        %1978 = vmatpush1.bf16.xpose.msra.mxu0 0
        %1979 = vmatprep.subr.bf16.mxu0 0
        %1980 = vmatpush1.bf16.xpose.msra.mxu0 0
        %1981 = vmatprep.subr.bf16.mxu0 0
        %1982 = vmatpush1.bf16.xpose.msra.mxu0 0
        %1983 = vmatprep.subr.bf16.mxu0 0
        %1984 = vmatpush1.bf16.xpose.msra.mxu0 0
        %1985 = vmatprep.subr.bf16.mxu0 0
        %1986 = vmatpush1.bf16.xpose.msra.mxu0 0
        %1987 = vmatprep.subr.bf16.mxu0 0
        %1988 = vmatpush1.bf16.xpose.msra.mxu0 0
        %1989 = vmatprep.subr.bf16.mxu0 0
        %1990 = vmatpush1.bf16.xpose.msra.mxu0 0
        %1991 = vmatprep.subr.bf16.mxu0 0
        %1992 = vmatpush1.bf16.xpose.msra.mxu0 0
        %1993 = vmatprep.subr.bf16.mxu0 0
        %1994 = vmatpush1.bf16.xpose.msra.mxu0 0
        %1995 = vmatprep.subr.bf16.mxu0 0
        %1996 = vmatpush1.bf16.xpose.msra.mxu0 0
        %1997 = vmatprep.subr.bf16.mxu0 0
        %1998 = vmatpush1.bf16.xpose.msra.mxu0 0
        %1999 = vmatprep.subr.bf16.mxu0 0
        %2000 = vmatpush1.bf16.xpose.msra.mxu0 0
        %2001 = vmatprep.mubr.bf16.mxu0 0
        %2002 = vmatmul.mubr.bf16.gmra.mrb[0].mxu0 %v1964
        %v2003 = vpop.f32.mrb[0].mxu0
        %v2004 = vadd.f32 0.0, %v2003
        %v2005 = vpop.f32.mrb[0].mxu0
        %v2006 = vpop.f32.mrb[0].mxu0
        %v2007 = vpop.f32.mrb[0].mxu0
        %2008 = vdwg.mxu0
        %v2009 = vmul.f32 %v2004, 0.35355338
        %v2010 = vsel %vm1890, %v2009, -1e+10
        %v2011 = vsel %vm1892, %v2010, -inf
        %2012 = vmax.xlane.f32.xlu0 %v2011
        %v2013 = vpop.xlane.xlu0 %2012
        %v2014 = vsub.f32 %v2010, %v2013
        %v2015 = vmul.f32 %v2014, 1.442695
        %v2016 = vpow.pop %v2015
        %v2017 = vsel %vm1892, %v2016, 0.0
        %2018 = vadd.xlane.f32.xlu0 %v2017
        %v2019 = vpop.xlane.xlu0 %2018
        %v2020 = vrcp.pop %v2019
        %v2021 = vmul.f32 %v2016, %v2020
        %s2022 = scalar_lea.vmem %s855, 8 [#allocation2]
        %2023 = vst.msk [vmem:[%s2022] sm:$0xff] %vm1892, %v2021
        %v2024 = vpack.c.bf16 %v2021, %v2021
        %2025 = vrot.lane.b32.xlu0 %v1836, 88
        %v2026 = vpop.permute.xlu0 %2025
        %v2028 = vsel %vm1892, %v2024, 0
        %v2031 = vsel %vm1912, %v2026, 0
        %2033 = vmatprep.subr.bf16.mxu0 0
        %2034 = vmatpush1.bf16.msra.mxu0 %v2031
        %2035 = vmatprep.subr.bf16.mxu0 0
        %2036 = vmatpush1.bf16.msra.mxu0 0
        %2037 = vmatprep.subr.bf16.mxu0 0
        %2038 = vmatpush1.bf16.msra.mxu0 0
        %2039 = vmatprep.subr.bf16.mxu0 0
        %2040 = vmatpush1.bf16.msra.mxu0 0
        %2041 = vmatprep.subr.bf16.mxu0 0
        %2042 = vmatpush1.bf16.msra.mxu0 0
        %2043 = vmatprep.subr.bf16.mxu0 0
        %2044 = vmatpush1.bf16.msra.mxu0 0
        %2045 = vmatprep.subr.bf16.mxu0 0
        %2046 = vmatpush1.bf16.msra.mxu0 0
        %2047 = vmatprep.subr.bf16.mxu0 0
        %2048 = vmatpush1.bf16.msra.mxu0 0
        %2049 = vmatprep.subr.bf16.mxu0 0
        %2050 = vmatpush1.bf16.msra.mxu0 0
        %2051 = vmatprep.subr.bf16.mxu0 0
        %2052 = vmatpush1.bf16.msra.mxu0 0
        %2053 = vmatprep.subr.bf16.mxu0 0
        %2054 = vmatpush1.bf16.msra.mxu0 0
        %2055 = vmatprep.subr.bf16.mxu0 0
        %2056 = vmatpush1.bf16.msra.mxu0 0
        %2057 = vmatprep.subr.bf16.mxu0 0
        %2058 = vmatpush1.bf16.msra.mxu0 0
        %2059 = vmatprep.subr.bf16.mxu0 0
        %2060 = vmatpush1.bf16.msra.mxu0 0
        %2061 = vmatprep.subr.bf16.mxu0 0
        %2062 = vmatpush1.bf16.msra.mxu0 0
        %2063 = vmatprep.subr.bf16.mxu0 0
        %2064 = vmatpush1.bf16.msra.mxu0 0
        %2065 = vmatprep.mubr.bf16.mxu0 0
        %2066 = vmatmul.mubr.bf16.gmra.mrb[0].mxu0 %v2028
        %v2067 = vpop.f32.mrb[0].mxu0
        %v2068 = vadd.f32 0.0, %v2067
        %v2069 = vpop.f32.mrb[0].mxu0
        %v2070 = vpop.f32.mrb[0].mxu0
        %v2071 = vpop.f32.mrb[0].mxu0
        %2072 = vdwg.mxu0
        %v2073 = vpack.c.bf16 %v2068, %v2068
        %s2074 = scalar_lea.vmem %s14, 4
        %v2075 = vld [vmem:[%s2074] sm:$0xf]
        %v2077 = vsel %vm1015, %v2073, 0
        %v2080 = vsel %vm1083, %v2075, 0
        %2082 = vmatprep.subr.bf16.mxu0 0
        %2083 = vmatpush1.bf16.msra.mxu0 %v2080
        %2084 = vmatprep.subr.bf16.mxu0 0
        %2085 = vmatpush1.bf16.msra.mxu0 0
        %2086 = vmatprep.subr.bf16.mxu0 0
        %2087 = vmatpush1.bf16.msra.mxu0 0
        %2088 = vmatprep.subr.bf16.mxu0 0
        %2089 = vmatpush1.bf16.msra.mxu0 0
        %2090 = vmatprep.subr.bf16.mxu0 0
        %2091 = vmatpush1.bf16.msra.mxu0 0
        %2092 = vmatprep.subr.bf16.mxu0 0
        %2093 = vmatpush1.bf16.msra.mxu0 0
        %2094 = vmatprep.subr.bf16.mxu0 0
        %2095 = vmatpush1.bf16.msra.mxu0 0
        %2096 = vmatprep.subr.bf16.mxu0 0
        %2097 = vmatpush1.bf16.msra.mxu0 0
        %2098 = vmatprep.subr.bf16.mxu0 0
        %2099 = vmatpush1.bf16.msra.mxu0 0
        %2100 = vmatprep.subr.bf16.mxu0 0
        %2101 = vmatpush1.bf16.msra.mxu0 0
        %2102 = vmatprep.subr.bf16.mxu0 0
        %2103 = vmatpush1.bf16.msra.mxu0 0
        %2104 = vmatprep.subr.bf16.mxu0 0
        %2105 = vmatpush1.bf16.msra.mxu0 0
        %2106 = vmatprep.subr.bf16.mxu0 0
        %2107 = vmatpush1.bf16.msra.mxu0 0
        %2108 = vmatprep.subr.bf16.mxu0 0
        %2109 = vmatpush1.bf16.msra.mxu0 0
        %2110 = vmatprep.subr.bf16.mxu0 0
        %2111 = vmatpush1.bf16.msra.mxu0 0
        %2112 = vmatprep.subr.bf16.mxu0 0
        %2113 = vmatpush1.bf16.msra.mxu0 0
        %2114 = vmatprep.mubr.bf16.mxu0 0
        %2115 = vmatmul.mubr.bf16.gmra.mrb[0].mxu0 %v2077
        %v2116 = vpop.f32.mrb[0].mxu0
        %v2117 = vadd.f32 0.0, %v2116
        %v2118 = vpop.f32.mrb[0].mxu0
        %v2119 = vpop.f32.mrb[0].mxu0
        %v2120 = vpop.f32.mrb[0].mxu0
        %2121 = vdwg.mxu0
        %v2123 = vsel %vm1015, %v1956, 0
        %v2126 = vsel %vm1083, %v1957, 0
        %2128 = vmatprep.subr.bf16.mxu0 0
        %2129 = vmatpush1.bf16.msra.mxu0 %v2126
        %2130 = vmatprep.subr.bf16.mxu0 0
        %2131 = vmatpush1.bf16.msra.mxu0 0
        %2132 = vmatprep.subr.bf16.mxu0 0
        %2133 = vmatpush1.bf16.msra.mxu0 0
        %2134 = vmatprep.subr.bf16.mxu0 0
        %2135 = vmatpush1.bf16.msra.mxu0 0
        %2136 = vmatprep.subr.bf16.mxu0 0
        %2137 = vmatpush1.bf16.msra.mxu0 0
        %2138 = vmatprep.subr.bf16.mxu0 0
        %2139 = vmatpush1.bf16.msra.mxu0 0
        %2140 = vmatprep.subr.bf16.mxu0 0
        %2141 = vmatpush1.bf16.msra.mxu0 0
        %2142 = vmatprep.subr.bf16.mxu0 0
        %2143 = vmatpush1.bf16.msra.mxu0 0
        %2144 = vmatprep.subr.bf16.mxu0 0
        %2145 = vmatpush1.bf16.msra.mxu0 0
        %2146 = vmatprep.subr.bf16.mxu0 0
        %2147 = vmatpush1.bf16.msra.mxu0 0
        %2148 = vmatprep.subr.bf16.mxu0 0
        %2149 = vmatpush1.bf16.msra.mxu0 0
        %2150 = vmatprep.subr.bf16.mxu0 0
        %2151 = vmatpush1.bf16.msra.mxu0 0
        %2152 = vmatprep.subr.bf16.mxu0 0
        %2153 = vmatpush1.bf16.msra.mxu0 0
        %2154 = vmatprep.subr.bf16.mxu0 0
        %2155 = vmatpush1.bf16.msra.mxu0 0
        %2156 = vmatprep.subr.bf16.mxu0 0
        %2157 = vmatpush1.bf16.msra.mxu0 0
        %2158 = vmatprep.subr.bf16.mxu0 0
        %2159 = vmatpush1.bf16.msra.mxu0 0
        %2160 = vmatprep.mubr.bf16.mxu0 0
        %2161 = vmatmul.mubr.bf16.gmra.mrb[0].mxu0 %v2123
        %v2162 = vpop.f32.mrb[0].mxu0
        %v2163 = vadd.f32 %v2117, %v2162
        %v2164 = vpop.f32.mrb[0].mxu0
        %v2165 = vpop.f32.mrb[0].mxu0
        %v2166 = vpop.f32.mrb[0].mxu0
        %2167 = vdwg.mxu0
        %2168 = vrot.lane.b32.xlu0 %v1835, 112
        %v2169 = vpop.permute.xlu0 %2168
        %2170 = vrot.lane.b32.xlu0 %v1836, 112
        %v2171 = vpop.permute.xlu0 %2170
        %v2173 = vsel %vm1015, %v2169, 0
        %v2176 = vsel %vm1015, %v2171, 0
        %2178 = vmatprep.subr.bf16.mxu0 0
        %2179 = vmatpush1.bf16.xpose.msra.mxu0 %v2176
        %2180 = vmatprep.subr.bf16.mxu0 0
        %2181 = vmatpush1.bf16.xpose.msra.mxu0 0
        %2182 = vmatprep.subr.bf16.mxu0 0
        %2183 = vmatpush1.bf16.xpose.msra.mxu0 0
        %2184 = vmatprep.subr.bf16.mxu0 0
        %2185 = vmatpush1.bf16.xpose.msra.mxu0 0
        %2186 = vmatprep.subr.bf16.mxu0 0
        %2187 = vmatpush1.bf16.xpose.msra.mxu0 0
        %2188 = vmatprep.subr.bf16.mxu0 0
        %2189 = vmatpush1.bf16.xpose.msra.mxu0 0
        %2190 = vmatprep.subr.bf16.mxu0 0
        %2191 = vmatpush1.bf16.xpose.msra.mxu0 0
        %2192 = vmatprep.subr.bf16.mxu0 0
        %2193 = vmatpush1.bf16.xpose.msra.mxu0 0
        %2194 = vmatprep.subr.bf16.mxu0 0
        %2195 = vmatpush1.bf16.xpose.msra.mxu0 0
        %2196 = vmatprep.subr.bf16.mxu0 0
        %2197 = vmatpush1.bf16.xpose.msra.mxu0 0
        %2198 = vmatprep.subr.bf16.mxu0 0
        %2199 = vmatpush1.bf16.xpose.msra.mxu0 0
        %2200 = vmatprep.subr.bf16.mxu0 0
        %2201 = vmatpush1.bf16.xpose.msra.mxu0 0
        %2202 = vmatprep.subr.bf16.mxu0 0
        %2203 = vmatpush1.bf16.xpose.msra.mxu0 0
        %2204 = vmatprep.subr.bf16.mxu0 0
        %2205 = vmatpush1.bf16.xpose.msra.mxu0 0
        %2206 = vmatprep.subr.bf16.mxu0 0
        %2207 = vmatpush1.bf16.xpose.msra.mxu0 0
        %2208 = vmatprep.subr.bf16.mxu0 0
        %2209 = vmatpush1.bf16.xpose.msra.mxu0 0
        %2210 = vmatprep.mubr.bf16.mxu0 0
        %2211 = vmatmul.mubr.bf16.gmra.mrb[0].mxu0 %v2173
        %v2212 = vpop.f32.mrb[0].mxu0
        %v2213 = vadd.f32 0.0, %v2212
        %v2214 = vpop.f32.mrb[0].mxu0
        %v2215 = vpop.f32.mrb[0].mxu0
        %v2216 = vpop.f32.mrb[0].mxu0
        %2217 = vdwg.mxu0
        %v2218 = vmul.f32 %v2213, 0.35355338
        %v2219 = vsel %vm1890, %v2218, -1e+10
        %v2220 = vsel %vm1892, %v2219, -inf
        %2221 = vmax.xlane.f32.xlu0 %v2220
        %v2222 = vpop.xlane.xlu0 %2221
        %v2223 = vsub.f32 %v2219, %v2222
        %v2224 = vmul.f32 %v2223, 1.442695
        %v2225 = vpow.pop %v2224
        %v2226 = vsel %vm1892, %v2225, 0.0
        %2227 = vadd.xlane.f32.xlu0 %v2226
        %v2228 = vpop.xlane.xlu0 %2227
        %v2229 = vrcp.pop %v2228
        %v2230 = vmul.f32 %v2225, %v2229
        %s2231 = scalar_lea.vmem %s855, 16 [#allocation2]
        %2232 = vst.msk [vmem:[%s2231] sm:$0xff] %vm1892, %v2230
        %v2233 = vpack.c.bf16 %v2230, %v2230
        %2234 = vrot.lane.b32.xlu0 %v1836, 80
        %v2235 = vpop.permute.xlu0 %2234
        %v2237 = vsel %vm1892, %v2233, 0
        %v2240 = vsel %vm1912, %v2235, 0
        %2242 = vmatprep.subr.bf16.mxu0 0
        %2243 = vmatpush1.bf16.msra.mxu0 %v2240
        %2244 = vmatprep.subr.bf16.mxu0 0
        %2245 = vmatpush1.bf16.msra.mxu0 0
        %2246 = vmatprep.subr.bf16.mxu0 0
        %2247 = vmatpush1.bf16.msra.mxu0 0
        %2248 = vmatprep.subr.bf16.mxu0 0
        %2249 = vmatpush1.bf16.msra.mxu0 0
        %2250 = vmatprep.subr.bf16.mxu0 0
        %2251 = vmatpush1.bf16.msra.mxu0 0
        %2252 = vmatprep.subr.bf16.mxu0 0
        %2253 = vmatpush1.bf16.msra.mxu0 0
        %2254 = vmatprep.subr.bf16.mxu0 0
        %2255 = vmatpush1.bf16.msra.mxu0 0
        %2256 = vmatprep.subr.bf16.mxu0 0
        %2257 = vmatpush1.bf16.msra.mxu0 0
        %2258 = vmatprep.subr.bf16.mxu0 0
        %2259 = vmatpush1.bf16.msra.mxu0 0
        %2260 = vmatprep.subr.bf16.mxu0 0
        %2261 = vmatpush1.bf16.msra.mxu0 0
        %2262 = vmatprep.subr.bf16.mxu0 0
        %2263 = vmatpush1.bf16.msra.mxu0 0
        %2264 = vmatprep.subr.bf16.mxu0 0
        %2265 = vmatpush1.bf16.msra.mxu0 0
        %2266 = vmatprep.subr.bf16.mxu0 0
        %2267 = vmatpush1.bf16.msra.mxu0 0
        %2268 = vmatprep.subr.bf16.mxu0 0
        %2269 = vmatpush1.bf16.msra.mxu0 0
        %2270 = vmatprep.subr.bf16.mxu0 0
        %2271 = vmatpush1.bf16.msra.mxu0 0
        %2272 = vmatprep.subr.bf16.mxu0 0
        %2273 = vmatpush1.bf16.msra.mxu0 0
        %2274 = vmatprep.mubr.bf16.mxu0 0
        %2275 = vmatmul.mubr.bf16.gmra.mrb[0].mxu0 %v2237
        %v2276 = vpop.f32.mrb[0].mxu0
        %v2277 = vadd.f32 0.0, %v2276
        %v2278 = vpop.f32.mrb[0].mxu0
        %v2279 = vpop.f32.mrb[0].mxu0
        %v2280 = vpop.f32.mrb[0].mxu0
        %2281 = vdwg.mxu0
        %v2282 = vpack.c.bf16 %v2277, %v2277
        %s2283 = scalar_lea.vmem %s14, 8
        %v2284 = vld [vmem:[%s2283] sm:$0xf]
        %v2286 = vsel %vm1015, %v2282, 0
        %v2289 = vsel %vm1083, %v2284, 0
        %2291 = vmatprep.subr.bf16.mxu0 0
        %2292 = vmatpush1.bf16.msra.mxu0 %v2289
        %2293 = vmatprep.subr.bf16.mxu0 0
        %2294 = vmatpush1.bf16.msra.mxu0 0
        %2295 = vmatprep.subr.bf16.mxu0 0
        %2296 = vmatpush1.bf16.msra.mxu0 0
        %2297 = vmatprep.subr.bf16.mxu0 0
        %2298 = vmatpush1.bf16.msra.mxu0 0
        %2299 = vmatprep.subr.bf16.mxu0 0
        %2300 = vmatpush1.bf16.msra.mxu0 0
        %2301 = vmatprep.subr.bf16.mxu0 0
        %2302 = vmatpush1.bf16.msra.mxu0 0
        %2303 = vmatprep.subr.bf16.mxu0 0
        %2304 = vmatpush1.bf16.msra.mxu0 0
        %2305 = vmatprep.subr.bf16.mxu0 0
        %2306 = vmatpush1.bf16.msra.mxu0 0
        %2307 = vmatprep.subr.bf16.mxu0 0
        %2308 = vmatpush1.bf16.msra.mxu0 0
        %2309 = vmatprep.subr.bf16.mxu0 0
        %2310 = vmatpush1.bf16.msra.mxu0 0
        %2311 = vmatprep.subr.bf16.mxu0 0
        %2312 = vmatpush1.bf16.msra.mxu0 0
        %2313 = vmatprep.subr.bf16.mxu0 0
        %2314 = vmatpush1.bf16.msra.mxu0 0
        %2315 = vmatprep.subr.bf16.mxu0 0
        %2316 = vmatpush1.bf16.msra.mxu0 0
        %2317 = vmatprep.subr.bf16.mxu0 0
        %2318 = vmatpush1.bf16.msra.mxu0 0
        %2319 = vmatprep.subr.bf16.mxu0 0
        %2320 = vmatpush1.bf16.msra.mxu0 0
        %2321 = vmatprep.subr.bf16.mxu0 0
        %2322 = vmatpush1.bf16.msra.mxu0 0
        %2323 = vmatprep.mubr.bf16.mxu0 0
        %2324 = vmatmul.mubr.bf16.gmra.mrb[0].mxu0 %v2286
        %v2325 = vpop.f32.mrb[0].mxu0
        %v2326 = vadd.f32 0.0, %v2325
        %v2327 = vpop.f32.mrb[0].mxu0
        %v2328 = vpop.f32.mrb[0].mxu0
        %v2329 = vpop.f32.mrb[0].mxu0
        %2330 = vdwg.mxu0
        %v2331 = vadd.f32 %v2163, %v2326
        %2332 = vrot.lane.b32.xlu0 %v1835, 104
        %v2333 = vpop.permute.xlu0 %2332
        %2334 = vrot.lane.b32.xlu0 %v1836, 104
        %v2335 = vpop.permute.xlu0 %2334
        %v2337 = vsel %vm1015, %v2333, 0
        %v2340 = vsel %vm1015, %v2335, 0
        %2342 = vmatprep.subr.bf16.mxu0 0
        %2343 = vmatpush1.bf16.xpose.msra.mxu0 %v2340
        %2344 = vmatprep.subr.bf16.mxu0 0
        %2345 = vmatpush1.bf16.xpose.msra.mxu0 0
        %2346 = vmatprep.subr.bf16.mxu0 0
        %2347 = vmatpush1.bf16.xpose.msra.mxu0 0
        %2348 = vmatprep.subr.bf16.mxu0 0
        %2349 = vmatpush1.bf16.xpose.msra.mxu0 0
        %2350 = vmatprep.subr.bf16.mxu0 0
        %2351 = vmatpush1.bf16.xpose.msra.mxu0 0
        %2352 = vmatprep.subr.bf16.mxu0 0
        %2353 = vmatpush1.bf16.xpose.msra.mxu0 0
        %2354 = vmatprep.subr.bf16.mxu0 0
        %2355 = vmatpush1.bf16.xpose.msra.mxu0 0
        %2356 = vmatprep.subr.bf16.mxu0 0
        %2357 = vmatpush1.bf16.xpose.msra.mxu0 0
        %2358 = vmatprep.subr.bf16.mxu0 0
        %2359 = vmatpush1.bf16.xpose.msra.mxu0 0
        %2360 = vmatprep.subr.bf16.mxu0 0
        %2361 = vmatpush1.bf16.xpose.msra.mxu0 0
        %2362 = vmatprep.subr.bf16.mxu0 0
        %2363 = vmatpush1.bf16.xpose.msra.mxu0 0
        %2364 = vmatprep.subr.bf16.mxu0 0
        %2365 = vmatpush1.bf16.xpose.msra.mxu0 0
        %2366 = vmatprep.subr.bf16.mxu0 0
        %2367 = vmatpush1.bf16.xpose.msra.mxu0 0
        %2368 = vmatprep.subr.bf16.mxu0 0
        %2369 = vmatpush1.bf16.xpose.msra.mxu0 0
        %2370 = vmatprep.subr.bf16.mxu0 0
        %2371 = vmatpush1.bf16.xpose.msra.mxu0 0
        %2372 = vmatprep.subr.bf16.mxu0 0
        %2373 = vmatpush1.bf16.xpose.msra.mxu0 0
        %2374 = vmatprep.mubr.bf16.mxu0 0
        %2375 = vmatmul.mubr.bf16.gmra.mrb[0].mxu0 %v2337
        %v2376 = vpop.f32.mrb[0].mxu0
        %v2377 = vadd.f32 0.0, %v2376
        %v2378 = vpop.f32.mrb[0].mxu0
        %v2379 = vpop.f32.mrb[0].mxu0
        %v2380 = vpop.f32.mrb[0].mxu0
        %2381 = vdwg.mxu0
        %v2382 = vmul.f32 %v2377, 0.35355338
        %v2383 = vsel %vm1890, %v2382, -1e+10
        %v2384 = vsel %vm1892, %v2383, -inf
        %2385 = vmax.xlane.f32.xlu0 %v2384
        %v2386 = vpop.xlane.xlu0 %2385
        %v2387 = vsub.f32 %v2383, %v2386
        %v2388 = vmul.f32 %v2387, 1.442695
        %v2389 = vpow.pop %v2388
        %v2390 = vsel %vm1892, %v2389, 0.0
        %2391 = vadd.xlane.f32.xlu0 %v2390
        %v2392 = vpop.xlane.xlu0 %2391
        %v2393 = vrcp.pop %v2392
        %v2394 = vmul.f32 %v2389, %v2393
        %s2395 = scalar_lea.vmem %s855, 24 [#allocation2]
        %2396 = vst.msk [vmem:[%s2395] sm:$0xff] %vm1892, %v2394
        %v2397 = vpack.c.bf16 %v2394, %v2394
        %2398 = vrot.lane.b32.xlu0 %v1836, 72
        %v2399 = vpop.permute.xlu0 %2398
        %v2401 = vsel %vm1892, %v2397, 0
        %v2404 = vsel %vm1912, %v2399, 0
        %2406 = vmatprep.subr.bf16.mxu0 0
        %2407 = vmatpush1.bf16.msra.mxu0 %v2404
        %2408 = vmatprep.subr.bf16.mxu0 0
        %2409 = vmatpush1.bf16.msra.mxu0 0
        %2410 = vmatprep.subr.bf16.mxu0 0
        %2411 = vmatpush1.bf16.msra.mxu0 0
        %2412 = vmatprep.subr.bf16.mxu0 0
        %2413 = vmatpush1.bf16.msra.mxu0 0
        %2414 = vmatprep.subr.bf16.mxu0 0
        %2415 = vmatpush1.bf16.msra.mxu0 0
        %2416 = vmatprep.subr.bf16.mxu0 0
        %2417 = vmatpush1.bf16.msra.mxu0 0
        %2418 = vmatprep.subr.bf16.mxu0 0
        %2419 = vmatpush1.bf16.msra.mxu0 0
        %2420 = vmatprep.subr.bf16.mxu0 0
        %2421 = vmatpush1.bf16.msra.mxu0 0
        %2422 = vmatprep.subr.bf16.mxu0 0
        %2423 = vmatpush1.bf16.msra.mxu0 0
        %2424 = vmatprep.subr.bf16.mxu0 0
        %2425 = vmatpush1.bf16.msra.mxu0 0
        %2426 = vmatprep.subr.bf16.mxu0 0
        %2427 = vmatpush1.bf16.msra.mxu0 0
        %2428 = vmatprep.subr.bf16.mxu0 0
        %2429 = vmatpush1.bf16.msra.mxu0 0
        %2430 = vmatprep.subr.bf16.mxu0 0
        %2431 = vmatpush1.bf16.msra.mxu0 0
        %2432 = vmatprep.subr.bf16.mxu0 0
        %2433 = vmatpush1.bf16.msra.mxu0 0
        %2434 = vmatprep.subr.bf16.mxu0 0
        %2435 = vmatpush1.bf16.msra.mxu0 0
        %2436 = vmatprep.subr.bf16.mxu0 0
        %2437 = vmatpush1.bf16.msra.mxu0 0
        %2438 = vmatprep.mubr.bf16.mxu0 0
        %2439 = vmatmul.mubr.bf16.gmra.mrb[0].mxu0 %v2401
        %v2440 = vpop.f32.mrb[0].mxu0
        %v2441 = vadd.f32 0.0, %v2440
        %v2442 = vpop.f32.mrb[0].mxu0
        %v2443 = vpop.f32.mrb[0].mxu0
        %v2444 = vpop.f32.mrb[0].mxu0
        %2445 = vdwg.mxu0
        %v2446 = vpack.c.bf16 %v2441, %v2441
        %s2447 = scalar_lea.vmem %s14, 12
        %v2448 = vld [vmem:[%s2447] sm:$0xf]
        %v2450 = vsel %vm1015, %v2446, 0
        %v2453 = vsel %vm1083, %v2448, 0
        %2455 = vmatprep.subr.bf16.mxu0 0
        %2456 = vmatpush1.bf16.msra.mxu0 %v2453
        %2457 = vmatprep.subr.bf16.mxu0 0
        %2458 = vmatpush1.bf16.msra.mxu0 0
        %2459 = vmatprep.subr.bf16.mxu0 0
        %2460 = vmatpush1.bf16.msra.mxu0 0
        %2461 = vmatprep.subr.bf16.mxu0 0
        %2462 = vmatpush1.bf16.msra.mxu0 0
        %2463 = vmatprep.subr.bf16.mxu0 0
        %2464 = vmatpush1.bf16.msra.mxu0 0
        %2465 = vmatprep.subr.bf16.mxu0 0
        %2466 = vmatpush1.bf16.msra.mxu0 0
        %2467 = vmatprep.subr.bf16.mxu0 0
        %2468 = vmatpush1.bf16.msra.mxu0 0
        %2469 = vmatprep.subr.bf16.mxu0 0
        %2470 = vmatpush1.bf16.msra.mxu0 0
        %2471 = vmatprep.subr.bf16.mxu0 0
        %2472 = vmatpush1.bf16.msra.mxu0 0
        %2473 = vmatprep.subr.bf16.mxu0 0
        %2474 = vmatpush1.bf16.msra.mxu0 0
        %2475 = vmatprep.subr.bf16.mxu0 0
        %2476 = vmatpush1.bf16.msra.mxu0 0
        %2477 = vmatprep.subr.bf16.mxu0 0
        %2478 = vmatpush1.bf16.msra.mxu0 0
        %2479 = vmatprep.subr.bf16.mxu0 0
        %2480 = vmatpush1.bf16.msra.mxu0 0
        %2481 = vmatprep.subr.bf16.mxu0 0
        %2482 = vmatpush1.bf16.msra.mxu0 0
        %2483 = vmatprep.subr.bf16.mxu0 0
        %2484 = vmatpush1.bf16.msra.mxu0 0
        %2485 = vmatprep.subr.bf16.mxu0 0
        %2486 = vmatpush1.bf16.msra.mxu0 0
        %2487 = vmatprep.mubr.bf16.mxu0 0
        %2488 = vmatmul.mubr.bf16.gmra.mrb[0].mxu0 %v2450
        %v2489 = vpop.f32.mrb[0].mxu0
        %v2490 = vadd.f32 0.0, %v2489
        %v2491 = vpop.f32.mrb[0].mxu0
        %v2492 = vpop.f32.mrb[0].mxu0
        %v2493 = vpop.f32.mrb[0].mxu0
        %2494 = vdwg.mxu0
        %v2495 = vadd.f32 %v2331, %v2490
        %v2496 = vld [vmem:[%s15] sm:$0x1]
        %v2498 = vlaneseq
        %v2499 = vshrl.u32 %v2498, 7
        %v2500 = vsub.s32 0, %v2499
        %v2501 = vrot.slane %v2496, %v2500
        %v2503 = vadd.f32 %v2495, %v2501
        %v2504 = vadd.f32 %v1699, %v2503
        %v2505 = vsel %vm906, %v2504, 0.0
        %2506 = vadd.xlane.f32.xlu0 %v2505
        %v2507 = vpop.xlane.xlu0 %2506
        %v2508 = vmul.f32 %v2507, %v1673
        %v2509 = vsub.f32 %v2504, %v2508
        %v2510 = vmul.f32 %v2509, %v2509
        %v2511 = vsel %vm906, %v2510, 0.0
        %2512 = vadd.xlane.f32.xlu0 %v2511
        %v2513 = vpop.xlane.xlu0 %2512
        %v2514 = vmul.f32 %v2513, %v1673
        %v2515 = vadd.f32 %v2514, 1e-05
        %v2516 = vrsqrt.pop %v2515
        %v2517 = vmul.f32 %v2509, %v2516
        %v2518 = vld [vmem:[%s22] sm:$0x1]
        %v2520 = vlaneseq
        %v2521 = vshrl.u32 %v2520, 7
        %v2522 = vsub.s32 0, %v2521
        %v2523 = vrot.slane %v2518, %v2522
        %v2525 = vmul.f32 %v2517, %v2523
        %v2526 = vld [vmem:[%s23] sm:$0x1]
        %v2528 = vlaneseq
        %v2529 = vshrl.u32 %v2528, 7
        %v2530 = vsub.s32 0, %v2529
        %v2531 = vrot.slane %v2526, %v2530
        %v2533 = vadd.f32 %v2525, %v2531
        %v2534 = vpack.c.bf16 %v2533, %v2533
        %v2535 = vld [vmem:[%s16] sm:$0xf]
        %v2536 = vld [vmem:[%s16 + $0x4] sm:$0xf]
        %v2537 = vld [vmem:[%s16 + $0x8] sm:$0xf]
        %v2538 = vld [vmem:[%s16 + $0xc] sm:$0xf]
        %v2539 = vld [vmem:[%s17] sm:$0x1]
        %v2541 = vlaneseq
        %v2542 = vshrl.u32 %v2541, 7
        %v2543 = vsub.s32 0, %v2542
        %v2544 = vrot.slane %v2539, %v2543
        %v2550 = vunpack.c.l.b16 %v2535
        %v2551 = vunpack.c.l.b16 %v2536
        %v2552 = vunpack.c.l.b16 %v2537
        %v2553 = vunpack.c.l.b16 %v2538
        %v2554 = vpack.c.b16 %v2551, %v2550
        %v2555 = vpack.c.b16 %v2553, %v2552
        %v2559 = vsel %vm906, %v2534, 0
        %2561 = vmatprep.subr.bf16.mxu0 0
        %2562 = vmatpush1.bf16.msra.mxu0 %v2554
        %2563 = vmatprep.subr.bf16.mxu0 0
        %2564 = vmatpush1.bf16.msra.mxu0 %v2555
        %2565 = vmatprep.subr.bf16.mxu0 0
        %2566 = vmatpush1.bf16.msra.mxu0 0
        %2567 = vmatprep.subr.bf16.mxu0 0
        %2568 = vmatpush1.bf16.msra.mxu0 0
        %2569 = vmatprep.subr.bf16.mxu0 0
        %2570 = vmatpush1.bf16.msra.mxu0 0
        %2571 = vmatprep.subr.bf16.mxu0 0
        %2572 = vmatpush1.bf16.msra.mxu0 0
        %2573 = vmatprep.subr.bf16.mxu0 0
        %2574 = vmatpush1.bf16.msra.mxu0 0
        %2575 = vmatprep.subr.bf16.mxu0 0
        %2576 = vmatpush1.bf16.msra.mxu0 0
        %2577 = vmatprep.subr.bf16.mxu0 0
        %2578 = vmatpush1.bf16.msra.mxu0 0
        %2579 = vmatprep.subr.bf16.mxu0 0
        %2580 = vmatpush1.bf16.msra.mxu0 0
        %2581 = vmatprep.subr.bf16.mxu0 0
        %2582 = vmatpush1.bf16.msra.mxu0 0
        %2583 = vmatprep.subr.bf16.mxu0 0
        %2584 = vmatpush1.bf16.msra.mxu0 0
        %2585 = vmatprep.subr.bf16.mxu0 0
        %2586 = vmatpush1.bf16.msra.mxu0 0
        %2587 = vmatprep.subr.bf16.mxu0 0
        %2588 = vmatpush1.bf16.msra.mxu0 0
        %2589 = vmatprep.subr.bf16.mxu0 0
        %2590 = vmatpush1.bf16.msra.mxu0 0
        %2591 = vmatprep.subr.bf16.mxu0 0
        %2592 = vmatpush1.bf16.msra.mxu0 0
        %2593 = vmatprep.mubr.bf16.mxu0 0
        %2594 = vmatmul.mubr.bf16.gmra.mrb[0].mxu0 %v2559
        %v2595 = vpop.f32.mrb[0].mxu0
        %v2596 = vadd.f32 %v2544, %v2595
        %v2597 = vpop.f32.mrb[0].mxu0
        %v2598 = vpop.f32.mrb[0].mxu0
        %v2599 = vpop.f32.mrb[0].mxu0
        %2600 = vdwg.mxu0
        %v2601 = vmax.f32 %v2596, 0.0
        %v2602 = vpack.c.bf16 %v2601, %v2601
        %v2603 = vld [vmem:[%s18] sm:$0xf]
        %v2604 = vld [vmem:[%s18 + $0x4] sm:$0xf]
        %v2605 = vld [vmem:[%s18 + $0x8] sm:$0xf]
        %v2606 = vld [vmem:[%s18 + $0xc] sm:$0xf]
        %v2607 = vld [vmem:[%s18 + $0x10] sm:$0xf]
        %v2608 = vld [vmem:[%s18 + $0x14] sm:$0xf]
        %v2609 = vld [vmem:[%s18 + $0x18] sm:$0xf]
        %v2610 = vld [vmem:[%s18 + $0x1c] sm:$0xf]
        %v2611 = vld [vmem:[%s19] sm:$0x1]
        %v2613 = vlaneseq
        %v2614 = vshrl.u32 %v2613, 7
        %v2615 = vsub.s32 0, %v2614
        %v2616 = vrot.slane %v2611, %v2615
        %v2626 = vunpack.c.l.b16 %v2603
        %v2627 = vunpack.c.l.b16 %v2604
        %v2628 = vunpack.c.l.b16 %v2605
        %v2629 = vunpack.c.l.b16 %v2606
        %v2630 = vunpack.c.l.b16 %v2607
        %v2631 = vunpack.c.l.b16 %v2608
        %v2632 = vunpack.c.l.b16 %v2609
        %v2633 = vunpack.c.l.b16 %v2610
        %v2634 = vpack.c.b16 %v2627, %v2626
        %v2635 = vpack.c.b16 %v2629, %v2628
        %v2636 = vpack.c.b16 %v2631, %v2630
        %v2637 = vpack.c.b16 %v2633, %v2632
        %vm2642 = vcmask 523264
        %v2644 = vsel %vm2642, %v2602, 0
        %2646 = vmatprep.subr.bf16.mxu0 0
        %2647 = vmatpush1.bf16.msra.mxu0 %v2634
        %2648 = vmatprep.subr.bf16.mxu0 0
        %2649 = vmatpush1.bf16.msra.mxu0 %v2635
        %2650 = vmatprep.subr.bf16.mxu0 0
        %2651 = vmatpush1.bf16.msra.mxu0 %v2636
        %2652 = vmatprep.subr.bf16.mxu0 0
        %2653 = vmatpush1.bf16.msra.mxu0 %v2637
        %2654 = vmatprep.subr.bf16.mxu0 0
        %2655 = vmatpush1.bf16.msra.mxu0 0
        %2656 = vmatprep.subr.bf16.mxu0 0
        %2657 = vmatpush1.bf16.msra.mxu0 0
        %2658 = vmatprep.subr.bf16.mxu0 0
        %2659 = vmatpush1.bf16.msra.mxu0 0
        %2660 = vmatprep.subr.bf16.mxu0 0
        %2661 = vmatpush1.bf16.msra.mxu0 0
        %2662 = vmatprep.subr.bf16.mxu0 0
        %2663 = vmatpush1.bf16.msra.mxu0 0
        %2664 = vmatprep.subr.bf16.mxu0 0
        %2665 = vmatpush1.bf16.msra.mxu0 0
        %2666 = vmatprep.subr.bf16.mxu0 0
        %2667 = vmatpush1.bf16.msra.mxu0 0
        %2668 = vmatprep.subr.bf16.mxu0 0
        %2669 = vmatpush1.bf16.msra.mxu0 0
        %2670 = vmatprep.subr.bf16.mxu0 0
        %2671 = vmatpush1.bf16.msra.mxu0 0
        %2672 = vmatprep.subr.bf16.mxu0 0
        %2673 = vmatpush1.bf16.msra.mxu0 0
        %2674 = vmatprep.subr.bf16.mxu0 0
        %2675 = vmatpush1.bf16.msra.mxu0 0
        %2676 = vmatprep.subr.bf16.mxu0 0
        %2677 = vmatpush1.bf16.msra.mxu0 0
        %2678 = vmatprep.mubr.bf16.mxu0 0
        %2679 = vmatmul.mubr.bf16.gmra.mrb[0].mxu0 %v2644
        %v2680 = vpop.f32.mrb[0].mxu0
        %v2681 = vadd.f32 %v2616, %v2680
        %v2682 = vpop.f32.mrb[0].mxu0
        %v2683 = vpop.f32.mrb[0].mxu0
        %v2684 = vpop.f32.mrb[0].mxu0
        %2685 = vdwg.mxu0
        %v2686 = vadd.f32 %v2533, %v2681
        %v2687 = vsel %vm906, %v2686, 0.0
        %2688 = vadd.xlane.f32.xlu0 %v2687
        %v2689 = vpop.xlane.xlu0 %2688
        %v2690 = vmul.f32 %v2689, %v1673
        %v2691 = vsub.f32 %v2686, %v2690
        %v2692 = vmul.f32 %v2691, %v2691
        %v2693 = vsel %vm906, %v2692, 0.0
        %2694 = vadd.xlane.f32.xlu0 %v2693
        %v2695 = vpop.xlane.xlu0 %2694
        %v2696 = vmul.f32 %v2695, %v1673
        %v2697 = vadd.f32 %v2696, 1e-05
        %v2698 = vrsqrt.pop %v2697
        %v2699 = vmul.f32 %v2691, %v2698
        %v2700 = vld [vmem:[%s24] sm:$0x1]
        %v2702 = vlaneseq
        %v2703 = vshrl.u32 %v2702, 7
        %v2704 = vsub.s32 0, %v2703
        %v2705 = vrot.slane %v2700, %v2704
        %v2707 = vmul.f32 %v2699, %v2705
        %v2708 = vld [vmem:[%s25] sm:$0x1]
        %v2710 = vlaneseq
        %v2711 = vshrl.u32 %v2710, 7
        %v2712 = vsub.s32 0, %v2711
        %v2713 = vrot.slane %v2708, %v2712
        %v2715 = vadd.f32 %v2707, %v2713
        %2716 = vst.msk [vmem:[%s875] sm:$0xff] %vm906, %v2715
        %p2717 = scmp.lt.s32.totalorder %s42, 1
        %s2718 = scalar_select %p2717, %s42, 1
        %s2719 = smul.addr %s2718, 8
        %s2720 = scalar_lea.vmem %s26, %s2719
        %s2721 = sand.u32 %s642, 1
        %s2722 = scalar_lea.sflag [#allocation3], %s2721
        %s2723 = sand.u32 %s642, 1
        %s2724 = smul.addr %s2723, 32
        %s2725 = scalar_lea.vmem [#allocation2], %s2724
        // Predicated region
        $region125: #{decoder_forward.3} parent=123 // pred_check
          %p2726 = pneg %p626
        $region126: #{decoder_forward.3} parent=123 // pred_check_branch
          %2728 = sbr.rel (%p2726) target = $region128
        $region127: #{decoder_forward.3} parent=123 // pred_region
          _
        $region128: #{decoder_forward.3} parent=123 // pred_fallthru
          _
        // Predicated region
        $region129: #{decoder_forward.3} parent=123 // pred_check
          %p2729 = pneg %p652
        $region130: #{decoder_forward.3} parent=123 // pred_check_branch
          %2731 = sbr.rel (%p2729) target = $region132
        $region131: #{decoder_forward.3} parent=123 // pred_region
          %s2733 = ssub.s32 512, 512
          %2734 = vsyncadd %s2722, %s2733
          %s2735 = smul.addr %s42, 4
          %s2736 = smul.addr %s2735, 128
          %s2737 = scalar_lea.hbm %s27, %s2736
          %s2738 = sshll.u32 %s2725, 4
          %s2739 = int_to_ptr.vmem [resolvable:$true] %s2738
          %2744 = dma.vmem_to_hbm [thread:$0]  %s2739, 512, %s2737, %s2722, 128, 128, 8
        $region132: #{decoder_forward.3} parent=123 // pred_fallthru
          _
      $region124: #{decoder_forward.3} parent=5 // pred_fallthru
        _
      %p2745 = scmp.le.s32.totalorder 2, %s37
      // Predicated region
      $region133: #{decoder_forward.3} parent=5 // pred_check
        %p2746 = pneg %p2745
      $region134: #{decoder_forward.3} parent=5 // pred_check_branch
        %2748 = sbr.rel (%p2746) target = $region136
      $region135: #{decoder_forward.3} parent=5 // pred_region
        %s2749 = ssub.s32 %s37, 2
        // Predicated region
        $region137: #{decoder_forward.3} parent=135 // pred_check
          %p2750 = pneg %p632
        $region138: #{decoder_forward.3} parent=135 // pred_check_branch
          %2752 = sbr.rel (%p2750) target = $region140
        $region139: #{decoder_forward.3} parent=135 // pred_region
          %p2753 = scmp.lt.s32.totalorder %s43, 1
          %s2754 = scalar_select %p2753, %s43, 1
          %s2755 = smul.addr %s2754, 8
          %s2756 = scalar_lea.vmem %s26, %s2755
        $region140: #{decoder_forward.3} parent=135 // pred_fallthru
          _
        // Predicated region
        $region141: #{decoder_forward.3} parent=135 // pred_check
          %p2757 = pneg %p658
        $region142: #{decoder_forward.3} parent=135 // pred_check_branch
          %2759 = sbr.rel (%p2757) target = $region144
        $region143: #{decoder_forward.3} parent=135 // pred_region
          %s2760 = sand.u32 %s643, 1
          %s2761 = scalar_lea.sflag [#allocation3], %s2760
          %s2762 = sand.u32 %s643, 1
          %s2763 = smul.addr %s2762, 32
          %s2764 = scalar_lea.vmem [#allocation2], %s2763
          %2765 = dma.done %s2761, 512
        $region144: #{decoder_forward.3} parent=135 // pred_fallthru
          _
      $region136: #{decoder_forward.3} parent=5 // pred_fallthru
        _
    $region6: #{decoder_forward.3} parent=1 // loop_footer
      %s41 = sadd.s32 1, %s37
    $region7: #{decoder_forward.3} parent=1 // loop_footer_branch
      %36 = sbr.rel target = $region3
    $region8: #{decoder_forward.3} parent=1 // loop_exit
      _
    %2766 = vsyncpa [#allocation3], 1
    %s2767 = scalar_lea.sflag [#allocation3], 1
    %2768 = vsyncpa %s2767, 1

</llo_original>
